<compile_context>
chip_gen: v7x
topology: tpu7x:2x2x1
jax: 0.10.0
libtpu: 0.0.40
codegen_flags: <defaults>
</compile_context>

<pallas_src>
import functools

import jax
import jax.numpy as jnp
from jax.experimental import pallas as pl
from jax.experimental.pallas import tpu as pltpu

LANE = 128   # vreg lane width -> fused output channels padded to this
KPAD = 16    # fused input channels padded to the bf16 sublane tile

EXTRACTOR_CHANNELS = (16, 32, 64)   # per-network output channels per stage


def _round_up(x, m):
    return ((x + m - 1) // m) * m


# ---------------------------------------------------------------------------
# Pallas kernel: fused teacher+student 3x3 conv + bias + ReLU (one image/block)
# ---------------------------------------------------------------------------
def _dual_conv3x3_kernel(x_ref, w_ref, b_ref, o_ref, col_ref,
                         *, tap_offsets, m_out, cin):
    """x_ref  : (m_in, cin)       bf16  zero-padded image, row pitch Wp (16-aligned)
       w_ref  : (9*cin, Npad)     bf16  fused teacher||student weights, K-concat
       b_ref  : (1, Npad)         f32   fused bias
       o_ref  : (m_out, Npad)     bf16  conv+bias+ReLU, flattened H x Wp rows
       col_ref: (m_out, 9*cin)    bf16  VMEM scratch: im2col slab
    """
    # Build the im2col slab with 9 static-offset copies.  dy offsets are
    # 16-aligned (Wp % 16 == 0); the dx in {1,2} sublane shifts are folded
    # into these copies so the single big dot below reads an aligned LHS.
    for k, off in enumerate(tap_offsets):
        col_ref[:, k * cin:(k + 1) * cin] = x_ref[off:off + m_out, :]

    # One MXU matmul with K = 9*cin (144/288/576): internal f32 accumulation,
    # no per-tap accumulator round-trips through VMEM.
    acc = jnp.dot(col_ref[...], w_ref[...], preferred_element_type=jnp.float32)
    acc = acc + b_ref[...]                       # epilogue in f32
    o_ref[...] = jnp.maximum(acc, 0.0).astype(o_ref.dtype)   # bf16 store


def dual_conv3x3_relu(x_nhwc, w_fused_bf16, b_fused, n_valid):
    """x: (B, H, W, Cx) f32/bf16; returns (B, H, W, n_valid) bf16
       (teacher channels [:n_valid//2], student channels [n_valid//2:])."""
    B, H, W, Cx = x_nhwc.shape
    K, Npad = w_fused_bf16.shape                 # K = 9 * cin_pad
    cin_pad = K // 9
    assert Cx <= cin_pad, (Cx, cin_pad)

    Wp = _round_up(W + 2, 16)                    # 16-aligned flattened row pitch
    m_out = H * Wp                               # flat output rows (mult. of 16)
    m_in = _round_up(m_out + 2 * Wp + 2, 16)     # covers max tap offset 2*Wp + 2

    # spatial 'SAME' zero pad (+ pitch pad), channel pad to cin_pad, bf16 cast,
    # flatten rows (all fused by XLA under jit).
    xp = jnp.pad(x_nhwc.astype(jnp.bfloat16),
                 ((0, 0), (1, 1), (1, Wp - W - 1), (0, cin_pad - Cx)))
    xf = xp.reshape(B, (H + 2) * Wp, cin_pad)
    xf = jnp.pad(xf, ((0, 0), (0, m_in - (H + 2) * Wp), (0, 0)))

    tap_offsets = tuple(dy * Wp + dx for dy in range(3) for dx in range(3))
    kern = functools.partial(_dual_conv3x3_kernel,
                             tap_offsets=tap_offsets, m_out=m_out, cin=cin_pad)

    # TODO(synk): for large images (m_out * Npad blocks > a few MiB) add an
    #             M-axis grid with a 2*Wp-row halo (esp. v7x, 64 MiB VMEM);
    #             the whole-image block is sized for the toy shapes here.
    out = pl.pallas_call(
        kern,
        out_shape=jax.ShapeDtypeStruct((B, m_out, Npad), jnp.bfloat16),
        grid_spec=pltpu.PrefetchScalarGridSpec(
            num_scalar_prefetch=0,
            grid=(B,),
            in_specs=[
                pl.BlockSpec((None, m_in, cin_pad), lambda b: (b, 0, 0)),  # image
                pl.BlockSpec((K, Npad), lambda b: (0, 0)),                 # weight
                pl.BlockSpec((1, Npad), lambda b: (0, 0)),                 # bias
            ],
            out_specs=pl.BlockSpec((None, m_out, Npad), lambda b: (b, 0, 0)),
            scratch_shapes=[pltpu.VMEM((m_out, K), jnp.bfloat16)],         # im2col
        ),
        compiler_params=pltpu.CompilerParams(
            dimension_semantics=("parallel",)),
    )(xf, w_fused_bf16, b_fused)

    # drop the pitch/wrap columns and the lane padding (fused by XLA under jit)
    return out.reshape(B, H, Wp, Npad)[:, :, :W, :n_valid]


# ---------------------------------------------------------------------------
# Parameter construction (extractor is unspecified -> deterministic 3-stage CNN)
# ---------------------------------------------------------------------------
def init_extractor_params(key, in_channels):
    """Per stage: 3x3 conv weight (9, Cin, Cout) + bias (Cout,)."""
    params = []
    cin = in_channels
    for cout in EXTRACTOR_CHANNELS:
        key, kw, kb = jax.random.split(key, 3)
        fan_in = 9 * cin
        w = jax.random.normal(kw, (9, cin, cout), jnp.float32) / jnp.sqrt(fan_in)
        b = 0.01 * jax.random.normal(kb, (cout,), jnp.float32)
        params.append((w, b))
        cin = cout
    return params


def build_fused_stage(wt, bt, ws, bs, shared_input):
    """Fuse teacher+student along N (padded to 128 lanes); stages >=2 get a
    block-diagonal K so each network only reads its own channels.  The weight
    is returned K-concatenated as (9*cin_pad, npad) for the single-dot kernel."""
    k9, cin, cout = wt.shape
    cin_f = cin if shared_input else 2 * cin
    cin_pad = _round_up(cin_f, KPAD)
    npad = _round_up(max(2 * cout, LANE), LANE)

    wf = jnp.zeros((k9, cin_pad, npad), jnp.float32)
    if shared_input:                       # stage 1: both read the image
        wf = wf.at[:, :cin, :cout].set(wt)
        wf = wf.at[:, :cin, cout:2 * cout].set(ws)
    else:                                  # block diagonal: T||S channels
        wf = wf.at[:, :cin, :cout].set(wt)
        wf = wf.at[:, cin:2 * cin, cout:2 * cout].set(ws)
    wf = wf.reshape(k9 * cin_pad, npad)    # K index = tap*cin_pad + c (matches kernel)

    bf = jnp.zeros((1, npad), jnp.float32)
    bf = bf.at[0, :cout].set(bt)
    bf = bf.at[0, cout:2 * cout].set(bs)
    return wf, bf


def avgpool2x2(x_nhwc):
    # TODO(synk): assumes even H, W (matches the power-of-two toy shapes).
    b, h, w, c = x_nhwc.shape
    return x_nhwc.reshape(b, h // 2, 2, w // 2, 2, c).mean(axis=(2, 4))


# ---------------------------------------------------------------------------
# Fused teacher+student forward (jit-ted; stage_couts is static)
# ---------------------------------------------------------------------------
def _ts_forward(stage_couts, fused_params, image_nchw):
    x = jnp.transpose(image_nchw, (0, 2, 3, 1))       # NCHW -> NHWC once
    t_feats, s_feats = [], []
    n_stages = len(stage_couts)
    for i, (cout, (wf, bf)) in enumerate(zip(stage_couts, fused_params)):
        y = dual_conv3x3_relu(x, wf, bf, n_valid=2 * cout)   # (B,H,W,2*cout) bf16
        t = jnp.transpose(y[..., :cout], (0, 3, 1, 2)).astype(jnp.float32)
        s = jnp.transpose(y[..., cout:2 * cout], (0, 3, 1, 2)).astype(jnp.float32)
        t_feats.append(jax.lax.stop_gradient(t))             # teacher frozen
        s_feats.append(s)
        if i < n_stages - 1:
            # TODO(synk): fuse the 2x2 avg-pool + next-stage slab build into the
            # kernel epilogue (second pooled bf16 output) to drop one tiny HBM
            # round-trip per stage; kept as jit-fused XLA glue here.
            x = avgpool2x2(y.astype(jnp.float32))             # carry T||S channels
    return tuple(t_feats), tuple(s_feats)


class TSModel:
    """JAX/Pallas port of the PyTorch TSModel forward pass."""

    def __init__(self, in_channels=4, seed=0):
        kt, ks = jax.random.split(jax.random.PRNGKey(seed))
        self.teacher_params = init_extractor_params(kt, in_channels)
        self.student_params = init_extractor_params(ks, in_channels)

        fused, couts = [], []
        for i, ((wt, bt), (ws, bs)) in enumerate(
                zip(self.teacher_params, self.student_params)):
            wf, bf = build_fused_stage(wt, bt, ws, bs, shared_input=(i == 0))
            fused.append((wf.astype(jnp.bfloat16), bf))      # bf16 weights
            couts.append(int(wt.shape[-1]))
        self.fused_params = tuple(fused)
        self._forward = jax.jit(functools.partial(_ts_forward, tuple(couts)))

    def __call__(self, image_nchw):
        t, s = self._forward(self.fused_params, image_nchw)
        return {'teacher_outputs': list(t), 'student_outputs': list(s)}

    # TODO(synk): predict() (cosine-similarity anomaly map + bilinear upsample
    #             + top-k score) is inference post-processing, not forward().


# ---------------------------------------------------------------------------
if __name__ == "__main__":
    key = jax.random.PRNGKey(0)
    image = jax.random.normal(key, (2, 4, 16, 16), jnp.float32)   # NCHW

    model = TSModel(in_channels=4, seed=0)
    outputs = model(image)
    jax.block_until_ready(jax.tree_util.tree_leaves(outputs))

    # multi-scale pyramid shapes (NCHW)
    t_shapes = [tuple(f.shape) for f in outputs['teacher_outputs']]
    s_shapes = [tuple(f.shape) for f in outputs['student_outputs']]
    assert t_shapes == [(2, 16, 16, 16), (2, 32, 8, 8), (2, 64, 4, 4)], t_shapes
    assert s_shapes == t_shapes, s_shapes

    # numerics: stage-1 teacher features vs XLA conv reference (bf16 operands,
    # bf16 output rounding to mirror the kernel's store dtype)
    wt, bt = model.teacher_params[0]
    x_nhwc = jnp.transpose(image, (0, 2, 3, 1))
    x_bf = x_nhwc.astype(jnp.bfloat16).astype(jnp.float32)
    w_bf = wt.reshape(3, 3, 4, 16).astype(jnp.bfloat16).astype(jnp.float32)
    ref = jax.lax.conv_general_dilated(
        x_bf, w_bf, (1, 1), 'SAME',
        dimension_numbers=('NHWC', 'HWIO', 'NHWC'))
    ref = jnp.maximum(ref + bt, 0.0).astype(jnp.bfloat16).astype(jnp.float32)
    got = jnp.transpose(outputs['teacher_outputs'][0], (0, 2, 3, 1))
    err = float(jnp.max(jnp.abs(got - ref)))
    assert err < 5e-2, f"stage-1 teacher mismatch: max abs err = {err}"

    print("KERNEL_OK")
</pallas_src>

<mosaic_0001>
module attributes {stable_mosaic.version = 11 : i64} {
  func.func @_dual_conv3x3_kernel(%arg0: i32, %arg1: memref<1x592x16xbf16, #tpu.memory_space<vmem>>, %arg2: memref<144x128xbf16, #tpu.memory_space<vmem>>, %arg3: memref<1x128xf32, #tpu.memory_space<vmem>>, %arg4: memref<1x512x128xbf16, #tpu.memory_space<vmem>>, %arg5: memref<512x144xbf16, #tpu.memory_space<vmem>>) attributes {dimension_semantics = [#tpu.dimension_semantics<parallel>], iteration_bounds = array<i64: 2>, scalar_prefetch = 0 : i64, scratch_operands = 1 : i64, tpu.core_type = #tpu.core_type<tc>, window_params = [{transform_indices = @transform_0, window_bounds = array<i64: 1, 592, 16>}, {pipeline_mode = #tpu.pipeline_mode<synchronous>, transform_indices = @transform_1, window_bounds = array<i64: 144, 128>}, {pipeline_mode = #tpu.pipeline_mode<synchronous>, transform_indices = @transform_2, window_bounds = array<i64: 1, 128>}, {transform_indices = @transform_3, window_bounds = array<i64: 1, 512, 128>}]} {
    %c0 = arith.constant 0 : index
    %c0_0 = arith.constant 0 : index
    %c0_1 = arith.constant 0 : index
    %0 = vector.load %arg1[%c0, %c0_0, %c0_1] : memref<1x592x16xbf16, #tpu.memory_space<vmem>>, vector<1x512x16xbf16>
    %1 = vector.shape_cast %0 : vector<1x512x16xbf16> to vector<512x16xbf16>
    %c0_2 = arith.constant 0 : index
    %c0_3 = arith.constant 0 : index
    %2 = vector.load %arg5[%c0_2, %c0_3] : memref<512x144xbf16, #tpu.memory_space<vmem>>, vector<512x16xbf16>
    tpu.vector_store %arg5[%c0_2, %c0_3], %1 {strides = array<i32>} : memref<512x144xbf16, #tpu.memory_space<vmem>>, vector<512x16xbf16>,
    %c0_4 = arith.constant 0 : index
    %c1 = arith.constant 1 : index
    %c0_5 = arith.constant 0 : index
    %3 = vector.load %arg1[%c0_4, %c1, %c0_5] : memref<1x592x16xbf16, #tpu.memory_space<vmem>>, vector<1x512x16xbf16>
    %4 = vector.shape_cast %3 : vector<1x512x16xbf16> to vector<512x16xbf16>
    %c0_6 = arith.constant 0 : index
    %c16 = arith.constant 16 : index
    %5 = vector.load %arg5[%c0_6, %c16] : memref<512x144xbf16, #tpu.memory_space<vmem>>, vector<512x16xbf16>
    tpu.vector_store %arg5[%c0_6, %c16], %4 {strides = array<i32>} : memref<512x144xbf16, #tpu.memory_space<vmem>>, vector<512x16xbf16>,
    %c0_7 = arith.constant 0 : index
    %c2 = arith.constant 2 : index
    %c0_8 = arith.constant 0 : index
    %6 = vector.load %arg1[%c0_7, %c2, %c0_8] : memref<1x592x16xbf16, #tpu.memory_space<vmem>>, vector<1x512x16xbf16>
    %7 = vector.shape_cast %6 : vector<1x512x16xbf16> to vector<512x16xbf16>
    %c0_9 = arith.constant 0 : index
    %c32 = arith.constant 32 : index
    %8 = vector.load %arg5[%c0_9, %c32] : memref<512x144xbf16, #tpu.memory_space<vmem>>, vector<512x16xbf16>
    tpu.vector_store %arg5[%c0_9, %c32], %7 {strides = array<i32>} : memref<512x144xbf16, #tpu.memory_space<vmem>>, vector<512x16xbf16>,
    %c0_10 = arith.constant 0 : index
    %c32_11 = arith.constant 32 : index
    %c0_12 = arith.constant 0 : index
    %9 = vector.load %arg1[%c0_10, %c32_11, %c0_12] : memref<1x592x16xbf16, #tpu.memory_space<vmem>>, vector<1x512x16xbf16>
    %10 = vector.shape_cast %9 : vector<1x512x16xbf16> to vector<512x16xbf16>
    %c0_13 = arith.constant 0 : index
    %c48 = arith.constant 48 : index
    %11 = vector.load %arg5[%c0_13, %c48] : memref<512x144xbf16, #tpu.memory_space<vmem>>, vector<512x16xbf16>
    tpu.vector_store %arg5[%c0_13, %c48], %10 {strides = array<i32>} : memref<512x144xbf16, #tpu.memory_space<vmem>>, vector<512x16xbf16>,
    %c0_14 = arith.constant 0 : index
    %c33 = arith.constant 33 : index
    %c0_15 = arith.constant 0 : index
    %12 = vector.load %arg1[%c0_14, %c33, %c0_15] : memref<1x592x16xbf16, #tpu.memory_space<vmem>>, vector<1x512x16xbf16>
    %13 = vector.shape_cast %12 : vector<1x512x16xbf16> to vector<512x16xbf16>
    %c0_16 = arith.constant 0 : index
    %c64 = arith.constant 64 : index
    %14 = vector.load %arg5[%c0_16, %c64] : memref<512x144xbf16, #tpu.memory_space<vmem>>, vector<512x16xbf16>
    tpu.vector_store %arg5[%c0_16, %c64], %13 {strides = array<i32>} : memref<512x144xbf16, #tpu.memory_space<vmem>>, vector<512x16xbf16>,
    %c0_17 = arith.constant 0 : index
    %c34 = arith.constant 34 : index
    %c0_18 = arith.constant 0 : index
    %15 = vector.load %arg1[%c0_17, %c34, %c0_18] : memref<1x592x16xbf16, #tpu.memory_space<vmem>>, vector<1x512x16xbf16>
    %16 = vector.shape_cast %15 : vector<1x512x16xbf16> to vector<512x16xbf16>
    %c0_19 = arith.constant 0 : index
    %c80 = arith.constant 80 : index
    %17 = vector.load %arg5[%c0_19, %c80] : memref<512x144xbf16, #tpu.memory_space<vmem>>, vector<512x16xbf16>
    tpu.vector_store %arg5[%c0_19, %c80], %16 {strides = array<i32>} : memref<512x144xbf16, #tpu.memory_space<vmem>>, vector<512x16xbf16>,
    %c0_20 = arith.constant 0 : index
    %c64_21 = arith.constant 64 : index
    %c0_22 = arith.constant 0 : index
    %18 = vector.load %arg1[%c0_20, %c64_21, %c0_22] : memref<1x592x16xbf16, #tpu.memory_space<vmem>>, vector<1x512x16xbf16>
    %19 = vector.shape_cast %18 : vector<1x512x16xbf16> to vector<512x16xbf16>
    %c0_23 = arith.constant 0 : index
    %c96 = arith.constant 96 : index
    %20 = vector.load %arg5[%c0_23, %c96] : memref<512x144xbf16, #tpu.memory_space<vmem>>, vector<512x16xbf16>
    tpu.vector_store %arg5[%c0_23, %c96], %19 {strides = array<i32>} : memref<512x144xbf16, #tpu.memory_space<vmem>>, vector<512x16xbf16>,
    %c0_24 = arith.constant 0 : index
    %c65 = arith.constant 65 : index
    %c0_25 = arith.constant 0 : index
    %21 = vector.load %arg1[%c0_24, %c65, %c0_25] : memref<1x592x16xbf16, #tpu.memory_space<vmem>>, vector<1x512x16xbf16>
    %22 = vector.shape_cast %21 : vector<1x512x16xbf16> to vector<512x16xbf16>
    %c0_26 = arith.constant 0 : index
    %c112 = arith.constant 112 : index
    %23 = vector.load %arg5[%c0_26, %c112] : memref<512x144xbf16, #tpu.memory_space<vmem>>, vector<512x16xbf16>
    tpu.vector_store %arg5[%c0_26, %c112], %22 {strides = array<i32>} : memref<512x144xbf16, #tpu.memory_space<vmem>>, vector<512x16xbf16>,
    %c0_27 = arith.constant 0 : index
    %c66 = arith.constant 66 : index
    %c0_28 = arith.constant 0 : index
    %24 = vector.load %arg1[%c0_27, %c66, %c0_28] : memref<1x592x16xbf16, #tpu.memory_space<vmem>>, vector<1x512x16xbf16>
    %25 = vector.shape_cast %24 : vector<1x512x16xbf16> to vector<512x16xbf16>
    %c0_29 = arith.constant 0 : index
    %c128 = arith.constant 128 : index
    %26 = vector.load %arg5[%c0_29, %c128] : memref<512x144xbf16, #tpu.memory_space<vmem>>, vector<512x16xbf16>
    tpu.vector_store %arg5[%c0_29, %c128], %25 {strides = array<i32>} : memref<512x144xbf16, #tpu.memory_space<vmem>>, vector<512x16xbf16>,
    %c0_30 = arith.constant 0 : index
    %c0_31 = arith.constant 0 : index
    %27 = vector.load %arg5[%c0_30, %c0_31] : memref<512x144xbf16, #tpu.memory_space<vmem>>, vector<512x144xbf16>
    %c0_32 = arith.constant 0 : index
    %c0_33 = arith.constant 0 : index
    %28 = vector.load %arg2[%c0_32, %c0_33] : memref<144x128xbf16, #tpu.memory_space<vmem>>, vector<144x128xbf16>
    %cst = arith.constant dense<0.000000e+00> : vector<512x128xf32>
    %29 = tpu.matmul %27, %28, %cst {dimension_numbers = #tpu.dot_dimension_numbers<[1], [0], [0], [1], [0, 0, 1, 1], [], []>} : vector<512x144xbf16>, vector<144x128xbf16>, vector<512x128xf32> -> vector<512x128xf32>
    %c0_34 = arith.constant 0 : index
    %c0_35 = arith.constant 0 : index
    %30 = vector.load %arg3[%c0_34, %c0_35] : memref<1x128xf32, #tpu.memory_space<vmem>>, vector<1x128xf32>
    %31 = vector.broadcast %30 : vector<1x128xf32> to vector<512x128xf32>
    %32 = arith.addf %29, %31 : vector<512x128xf32>
    %cst_36 = arith.constant 0.000000e+00 : f32
    %33 = vector.broadcast %cst_36 : f32 to vector<512x128xf32>
    %34 = arith.maximumf %32, %33 : vector<512x128xf32>
    %35 = arith.truncf %34 : vector<512x128xf32> to vector<512x128xbf16>
    %c0_37 = arith.constant 0 : index
    %c0_38 = arith.constant 0 : index
    %c0_39 = arith.constant 0 : index
    %36 = vector.load %arg4[%c0_37, %c0_38, %c0_39] : memref<1x512x128xbf16, #tpu.memory_space<vmem>>, vector<1x512x128xbf16>
    %37 = vector.shape_cast %36 : vector<1x512x128xbf16> to vector<512x128xbf16>
    %38 = vector.shape_cast %35 : vector<512x128xbf16> to vector<1x512x128xbf16>
    tpu.vector_store %arg4[%c0_37, %c0_38, %c0_39], %38 {strides = array<i32>} : memref<1x512x128xbf16, #tpu.memory_space<vmem>>, vector<1x512x128xbf16>,
    return
  }
  func.func @transform_0(%arg0: i32) -> (i32, i32, i32) {
    %c0_i32 = arith.constant 0 : i32
    %c0_i32_0 = arith.constant 0 : i32
    %c0_i32_1 = arith.constant 0 : i32
    return %arg0, %c0_i32, %c0_i32_0 : i32, i32, i32
  }
  func.func @transform_1(%arg0: i32) -> (i32, i32) {
    %c0_i32 = arith.constant 0 : i32
    %c0_i32_0 = arith.constant 0 : i32
    %c0_i32_1 = arith.constant 0 : i32
    return %c0_i32, %c0_i32_0 : i32, i32
  }
  func.func @transform_2(%arg0: i32) -> (i32, i32) {
    %c0_i32 = arith.constant 0 : i32
    %c0_i32_0 = arith.constant 0 : i32
    %c0_i32_1 = arith.constant 0 : i32
    return %c0_i32, %c0_i32_0 : i32, i32
  }
  func.func @transform_3(%arg0: i32) -> (i32, i32, i32) {
    %c0_i32 = arith.constant 0 : i32
    %c0_i32_0 = arith.constant 0 : i32
    %c0_i32_1 = arith.constant 0 : i32
    return %arg0, %c0_i32, %c0_i32_0 : i32, i32, i32
  }
}

module attributes {stable_mosaic.version = 11 : i64} {
  func.func @_dual_conv3x3_kernel(%arg0: i32, %arg1: memref<1x176x32xbf16, #tpu.memory_space<vmem>>, %arg2: memref<288x128xbf16, #tpu.memory_space<vmem>>, %arg3: memref<1x128xf32, #tpu.memory_space<vmem>>, %arg4: memref<1x128x128xbf16, #tpu.memory_space<vmem>>, %arg5: memref<128x288xbf16, #tpu.memory_space<vmem>>) attributes {dimension_semantics = [#tpu.dimension_semantics<parallel>], iteration_bounds = array<i64: 2>, scalar_prefetch = 0 : i64, scratch_operands = 1 : i64, tpu.core_type = #tpu.core_type<tc>, window_params = [{transform_indices = @transform_0, window_bounds = array<i64: 1, 176, 32>}, {pipeline_mode = #tpu.pipeline_mode<synchronous>, transform_indices = @transform_1, window_bounds = array<i64: 288, 128>}, {pipeline_mode = #tpu.pipeline_mode<synchronous>, transform_indices = @transform_2, window_bounds = array<i64: 1, 128>}, {transform_indices = @transform_3, window_bounds = array<i64: 1, 128, 128>}]} {
    %c0 = arith.constant 0 : index
    %c0_0 = arith.constant 0 : index
    %c0_1 = arith.constant 0 : index
    %0 = vector.load %arg1[%c0, %c0_0, %c0_1] : memref<1x176x32xbf16, #tpu.memory_space<vmem>>, vector<1x128x32xbf16>
    %1 = vector.shape_cast %0 : vector<1x128x32xbf16> to vector<128x32xbf16>
    %c0_2 = arith.constant 0 : index
    %c0_3 = arith.constant 0 : index
    %2 = vector.load %arg5[%c0_2, %c0_3] : memref<128x288xbf16, #tpu.memory_space<vmem>>, vector<128x32xbf16>
    tpu.vector_store %arg5[%c0_2, %c0_3], %1 {strides = array<i32>} : memref<128x288xbf16, #tpu.memory_space<vmem>>, vector<128x32xbf16>,
    %c0_4 = arith.constant 0 : index
    %c1 = arith.constant 1 : index
    %c0_5 = arith.constant 0 : index
    %3 = vector.load %arg1[%c0_4, %c1, %c0_5] : memref<1x176x32xbf16, #tpu.memory_space<vmem>>, vector<1x128x32xbf16>
    %4 = vector.shape_cast %3 : vector<1x128x32xbf16> to vector<128x32xbf16>
    %c0_6 = arith.constant 0 : index
    %c32 = arith.constant 32 : index
    %5 = vector.load %arg5[%c0_6, %c32] : memref<128x288xbf16, #tpu.memory_space<vmem>>, vector<128x32xbf16>
    tpu.vector_store %arg5[%c0_6, %c32], %4 {strides = array<i32>} : memref<128x288xbf16, #tpu.memory_space<vmem>>, vector<128x32xbf16>,
    %c0_7 = arith.constant 0 : index
    %c2 = arith.constant 2 : index
    %c0_8 = arith.constant 0 : index
    %6 = vector.load %arg1[%c0_7, %c2, %c0_8] : memref<1x176x32xbf16, #tpu.memory_space<vmem>>, vector<1x128x32xbf16>
    %7 = vector.shape_cast %6 : vector<1x128x32xbf16> to vector<128x32xbf16>
    %c0_9 = arith.constant 0 : index
    %c64 = arith.constant 64 : index
    %8 = vector.load %arg5[%c0_9, %c64] : memref<128x288xbf16, #tpu.memory_space<vmem>>, vector<128x32xbf16>
    tpu.vector_store %arg5[%c0_9, %c64], %7 {strides = array<i32>} : memref<128x288xbf16, #tpu.memory_space<vmem>>, vector<128x32xbf16>,
    %c0_10 = arith.constant 0 : index
    %c16 = arith.constant 16 : index
    %c0_11 = arith.constant 0 : index
    %9 = vector.load %arg1[%c0_10, %c16, %c0_11] : memref<1x176x32xbf16, #tpu.memory_space<vmem>>, vector<1x128x32xbf16>
    %10 = vector.shape_cast %9 : vector<1x128x32xbf16> to vector<128x32xbf16>
    %c0_12 = arith.constant 0 : index
    %c96 = arith.constant 96 : index
    %11 = vector.load %arg5[%c0_12, %c96] : memref<128x288xbf16, #tpu.memory_space<vmem>>, vector<128x32xbf16>
    tpu.vector_store %arg5[%c0_12, %c96], %10 {strides = array<i32>} : memref<128x288xbf16, #tpu.memory_space<vmem>>, vector<128x32xbf16>,
    %c0_13 = arith.constant 0 : index
    %c17 = arith.constant 17 : index
    %c0_14 = arith.constant 0 : index
    %12 = vector.load %arg1[%c0_13, %c17, %c0_14] : memref<1x176x32xbf16, #tpu.memory_space<vmem>>, vector<1x128x32xbf16>
    %13 = vector.shape_cast %12 : vector<1x128x32xbf16> to vector<128x32xbf16>
    %c0_15 = arith.constant 0 : index
    %c128 = arith.constant 128 : index
    %14 = vector.load %arg5[%c0_15, %c128] : memref<128x288xbf16, #tpu.memory_space<vmem>>, vector<128x32xbf16>
    tpu.vector_store %arg5[%c0_15, %c128], %13 {strides = array<i32>} : memref<128x288xbf16, #tpu.memory_space<vmem>>, vector<128x32xbf16>,
    %c0_16 = arith.constant 0 : index
    %c18 = arith.constant 18 : index
    %c0_17 = arith.constant 0 : index
    %15 = vector.load %arg1[%c0_16, %c18, %c0_17] : memref<1x176x32xbf16, #tpu.memory_space<vmem>>, vector<1x128x32xbf16>
    %16 = vector.shape_cast %15 : vector<1x128x32xbf16> to vector<128x32xbf16>
    %c0_18 = arith.constant 0 : index
    %c160 = arith.constant 160 : index
    %17 = vector.load %arg5[%c0_18, %c160] : memref<128x288xbf16, #tpu.memory_space<vmem>>, vector<128x32xbf16>
    tpu.vector_store %arg5[%c0_18, %c160], %16 {strides = array<i32>} : memref<128x288xbf16, #tpu.memory_space<vmem>>, vector<128x32xbf16>,
    %c0_19 = arith.constant 0 : index
    %c32_20 = arith.constant 32 : index
    %c0_21 = arith.constant 0 : index
    %18 = vector.load %arg1[%c0_19, %c32_20, %c0_21] : memref<1x176x32xbf16, #tpu.memory_space<vmem>>, vector<1x128x32xbf16>
    %19 = vector.shape_cast %18 : vector<1x128x32xbf16> to vector<128x32xbf16>
    %c0_22 = arith.constant 0 : index
    %c192 = arith.constant 192 : index
    %20 = vector.load %arg5[%c0_22, %c192] : memref<128x288xbf16, #tpu.memory_space<vmem>>, vector<128x32xbf16>
    tpu.vector_store %arg5[%c0_22, %c192], %19 {strides = array<i32>} : memref<128x288xbf16, #tpu.memory_space<vmem>>, vector<128x32xbf16>,
    %c0_23 = arith.constant 0 : index
    %c33 = arith.constant 33 : index
    %c0_24 = arith.constant 0 : index
    %21 = vector.load %arg1[%c0_23, %c33, %c0_24] : memref<1x176x32xbf16, #tpu.memory_space<vmem>>, vector<1x128x32xbf16>
    %22 = vector.shape_cast %21 : vector<1x128x32xbf16> to vector<128x32xbf16>
    %c0_25 = arith.constant 0 : index
    %c224 = arith.constant 224 : index
    %23 = vector.load %arg5[%c0_25, %c224] : memref<128x288xbf16, #tpu.memory_space<vmem>>, vector<128x32xbf16>
    tpu.vector_store %arg5[%c0_25, %c224], %22 {strides = array<i32>} : memref<128x288xbf16, #tpu.memory_space<vmem>>, vector<128x32xbf16>,
    %c0_26 = arith.constant 0 : index
    %c34 = arith.constant 34 : index
    %c0_27 = arith.constant 0 : index
    %24 = vector.load %arg1[%c0_26, %c34, %c0_27] : memref<1x176x32xbf16, #tpu.memory_space<vmem>>, vector<1x128x32xbf16>
    %25 = vector.shape_cast %24 : vector<1x128x32xbf16> to vector<128x32xbf16>
    %c0_28 = arith.constant 0 : index
    %c256 = arith.constant 256 : index
    %26 = vector.load %arg5[%c0_28, %c256] : memref<128x288xbf16, #tpu.memory_space<vmem>>, vector<128x32xbf16>
    tpu.vector_store %arg5[%c0_28, %c256], %25 {strides = array<i32>} : memref<128x288xbf16, #tpu.memory_space<vmem>>, vector<128x32xbf16>,
    %c0_29 = arith.constant 0 : index
    %c0_30 = arith.constant 0 : index
    %27 = vector.load %arg5[%c0_29, %c0_30] : memref<128x288xbf16, #tpu.memory_space<vmem>>, vector<128x288xbf16>
    %c0_31 = arith.constant 0 : index
    %c0_32 = arith.constant 0 : index
    %28 = vector.load %arg2[%c0_31, %c0_32] : memref<288x128xbf16, #tpu.memory_space<vmem>>, vector<288x128xbf16>
    %cst = arith.constant dense<0.000000e+00> : vector<128x128xf32>
    %29 = tpu.matmul %27, %28, %cst {dimension_numbers = #tpu.dot_dimension_numbers<[1], [0], [0], [1], [0, 0, 1, 1], [], []>} : vector<128x288xbf16>, vector<288x128xbf16>, vector<128x128xf32> -> vector<128x128xf32>
    %c0_33 = arith.constant 0 : index
    %c0_34 = arith.constant 0 : index
    %30 = vector.load %arg3[%c0_33, %c0_34] : memref<1x128xf32, #tpu.memory_space<vmem>>, vector<1x128xf32>
    %31 = vector.broadcast %30 : vector<1x128xf32> to vector<128x128xf32>
    %32 = arith.addf %29, %31 : vector<128x128xf32>
    %cst_35 = arith.constant 0.000000e+00 : f32
    %33 = vector.broadcast %cst_35 : f32 to vector<128x128xf32>
    %34 = arith.maximumf %32, %33 : vector<128x128xf32>
    %35 = arith.truncf %34 : vector<128x128xf32> to vector<128x128xbf16>
    %c0_36 = arith.constant 0 : index
    %c0_37 = arith.constant 0 : index
    %c0_38 = arith.constant 0 : index
    %36 = vector.load %arg4[%c0_36, %c0_37, %c0_38] : memref<1x128x128xbf16, #tpu.memory_space<vmem>>, vector<1x128x128xbf16>
    %37 = vector.shape_cast %36 : vector<1x128x128xbf16> to vector<128x128xbf16>
    %38 = vector.shape_cast %35 : vector<128x128xbf16> to vector<1x128x128xbf16>
    tpu.vector_store %arg4[%c0_36, %c0_37, %c0_38], %38 {strides = array<i32>} : memref<1x128x128xbf16, #tpu.memory_space<vmem>>, vector<1x128x128xbf16>,
    return
  }
  func.func @transform_0(%arg0: i32) -> (i32, i32, i32) {
    %c0_i32 = arith.constant 0 : i32
    %c0_i32_0 = arith.constant 0 : i32
    %c0_i32_1 = arith.constant 0 : i32
    return %arg0, %c0_i32, %c0_i32_0 : i32, i32, i32
  }
  func.func @transform_1(%arg0: i32) -> (i32, i32) {
    %c0_i32 = arith.constant 0 : i32
    %c0_i32_0 = arith.constant 0 : i32
    %c0_i32_1 = arith.constant 0 : i32
    return %c0_i32, %c0_i32_0 : i32, i32
  }
  func.func @transform_2(%arg0: i32) -> (i32, i32) {
    %c0_i32 = arith.constant 0 : i32
    %c0_i32_0 = arith.constant 0 : i32
    %c0_i32_1 = arith.constant 0 : i32
    return %c0_i32, %c0_i32_0 : i32, i32
  }
  func.func @transform_3(%arg0: i32) -> (i32, i32, i32) {
    %c0_i32 = arith.constant 0 : i32
    %c0_i32_0 = arith.constant 0 : i32
    %c0_i32_1 = arith.constant 0 : i32
    return %arg0, %c0_i32, %c0_i32_0 : i32, i32, i32
  }
}

module attributes {stable_mosaic.version = 11 : i64} {
  func.func @_dual_conv3x3_kernel(%arg0: i32, %arg1: memref<1x112x64xbf16, #tpu.memory_space<vmem>>, %arg2: memref<576x128xbf16, #tpu.memory_space<vmem>>, %arg3: memref<1x128xf32, #tpu.memory_space<vmem>>, %arg4: memref<1x64x128xbf16, #tpu.memory_space<vmem>>, %arg5: memref<64x576xbf16, #tpu.memory_space<vmem>>) attributes {dimension_semantics = [#tpu.dimension_semantics<parallel>], iteration_bounds = array<i64: 2>, scalar_prefetch = 0 : i64, scratch_operands = 1 : i64, tpu.core_type = #tpu.core_type<tc>, window_params = [{transform_indices = @transform_0, window_bounds = array<i64: 1, 112, 64>}, {pipeline_mode = #tpu.pipeline_mode<synchronous>, transform_indices = @transform_1, window_bounds = array<i64: 576, 128>}, {pipeline_mode = #tpu.pipeline_mode<synchronous>, transform_indices = @transform_2, window_bounds = array<i64: 1, 128>}, {transform_indices = @transform_3, window_bounds = array<i64: 1, 64, 128>}]} {
    %c0 = arith.constant 0 : index
    %c0_0 = arith.constant 0 : index
    %c0_1 = arith.constant 0 : index
    %0 = vector.load %arg1[%c0, %c0_0, %c0_1] : memref<1x112x64xbf16, #tpu.memory_space<vmem>>, vector<1x64x64xbf16>
    %1 = vector.shape_cast %0 : vector<1x64x64xbf16> to vector<64x64xbf16>
    %c0_2 = arith.constant 0 : index
    %c0_3 = arith.constant 0 : index
    %2 = vector.load %arg5[%c0_2, %c0_3] : memref<64x576xbf16, #tpu.memory_space<vmem>>, vector<64x64xbf16>
    tpu.vector_store %arg5[%c0_2, %c0_3], %1 {strides = array<i32>} : memref<64x576xbf16, #tpu.memory_space<vmem>>, vector<64x64xbf16>,
    %c0_4 = arith.constant 0 : index
    %c1 = arith.constant 1 : index
    %c0_5 = arith.constant 0 : index
    %3 = vector.load %arg1[%c0_4, %c1, %c0_5] : memref<1x112x64xbf16, #tpu.memory_space<vmem>>, vector<1x64x64xbf16>
    %4 = vector.shape_cast %3 : vector<1x64x64xbf16> to vector<64x64xbf16>
    %c0_6 = arith.constant 0 : index
    %c64 = arith.constant 64 : index
    %5 = vector.load %arg5[%c0_6, %c64] : memref<64x576xbf16, #tpu.memory_space<vmem>>, vector<64x64xbf16>
    tpu.vector_store %arg5[%c0_6, %c64], %4 {strides = array<i32>} : memref<64x576xbf16, #tpu.memory_space<vmem>>, vector<64x64xbf16>,
    %c0_7 = arith.constant 0 : index
    %c2 = arith.constant 2 : index
    %c0_8 = arith.constant 0 : index
    %6 = vector.load %arg1[%c0_7, %c2, %c0_8] : memref<1x112x64xbf16, #tpu.memory_space<vmem>>, vector<1x64x64xbf16>
    %7 = vector.shape_cast %6 : vector<1x64x64xbf16> to vector<64x64xbf16>
    %c0_9 = arith.constant 0 : index
    %c128 = arith.constant 128 : index
    %8 = vector.load %arg5[%c0_9, %c128] : memref<64x576xbf16, #tpu.memory_space<vmem>>, vector<64x64xbf16>
    tpu.vector_store %arg5[%c0_9, %c128], %7 {strides = array<i32>} : memref<64x576xbf16, #tpu.memory_space<vmem>>, vector<64x64xbf16>,
    %c0_10 = arith.constant 0 : index
    %c16 = arith.constant 16 : index
    %c0_11 = arith.constant 0 : index
    %9 = vector.load %arg1[%c0_10, %c16, %c0_11] : memref<1x112x64xbf16, #tpu.memory_space<vmem>>, vector<1x64x64xbf16>
    %10 = vector.shape_cast %9 : vector<1x64x64xbf16> to vector<64x64xbf16>
    %c0_12 = arith.constant 0 : index
    %c192 = arith.constant 192 : index
    %11 = vector.load %arg5[%c0_12, %c192] : memref<64x576xbf16, #tpu.memory_space<vmem>>, vector<64x64xbf16>
    tpu.vector_store %arg5[%c0_12, %c192], %10 {strides = array<i32>} : memref<64x576xbf16, #tpu.memory_space<vmem>>, vector<64x64xbf16>,
    %c0_13 = arith.constant 0 : index
    %c17 = arith.constant 17 : index
    %c0_14 = arith.constant 0 : index
    %12 = vector.load %arg1[%c0_13, %c17, %c0_14] : memref<1x112x64xbf16, #tpu.memory_space<vmem>>, vector<1x64x64xbf16>
    %13 = vector.shape_cast %12 : vector<1x64x64xbf16> to vector<64x64xbf16>
    %c0_15 = arith.constant 0 : index
    %c256 = arith.constant 256 : index
    %14 = vector.load %arg5[%c0_15, %c256] : memref<64x576xbf16, #tpu.memory_space<vmem>>, vector<64x64xbf16>
    tpu.vector_store %arg5[%c0_15, %c256], %13 {strides = array<i32>} : memref<64x576xbf16, #tpu.memory_space<vmem>>, vector<64x64xbf16>,
    %c0_16 = arith.constant 0 : index
    %c18 = arith.constant 18 : index
    %c0_17 = arith.constant 0 : index
    %15 = vector.load %arg1[%c0_16, %c18, %c0_17] : memref<1x112x64xbf16, #tpu.memory_space<vmem>>, vector<1x64x64xbf16>
    %16 = vector.shape_cast %15 : vector<1x64x64xbf16> to vector<64x64xbf16>
    %c0_18 = arith.constant 0 : index
    %c320 = arith.constant 320 : index
    %17 = vector.load %arg5[%c0_18, %c320] : memref<64x576xbf16, #tpu.memory_space<vmem>>, vector<64x64xbf16>
    tpu.vector_store %arg5[%c0_18, %c320], %16 {strides = array<i32>} : memref<64x576xbf16, #tpu.memory_space<vmem>>, vector<64x64xbf16>,
    %c0_19 = arith.constant 0 : index
    %c32 = arith.constant 32 : index
    %c0_20 = arith.constant 0 : index
    %18 = vector.load %arg1[%c0_19, %c32, %c0_20] : memref<1x112x64xbf16, #tpu.memory_space<vmem>>, vector<1x64x64xbf16>
    %19 = vector.shape_cast %18 : vector<1x64x64xbf16> to vector<64x64xbf16>
    %c0_21 = arith.constant 0 : index
    %c384 = arith.constant 384 : index
    %20 = vector.load %arg5[%c0_21, %c384] : memref<64x576xbf16, #tpu.memory_space<vmem>>, vector<64x64xbf16>
    tpu.vector_store %arg5[%c0_21, %c384], %19 {strides = array<i32>} : memref<64x576xbf16, #tpu.memory_space<vmem>>, vector<64x64xbf16>,
    %c0_22 = arith.constant 0 : index
    %c33 = arith.constant 33 : index
    %c0_23 = arith.constant 0 : index
    %21 = vector.load %arg1[%c0_22, %c33, %c0_23] : memref<1x112x64xbf16, #tpu.memory_space<vmem>>, vector<1x64x64xbf16>
    %22 = vector.shape_cast %21 : vector<1x64x64xbf16> to vector<64x64xbf16>
    %c0_24 = arith.constant 0 : index
    %c448 = arith.constant 448 : index
    %23 = vector.load %arg5[%c0_24, %c448] : memref<64x576xbf16, #tpu.memory_space<vmem>>, vector<64x64xbf16>
    tpu.vector_store %arg5[%c0_24, %c448], %22 {strides = array<i32>} : memref<64x576xbf16, #tpu.memory_space<vmem>>, vector<64x64xbf16>,
    %c0_25 = arith.constant 0 : index
    %c34 = arith.constant 34 : index
    %c0_26 = arith.constant 0 : index
    %24 = vector.load %arg1[%c0_25, %c34, %c0_26] : memref<1x112x64xbf16, #tpu.memory_space<vmem>>, vector<1x64x64xbf16>
    %25 = vector.shape_cast %24 : vector<1x64x64xbf16> to vector<64x64xbf16>
    %c0_27 = arith.constant 0 : index
    %c512 = arith.constant 512 : index
    %26 = vector.load %arg5[%c0_27, %c512] : memref<64x576xbf16, #tpu.memory_space<vmem>>, vector<64x64xbf16>
    tpu.vector_store %arg5[%c0_27, %c512], %25 {strides = array<i32>} : memref<64x576xbf16, #tpu.memory_space<vmem>>, vector<64x64xbf16>,
    %c0_28 = arith.constant 0 : index
    %c0_29 = arith.constant 0 : index
    %27 = vector.load %arg5[%c0_28, %c0_29] : memref<64x576xbf16, #tpu.memory_space<vmem>>, vector<64x576xbf16>
    %c0_30 = arith.constant 0 : index
    %c0_31 = arith.constant 0 : index
    %28 = vector.load %arg2[%c0_30, %c0_31] : memref<576x128xbf16, #tpu.memory_space<vmem>>, vector<576x128xbf16>
    %cst = arith.constant dense<0.000000e+00> : vector<64x128xf32>
    %29 = tpu.matmul %27, %28, %cst {dimension_numbers = #tpu.dot_dimension_numbers<[1], [0], [0], [1], [0, 0, 1, 1], [], []>} : vector<64x576xbf16>, vector<576x128xbf16>, vector<64x128xf32> -> vector<64x128xf32>
    %c0_32 = arith.constant 0 : index
    %c0_33 = arith.constant 0 : index
    %30 = vector.load %arg3[%c0_32, %c0_33] : memref<1x128xf32, #tpu.memory_space<vmem>>, vector<1x128xf32>
    %31 = vector.broadcast %30 : vector<1x128xf32> to vector<64x128xf32>
    %32 = arith.addf %29, %31 : vector<64x128xf32>
    %cst_34 = arith.constant 0.000000e+00 : f32
    %33 = vector.broadcast %cst_34 : f32 to vector<64x128xf32>
    %34 = arith.maximumf %32, %33 : vector<64x128xf32>
    %35 = arith.truncf %34 : vector<64x128xf32> to vector<64x128xbf16>
    %c0_35 = arith.constant 0 : index
    %c0_36 = arith.constant 0 : index
    %c0_37 = arith.constant 0 : index
    %36 = vector.load %arg4[%c0_35, %c0_36, %c0_37] : memref<1x64x128xbf16, #tpu.memory_space<vmem>>, vector<1x64x128xbf16>
    %37 = vector.shape_cast %36 : vector<1x64x128xbf16> to vector<64x128xbf16>
    %38 = vector.shape_cast %35 : vector<64x128xbf16> to vector<1x64x128xbf16>
    tpu.vector_store %arg4[%c0_35, %c0_36, %c0_37], %38 {strides = array<i32>} : memref<1x64x128xbf16, #tpu.memory_space<vmem>>, vector<1x64x128xbf16>,
    return
  }
  func.func @transform_0(%arg0: i32) -> (i32, i32, i32) {
    %c0_i32 = arith.constant 0 : i32
    %c0_i32_0 = arith.constant 0 : i32
    %c0_i32_1 = arith.constant 0 : i32
    return %arg0, %c0_i32, %c0_i32_0 : i32, i32, i32
  }
  func.func @transform_1(%arg0: i32) -> (i32, i32) {
    %c0_i32 = arith.constant 0 : i32
    %c0_i32_0 = arith.constant 0 : i32
    %c0_i32_1 = arith.constant 0 : i32
    return %c0_i32, %c0_i32_0 : i32, i32
  }
  func.func @transform_2(%arg0: i32) -> (i32, i32) {
    %c0_i32 = arith.constant 0 : i32
    %c0_i32_0 = arith.constant 0 : i32
    %c0_i32_1 = arith.constant 0 : i32
    return %c0_i32, %c0_i32_0 : i32, i32
  }
  func.func @transform_3(%arg0: i32) -> (i32, i32, i32) {
    %c0_i32 = arith.constant 0 : i32
    %c0_i32_0 = arith.constant 0 : i32
    %c0_i32_1 = arith.constant 0 : i32
    return %arg0, %c0_i32, %c0_i32_0 : i32, i32, i32
  }
}

</mosaic_0001>

<llo_original>
// kernel: _ts_forward.4
$region0: #{_ts_forward.4}
  #allocation0 [shape = 'u32[]', space=smem, size = 0x4, offset = 0x4, fixed_abs, tag = 'smem constant byte address 0x4 - core index']
  #allocation1 [shape = 'u32[144,128]{1,0:T(1,128)}', space=vmem, size = 0x12000, scoped, tag = 'internal scratch']
  #allocation2 [shape = 'bf16[128,288]{1,0:T(16,128)(2,1)}', space=vmem, size = 0x18000, scoped, tag = 'scratch operand']
  %s0 = inlined_call_operand.vmem [shape: bf16[2,176,32], index: 0, kind: input, shape index: {}]
  %s1 = inlined_call_operand.vmem [shape: bf16[288,128], index: 1, kind: input, shape index: {}]
  %s2 = inlined_call_operand.vmem [shape: f32[1,128], index: 2, kind: input, shape index: {}]
  %s3 = inlined_call_operand.vmem [shape: bf16[2,128,128], index: 3, kind: output, shape index: {}]
  %s4 = sld [smem:[#allocation0]]
  $region45: #{_ts_forward.4} parent=0
    _
  %s6 = ssub.s32 1, %s4
  %s7 = scalar_select 0, %s6, %s4
  loop: start=0, step=1, limit=4
  $region2: #{_ts_forward.4} parent=0 // loop_pre_header
    _
  $region3: #{_ts_forward.4} parent=0 // loop_header
    %s9 = sphi 0, %s13
    %p10 = scmp.ge.s32.totalorder %s9, 4
    %s19 = sphi 0, %s21
    %s22 = sphi 0, %s19
    %s23 = sphi 0, %s22
    %s39 = sphi 0, %s23
    %s43 = sphi 0, %s43
    %s45 = sphi 0, %s43
    %s46 = sphi 0, %s45
    %s60 = sphi 0, %s46
    %s64 = sphi 0, %s64
    %s66 = sphi 0, %s64
    %s67 = sphi 0, %s66
    %s81 = sphi 0, %s67
    %s87 = sphi 0, %s89
    %s90 = sphi 0, %s87
    %s91 = sphi 0, %s90
    %s107 = sphi 0, %s91
  $region4: #{_ts_forward.4} parent=0 // loop_header_branch
    %12 = sbr.rel (%p10) target = $region8
  $region5: #{_ts_forward.4} parent=0 // loop_body
    %s14 = ssub.s32 %s9, 1
    %s15 = ssub.s32 %s9, 2
    %s16 = sadd.s32 %s9, 1
    %s17 = ssub.s32 %s9, %s16
    %p18 = scmp.eq.s32.totalorder %s17, 0
    %s20 = sadd.s32 %s19, 1
    %s21 = scalar_select %p18, %s19, %s20
    %p24 = pneg %p18
    %p25 = scmp.eq.s32.totalorder %s9, 1
    %p26 = por %p24, %p25
    %p27 = scmp.ne.s32.totalorder %s19, %s22
    %p28 = scmp.eq.s32.totalorder %s9, 0
    %p29 = por %p27, %p28
    %p30 = scmp.ne.s32.totalorder %s19, %s22
    %p31 = scmp.eq.s32.totalorder %s14, 1
    %p32 = por %p30, %p31
    %p33 = scmp.ne.s32.totalorder %s22, %s23
    %p34 = scmp.eq.s32.totalorder %s14, 0
    %p35 = por %p33, %p34
    %p36 = scmp.ne.s32.totalorder %s22, %s23
    %p37 = scmp.eq.s32.totalorder %s15, 1
    %p38 = por %p36, %p37
    %p40 = scmp.ne.s32.totalorder %s23, %s39
    %p41 = scmp.eq.s32.totalorder %s15, 0
    %p42 = por %p40, %p41
    %s44 = sadd.s32 %s43, 1
    %p47 = scmp.eq.s32.totalorder %s9, 1
    %p48 = scmp.ne.s32.totalorder %s43, %s45
    %p49 = scmp.eq.s32.totalorder %s9, 0
    %p50 = por %p48, %p49
    %p51 = scmp.ne.s32.totalorder %s43, %s45
    %p52 = scmp.eq.s32.totalorder %s14, 1
    %p53 = por %p51, %p52
    %p54 = scmp.ne.s32.totalorder %s45, %s46
    %p55 = scmp.eq.s32.totalorder %s14, 0
    %p56 = por %p54, %p55
    %p57 = scmp.ne.s32.totalorder %s45, %s46
    %p58 = scmp.eq.s32.totalorder %s15, 1
    %p59 = por %p57, %p58
    %p61 = scmp.ne.s32.totalorder %s46, %s60
    %p62 = scmp.eq.s32.totalorder %s15, 0
    %p63 = por %p61, %p62
    %s65 = sadd.s32 %s64, 1
    %p68 = scmp.eq.s32.totalorder %s9, 1
    %p69 = scmp.ne.s32.totalorder %s64, %s66
    %p70 = scmp.eq.s32.totalorder %s9, 0
    %p71 = por %p69, %p70
    %p72 = scmp.ne.s32.totalorder %s64, %s66
    %p73 = scmp.eq.s32.totalorder %s14, 1
    %p74 = por %p72, %p73
    %p75 = scmp.ne.s32.totalorder %s66, %s67
    %p76 = scmp.eq.s32.totalorder %s14, 0
    %p77 = por %p75, %p76
    %p78 = scmp.ne.s32.totalorder %s66, %s67
    %p79 = scmp.eq.s32.totalorder %s15, 1
    %p80 = por %p78, %p79
    %p82 = scmp.ne.s32.totalorder %s67, %s81
    %p83 = scmp.eq.s32.totalorder %s15, 0
    %p84 = por %p82, %p83
    %s85 = ssub.s32 %s9, %s16
    %p86 = scmp.eq.s32.totalorder %s85, 0
    %s88 = sadd.s32 %s87, 1
    %s89 = scalar_select %p86, %s87, %s88
    %p92 = pneg %p86
    %p93 = scmp.eq.s32.totalorder %s9, 1
    %p94 = por %p92, %p93
    %p95 = scmp.ne.s32.totalorder %s87, %s90
    %p96 = scmp.eq.s32.totalorder %s9, 0
    %p97 = por %p95, %p96
    %p98 = scmp.ne.s32.totalorder %s87, %s90
    %p99 = scmp.eq.s32.totalorder %s14, 1
    %p100 = por %p98, %p99
    %p101 = scmp.ne.s32.totalorder %s90, %s91
    %p102 = scmp.eq.s32.totalorder %s14, 0
    %p103 = por %p101, %p102
    %p104 = scmp.ne.s32.totalorder %s90, %s91
    %p105 = scmp.eq.s32.totalorder %s15, 1
    %p106 = por %p104, %p105
    %p108 = scmp.ne.s32.totalorder %s91, %s107
    %p109 = scmp.eq.s32.totalorder %s15, 0
    %p110 = por %p108, %p109
    %p111 = scmp.le.s32.totalorder 1, %s9
    %p112 = scmp.lt.s32.totalorder %s9, 3
    %p113 = pnand %p111, %p112
    %p114 = pneg %p113
    // Predicated region
    $region9: #{_ts_forward.4} parent=5 // pred_check
      _
    $region10: #{_ts_forward.4} parent=5 // pred_check_branch
      %116 = sbr.rel (%p113) target = $region12
    $region11: #{_ts_forward.4} parent=5 // pred_region
      %s117 = ssub.s32 %s9, 1
      // Predicated region
      $region13: #{_ts_forward.4} parent=11 // pred_check
        %p118 = pneg %p56
      $region14: #{_ts_forward.4} parent=11 // pred_check_branch
        %120 = sbr.rel (%p118) target = $region16
      $region15: #{_ts_forward.4} parent=11 // pred_region
        _
      $region16: #{_ts_forward.4} parent=11 // pred_fallthru
        _
      // Predicated region
      $region17: #{_ts_forward.4} parent=11 // pred_check
        %p121 = pneg %p77
      $region18: #{_ts_forward.4} parent=11 // pred_check_branch
        %123 = sbr.rel (%p121) target = $region20
      $region19: #{_ts_forward.4} parent=11 // pred_region
        _
      $region20: #{_ts_forward.4} parent=11 // pred_fallthru
        _
    $region12: #{_ts_forward.4} parent=5 // pred_fallthru
      _
    %p124 = scmp.lt.s32.totalorder %s9, 2
    // Predicated region
    $region21: #{_ts_forward.4} parent=5 // pred_check
      %p125 = pneg %p124
    $region22: #{_ts_forward.4} parent=5 // pred_check_branch
      %127 = sbr.rel (%p125) target = $region24
    $region23: #{_ts_forward.4} parent=5 // pred_region
      // Predicated region
      $region25: #{_ts_forward.4} parent=23 // pred_check
        %p128 = pneg %p29
      $region26: #{_ts_forward.4} parent=23 // pred_check_branch
        %130 = sbr.rel (%p128) target = $region28
      $region27: #{_ts_forward.4} parent=23 // pred_region
        %p131 = scmp.lt.s32.totalorder %s9, 1
        %s132 = scalar_select %p131, %s9, 1
        %s133 = smul.addr %s132, 22
        %s134 = smul.addr %s133, 4
        %s135 = scalar_lea.vmem %s0, %s134
      $region28: #{_ts_forward.4} parent=23 // pred_fallthru
        _
    $region24: #{_ts_forward.4} parent=5 // pred_fallthru
      _
    %p136 = scmp.le.s32.totalorder 1, %s9
    %p137 = scmp.lt.s32.totalorder %s9, 3
    %p138 = pnand %p136, %p137
    %p139 = pneg %p138
    // Predicated region
    $region29: #{_ts_forward.4} parent=5 // pred_check
      _
    $region30: #{_ts_forward.4} parent=5 // pred_check_branch
      %141 = sbr.rel (%p138) target = $region32
    $region31: #{_ts_forward.4} parent=5 // pred_region
      %s142 = ssub.s32 %s9, 1
      %p143 = scmp.lt.s32.totalorder %s14, 1
      %s144 = scalar_select %p143, %s14, 1
      %s145 = smul.addr %s144, 22
      %s146 = smul.addr %s145, 4
      %s147 = scalar_lea.vmem %s0, %s146
      %p148 = pneg %p35
      %p149 = pneg %p32
      %p150 = pneg %p56
      %p151 = pneg %p53
      %p152 = pneg %p77
      %p153 = pneg %p74
      %p154 = pneg %p103
      %p155 = pneg %p100
      %p156 = scmp.lt.s32.totalorder %s14, 1
      %s157 = scalar_select %p156, %s14, 1
      %s158 = smul.addr %s157, 16
      %s159 = smul.addr %s158, 4
      %s160 = scalar_lea.vmem %s3, %s159
      %p161 = scmp.lt.s32.totalorder %s14, 1
      %s162 = scalar_select %p161, %s14, 1
      %s163 = smul.addr %s162, 22
      %s164 = smul.addr %s163, 4
      %s165 = scalar_lea.vmem %s0, %s164
      %p166 = scmp.lt.s32.totalorder %s14, 1
      %s167 = scalar_select %p166, %s14, 1
      %s168 = smul.addr %s167, 16
      %s169 = smul.addr %s168, 4
      %s170 = scalar_lea.vmem %s3, %s169
      %v172 = vld [vmem:[%s165] sm:$0xf]
      %v173 = vld [vmem:[%s165 + $0x4] sm:$0xf]
      %v174 = vld [vmem:[%s165 + $0x8] sm:$0xf]
      %v175 = vld [vmem:[%s165 + $0xc] sm:$0xf]
      %v176 = vld [vmem:[%s165 + $0x10] sm:$0xf]
      %v177 = vld [vmem:[%s165 + $0x14] sm:$0xf]
      %v178 = vld [vmem:[%s165 + $0x18] sm:$0xf]
      %v179 = vld [vmem:[%s165 + $0x1c] sm:$0xf]
      %v180 = vld [vmem:[%s165 + $0x20] sm:$0xf]
      %v181 = vld [vmem:[%s165 + $0x24] sm:$0xf]
      %v182 = vld [vmem:[%s165 + $0x28] sm:$0xf]
      %v183 = vld [vmem:[%s165 + $0x2c] sm:$0xf]
      %v184 = vld [vmem:[%s165 + $0x30] sm:$0xf]
      %v185 = vld [vmem:[%s165 + $0x34] sm:$0xf]
      %v186 = vld [vmem:[%s165 + $0x38] sm:$0xf]
      %v187 = vld [vmem:[%s165 + $0x3c] sm:$0xf]
      %v204 = vunpack.c.l.b16 %v172
      %v205 = vunpack.c.l.b16 %v173
      %v206 = vunpack.c.l.b16 %v174
      %v207 = vunpack.c.l.b16 %v175
      %v208 = vunpack.c.l.b16 %v176
      %v209 = vunpack.c.l.b16 %v177
      %v210 = vunpack.c.l.b16 %v178
      %v211 = vunpack.c.l.b16 %v179
      %v212 = vunpack.c.l.b16 %v180
      %v213 = vunpack.c.l.b16 %v181
      %v214 = vunpack.c.l.b16 %v182
      %v215 = vunpack.c.l.b16 %v183
      %v216 = vunpack.c.l.b16 %v184
      %v217 = vunpack.c.l.b16 %v185
      %v218 = vunpack.c.l.b16 %v186
      %v219 = vunpack.c.l.b16 %v187
      %v220 = vpack.c.b16 %v205, %v204
      %v221 = vpack.c.b16 %v207, %v206
      %v222 = vpack.c.b16 %v209, %v208
      %v223 = vpack.c.b16 %v211, %v210
      %v224 = vpack.c.b16 %v213, %v212
      %v225 = vpack.c.b16 %v215, %v214
      %v226 = vpack.c.b16 %v217, %v216
      %v227 = vpack.c.b16 %v219, %v218
      %vm236 = vcmask 261120
      %237 = vst.msk [vmem:[#allocation2] sm:$0xff] %vm236, %v220
      %238 = vst.msk [vmem:[#allocation2 + $0x18] sm:$0xff] %vm236, %v221
      %239 = vst.msk [vmem:[#allocation2 + $0x30] sm:$0xff] %vm236, %v222
      %240 = vst.msk [vmem:[#allocation2 + $0x48] sm:$0xff] %vm236, %v223
      %241 = vst.msk [vmem:[#allocation2 + $0x60] sm:$0xff] %vm236, %v224
      %242 = vst.msk [vmem:[#allocation2 + $0x78] sm:$0xff] %vm236, %v225
      %243 = vst.msk [vmem:[#allocation2 + $0x90] sm:$0xff] %vm236, %v226
      %244 = vst.msk [vmem:[#allocation2 + $0xa8] sm:$0xff] %vm236, %v227
      %v245 = vld [vmem:[%s165] sm:$0xf]
      %v246 = vld [vmem:[%s165 + $0x4] sm:$0xf]
      %v247 = vld [vmem:[%s165 + $0x8] sm:$0xf]
      %v248 = vld [vmem:[%s165 + $0xc] sm:$0xf]
      %v249 = vld [vmem:[%s165 + $0x10] sm:$0xf]
      %v250 = vld [vmem:[%s165 + $0x14] sm:$0xf]
      %v251 = vld [vmem:[%s165 + $0x18] sm:$0xf]
      %v252 = vld [vmem:[%s165 + $0x1c] sm:$0xf]
      %v253 = vld [vmem:[%s165 + $0x20] sm:$0xf]
      %v254 = vld [vmem:[%s165 + $0x24] sm:$0xf]
      %v255 = vld [vmem:[%s165 + $0x28] sm:$0xf]
      %v256 = vld [vmem:[%s165 + $0x2c] sm:$0xf]
      %v257 = vld [vmem:[%s165 + $0x30] sm:$0xf]
      %v258 = vld [vmem:[%s165 + $0x34] sm:$0xf]
      %v259 = vld [vmem:[%s165 + $0x38] sm:$0xf]
      %v260 = vld [vmem:[%s165 + $0x3c] sm:$0xf]
      %v261 = vld [vmem:[%s165 + $0x40] sm:$0x1]
      %v279 = vunpack.c.l.b16 %v245
      %v280 = vunpack.c.l.b16 %v246
      %v281 = vunpack.c.l.b16 %v247
      %v282 = vunpack.c.l.b16 %v248
      %v283 = vunpack.c.l.b16 %v249
      %v284 = vunpack.c.l.b16 %v250
      %v285 = vunpack.c.l.b16 %v251
      %v286 = vunpack.c.l.b16 %v252
      %v287 = vunpack.c.l.b16 %v253
      %v288 = vunpack.c.l.b16 %v254
      %v289 = vunpack.c.l.b16 %v255
      %v290 = vunpack.c.l.b16 %v256
      %v291 = vunpack.c.l.b16 %v257
      %v292 = vunpack.c.l.b16 %v258
      %v293 = vunpack.c.l.b16 %v259
      %v294 = vunpack.c.l.b16 %v260
      %v295 = vunpack.c.l.b16 %v261
      %v296 = vpack.c.b16 %v280, %v279
      %v297 = vpack.c.b16 %v282, %v281
      %v298 = vpack.c.b16 %v284, %v283
      %v299 = vpack.c.b16 %v286, %v285
      %v300 = vpack.c.b16 %v288, %v287
      %v301 = vpack.c.b16 %v290, %v289
      %v302 = vpack.c.b16 %v292, %v291
      %v303 = vpack.c.b16 %v294, %v293
      %v304 = vpack.c.b16 %v295, %v295
      %vm305 = vsmask.f32 7424
      %v307 = vshrl.u32 %v296, 16
      %v309 = vshll.u32 %v296, 16
      %v311 = vrot.slane %v309, 1
      %v312 = vor.u32 %v307, %v311
      %v314 = vshll.u32 %v297, 16
      %v316 = vrot.slane %v314, 1
      %v317 = vsel %vm305, %v312, %v316
      %v318 = vshrl.u32 %v297, 16
      %v320 = vor.u32 %v318, %v316
      %v322 = vshll.u32 %v298, 16
      %v324 = vrot.slane %v322, 1
      %v325 = vsel %vm305, %v320, %v324
      %v326 = vshrl.u32 %v298, 16
      %v328 = vor.u32 %v326, %v324
      %v330 = vshll.u32 %v299, 16
      %v332 = vrot.slane %v330, 1
      %v333 = vsel %vm305, %v328, %v332
      %v334 = vshrl.u32 %v299, 16
      %v336 = vor.u32 %v334, %v332
      %v338 = vshll.u32 %v300, 16
      %v340 = vrot.slane %v338, 1
      %v341 = vsel %vm305, %v336, %v340
      %v342 = vshrl.u32 %v300, 16
      %v344 = vor.u32 %v342, %v340
      %v346 = vshll.u32 %v301, 16
      %v348 = vrot.slane %v346, 1
      %v349 = vsel %vm305, %v344, %v348
      %v350 = vshrl.u32 %v301, 16
      %v352 = vor.u32 %v350, %v348
      %v354 = vshll.u32 %v302, 16
      %v356 = vrot.slane %v354, 1
      %v357 = vsel %vm305, %v352, %v356
      %v358 = vshrl.u32 %v302, 16
      %v360 = vor.u32 %v358, %v356
      %v362 = vshll.u32 %v303, 16
      %v364 = vrot.slane %v362, 1
      %v365 = vsel %vm305, %v360, %v364
      %v366 = vshrl.u32 %v303, 16
      %v368 = vor.u32 %v366, %v364
      %v370 = vshll.u32 %v304, 16
      %v372 = vrot.slane %v370, 1
      %v373 = vsel %vm305, %v368, %v372
      %374 = vrot.lane.b32.xlu0 %v317, 32
      %v375 = vpop.permute.xlu0 %374
      %376 = vrot.lane.b32.xlu0 %v325, 32
      %v377 = vpop.permute.xlu0 %376
      %378 = vrot.lane.b32.xlu0 %v333, 32
      %v379 = vpop.permute.xlu0 %378
      %380 = vrot.lane.b32.xlu0 %v341, 32
      %v381 = vpop.permute.xlu0 %380
      %382 = vrot.lane.b32.xlu0 %v349, 32
      %v383 = vpop.permute.xlu0 %382
      %384 = vrot.lane.b32.xlu0 %v357, 32
      %v385 = vpop.permute.xlu0 %384
      %386 = vrot.lane.b32.xlu0 %v365, 32
      %v387 = vpop.permute.xlu0 %386
      %388 = vrot.lane.b32.xlu0 %v373, 32
      %v389 = vpop.permute.xlu0 %388
      %vm398 = vcmask 523520
      %399 = vst.msk [vmem:[#allocation2] sm:$0xff] %vm398, %v375
      %400 = vst.msk [vmem:[#allocation2 + $0x18] sm:$0xff] %vm398, %v377
      %401 = vst.msk [vmem:[#allocation2 + $0x30] sm:$0xff] %vm398, %v379
      %402 = vst.msk [vmem:[#allocation2 + $0x48] sm:$0xff] %vm398, %v381
      %403 = vst.msk [vmem:[#allocation2 + $0x60] sm:$0xff] %vm398, %v383
      %404 = vst.msk [vmem:[#allocation2 + $0x78] sm:$0xff] %vm398, %v385
      %405 = vst.msk [vmem:[#allocation2 + $0x90] sm:$0xff] %vm398, %v387
      %406 = vst.msk [vmem:[#allocation2 + $0xa8] sm:$0xff] %vm398, %v389
      %v407 = vld [vmem:[%s165] sm:$0xe]
      %v408 = vld [vmem:[%s165 + $0x4] sm:$0xf]
      %v409 = vld [vmem:[%s165 + $0x8] sm:$0xf]
      %v410 = vld [vmem:[%s165 + $0xc] sm:$0xf]
      %v411 = vld [vmem:[%s165 + $0x10] sm:$0xf]
      %v412 = vld [vmem:[%s165 + $0x14] sm:$0xf]
      %v413 = vld [vmem:[%s165 + $0x18] sm:$0xf]
      %v414 = vld [vmem:[%s165 + $0x1c] sm:$0xf]
      %v415 = vld [vmem:[%s165 + $0x20] sm:$0xf]
      %v416 = vld [vmem:[%s165 + $0x24] sm:$0xf]
      %v417 = vld [vmem:[%s165 + $0x28] sm:$0xf]
      %v418 = vld [vmem:[%s165 + $0x2c] sm:$0xf]
      %v419 = vld [vmem:[%s165 + $0x30] sm:$0xf]
      %v420 = vld [vmem:[%s165 + $0x34] sm:$0xf]
      %v421 = vld [vmem:[%s165 + $0x38] sm:$0xf]
      %v422 = vld [vmem:[%s165 + $0x3c] sm:$0xf]
      %v423 = vld [vmem:[%s165 + $0x40] sm:$0x1]
      %v441 = vunpack.c.l.b16 %v407
      %v442 = vunpack.c.l.b16 %v408
      %v443 = vunpack.c.l.b16 %v409
      %v444 = vunpack.c.l.b16 %v410
      %v445 = vunpack.c.l.b16 %v411
      %v446 = vunpack.c.l.b16 %v412
      %v447 = vunpack.c.l.b16 %v413
      %v448 = vunpack.c.l.b16 %v414
      %v449 = vunpack.c.l.b16 %v415
      %v450 = vunpack.c.l.b16 %v416
      %v451 = vunpack.c.l.b16 %v417
      %v452 = vunpack.c.l.b16 %v418
      %v453 = vunpack.c.l.b16 %v419
      %v454 = vunpack.c.l.b16 %v420
      %v455 = vunpack.c.l.b16 %v421
      %v456 = vunpack.c.l.b16 %v422
      %v457 = vunpack.c.l.b16 %v423
      %v458 = vpack.c.b16 %v442, %v441
      %v459 = vpack.c.b16 %v444, %v443
      %v460 = vpack.c.b16 %v446, %v445
      %v461 = vpack.c.b16 %v448, %v447
      %v462 = vpack.c.b16 %v450, %v449
      %v463 = vpack.c.b16 %v452, %v451
      %v464 = vpack.c.b16 %v454, %v453
      %v465 = vpack.c.b16 %v456, %v455
      %v466 = vpack.c.b16 %v457, %v457
      %vm467 = vcmask 1046528
      %v468 = vrot.slane %v458, 1
      %v469 = vrot.slane %v459, 1
      %v470 = vsel %vm467, %v468, %v469
      %v471 = vrot.slane %v460, 1
      %v472 = vsel %vm467, %v469, %v471
      %v473 = vrot.slane %v461, 1
      %v474 = vsel %vm467, %v471, %v473
      %v475 = vrot.slane %v462, 1
      %v476 = vsel %vm467, %v473, %v475
      %v477 = vrot.slane %v463, 1
      %v478 = vsel %vm467, %v475, %v477
      %v479 = vrot.slane %v464, 1
      %v480 = vsel %vm467, %v477, %v479
      %v481 = vrot.slane %v465, 1
      %v482 = vsel %vm467, %v479, %v481
      %v483 = vrot.slane %v466, 1
      %v484 = vsel %vm467, %v481, %v483
      %485 = vrot.lane.b32.xlu0 %v470, 64
      %v486 = vpop.permute.xlu0 %485
      %487 = vrot.lane.b32.xlu0 %v472, 64
      %v488 = vpop.permute.xlu0 %487
      %489 = vrot.lane.b32.xlu0 %v474, 64
      %v490 = vpop.permute.xlu0 %489
      %491 = vrot.lane.b32.xlu0 %v476, 64
      %v492 = vpop.permute.xlu0 %491
      %493 = vrot.lane.b32.xlu0 %v478, 64
      %v494 = vpop.permute.xlu0 %493
      %495 = vrot.lane.b32.xlu0 %v480, 64
      %v496 = vpop.permute.xlu0 %495
      %497 = vrot.lane.b32.xlu0 %v482, 64
      %v498 = vpop.permute.xlu0 %497
      %499 = vrot.lane.b32.xlu0 %v484, 64
      %v500 = vpop.permute.xlu0 %499
      %vm509 = vcmask 785920
      %510 = vst.msk [vmem:[#allocation2] sm:$0xff] %vm509, %v486
      %511 = vst.msk [vmem:[#allocation2 + $0x18] sm:$0xff] %vm509, %v488
      %512 = vst.msk [vmem:[#allocation2 + $0x30] sm:$0xff] %vm509, %v490
      %513 = vst.msk [vmem:[#allocation2 + $0x48] sm:$0xff] %vm509, %v492
      %514 = vst.msk [vmem:[#allocation2 + $0x60] sm:$0xff] %vm509, %v494
      %515 = vst.msk [vmem:[#allocation2 + $0x78] sm:$0xff] %vm509, %v496
      %516 = vst.msk [vmem:[#allocation2 + $0x90] sm:$0xff] %vm509, %v498
      %517 = vst.msk [vmem:[#allocation2 + $0xa8] sm:$0xff] %vm509, %v500
      %v518 = vld [vmem:[%s165 + $0x8] sm:$0xf]
      %v519 = vld [vmem:[%s165 + $0xc] sm:$0xf]
      %v520 = vld [vmem:[%s165 + $0x10] sm:$0xf]
      %v521 = vld [vmem:[%s165 + $0x14] sm:$0xf]
      %v522 = vld [vmem:[%s165 + $0x18] sm:$0xf]
      %v523 = vld [vmem:[%s165 + $0x1c] sm:$0xf]
      %v524 = vld [vmem:[%s165 + $0x20] sm:$0xf]
      %v525 = vld [vmem:[%s165 + $0x24] sm:$0xf]
      %v526 = vld [vmem:[%s165 + $0x28] sm:$0xf]
      %v527 = vld [vmem:[%s165 + $0x2c] sm:$0xf]
      %v528 = vld [vmem:[%s165 + $0x30] sm:$0xf]
      %v529 = vld [vmem:[%s165 + $0x34] sm:$0xf]
      %v530 = vld [vmem:[%s165 + $0x38] sm:$0xf]
      %v531 = vld [vmem:[%s165 + $0x3c] sm:$0xf]
      %v532 = vld [vmem:[%s165 + $0x40] sm:$0xf]
      %v533 = vld [vmem:[%s165 + $0x44] sm:$0xf]
      %v550 = vunpack.c.l.b16 %v518
      %v551 = vunpack.c.l.b16 %v519
      %v552 = vunpack.c.l.b16 %v520
      %v553 = vunpack.c.l.b16 %v521
      %v554 = vunpack.c.l.b16 %v522
      %v555 = vunpack.c.l.b16 %v523
      %v556 = vunpack.c.l.b16 %v524
      %v557 = vunpack.c.l.b16 %v525
      %v558 = vunpack.c.l.b16 %v526
      %v559 = vunpack.c.l.b16 %v527
      %v560 = vunpack.c.l.b16 %v528
      %v561 = vunpack.c.l.b16 %v529
      %v562 = vunpack.c.l.b16 %v530
      %v563 = vunpack.c.l.b16 %v531
      %v564 = vunpack.c.l.b16 %v532
      %v565 = vunpack.c.l.b16 %v533
      %v566 = vpack.c.b16 %v551, %v550
      %v567 = vpack.c.b16 %v553, %v552
      %v568 = vpack.c.b16 %v555, %v554
      %v569 = vpack.c.b16 %v557, %v556
      %v570 = vpack.c.b16 %v559, %v558
      %v571 = vpack.c.b16 %v561, %v560
      %v572 = vpack.c.b16 %v563, %v562
      %v573 = vpack.c.b16 %v565, %v564
      %574 = vrot.lane.b32.xlu0 %v566, 96
      %v575 = vpop.permute.xlu0 %574
      %576 = vrot.lane.b32.xlu0 %v567, 96
      %v577 = vpop.permute.xlu0 %576
      %578 = vrot.lane.b32.xlu0 %v568, 96
      %v579 = vpop.permute.xlu0 %578
      %580 = vrot.lane.b32.xlu0 %v569, 96
      %v581 = vpop.permute.xlu0 %580
      %582 = vrot.lane.b32.xlu0 %v570, 96
      %v583 = vpop.permute.xlu0 %582
      %584 = vrot.lane.b32.xlu0 %v571, 96
      %v585 = vpop.permute.xlu0 %584
      %586 = vrot.lane.b32.xlu0 %v572, 96
      %v587 = vpop.permute.xlu0 %586
      %588 = vrot.lane.b32.xlu0 %v573, 96
      %v589 = vpop.permute.xlu0 %588
      %vm598 = vcmask 1048320
      %599 = vst.msk [vmem:[#allocation2] sm:$0xff] %vm598, %v575
      %600 = vst.msk [vmem:[#allocation2 + $0x18] sm:$0xff] %vm598, %v577
      %601 = vst.msk [vmem:[#allocation2 + $0x30] sm:$0xff] %vm598, %v579
      %602 = vst.msk [vmem:[#allocation2 + $0x48] sm:$0xff] %vm598, %v581
      %603 = vst.msk [vmem:[#allocation2 + $0x60] sm:$0xff] %vm598, %v583
      %604 = vst.msk [vmem:[#allocation2 + $0x78] sm:$0xff] %vm598, %v585
      %605 = vst.msk [vmem:[#allocation2 + $0x90] sm:$0xff] %vm598, %v587
      %606 = vst.msk [vmem:[#allocation2 + $0xa8] sm:$0xff] %vm598, %v589
      %v607 = vld [vmem:[%s165 + $0x8] sm:$0xf]
      %v608 = vld [vmem:[%s165 + $0xc] sm:$0xf]
      %v609 = vld [vmem:[%s165 + $0x10] sm:$0xf]
      %v610 = vld [vmem:[%s165 + $0x14] sm:$0xf]
      %v611 = vld [vmem:[%s165 + $0x18] sm:$0xf]
      %v612 = vld [vmem:[%s165 + $0x1c] sm:$0xf]
      %v613 = vld [vmem:[%s165 + $0x20] sm:$0xf]
      %v614 = vld [vmem:[%s165 + $0x24] sm:$0xf]
      %v615 = vld [vmem:[%s165 + $0x28] sm:$0xf]
      %v616 = vld [vmem:[%s165 + $0x2c] sm:$0xf]
      %v617 = vld [vmem:[%s165 + $0x30] sm:$0xf]
      %v618 = vld [vmem:[%s165 + $0x34] sm:$0xf]
      %v619 = vld [vmem:[%s165 + $0x38] sm:$0xf]
      %v620 = vld [vmem:[%s165 + $0x3c] sm:$0xf]
      %v621 = vld [vmem:[%s165 + $0x40] sm:$0xf]
      %v622 = vld [vmem:[%s165 + $0x44] sm:$0xf]
      %v623 = vld [vmem:[%s165 + $0x48] sm:$0x1]
      %v641 = vunpack.c.l.b16 %v607
      %v642 = vunpack.c.l.b16 %v608
      %v643 = vunpack.c.l.b16 %v609
      %v644 = vunpack.c.l.b16 %v610
      %v645 = vunpack.c.l.b16 %v611
      %v646 = vunpack.c.l.b16 %v612
      %v647 = vunpack.c.l.b16 %v613
      %v648 = vunpack.c.l.b16 %v614
      %v649 = vunpack.c.l.b16 %v615
      %v650 = vunpack.c.l.b16 %v616
      %v651 = vunpack.c.l.b16 %v617
      %v652 = vunpack.c.l.b16 %v618
      %v653 = vunpack.c.l.b16 %v619
      %v654 = vunpack.c.l.b16 %v620
      %v655 = vunpack.c.l.b16 %v621
      %v656 = vunpack.c.l.b16 %v622
      %v657 = vunpack.c.l.b16 %v623
      %v658 = vpack.c.b16 %v642, %v641
      %v659 = vpack.c.b16 %v644, %v643
      %v660 = vpack.c.b16 %v646, %v645
      %v661 = vpack.c.b16 %v648, %v647
      %v662 = vpack.c.b16 %v650, %v649
      %v663 = vpack.c.b16 %v652, %v651
      %v664 = vpack.c.b16 %v654, %v653
      %v665 = vpack.c.b16 %v656, %v655
      %v666 = vpack.c.b16 %v657, %v657
      %v668 = vshrl.u32 %v658, 16
      %v670 = vshll.u32 %v658, 16
      %v672 = vrot.slane %v670, 1
      %v673 = vor.u32 %v668, %v672
      %v675 = vshll.u32 %v659, 16
      %v677 = vrot.slane %v675, 1
      %v678 = vsel %vm305, %v673, %v677
      %v679 = vshrl.u32 %v659, 16
      %v681 = vor.u32 %v679, %v677
      %v683 = vshll.u32 %v660, 16
      %v685 = vrot.slane %v683, 1
      %v686 = vsel %vm305, %v681, %v685
      %v687 = vshrl.u32 %v660, 16
      %v689 = vor.u32 %v687, %v685
      %v691 = vshll.u32 %v661, 16
      %v693 = vrot.slane %v691, 1
      %v694 = vsel %vm305, %v689, %v693
      %v695 = vshrl.u32 %v661, 16
      %v697 = vor.u32 %v695, %v693
      %v699 = vshll.u32 %v662, 16
      %v701 = vrot.slane %v699, 1
      %v702 = vsel %vm305, %v697, %v701
      %v703 = vshrl.u32 %v662, 16
      %v705 = vor.u32 %v703, %v701
      %v707 = vshll.u32 %v663, 16
      %v709 = vrot.slane %v707, 1
      %v710 = vsel %vm305, %v705, %v709
      %v711 = vshrl.u32 %v663, 16
      %v713 = vor.u32 %v711, %v709
      %v715 = vshll.u32 %v664, 16
      %v717 = vrot.slane %v715, 1
      %v718 = vsel %vm305, %v713, %v717
      %v719 = vshrl.u32 %v664, 16
      %v721 = vor.u32 %v719, %v717
      %v723 = vshll.u32 %v665, 16
      %v725 = vrot.slane %v723, 1
      %v726 = vsel %vm305, %v721, %v725
      %v727 = vshrl.u32 %v665, 16
      %v729 = vor.u32 %v727, %v725
      %v731 = vshll.u32 %v666, 16
      %v733 = vrot.slane %v731, 1
      %v734 = vsel %vm305, %v729, %v733
      %743 = vst.msk [vmem:[#allocation2 + $0x8] sm:$0xff] %vm236, %v678
      %744 = vst.msk [vmem:[#allocation2 + $0x20] sm:$0xff] %vm236, %v686
      %745 = vst.msk [vmem:[#allocation2 + $0x38] sm:$0xff] %vm236, %v694
      %746 = vst.msk [vmem:[#allocation2 + $0x50] sm:$0xff] %vm236, %v702
      %747 = vst.msk [vmem:[#allocation2 + $0x68] sm:$0xff] %vm236, %v710
      %748 = vst.msk [vmem:[#allocation2 + $0x80] sm:$0xff] %vm236, %v718
      %749 = vst.msk [vmem:[#allocation2 + $0x98] sm:$0xff] %vm236, %v726
      %750 = vst.msk [vmem:[#allocation2 + $0xb0] sm:$0xff] %vm236, %v734
      %v751 = vld [vmem:[%s165 + $0x8] sm:$0xe]
      %v752 = vld [vmem:[%s165 + $0xc] sm:$0xf]
      %v753 = vld [vmem:[%s165 + $0x10] sm:$0xf]
      %v754 = vld [vmem:[%s165 + $0x14] sm:$0xf]
      %v755 = vld [vmem:[%s165 + $0x18] sm:$0xf]
      %v756 = vld [vmem:[%s165 + $0x1c] sm:$0xf]
      %v757 = vld [vmem:[%s165 + $0x20] sm:$0xf]
      %v758 = vld [vmem:[%s165 + $0x24] sm:$0xf]
      %v759 = vld [vmem:[%s165 + $0x28] sm:$0xf]
      %v760 = vld [vmem:[%s165 + $0x2c] sm:$0xf]
      %v761 = vld [vmem:[%s165 + $0x30] sm:$0xf]
      %v762 = vld [vmem:[%s165 + $0x34] sm:$0xf]
      %v763 = vld [vmem:[%s165 + $0x38] sm:$0xf]
      %v764 = vld [vmem:[%s165 + $0x3c] sm:$0xf]
      %v765 = vld [vmem:[%s165 + $0x40] sm:$0xf]
      %v766 = vld [vmem:[%s165 + $0x44] sm:$0xf]
      %v767 = vld [vmem:[%s165 + $0x48] sm:$0x1]
      %v785 = vunpack.c.l.b16 %v751
      %v786 = vunpack.c.l.b16 %v752
      %v787 = vunpack.c.l.b16 %v753
      %v788 = vunpack.c.l.b16 %v754
      %v789 = vunpack.c.l.b16 %v755
      %v790 = vunpack.c.l.b16 %v756
      %v791 = vunpack.c.l.b16 %v757
      %v792 = vunpack.c.l.b16 %v758
      %v793 = vunpack.c.l.b16 %v759
      %v794 = vunpack.c.l.b16 %v760
      %v795 = vunpack.c.l.b16 %v761
      %v796 = vunpack.c.l.b16 %v762
      %v797 = vunpack.c.l.b16 %v763
      %v798 = vunpack.c.l.b16 %v764
      %v799 = vunpack.c.l.b16 %v765
      %v800 = vunpack.c.l.b16 %v766
      %v801 = vunpack.c.l.b16 %v767
      %v802 = vpack.c.b16 %v786, %v785
      %v803 = vpack.c.b16 %v788, %v787
      %v804 = vpack.c.b16 %v790, %v789
      %v805 = vpack.c.b16 %v792, %v791
      %v806 = vpack.c.b16 %v794, %v793
      %v807 = vpack.c.b16 %v796, %v795
      %v808 = vpack.c.b16 %v798, %v797
      %v809 = vpack.c.b16 %v800, %v799
      %v810 = vpack.c.b16 %v801, %v801
      %v811 = vrot.slane %v802, 1
      %v812 = vrot.slane %v803, 1
      %v813 = vsel %vm467, %v811, %v812
      %v814 = vrot.slane %v804, 1
      %v815 = vsel %vm467, %v812, %v814
      %v816 = vrot.slane %v805, 1
      %v817 = vsel %vm467, %v814, %v816
      %v818 = vrot.slane %v806, 1
      %v819 = vsel %vm467, %v816, %v818
      %v820 = vrot.slane %v807, 1
      %v821 = vsel %vm467, %v818, %v820
      %v822 = vrot.slane %v808, 1
      %v823 = vsel %vm467, %v820, %v822
      %v824 = vrot.slane %v809, 1
      %v825 = vsel %vm467, %v822, %v824
      %v826 = vrot.slane %v810, 1
      %v827 = vsel %vm467, %v824, %v826
      %828 = vrot.lane.b32.xlu0 %v813, 32
      %v829 = vpop.permute.xlu0 %828
      %830 = vrot.lane.b32.xlu0 %v815, 32
      %v831 = vpop.permute.xlu0 %830
      %832 = vrot.lane.b32.xlu0 %v817, 32
      %v833 = vpop.permute.xlu0 %832
      %834 = vrot.lane.b32.xlu0 %v819, 32
      %v835 = vpop.permute.xlu0 %834
      %836 = vrot.lane.b32.xlu0 %v821, 32
      %v837 = vpop.permute.xlu0 %836
      %838 = vrot.lane.b32.xlu0 %v823, 32
      %v839 = vpop.permute.xlu0 %838
      %840 = vrot.lane.b32.xlu0 %v825, 32
      %v841 = vpop.permute.xlu0 %840
      %842 = vrot.lane.b32.xlu0 %v827, 32
      %v843 = vpop.permute.xlu0 %842
      %852 = vst.msk [vmem:[#allocation2 + $0x8] sm:$0xff] %vm398, %v829
      %853 = vst.msk [vmem:[#allocation2 + $0x20] sm:$0xff] %vm398, %v831
      %854 = vst.msk [vmem:[#allocation2 + $0x38] sm:$0xff] %vm398, %v833
      %855 = vst.msk [vmem:[#allocation2 + $0x50] sm:$0xff] %vm398, %v835
      %856 = vst.msk [vmem:[#allocation2 + $0x68] sm:$0xff] %vm398, %v837
      %857 = vst.msk [vmem:[#allocation2 + $0x80] sm:$0xff] %vm398, %v839
      %858 = vst.msk [vmem:[#allocation2 + $0x98] sm:$0xff] %vm398, %v841
      %859 = vst.msk [vmem:[#allocation2 + $0xb0] sm:$0xff] %vm398, %v843
      %v860 = vld [vmem:[%s165 + $0x10] sm:$0xf]
      %v861 = vld [vmem:[%s165 + $0x14] sm:$0xf]
      %v862 = vld [vmem:[%s165 + $0x18] sm:$0xf]
      %v863 = vld [vmem:[%s165 + $0x1c] sm:$0xf]
      %v864 = vld [vmem:[%s165 + $0x20] sm:$0xf]
      %v865 = vld [vmem:[%s165 + $0x24] sm:$0xf]
      %v866 = vld [vmem:[%s165 + $0x28] sm:$0xf]
      %v867 = vld [vmem:[%s165 + $0x2c] sm:$0xf]
      %v868 = vld [vmem:[%s165 + $0x30] sm:$0xf]
      %v869 = vld [vmem:[%s165 + $0x34] sm:$0xf]
      %v870 = vld [vmem:[%s165 + $0x38] sm:$0xf]
      %v871 = vld [vmem:[%s165 + $0x3c] sm:$0xf]
      %v872 = vld [vmem:[%s165 + $0x40] sm:$0xf]
      %v873 = vld [vmem:[%s165 + $0x44] sm:$0xf]
      %v874 = vld [vmem:[%s165 + $0x48] sm:$0xf]
      %v875 = vld [vmem:[%s165 + $0x4c] sm:$0xf]
      %v892 = vunpack.c.l.b16 %v860
      %v893 = vunpack.c.l.b16 %v861
      %v894 = vunpack.c.l.b16 %v862
      %v895 = vunpack.c.l.b16 %v863
      %v896 = vunpack.c.l.b16 %v864
      %v897 = vunpack.c.l.b16 %v865
      %v898 = vunpack.c.l.b16 %v866
      %v899 = vunpack.c.l.b16 %v867
      %v900 = vunpack.c.l.b16 %v868
      %v901 = vunpack.c.l.b16 %v869
      %v902 = vunpack.c.l.b16 %v870
      %v903 = vunpack.c.l.b16 %v871
      %v904 = vunpack.c.l.b16 %v872
      %v905 = vunpack.c.l.b16 %v873
      %v906 = vunpack.c.l.b16 %v874
      %v907 = vunpack.c.l.b16 %v875
      %v908 = vpack.c.b16 %v893, %v892
      %v909 = vpack.c.b16 %v895, %v894
      %v910 = vpack.c.b16 %v897, %v896
      %v911 = vpack.c.b16 %v899, %v898
      %v912 = vpack.c.b16 %v901, %v900
      %v913 = vpack.c.b16 %v903, %v902
      %v914 = vpack.c.b16 %v905, %v904
      %v915 = vpack.c.b16 %v907, %v906
      %916 = vrot.lane.b32.xlu0 %v908, 64
      %v917 = vpop.permute.xlu0 %916
      %918 = vrot.lane.b32.xlu0 %v909, 64
      %v919 = vpop.permute.xlu0 %918
      %920 = vrot.lane.b32.xlu0 %v910, 64
      %v921 = vpop.permute.xlu0 %920
      %922 = vrot.lane.b32.xlu0 %v911, 64
      %v923 = vpop.permute.xlu0 %922
      %924 = vrot.lane.b32.xlu0 %v912, 64
      %v925 = vpop.permute.xlu0 %924
      %926 = vrot.lane.b32.xlu0 %v913, 64
      %v927 = vpop.permute.xlu0 %926
      %928 = vrot.lane.b32.xlu0 %v914, 64
      %v929 = vpop.permute.xlu0 %928
      %930 = vrot.lane.b32.xlu0 %v915, 64
      %v931 = vpop.permute.xlu0 %930
      %940 = vst.msk [vmem:[#allocation2 + $0x8] sm:$0xff] %vm509, %v917
      %941 = vst.msk [vmem:[#allocation2 + $0x20] sm:$0xff] %vm509, %v919
      %942 = vst.msk [vmem:[#allocation2 + $0x38] sm:$0xff] %vm509, %v921
      %943 = vst.msk [vmem:[#allocation2 + $0x50] sm:$0xff] %vm509, %v923
      %944 = vst.msk [vmem:[#allocation2 + $0x68] sm:$0xff] %vm509, %v925
      %945 = vst.msk [vmem:[#allocation2 + $0x80] sm:$0xff] %vm509, %v927
      %946 = vst.msk [vmem:[#allocation2 + $0x98] sm:$0xff] %vm509, %v929
      %947 = vst.msk [vmem:[#allocation2 + $0xb0] sm:$0xff] %vm509, %v931
      %v948 = vld [vmem:[%s165 + $0x10] sm:$0xf]
      %v949 = vld [vmem:[%s165 + $0x14] sm:$0xf]
      %v950 = vld [vmem:[%s165 + $0x18] sm:$0xf]
      %v951 = vld [vmem:[%s165 + $0x1c] sm:$0xf]
      %v952 = vld [vmem:[%s165 + $0x20] sm:$0xf]
      %v953 = vld [vmem:[%s165 + $0x24] sm:$0xf]
      %v954 = vld [vmem:[%s165 + $0x28] sm:$0xf]
      %v955 = vld [vmem:[%s165 + $0x2c] sm:$0xf]
      %v956 = vld [vmem:[%s165 + $0x30] sm:$0xf]
      %v957 = vld [vmem:[%s165 + $0x34] sm:$0xf]
      %v958 = vld [vmem:[%s165 + $0x38] sm:$0xf]
      %v959 = vld [vmem:[%s165 + $0x3c] sm:$0xf]
      %v960 = vld [vmem:[%s165 + $0x40] sm:$0xf]
      %v961 = vld [vmem:[%s165 + $0x44] sm:$0xf]
      %v962 = vld [vmem:[%s165 + $0x48] sm:$0xf]
      %v963 = vld [vmem:[%s165 + $0x4c] sm:$0xf]
      %v964 = vld [vmem:[%s165 + $0x50] sm:$0x1]
      %v982 = vunpack.c.l.b16 %v948
      %v983 = vunpack.c.l.b16 %v949
      %v984 = vunpack.c.l.b16 %v950
      %v985 = vunpack.c.l.b16 %v951
      %v986 = vunpack.c.l.b16 %v952
      %v987 = vunpack.c.l.b16 %v953
      %v988 = vunpack.c.l.b16 %v954
      %v989 = vunpack.c.l.b16 %v955
      %v990 = vunpack.c.l.b16 %v956
      %v991 = vunpack.c.l.b16 %v957
      %v992 = vunpack.c.l.b16 %v958
      %v993 = vunpack.c.l.b16 %v959
      %v994 = vunpack.c.l.b16 %v960
      %v995 = vunpack.c.l.b16 %v961
      %v996 = vunpack.c.l.b16 %v962
      %v997 = vunpack.c.l.b16 %v963
      %v998 = vunpack.c.l.b16 %v964
      %v999 = vpack.c.b16 %v983, %v982
      %v1000 = vpack.c.b16 %v985, %v984
      %v1001 = vpack.c.b16 %v987, %v986
      %v1002 = vpack.c.b16 %v989, %v988
      %v1003 = vpack.c.b16 %v991, %v990
      %v1004 = vpack.c.b16 %v993, %v992
      %v1005 = vpack.c.b16 %v995, %v994
      %v1006 = vpack.c.b16 %v997, %v996
      %v1007 = vpack.c.b16 %v998, %v998
      %v1009 = vshrl.u32 %v999, 16
      %v1011 = vshll.u32 %v999, 16
      %v1013 = vrot.slane %v1011, 1
      %v1014 = vor.u32 %v1009, %v1013
      %v1016 = vshll.u32 %v1000, 16
      %v1018 = vrot.slane %v1016, 1
      %v1019 = vsel %vm305, %v1014, %v1018
      %v1020 = vshrl.u32 %v1000, 16
      %v1022 = vor.u32 %v1020, %v1018
      %v1024 = vshll.u32 %v1001, 16
      %v1026 = vrot.slane %v1024, 1
      %v1027 = vsel %vm305, %v1022, %v1026
      %v1028 = vshrl.u32 %v1001, 16
      %v1030 = vor.u32 %v1028, %v1026
      %v1032 = vshll.u32 %v1002, 16
      %v1034 = vrot.slane %v1032, 1
      %v1035 = vsel %vm305, %v1030, %v1034
      %v1036 = vshrl.u32 %v1002, 16
      %v1038 = vor.u32 %v1036, %v1034
      %v1040 = vshll.u32 %v1003, 16
      %v1042 = vrot.slane %v1040, 1
      %v1043 = vsel %vm305, %v1038, %v1042
      %v1044 = vshrl.u32 %v1003, 16
      %v1046 = vor.u32 %v1044, %v1042
      %v1048 = vshll.u32 %v1004, 16
      %v1050 = vrot.slane %v1048, 1
      %v1051 = vsel %vm305, %v1046, %v1050
      %v1052 = vshrl.u32 %v1004, 16
      %v1054 = vor.u32 %v1052, %v1050
      %v1056 = vshll.u32 %v1005, 16
      %v1058 = vrot.slane %v1056, 1
      %v1059 = vsel %vm305, %v1054, %v1058
      %v1060 = vshrl.u32 %v1005, 16
      %v1062 = vor.u32 %v1060, %v1058
      %v1064 = vshll.u32 %v1006, 16
      %v1066 = vrot.slane %v1064, 1
      %v1067 = vsel %vm305, %v1062, %v1066
      %v1068 = vshrl.u32 %v1006, 16
      %v1070 = vor.u32 %v1068, %v1066
      %v1072 = vshll.u32 %v1007, 16
      %v1074 = vrot.slane %v1072, 1
      %v1075 = vsel %vm305, %v1070, %v1074
      %1076 = vrot.lane.b32.xlu0 %v1019, 96
      %v1077 = vpop.permute.xlu0 %1076
      %1078 = vrot.lane.b32.xlu0 %v1027, 96
      %v1079 = vpop.permute.xlu0 %1078
      %1080 = vrot.lane.b32.xlu0 %v1035, 96
      %v1081 = vpop.permute.xlu0 %1080
      %1082 = vrot.lane.b32.xlu0 %v1043, 96
      %v1083 = vpop.permute.xlu0 %1082
      %1084 = vrot.lane.b32.xlu0 %v1051, 96
      %v1085 = vpop.permute.xlu0 %1084
      %1086 = vrot.lane.b32.xlu0 %v1059, 96
      %v1087 = vpop.permute.xlu0 %1086
      %1088 = vrot.lane.b32.xlu0 %v1067, 96
      %v1089 = vpop.permute.xlu0 %1088
      %1090 = vrot.lane.b32.xlu0 %v1075, 96
      %v1091 = vpop.permute.xlu0 %1090
      %1100 = vst.msk [vmem:[#allocation2 + $0x8] sm:$0xff] %vm598, %v1077
      %1101 = vst.msk [vmem:[#allocation2 + $0x20] sm:$0xff] %vm598, %v1079
      %1102 = vst.msk [vmem:[#allocation2 + $0x38] sm:$0xff] %vm598, %v1081
      %1103 = vst.msk [vmem:[#allocation2 + $0x50] sm:$0xff] %vm598, %v1083
      %1104 = vst.msk [vmem:[#allocation2 + $0x68] sm:$0xff] %vm598, %v1085
      %1105 = vst.msk [vmem:[#allocation2 + $0x80] sm:$0xff] %vm598, %v1087
      %1106 = vst.msk [vmem:[#allocation2 + $0x98] sm:$0xff] %vm598, %v1089
      %1107 = vst.msk [vmem:[#allocation2 + $0xb0] sm:$0xff] %vm598, %v1091
      %v1108 = vld [vmem:[%s165 + $0x10] sm:$0xe]
      %v1109 = vld [vmem:[%s165 + $0x14] sm:$0xf]
      %v1110 = vld [vmem:[%s165 + $0x18] sm:$0xf]
      %v1111 = vld [vmem:[%s165 + $0x1c] sm:$0xf]
      %v1112 = vld [vmem:[%s165 + $0x20] sm:$0xf]
      %v1113 = vld [vmem:[%s165 + $0x24] sm:$0xf]
      %v1114 = vld [vmem:[%s165 + $0x28] sm:$0xf]
      %v1115 = vld [vmem:[%s165 + $0x2c] sm:$0xf]
      %v1116 = vld [vmem:[%s165 + $0x30] sm:$0xf]
      %v1117 = vld [vmem:[%s165 + $0x34] sm:$0xf]
      %v1118 = vld [vmem:[%s165 + $0x38] sm:$0xf]
      %v1119 = vld [vmem:[%s165 + $0x3c] sm:$0xf]
      %v1120 = vld [vmem:[%s165 + $0x40] sm:$0xf]
      %v1121 = vld [vmem:[%s165 + $0x44] sm:$0xf]
      %v1122 = vld [vmem:[%s165 + $0x48] sm:$0xf]
      %v1123 = vld [vmem:[%s165 + $0x4c] sm:$0xf]
      %v1124 = vld [vmem:[%s165 + $0x50] sm:$0x1]
      %v1142 = vunpack.c.l.b16 %v1108
      %v1143 = vunpack.c.l.b16 %v1109
      %v1144 = vunpack.c.l.b16 %v1110
      %v1145 = vunpack.c.l.b16 %v1111
      %v1146 = vunpack.c.l.b16 %v1112
      %v1147 = vunpack.c.l.b16 %v1113
      %v1148 = vunpack.c.l.b16 %v1114
      %v1149 = vunpack.c.l.b16 %v1115
      %v1150 = vunpack.c.l.b16 %v1116
      %v1151 = vunpack.c.l.b16 %v1117
      %v1152 = vunpack.c.l.b16 %v1118
      %v1153 = vunpack.c.l.b16 %v1119
      %v1154 = vunpack.c.l.b16 %v1120
      %v1155 = vunpack.c.l.b16 %v1121
      %v1156 = vunpack.c.l.b16 %v1122
      %v1157 = vunpack.c.l.b16 %v1123
      %v1158 = vunpack.c.l.b16 %v1124
      %v1159 = vpack.c.b16 %v1143, %v1142
      %v1160 = vpack.c.b16 %v1145, %v1144
      %v1161 = vpack.c.b16 %v1147, %v1146
      %v1162 = vpack.c.b16 %v1149, %v1148
      %v1163 = vpack.c.b16 %v1151, %v1150
      %v1164 = vpack.c.b16 %v1153, %v1152
      %v1165 = vpack.c.b16 %v1155, %v1154
      %v1166 = vpack.c.b16 %v1157, %v1156
      %v1167 = vpack.c.b16 %v1158, %v1158
      %v1168 = vrot.slane %v1159, 1
      %v1169 = vrot.slane %v1160, 1
      %v1170 = vsel %vm467, %v1168, %v1169
      %v1171 = vrot.slane %v1161, 1
      %v1172 = vsel %vm467, %v1169, %v1171
      %v1173 = vrot.slane %v1162, 1
      %v1174 = vsel %vm467, %v1171, %v1173
      %v1175 = vrot.slane %v1163, 1
      %v1176 = vsel %vm467, %v1173, %v1175
      %v1177 = vrot.slane %v1164, 1
      %v1178 = vsel %vm467, %v1175, %v1177
      %v1179 = vrot.slane %v1165, 1
      %v1180 = vsel %vm467, %v1177, %v1179
      %v1181 = vrot.slane %v1166, 1
      %v1182 = vsel %vm467, %v1179, %v1181
      %v1183 = vrot.slane %v1167, 1
      %v1184 = vsel %vm467, %v1181, %v1183
      %1193 = vst.msk [vmem:[#allocation2 + $0x10] sm:$0xff] %vm236, %v1170
      %1194 = vst.msk [vmem:[#allocation2 + $0x28] sm:$0xff] %vm236, %v1172
      %1195 = vst.msk [vmem:[#allocation2 + $0x40] sm:$0xff] %vm236, %v1174
      %1196 = vst.msk [vmem:[#allocation2 + $0x58] sm:$0xff] %vm236, %v1176
      %1197 = vst.msk [vmem:[#allocation2 + $0x70] sm:$0xff] %vm236, %v1178
      %1198 = vst.msk [vmem:[#allocation2 + $0x88] sm:$0xff] %vm236, %v1180
      %1199 = vst.msk [vmem:[#allocation2 + $0xa0] sm:$0xff] %vm236, %v1182
      %1200 = vst.msk [vmem:[#allocation2 + $0xb8] sm:$0xff] %vm236, %v1184
      %v1201 = vld [vmem:[#allocation2] sm:$0xff]
      %v1202 = vld [vmem:[#allocation2 + $0x8] sm:$0xff]
      %v1203 = vld [vmem:[#allocation2 + $0x10] sm:$0xff]
      %v1204 = vld [vmem:[#allocation2 + $0x18] sm:$0xff]
      %v1205 = vld [vmem:[#allocation2 + $0x20] sm:$0xff]
      %v1206 = vld [vmem:[#allocation2 + $0x28] sm:$0xff]
      %v1207 = vld [vmem:[#allocation2 + $0x30] sm:$0xff]
      %v1208 = vld [vmem:[#allocation2 + $0x38] sm:$0xff]
      %v1209 = vld [vmem:[#allocation2 + $0x40] sm:$0xff]
      %v1210 = vld [vmem:[#allocation2 + $0x48] sm:$0xff]
      %v1211 = vld [vmem:[#allocation2 + $0x50] sm:$0xff]
      %v1212 = vld [vmem:[#allocation2 + $0x58] sm:$0xff]
      %v1213 = vld [vmem:[#allocation2 + $0x60] sm:$0xff]
      %v1214 = vld [vmem:[#allocation2 + $0x68] sm:$0xff]
      %v1215 = vld [vmem:[#allocation2 + $0x70] sm:$0xff]
      %v1216 = vld [vmem:[#allocation2 + $0x78] sm:$0xff]
      %v1217 = vld [vmem:[#allocation2 + $0x80] sm:$0xff]
      %v1218 = vld [vmem:[#allocation2 + $0x88] sm:$0xff]
      %v1219 = vld [vmem:[#allocation2 + $0x90] sm:$0xff]
      %v1220 = vld [vmem:[#allocation2 + $0x98] sm:$0xff]
      %v1221 = vld [vmem:[#allocation2 + $0xa0] sm:$0xff]
      %v1222 = vld [vmem:[#allocation2 + $0xa8] sm:$0xff]
      %v1223 = vld [vmem:[#allocation2 + $0xb0] sm:$0xff]
      %v1224 = vld [vmem:[#allocation2 + $0xb8] sm:$0xff]
      %v1225 = vld [vmem:[%s1] sm:$0xf]
      %v1226 = vld [vmem:[%s1 + $0x4] sm:$0xf]
      %v1227 = vld [vmem:[%s1 + $0x8] sm:$0xf]
      %v1228 = vld [vmem:[%s1 + $0xc] sm:$0xf]
      %v1229 = vld [vmem:[%s1 + $0x10] sm:$0xf]
      %v1230 = vld [vmem:[%s1 + $0x14] sm:$0xf]
      %v1231 = vld [vmem:[%s1 + $0x18] sm:$0xf]
      %v1232 = vld [vmem:[%s1 + $0x1c] sm:$0xf]
      %v1233 = vld [vmem:[%s1 + $0x20] sm:$0xf]
      %v1234 = vld [vmem:[%s1 + $0x24] sm:$0xf]
      %v1235 = vld [vmem:[%s1 + $0x28] sm:$0xf]
      %v1236 = vld [vmem:[%s1 + $0x2c] sm:$0xf]
      %v1237 = vld [vmem:[%s1 + $0x30] sm:$0xf]
      %v1238 = vld [vmem:[%s1 + $0x34] sm:$0xf]
      %v1239 = vld [vmem:[%s1 + $0x38] sm:$0xf]
      %v1240 = vld [vmem:[%s1 + $0x3c] sm:$0xf]
      %v1241 = vld [vmem:[%s1 + $0x40] sm:$0xf]
      %v1242 = vld [vmem:[%s1 + $0x44] sm:$0xf]
      %v1243 = vld [vmem:[%s1 + $0x48] sm:$0xf]
      %v1244 = vld [vmem:[%s1 + $0x4c] sm:$0xf]
      %v1245 = vld [vmem:[%s1 + $0x50] sm:$0xf]
      %v1246 = vld [vmem:[%s1 + $0x54] sm:$0xf]
      %v1247 = vld [vmem:[%s1 + $0x58] sm:$0xf]
      %v1248 = vld [vmem:[%s1 + $0x5c] sm:$0xf]
      %v1249 = vld [vmem:[%s1 + $0x60] sm:$0xf]
      %v1250 = vld [vmem:[%s1 + $0x64] sm:$0xf]
      %v1251 = vld [vmem:[%s1 + $0x68] sm:$0xf]
      %v1252 = vld [vmem:[%s1 + $0x6c] sm:$0xf]
      %v1253 = vld [vmem:[%s1 + $0x70] sm:$0xf]
      %v1254 = vld [vmem:[%s1 + $0x74] sm:$0xf]
      %v1255 = vld [vmem:[%s1 + $0x78] sm:$0xf]
      %v1256 = vld [vmem:[%s1 + $0x7c] sm:$0xf]
      %v1257 = vld [vmem:[%s1 + $0x80] sm:$0xf]
      %v1258 = vld [vmem:[%s1 + $0x84] sm:$0xf]
      %v1259 = vld [vmem:[%s1 + $0x88] sm:$0xf]
      %v1260 = vld [vmem:[%s1 + $0x8c] sm:$0xf]
      %v1261 = vld [vmem:[%s2] sm:$0x1]
      %v1263 = vlaneseq
      %v1264 = vshrl.u32 %v1263, 7
      %v1265 = vsub.s32 0, %v1264
      %v1266 = vrot.slane %v1261, %v1265
      %v1304 = vunpack.c.l.b16 %v1225
      %v1305 = vunpack.c.l.b16 %v1226
      %v1306 = vunpack.c.l.b16 %v1227
      %v1307 = vunpack.c.l.b16 %v1228
      %v1308 = vunpack.c.l.b16 %v1229
      %v1309 = vunpack.c.l.b16 %v1230
      %v1310 = vunpack.c.l.b16 %v1231
      %v1311 = vunpack.c.l.b16 %v1232
      %v1312 = vunpack.c.l.b16 %v1233
      %v1313 = vunpack.c.l.b16 %v1234
      %v1314 = vunpack.c.l.b16 %v1235
      %v1315 = vunpack.c.l.b16 %v1236
      %v1316 = vunpack.c.l.b16 %v1237
      %v1317 = vunpack.c.l.b16 %v1238
      %v1318 = vunpack.c.l.b16 %v1239
      %v1319 = vunpack.c.l.b16 %v1240
      %v1320 = vunpack.c.l.b16 %v1241
      %v1321 = vunpack.c.l.b16 %v1242
      %v1322 = vunpack.c.l.b16 %v1243
      %v1323 = vunpack.c.l.b16 %v1244
      %v1324 = vunpack.c.l.b16 %v1245
      %v1325 = vunpack.c.l.b16 %v1246
      %v1326 = vunpack.c.l.b16 %v1247
      %v1327 = vunpack.c.l.b16 %v1248
      %v1328 = vunpack.c.l.b16 %v1249
      %v1329 = vunpack.c.l.b16 %v1250
      %v1330 = vunpack.c.l.b16 %v1251
      %v1331 = vunpack.c.l.b16 %v1252
      %v1332 = vunpack.c.l.b16 %v1253
      %v1333 = vunpack.c.l.b16 %v1254
      %v1334 = vunpack.c.l.b16 %v1255
      %v1335 = vunpack.c.l.b16 %v1256
      %v1336 = vunpack.c.l.b16 %v1257
      %v1337 = vunpack.c.l.b16 %v1258
      %v1338 = vunpack.c.l.b16 %v1259
      %v1339 = vunpack.c.l.b16 %v1260
      %v1340 = vpack.c.b16 %v1305, %v1304
      %v1341 = vpack.c.b16 %v1307, %v1306
      %v1342 = vpack.c.b16 %v1309, %v1308
      %v1343 = vpack.c.b16 %v1311, %v1310
      %v1344 = vpack.c.b16 %v1313, %v1312
      %v1345 = vpack.c.b16 %v1315, %v1314
      %v1346 = vpack.c.b16 %v1317, %v1316
      %v1347 = vpack.c.b16 %v1319, %v1318
      %v1348 = vpack.c.b16 %v1321, %v1320
      %v1349 = vpack.c.b16 %v1323, %v1322
      %v1350 = vpack.c.b16 %v1325, %v1324
      %v1351 = vpack.c.b16 %v1327, %v1326
      %v1352 = vpack.c.b16 %v1329, %v1328
      %v1353 = vpack.c.b16 %v1331, %v1330
      %v1354 = vpack.c.b16 %v1333, %v1332
      %v1355 = vpack.c.b16 %v1335, %v1334
      %v1356 = vpack.c.b16 %v1337, %v1336
      %v1357 = vpack.c.b16 %v1339, %v1338
      %v1377 = vsel %vm236, %v1203, 0
      %v1380 = vsel %vm236, %v1206, 0
      %v1383 = vsel %vm236, %v1209, 0
      %v1386 = vsel %vm236, %v1212, 0
      %v1389 = vsel %vm236, %v1215, 0
      %v1392 = vsel %vm236, %v1218, 0
      %v1395 = vsel %vm236, %v1221, 0
      %v1398 = vsel %vm236, %v1224, 0
      %1400 = vmatprep.subr.bf16.mxu0 0
      %1401 = vmatpush1.bf16.msra.mxu0 %v1340
      %1402 = vmatprep.subr.bf16.mxu0 0
      %1403 = vmatpush1.bf16.msra.mxu0 %v1341
      %1404 = vmatprep.subr.bf16.mxu0 0
      %1405 = vmatpush1.bf16.msra.mxu0 %v1342
      %1406 = vmatprep.subr.bf16.mxu0 0
      %1407 = vmatpush1.bf16.msra.mxu0 %v1343
      %1408 = vmatprep.subr.bf16.mxu0 0
      %1409 = vmatpush1.bf16.msra.mxu0 %v1344
      %1410 = vmatprep.subr.bf16.mxu0 0
      %1411 = vmatpush1.bf16.msra.mxu0 %v1345
      %1412 = vmatprep.subr.bf16.mxu0 0
      %1413 = vmatpush1.bf16.msra.mxu0 %v1346
      %1414 = vmatprep.subr.bf16.mxu0 0
      %1415 = vmatpush1.bf16.msra.mxu0 %v1347
      %1416 = vmatprep.subr.bf16.mxu0 0
      %1417 = vmatpush1.bf16.msra.mxu0 %v1348
      %1418 = vmatprep.subr.bf16.mxu0 0
      %1419 = vmatpush1.bf16.msra.mxu0 %v1349
      %1420 = vmatprep.subr.bf16.mxu0 0
      %1421 = vmatpush1.bf16.msra.mxu0 %v1350
      %1422 = vmatprep.subr.bf16.mxu0 0
      %1423 = vmatpush1.bf16.msra.mxu0 %v1351
      %1424 = vmatprep.subr.bf16.mxu0 0
      %1425 = vmatpush1.bf16.msra.mxu0 %v1352
      %1426 = vmatprep.subr.bf16.mxu0 0
      %1427 = vmatpush1.bf16.msra.mxu0 %v1353
      %1428 = vmatprep.subr.bf16.mxu0 0
      %1429 = vmatpush1.bf16.msra.mxu0 %v1354
      %1430 = vmatprep.subr.bf16.mxu0 0
      %1431 = vmatpush1.bf16.msra.mxu0 %v1355
      %1432 = vmatprep.mubr.bf16.mxu0 %v1202
      %1433 = vmatmul.mubr.bf16.gmra.mrb[0].mxu0 %v1201
      %v1434 = vpop.f32.mrb[0].mxu0
      %v1435 = vadd.f32 %v1266, %v1434
      %v1436 = vpop.f32.mrb[0].mxu0
      %v1437 = vpop.f32.mrb[0].mxu0
      %v1438 = vadd.f32 %v1266, %v1437
      %v1439 = vpop.f32.mrb[0].mxu0
      %1440 = vmatprep.mubr.bf16.mxu0 %v1205
      %1441 = vmatmul.mubr.bf16.gmra.mrb[0].mxu0 %v1204
      %v1442 = vpop.f32.mrb[0].mxu0
      %v1443 = vadd.f32 %v1266, %v1442
      %v1444 = vpop.f32.mrb[0].mxu0
      %v1445 = vpop.f32.mrb[0].mxu0
      %v1446 = vadd.f32 %v1266, %v1445
      %v1447 = vpop.f32.mrb[0].mxu0
      %1448 = vmatprep.mubr.bf16.mxu0 %v1208
      %1449 = vmatmul.mubr.bf16.gmra.mrb[0].mxu0 %v1207
      %v1450 = vpop.f32.mrb[0].mxu0
      %v1451 = vadd.f32 %v1266, %v1450
      %v1452 = vpop.f32.mrb[0].mxu0
      %v1453 = vpop.f32.mrb[0].mxu0
      %v1454 = vadd.f32 %v1266, %v1453
      %v1455 = vpop.f32.mrb[0].mxu0
      %1456 = vmatprep.mubr.bf16.mxu0 %v1211
      %1457 = vmatmul.mubr.bf16.gmra.mrb[0].mxu0 %v1210
      %v1458 = vpop.f32.mrb[0].mxu0
      %v1459 = vadd.f32 %v1266, %v1458
      %v1460 = vpop.f32.mrb[0].mxu0
      %v1461 = vpop.f32.mrb[0].mxu0
      %v1462 = vadd.f32 %v1266, %v1461
      %v1463 = vpop.f32.mrb[0].mxu0
      %1464 = vmatprep.mubr.bf16.mxu0 %v1214
      %1465 = vmatmul.mubr.bf16.gmra.mrb[0].mxu0 %v1213
      %v1466 = vpop.f32.mrb[0].mxu0
      %v1467 = vadd.f32 %v1266, %v1466
      %v1468 = vpop.f32.mrb[0].mxu0
      %v1469 = vpop.f32.mrb[0].mxu0
      %v1470 = vadd.f32 %v1266, %v1469
      %v1471 = vpop.f32.mrb[0].mxu0
      %1472 = vmatprep.mubr.bf16.mxu0 %v1217
      %1473 = vmatmul.mubr.bf16.gmra.mrb[0].mxu0 %v1216
      %v1474 = vpop.f32.mrb[0].mxu0
      %v1475 = vadd.f32 %v1266, %v1474
      %v1476 = vpop.f32.mrb[0].mxu0
      %v1477 = vpop.f32.mrb[0].mxu0
      %v1478 = vadd.f32 %v1266, %v1477
      %v1479 = vpop.f32.mrb[0].mxu0
      %1480 = vmatprep.mubr.bf16.mxu0 %v1220
      %1481 = vmatmul.mubr.bf16.gmra.mrb[0].mxu0 %v1219
      %v1482 = vpop.f32.mrb[0].mxu0
      %v1483 = vadd.f32 %v1266, %v1482
      %v1484 = vpop.f32.mrb[0].mxu0
      %v1485 = vpop.f32.mrb[0].mxu0
      %v1486 = vadd.f32 %v1266, %v1485
      %v1487 = vpop.f32.mrb[0].mxu0
      %1488 = vmatprep.mubr.bf16.mxu0 %v1223
      %1489 = vmatmul.mubr.bf16.gmra.mrb[0].mxu0 %v1222
      %v1490 = vpop.f32.mrb[0].mxu0
      %v1491 = vadd.f32 %v1266, %v1490
      %v1492 = vpop.f32.mrb[0].mxu0
      %v1493 = vpop.f32.mrb[0].mxu0
      %v1494 = vadd.f32 %v1266, %v1493
      %v1495 = vpop.f32.mrb[0].mxu0
      %1496 = vdwg.mxu0
      %1497 = vmatprep.subr.bf16.mxu0 0
      %1498 = vmatpush1.bf16.msra.mxu0 %v1356
      %1499 = vmatprep.subr.bf16.mxu0 0
      %1500 = vmatpush1.bf16.msra.mxu0 %v1357
      %1501 = vmatprep.subr.bf16.mxu0 0
      %1502 = vmatpush1.bf16.msra.mxu0 0
      %1503 = vmatprep.subr.bf16.mxu0 0
      %1504 = vmatpush1.bf16.msra.mxu0 0
      %1505 = vmatprep.subr.bf16.mxu0 0
      %1506 = vmatpush1.bf16.msra.mxu0 0
      %1507 = vmatprep.subr.bf16.mxu0 0
      %1508 = vmatpush1.bf16.msra.mxu0 0
      %1509 = vmatprep.subr.bf16.mxu0 0
      %1510 = vmatpush1.bf16.msra.mxu0 0
      %1511 = vmatprep.subr.bf16.mxu0 0
      %1512 = vmatpush1.bf16.msra.mxu0 0
      %1513 = vmatprep.subr.bf16.mxu0 0
      %1514 = vmatpush1.bf16.msra.mxu0 0
      %1515 = vmatprep.subr.bf16.mxu0 0
      %1516 = vmatpush1.bf16.msra.mxu0 0
      %1517 = vmatprep.subr.bf16.mxu0 0
      %1518 = vmatpush1.bf16.msra.mxu0 0
      %1519 = vmatprep.subr.bf16.mxu0 0
      %1520 = vmatpush1.bf16.msra.mxu0 0
      %1521 = vmatprep.subr.bf16.mxu0 0
      %1522 = vmatpush1.bf16.msra.mxu0 0
      %1523 = vmatprep.subr.bf16.mxu0 0
      %1524 = vmatpush1.bf16.msra.mxu0 0
      %1525 = vmatprep.subr.bf16.mxu0 0
      %1526 = vmatpush1.bf16.msra.mxu0 0
      %1527 = vmatprep.subr.bf16.mxu0 0
      %1528 = vmatpush1.bf16.msra.mxu0 0
      %1529 = vmatprep.mubr.bf16.mxu0 0
      %1530 = vmatmul.mubr.bf16.gmra.mrb[0].mxu0 %v1377
      %v1531 = vpop.f32.mrb[0].mxu0
      %v1532 = vadd.f32 %v1435, %v1531
      %v1533 = vpop.f32.mrb[0].mxu0
      %v1534 = vpop.f32.mrb[0].mxu0
      %v1535 = vadd.f32 %v1438, %v1534
      %v1536 = vpop.f32.mrb[0].mxu0
      %1537 = vmatprep.mubr.bf16.mxu0 0
      %1538 = vmatmul.mubr.bf16.gmra.mrb[0].mxu0 %v1380
      %v1539 = vpop.f32.mrb[0].mxu0
      %v1540 = vadd.f32 %v1443, %v1539
      %v1541 = vpop.f32.mrb[0].mxu0
      %v1542 = vpop.f32.mrb[0].mxu0
      %v1543 = vadd.f32 %v1446, %v1542
      %v1544 = vpop.f32.mrb[0].mxu0
      %1545 = vmatprep.mubr.bf16.mxu0 0
      %1546 = vmatmul.mubr.bf16.gmra.mrb[0].mxu0 %v1383
      %v1547 = vpop.f32.mrb[0].mxu0
      %v1548 = vadd.f32 %v1451, %v1547
      %v1549 = vpop.f32.mrb[0].mxu0
      %v1550 = vpop.f32.mrb[0].mxu0
      %v1551 = vadd.f32 %v1454, %v1550
      %v1552 = vpop.f32.mrb[0].mxu0
      %1553 = vmatprep.mubr.bf16.mxu0 0
      %1554 = vmatmul.mubr.bf16.gmra.mrb[0].mxu0 %v1386
      %v1555 = vpop.f32.mrb[0].mxu0
      %v1556 = vadd.f32 %v1459, %v1555
      %v1557 = vpop.f32.mrb[0].mxu0
      %v1558 = vpop.f32.mrb[0].mxu0
      %v1559 = vadd.f32 %v1462, %v1558
      %v1560 = vpop.f32.mrb[0].mxu0
      %1561 = vmatprep.mubr.bf16.mxu0 0
      %1562 = vmatmul.mubr.bf16.gmra.mrb[0].mxu0 %v1389
      %v1563 = vpop.f32.mrb[0].mxu0
      %v1564 = vadd.f32 %v1467, %v1563
      %v1565 = vpop.f32.mrb[0].mxu0
      %v1566 = vpop.f32.mrb[0].mxu0
      %v1567 = vadd.f32 %v1470, %v1566
      %v1568 = vpop.f32.mrb[0].mxu0
      %1569 = vmatprep.mubr.bf16.mxu0 0
      %1570 = vmatmul.mubr.bf16.gmra.mrb[0].mxu0 %v1392
      %v1571 = vpop.f32.mrb[0].mxu0
      %v1572 = vadd.f32 %v1475, %v1571
      %v1573 = vpop.f32.mrb[0].mxu0
      %v1574 = vpop.f32.mrb[0].mxu0
      %v1575 = vadd.f32 %v1478, %v1574
      %v1576 = vpop.f32.mrb[0].mxu0
      %1577 = vmatprep.mubr.bf16.mxu0 0
      %1578 = vmatmul.mubr.bf16.gmra.mrb[0].mxu0 %v1395
      %v1579 = vpop.f32.mrb[0].mxu0
      %v1580 = vadd.f32 %v1483, %v1579
      %v1581 = vpop.f32.mrb[0].mxu0
      %v1582 = vpop.f32.mrb[0].mxu0
      %v1583 = vadd.f32 %v1486, %v1582
      %v1584 = vpop.f32.mrb[0].mxu0
      %1585 = vmatprep.mubr.bf16.mxu0 0
      %1586 = vmatmul.mubr.bf16.gmra.mrb[0].mxu0 %v1398
      %v1587 = vpop.f32.mrb[0].mxu0
      %v1588 = vadd.f32 %v1491, %v1587
      %v1589 = vpop.f32.mrb[0].mxu0
      %v1590 = vpop.f32.mrb[0].mxu0
      %v1591 = vadd.f32 %v1494, %v1590
      %v1592 = vpop.f32.mrb[0].mxu0
      %1593 = vdwg.mxu0
      %v1594 = vmax.f32 %v1532, 0.0
      %v1595 = vmax.f32 %v1535, 0.0
      %v1596 = vmax.f32 %v1540, 0.0
      %v1597 = vmax.f32 %v1543, 0.0
      %v1598 = vmax.f32 %v1548, 0.0
      %v1599 = vmax.f32 %v1551, 0.0
      %v1600 = vmax.f32 %v1556, 0.0
      %v1601 = vmax.f32 %v1559, 0.0
      %v1602 = vmax.f32 %v1564, 0.0
      %v1603 = vmax.f32 %v1567, 0.0
      %v1604 = vmax.f32 %v1572, 0.0
      %v1605 = vmax.f32 %v1575, 0.0
      %v1606 = vmax.f32 %v1580, 0.0
      %v1607 = vmax.f32 %v1583, 0.0
      %v1608 = vmax.f32 %v1588, 0.0
      %v1609 = vmax.f32 %v1591, 0.0
      %v1610 = vpack.c.bf16 %v1595, %v1594
      %v1611 = vpack.c.bf16 %v1597, %v1596
      %v1612 = vpack.c.bf16 %v1599, %v1598
      %v1613 = vpack.c.bf16 %v1601, %v1600
      %v1614 = vpack.c.bf16 %v1603, %v1602
      %v1615 = vpack.c.bf16 %v1605, %v1604
      %v1616 = vpack.c.bf16 %v1607, %v1606
      %v1617 = vpack.c.bf16 %v1609, %v1608
      %v1626 = vunpack.c.l.b16 %v1610
      %v1627 = vunpack.c.h.b16 %v1610
      %v1628 = vunpack.c.l.b16 %v1611
      %v1629 = vunpack.c.h.b16 %v1611
      %v1630 = vunpack.c.l.b16 %v1612
      %v1631 = vunpack.c.h.b16 %v1612
      %v1632 = vunpack.c.l.b16 %v1613
      %v1633 = vunpack.c.h.b16 %v1613
      %v1634 = vunpack.c.l.b16 %v1614
      %v1635 = vunpack.c.h.b16 %v1614
      %v1636 = vunpack.c.l.b16 %v1615
      %v1637 = vunpack.c.h.b16 %v1615
      %v1638 = vunpack.c.l.b16 %v1616
      %v1639 = vunpack.c.h.b16 %v1616
      %v1640 = vunpack.c.l.b16 %v1617
      %v1641 = vunpack.c.h.b16 %v1617
      %v1642 = vpack.c.b16 %v1626, %v1626
      %v1643 = vpack.c.b16 %v1627, %v1627
      %v1644 = vpack.c.b16 %v1628, %v1628
      %v1645 = vpack.c.b16 %v1629, %v1629
      %v1646 = vpack.c.b16 %v1630, %v1630
      %v1647 = vpack.c.b16 %v1631, %v1631
      %v1648 = vpack.c.b16 %v1632, %v1632
      %v1649 = vpack.c.b16 %v1633, %v1633
      %v1650 = vpack.c.b16 %v1634, %v1634
      %v1651 = vpack.c.b16 %v1635, %v1635
      %v1652 = vpack.c.b16 %v1636, %v1636
      %v1653 = vpack.c.b16 %v1637, %v1637
      %v1654 = vpack.c.b16 %v1638, %v1638
      %v1655 = vpack.c.b16 %v1639, %v1639
      %v1656 = vpack.c.b16 %v1640, %v1640
      %v1657 = vpack.c.b16 %v1641, %v1641
      %1674 = vst [vmem:[%s170] sm:$0xf] %v1642
      %1675 = vst [vmem:[%s170 + $0x4] sm:$0xf] %v1643
      %1676 = vst [vmem:[%s170 + $0x8] sm:$0xf] %v1644
      %1677 = vst [vmem:[%s170 + $0xc] sm:$0xf] %v1645
      %1678 = vst [vmem:[%s170 + $0x10] sm:$0xf] %v1646
      %1679 = vst [vmem:[%s170 + $0x14] sm:$0xf] %v1647
      %1680 = vst [vmem:[%s170 + $0x18] sm:$0xf] %v1648
      %1681 = vst [vmem:[%s170 + $0x1c] sm:$0xf] %v1649
      %1682 = vst [vmem:[%s170 + $0x20] sm:$0xf] %v1650
      %1683 = vst [vmem:[%s170 + $0x24] sm:$0xf] %v1651
      %1684 = vst [vmem:[%s170 + $0x28] sm:$0xf] %v1652
      %1685 = vst [vmem:[%s170 + $0x2c] sm:$0xf] %v1653
      %1686 = vst [vmem:[%s170 + $0x30] sm:$0xf] %v1654
      %1687 = vst [vmem:[%s170 + $0x34] sm:$0xf] %v1655
      %1688 = vst [vmem:[%s170 + $0x38] sm:$0xf] %v1656
      %1689 = vst [vmem:[%s170 + $0x3c] sm:$0xf] %v1657
      %p1690 = scmp.lt.s32.totalorder %s14, 1
      %s1691 = scalar_select %p1690, %s14, 1
      %s1692 = smul.addr %s1691, 16
      %s1693 = smul.addr %s1692, 4
      %s1694 = scalar_lea.vmem %s3, %s1693
      // Predicated region
      $region33: #{_ts_forward.4} parent=31 // pred_check
        %p1695 = pneg %p100
      $region34: #{_ts_forward.4} parent=31 // pred_check_branch
        %1697 = sbr.rel (%p1695) target = $region36
      $region35: #{_ts_forward.4} parent=31 // pred_region
        _
      $region36: #{_ts_forward.4} parent=31 // pred_fallthru
        _
    $region32: #{_ts_forward.4} parent=5 // pred_fallthru
      _
    %p1698 = scmp.le.s32.totalorder 2, %s9
    // Predicated region
    $region37: #{_ts_forward.4} parent=5 // pred_check
      %p1699 = pneg %p1698
    $region38: #{_ts_forward.4} parent=5 // pred_check_branch
      %1701 = sbr.rel (%p1699) target = $region40
    $region39: #{_ts_forward.4} parent=5 // pred_region
      %s1702 = ssub.s32 %s9, 2
      // Predicated region
      $region41: #{_ts_forward.4} parent=39 // pred_check
        %p1703 = pneg %p106
      $region42: #{_ts_forward.4} parent=39 // pred_check_branch
        %1705 = sbr.rel (%p1703) target = $region44
      $region43: #{_ts_forward.4} parent=39 // pred_region
        %p1706 = scmp.lt.s32.totalorder %s15, 1
        %s1707 = scalar_select %p1706, %s15, 1
        %s1708 = smul.addr %s1707, 16
        %s1709 = smul.addr %s1708, 4
        %s1710 = scalar_lea.vmem %s3, %s1709
      $region44: #{_ts_forward.4} parent=39 // pred_fallthru
        _
    $region40: #{_ts_forward.4} parent=5 // pred_fallthru
      _
  $region6: #{_ts_forward.4} parent=0 // loop_footer
    %s13 = sadd.s32 1, %s9
  $region7: #{_ts_forward.4} parent=0 // loop_footer_branch
    %8 = sbr.rel target = $region3
  $region8: #{_ts_forward.4} parent=0 // loop_exit
    _

// kernel: _ts_forward.5
$region0: #{_ts_forward.5}
  #allocation0 [shape = 'u32[]', space=smem, size = 0x4, offset = 0x4, fixed_abs, tag = 'smem constant byte address 0x4 - core index']
  #allocation1 [shape = 'u32[144,128]{1,0:T(1,128)}', space=vmem, size = 0x12000, scoped, tag = 'internal scratch']
  #allocation2 [shape = 'bf16[64,576]{1,0:T(16,128)(2,1)}', space=vmem, size = 0x14000, scoped, tag = 'scratch operand']
  %s0 = inlined_call_operand.vmem [shape: bf16[2,112,64], index: 0, kind: input, shape index: {}]
  %s1 = inlined_call_operand.vmem [shape: bf16[576,128], index: 1, kind: input, shape index: {}]
  %s2 = inlined_call_operand.vmem [shape: f32[1,128], index: 2, kind: input, shape index: {}]
  %s3 = inlined_call_operand.vmem [shape: bf16[2,64,128], index: 3, kind: output, shape index: {}]
  %s4 = sld [smem:[#allocation0]]
  $region45: #{_ts_forward.5} parent=0
    _
  %s6 = ssub.s32 1, %s4
  %s7 = scalar_select 0, %s6, %s4
  loop: start=0, step=1, limit=4
  $region2: #{_ts_forward.5} parent=0 // loop_pre_header
    _
  $region3: #{_ts_forward.5} parent=0 // loop_header
    %s9 = sphi 0, %s13
    %p10 = scmp.ge.s32.totalorder %s9, 4
    %s19 = sphi 0, %s21
    %s22 = sphi 0, %s19
    %s23 = sphi 0, %s22
    %s39 = sphi 0, %s23
    %s43 = sphi 0, %s43
    %s45 = sphi 0, %s43
    %s46 = sphi 0, %s45
    %s60 = sphi 0, %s46
    %s64 = sphi 0, %s64
    %s66 = sphi 0, %s64
    %s67 = sphi 0, %s66
    %s81 = sphi 0, %s67
    %s87 = sphi 0, %s89
    %s90 = sphi 0, %s87
    %s91 = sphi 0, %s90
    %s107 = sphi 0, %s91
  $region4: #{_ts_forward.5} parent=0 // loop_header_branch
    %12 = sbr.rel (%p10) target = $region8
  $region5: #{_ts_forward.5} parent=0 // loop_body
    %s14 = ssub.s32 %s9, 1
    %s15 = ssub.s32 %s9, 2
    %s16 = sadd.s32 %s9, 1
    %s17 = ssub.s32 %s9, %s16
    %p18 = scmp.eq.s32.totalorder %s17, 0
    %s20 = sadd.s32 %s19, 1
    %s21 = scalar_select %p18, %s19, %s20
    %p24 = pneg %p18
    %p25 = scmp.eq.s32.totalorder %s9, 1
    %p26 = por %p24, %p25
    %p27 = scmp.ne.s32.totalorder %s19, %s22
    %p28 = scmp.eq.s32.totalorder %s9, 0
    %p29 = por %p27, %p28
    %p30 = scmp.ne.s32.totalorder %s19, %s22
    %p31 = scmp.eq.s32.totalorder %s14, 1
    %p32 = por %p30, %p31
    %p33 = scmp.ne.s32.totalorder %s22, %s23
    %p34 = scmp.eq.s32.totalorder %s14, 0
    %p35 = por %p33, %p34
    %p36 = scmp.ne.s32.totalorder %s22, %s23
    %p37 = scmp.eq.s32.totalorder %s15, 1
    %p38 = por %p36, %p37
    %p40 = scmp.ne.s32.totalorder %s23, %s39
    %p41 = scmp.eq.s32.totalorder %s15, 0
    %p42 = por %p40, %p41
    %s44 = sadd.s32 %s43, 1
    %p47 = scmp.eq.s32.totalorder %s9, 1
    %p48 = scmp.ne.s32.totalorder %s43, %s45
    %p49 = scmp.eq.s32.totalorder %s9, 0
    %p50 = por %p48, %p49
    %p51 = scmp.ne.s32.totalorder %s43, %s45
    %p52 = scmp.eq.s32.totalorder %s14, 1
    %p53 = por %p51, %p52
    %p54 = scmp.ne.s32.totalorder %s45, %s46
    %p55 = scmp.eq.s32.totalorder %s14, 0
    %p56 = por %p54, %p55
    %p57 = scmp.ne.s32.totalorder %s45, %s46
    %p58 = scmp.eq.s32.totalorder %s15, 1
    %p59 = por %p57, %p58
    %p61 = scmp.ne.s32.totalorder %s46, %s60
    %p62 = scmp.eq.s32.totalorder %s15, 0
    %p63 = por %p61, %p62
    %s65 = sadd.s32 %s64, 1
    %p68 = scmp.eq.s32.totalorder %s9, 1
    %p69 = scmp.ne.s32.totalorder %s64, %s66
    %p70 = scmp.eq.s32.totalorder %s9, 0
    %p71 = por %p69, %p70
    %p72 = scmp.ne.s32.totalorder %s64, %s66
    %p73 = scmp.eq.s32.totalorder %s14, 1
    %p74 = por %p72, %p73
    %p75 = scmp.ne.s32.totalorder %s66, %s67
    %p76 = scmp.eq.s32.totalorder %s14, 0
    %p77 = por %p75, %p76
    %p78 = scmp.ne.s32.totalorder %s66, %s67
    %p79 = scmp.eq.s32.totalorder %s15, 1
    %p80 = por %p78, %p79
    %p82 = scmp.ne.s32.totalorder %s67, %s81
    %p83 = scmp.eq.s32.totalorder %s15, 0
    %p84 = por %p82, %p83
    %s85 = ssub.s32 %s9, %s16
    %p86 = scmp.eq.s32.totalorder %s85, 0
    %s88 = sadd.s32 %s87, 1
    %s89 = scalar_select %p86, %s87, %s88
    %p92 = pneg %p86
    %p93 = scmp.eq.s32.totalorder %s9, 1
    %p94 = por %p92, %p93
    %p95 = scmp.ne.s32.totalorder %s87, %s90
    %p96 = scmp.eq.s32.totalorder %s9, 0
    %p97 = por %p95, %p96
    %p98 = scmp.ne.s32.totalorder %s87, %s90
    %p99 = scmp.eq.s32.totalorder %s14, 1
    %p100 = por %p98, %p99
    %p101 = scmp.ne.s32.totalorder %s90, %s91
    %p102 = scmp.eq.s32.totalorder %s14, 0
    %p103 = por %p101, %p102
    %p104 = scmp.ne.s32.totalorder %s90, %s91
    %p105 = scmp.eq.s32.totalorder %s15, 1
    %p106 = por %p104, %p105
    %p108 = scmp.ne.s32.totalorder %s91, %s107
    %p109 = scmp.eq.s32.totalorder %s15, 0
    %p110 = por %p108, %p109
    %p111 = scmp.le.s32.totalorder 1, %s9
    %p112 = scmp.lt.s32.totalorder %s9, 3
    %p113 = pnand %p111, %p112
    %p114 = pneg %p113
    // Predicated region
    $region9: #{_ts_forward.5} parent=5 // pred_check
      _
    $region10: #{_ts_forward.5} parent=5 // pred_check_branch
      %116 = sbr.rel (%p113) target = $region12
    $region11: #{_ts_forward.5} parent=5 // pred_region
      %s117 = ssub.s32 %s9, 1
      // Predicated region
      $region13: #{_ts_forward.5} parent=11 // pred_check
        %p118 = pneg %p56
      $region14: #{_ts_forward.5} parent=11 // pred_check_branch
        %120 = sbr.rel (%p118) target = $region16
      $region15: #{_ts_forward.5} parent=11 // pred_region
        _
      $region16: #{_ts_forward.5} parent=11 // pred_fallthru
        _
      // Predicated region
      $region17: #{_ts_forward.5} parent=11 // pred_check
        %p121 = pneg %p77
      $region18: #{_ts_forward.5} parent=11 // pred_check_branch
        %123 = sbr.rel (%p121) target = $region20
      $region19: #{_ts_forward.5} parent=11 // pred_region
        _
      $region20: #{_ts_forward.5} parent=11 // pred_fallthru
        _
    $region12: #{_ts_forward.5} parent=5 // pred_fallthru
      _
    %p124 = scmp.lt.s32.totalorder %s9, 2
    // Predicated region
    $region21: #{_ts_forward.5} parent=5 // pred_check
      %p125 = pneg %p124
    $region22: #{_ts_forward.5} parent=5 // pred_check_branch
      %127 = sbr.rel (%p125) target = $region24
    $region23: #{_ts_forward.5} parent=5 // pred_region
      // Predicated region
      $region25: #{_ts_forward.5} parent=23 // pred_check
        %p128 = pneg %p29
      $region26: #{_ts_forward.5} parent=23 // pred_check_branch
        %130 = sbr.rel (%p128) target = $region28
      $region27: #{_ts_forward.5} parent=23 // pred_region
        %p131 = scmp.lt.s32.totalorder %s9, 1
        %s132 = scalar_select %p131, %s9, 1
        %s133 = smul.addr %s132, 14
        %s134 = smul.addr %s133, 4
        %s135 = scalar_lea.vmem %s0, %s134
      $region28: #{_ts_forward.5} parent=23 // pred_fallthru
        _
    $region24: #{_ts_forward.5} parent=5 // pred_fallthru
      _
    %p136 = scmp.le.s32.totalorder 1, %s9
    %p137 = scmp.lt.s32.totalorder %s9, 3
    %p138 = pnand %p136, %p137
    %p139 = pneg %p138
    // Predicated region
    $region29: #{_ts_forward.5} parent=5 // pred_check
      _
    $region30: #{_ts_forward.5} parent=5 // pred_check_branch
      %141 = sbr.rel (%p138) target = $region32
    $region31: #{_ts_forward.5} parent=5 // pred_region
      %s142 = ssub.s32 %s9, 1
      %p143 = scmp.lt.s32.totalorder %s14, 1
      %s144 = scalar_select %p143, %s14, 1
      %s145 = smul.addr %s144, 14
      %s146 = smul.addr %s145, 4
      %s147 = scalar_lea.vmem %s0, %s146
      %p148 = pneg %p35
      %p149 = pneg %p32
      %p150 = pneg %p56
      %p151 = pneg %p53
      %p152 = pneg %p77
      %p153 = pneg %p74
      %p154 = pneg %p103
      %p155 = pneg %p100
      %p156 = scmp.lt.s32.totalorder %s14, 1
      %s157 = scalar_select %p156, %s14, 1
      %s158 = smul.addr %s157, 8
      %s159 = smul.addr %s158, 4
      %s160 = scalar_lea.vmem %s3, %s159
      %p161 = scmp.lt.s32.totalorder %s14, 1
      %s162 = scalar_select %p161, %s14, 1
      %s163 = smul.addr %s162, 14
      %s164 = smul.addr %s163, 4
      %s165 = scalar_lea.vmem %s0, %s164
      %p166 = scmp.lt.s32.totalorder %s14, 1
      %s167 = scalar_select %p166, %s14, 1
      %s168 = smul.addr %s167, 8
      %s169 = smul.addr %s168, 4
      %s170 = scalar_lea.vmem %s3, %s169
      %v172 = vld [vmem:[%s165] sm:$0xf]
      %v173 = vld [vmem:[%s165 + $0x4] sm:$0xf]
      %v174 = vld [vmem:[%s165 + $0x8] sm:$0xf]
      %v175 = vld [vmem:[%s165 + $0xc] sm:$0xf]
      %v176 = vld [vmem:[%s165 + $0x10] sm:$0xf]
      %v177 = vld [vmem:[%s165 + $0x14] sm:$0xf]
      %v178 = vld [vmem:[%s165 + $0x18] sm:$0xf]
      %v179 = vld [vmem:[%s165 + $0x1c] sm:$0xf]
      %v188 = vunpack.c.l.b16 %v172
      %v189 = vunpack.c.l.b16 %v173
      %v190 = vunpack.c.l.b16 %v174
      %v191 = vunpack.c.l.b16 %v175
      %v192 = vunpack.c.l.b16 %v176
      %v193 = vunpack.c.l.b16 %v177
      %v194 = vunpack.c.l.b16 %v178
      %v195 = vunpack.c.l.b16 %v179
      %v196 = vpack.c.b16 %v189, %v188
      %v197 = vpack.c.b16 %v191, %v190
      %v198 = vpack.c.b16 %v193, %v192
      %v199 = vpack.c.b16 %v195, %v194
      %vm204 = vcmask 523264
      %205 = vst.msk [vmem:[#allocation2] sm:$0xff] %vm204, %v196
      %206 = vst.msk [vmem:[#allocation2 + $0x28] sm:$0xff] %vm204, %v197
      %207 = vst.msk [vmem:[#allocation2 + $0x50] sm:$0xff] %vm204, %v198
      %208 = vst.msk [vmem:[#allocation2 + $0x78] sm:$0xff] %vm204, %v199
      %v209 = vld [vmem:[%s165] sm:$0xf]
      %v210 = vld [vmem:[%s165 + $0x4] sm:$0xf]
      %v211 = vld [vmem:[%s165 + $0x8] sm:$0xf]
      %v212 = vld [vmem:[%s165 + $0xc] sm:$0xf]
      %v213 = vld [vmem:[%s165 + $0x10] sm:$0xf]
      %v214 = vld [vmem:[%s165 + $0x14] sm:$0xf]
      %v215 = vld [vmem:[%s165 + $0x18] sm:$0xf]
      %v216 = vld [vmem:[%s165 + $0x1c] sm:$0xf]
      %v217 = vld [vmem:[%s165 + $0x20] sm:$0x1]
      %v227 = vunpack.c.l.b16 %v209
      %v228 = vunpack.c.l.b16 %v210
      %v229 = vunpack.c.l.b16 %v211
      %v230 = vunpack.c.l.b16 %v212
      %v231 = vunpack.c.l.b16 %v213
      %v232 = vunpack.c.l.b16 %v214
      %v233 = vunpack.c.l.b16 %v215
      %v234 = vunpack.c.l.b16 %v216
      %v235 = vunpack.c.l.b16 %v217
      %v236 = vpack.c.b16 %v228, %v227
      %v237 = vpack.c.b16 %v230, %v229
      %v238 = vpack.c.b16 %v232, %v231
      %v239 = vpack.c.b16 %v234, %v233
      %v240 = vpack.c.b16 %v235, %v235
      %vm241 = vsmask.f32 7424
      %v243 = vshrl.u32 %v236, 16
      %v245 = vshll.u32 %v236, 16
      %v247 = vrot.slane %v245, 1
      %v248 = vor.u32 %v243, %v247
      %v250 = vshll.u32 %v237, 16
      %v252 = vrot.slane %v250, 1
      %v253 = vsel %vm241, %v248, %v252
      %v254 = vshrl.u32 %v237, 16
      %v256 = vor.u32 %v254, %v252
      %v258 = vshll.u32 %v238, 16
      %v260 = vrot.slane %v258, 1
      %v261 = vsel %vm241, %v256, %v260
      %v262 = vshrl.u32 %v238, 16
      %v264 = vor.u32 %v262, %v260
      %v266 = vshll.u32 %v239, 16
      %v268 = vrot.slane %v266, 1
      %v269 = vsel %vm241, %v264, %v268
      %v270 = vshrl.u32 %v239, 16
      %v272 = vor.u32 %v270, %v268
      %v274 = vshll.u32 %v240, 16
      %v276 = vrot.slane %v274, 1
      %v277 = vsel %vm241, %v272, %v276
      %278 = vrot.lane.b32.xlu0 %v253, 64
      %v279 = vpop.permute.xlu0 %278
      %280 = vrot.lane.b32.xlu0 %v261, 64
      %v281 = vpop.permute.xlu0 %280
      %282 = vrot.lane.b32.xlu0 %v269, 64
      %v283 = vpop.permute.xlu0 %282
      %284 = vrot.lane.b32.xlu0 %v277, 64
      %v285 = vpop.permute.xlu0 %284
      %vm290 = vcmask 1048064
      %291 = vst.msk [vmem:[#allocation2] sm:$0xff] %vm290, %v279
      %292 = vst.msk [vmem:[#allocation2 + $0x28] sm:$0xff] %vm290, %v281
      %293 = vst.msk [vmem:[#allocation2 + $0x50] sm:$0xff] %vm290, %v283
      %294 = vst.msk [vmem:[#allocation2 + $0x78] sm:$0xff] %vm290, %v285
      %v295 = vld [vmem:[%s165] sm:$0xe]
      %v296 = vld [vmem:[%s165 + $0x4] sm:$0xf]
      %v297 = vld [vmem:[%s165 + $0x8] sm:$0xf]
      %v298 = vld [vmem:[%s165 + $0xc] sm:$0xf]
      %v299 = vld [vmem:[%s165 + $0x10] sm:$0xf]
      %v300 = vld [vmem:[%s165 + $0x14] sm:$0xf]
      %v301 = vld [vmem:[%s165 + $0x18] sm:$0xf]
      %v302 = vld [vmem:[%s165 + $0x1c] sm:$0xf]
      %v303 = vld [vmem:[%s165 + $0x20] sm:$0x1]
      %v313 = vunpack.c.l.b16 %v295
      %v314 = vunpack.c.l.b16 %v296
      %v315 = vunpack.c.l.b16 %v297
      %v316 = vunpack.c.l.b16 %v298
      %v317 = vunpack.c.l.b16 %v299
      %v318 = vunpack.c.l.b16 %v300
      %v319 = vunpack.c.l.b16 %v301
      %v320 = vunpack.c.l.b16 %v302
      %v321 = vunpack.c.l.b16 %v303
      %v322 = vpack.c.b16 %v314, %v313
      %v323 = vpack.c.b16 %v316, %v315
      %v324 = vpack.c.b16 %v318, %v317
      %v325 = vpack.c.b16 %v320, %v319
      %v326 = vpack.c.b16 %v321, %v321
      %vm327 = vcmask 1046528
      %v328 = vrot.slane %v322, 1
      %v329 = vrot.slane %v323, 1
      %v330 = vsel %vm327, %v328, %v329
      %v331 = vrot.slane %v324, 1
      %v332 = vsel %vm327, %v329, %v331
      %v333 = vrot.slane %v325, 1
      %v334 = vsel %vm327, %v331, %v333
      %v335 = vrot.slane %v326, 1
      %v336 = vsel %vm327, %v333, %v335
      %341 = vst.msk [vmem:[#allocation2 + $0x8] sm:$0xff] %vm204, %v330
      %342 = vst.msk [vmem:[#allocation2 + $0x30] sm:$0xff] %vm204, %v332
      %343 = vst.msk [vmem:[#allocation2 + $0x58] sm:$0xff] %vm204, %v334
      %344 = vst.msk [vmem:[#allocation2 + $0x80] sm:$0xff] %vm204, %v336
      %v345 = vld [vmem:[%s165 + $0x8] sm:$0xf]
      %v346 = vld [vmem:[%s165 + $0xc] sm:$0xf]
      %v347 = vld [vmem:[%s165 + $0x10] sm:$0xf]
      %v348 = vld [vmem:[%s165 + $0x14] sm:$0xf]
      %v349 = vld [vmem:[%s165 + $0x18] sm:$0xf]
      %v350 = vld [vmem:[%s165 + $0x1c] sm:$0xf]
      %v351 = vld [vmem:[%s165 + $0x20] sm:$0xf]
      %v352 = vld [vmem:[%s165 + $0x24] sm:$0xf]
      %v361 = vunpack.c.l.b16 %v345
      %v362 = vunpack.c.l.b16 %v346
      %v363 = vunpack.c.l.b16 %v347
      %v364 = vunpack.c.l.b16 %v348
      %v365 = vunpack.c.l.b16 %v349
      %v366 = vunpack.c.l.b16 %v350
      %v367 = vunpack.c.l.b16 %v351
      %v368 = vunpack.c.l.b16 %v352
      %v369 = vpack.c.b16 %v362, %v361
      %v370 = vpack.c.b16 %v364, %v363
      %v371 = vpack.c.b16 %v366, %v365
      %v372 = vpack.c.b16 %v368, %v367
      %373 = vrot.lane.b32.xlu0 %v369, 64
      %v374 = vpop.permute.xlu0 %373
      %375 = vrot.lane.b32.xlu0 %v370, 64
      %v376 = vpop.permute.xlu0 %375
      %377 = vrot.lane.b32.xlu0 %v371, 64
      %v378 = vpop.permute.xlu0 %377
      %379 = vrot.lane.b32.xlu0 %v372, 64
      %v380 = vpop.permute.xlu0 %379
      %385 = vst.msk [vmem:[#allocation2 + $0x8] sm:$0xff] %vm290, %v374
      %386 = vst.msk [vmem:[#allocation2 + $0x30] sm:$0xff] %vm290, %v376
      %387 = vst.msk [vmem:[#allocation2 + $0x58] sm:$0xff] %vm290, %v378
      %388 = vst.msk [vmem:[#allocation2 + $0x80] sm:$0xff] %vm290, %v380
      %v389 = vld [vmem:[%s165 + $0x8] sm:$0xf]
      %v390 = vld [vmem:[%s165 + $0xc] sm:$0xf]
      %v391 = vld [vmem:[%s165 + $0x10] sm:$0xf]
      %v392 = vld [vmem:[%s165 + $0x14] sm:$0xf]
      %v393 = vld [vmem:[%s165 + $0x18] sm:$0xf]
      %v394 = vld [vmem:[%s165 + $0x1c] sm:$0xf]
      %v395 = vld [vmem:[%s165 + $0x20] sm:$0xf]
      %v396 = vld [vmem:[%s165 + $0x24] sm:$0xf]
      %v397 = vld [vmem:[%s165 + $0x28] sm:$0x1]
      %v407 = vunpack.c.l.b16 %v389
      %v408 = vunpack.c.l.b16 %v390
      %v409 = vunpack.c.l.b16 %v391
      %v410 = vunpack.c.l.b16 %v392
      %v411 = vunpack.c.l.b16 %v393
      %v412 = vunpack.c.l.b16 %v394
      %v413 = vunpack.c.l.b16 %v395
      %v414 = vunpack.c.l.b16 %v396
      %v415 = vunpack.c.l.b16 %v397
      %v416 = vpack.c.b16 %v408, %v407
      %v417 = vpack.c.b16 %v410, %v409
      %v418 = vpack.c.b16 %v412, %v411
      %v419 = vpack.c.b16 %v414, %v413
      %v420 = vpack.c.b16 %v415, %v415
      %v422 = vshrl.u32 %v416, 16
      %v424 = vshll.u32 %v416, 16
      %v426 = vrot.slane %v424, 1
      %v427 = vor.u32 %v422, %v426
      %v429 = vshll.u32 %v417, 16
      %v431 = vrot.slane %v429, 1
      %v432 = vsel %vm241, %v427, %v431
      %v433 = vshrl.u32 %v417, 16
      %v435 = vor.u32 %v433, %v431
      %v437 = vshll.u32 %v418, 16
      %v439 = vrot.slane %v437, 1
      %v440 = vsel %vm241, %v435, %v439
      %v441 = vshrl.u32 %v418, 16
      %v443 = vor.u32 %v441, %v439
      %v445 = vshll.u32 %v419, 16
      %v447 = vrot.slane %v445, 1
      %v448 = vsel %vm241, %v443, %v447
      %v449 = vshrl.u32 %v419, 16
      %v451 = vor.u32 %v449, %v447
      %v453 = vshll.u32 %v420, 16
      %v455 = vrot.slane %v453, 1
      %v456 = vsel %vm241, %v451, %v455
      %461 = vst.msk [vmem:[#allocation2 + $0x10] sm:$0xff] %vm204, %v432
      %462 = vst.msk [vmem:[#allocation2 + $0x38] sm:$0xff] %vm204, %v440
      %463 = vst.msk [vmem:[#allocation2 + $0x60] sm:$0xff] %vm204, %v448
      %464 = vst.msk [vmem:[#allocation2 + $0x88] sm:$0xff] %vm204, %v456
      %v465 = vld [vmem:[%s165 + $0x8] sm:$0xe]
      %v466 = vld [vmem:[%s165 + $0xc] sm:$0xf]
      %v467 = vld [vmem:[%s165 + $0x10] sm:$0xf]
      %v468 = vld [vmem:[%s165 + $0x14] sm:$0xf]
      %v469 = vld [vmem:[%s165 + $0x18] sm:$0xf]
      %v470 = vld [vmem:[%s165 + $0x1c] sm:$0xf]
      %v471 = vld [vmem:[%s165 + $0x20] sm:$0xf]
      %v472 = vld [vmem:[%s165 + $0x24] sm:$0xf]
      %v473 = vld [vmem:[%s165 + $0x28] sm:$0x1]
      %v483 = vunpack.c.l.b16 %v465
      %v484 = vunpack.c.l.b16 %v466
      %v485 = vunpack.c.l.b16 %v467
      %v486 = vunpack.c.l.b16 %v468
      %v487 = vunpack.c.l.b16 %v469
      %v488 = vunpack.c.l.b16 %v470
      %v489 = vunpack.c.l.b16 %v471
      %v490 = vunpack.c.l.b16 %v472
      %v491 = vunpack.c.l.b16 %v473
      %v492 = vpack.c.b16 %v484, %v483
      %v493 = vpack.c.b16 %v486, %v485
      %v494 = vpack.c.b16 %v488, %v487
      %v495 = vpack.c.b16 %v490, %v489
      %v496 = vpack.c.b16 %v491, %v491
      %v497 = vrot.slane %v492, 1
      %v498 = vrot.slane %v493, 1
      %v499 = vsel %vm327, %v497, %v498
      %v500 = vrot.slane %v494, 1
      %v501 = vsel %vm327, %v498, %v500
      %v502 = vrot.slane %v495, 1
      %v503 = vsel %vm327, %v500, %v502
      %v504 = vrot.slane %v496, 1
      %v505 = vsel %vm327, %v502, %v504
      %506 = vrot.lane.b32.xlu0 %v499, 64
      %v507 = vpop.permute.xlu0 %506
      %508 = vrot.lane.b32.xlu0 %v501, 64
      %v509 = vpop.permute.xlu0 %508
      %510 = vrot.lane.b32.xlu0 %v503, 64
      %v511 = vpop.permute.xlu0 %510
      %512 = vrot.lane.b32.xlu0 %v505, 64
      %v513 = vpop.permute.xlu0 %512
      %518 = vst.msk [vmem:[#allocation2 + $0x10] sm:$0xff] %vm290, %v507
      %519 = vst.msk [vmem:[#allocation2 + $0x38] sm:$0xff] %vm290, %v509
      %520 = vst.msk [vmem:[#allocation2 + $0x60] sm:$0xff] %vm290, %v511
      %521 = vst.msk [vmem:[#allocation2 + $0x88] sm:$0xff] %vm290, %v513
      %v522 = vld [vmem:[%s165 + $0x10] sm:$0xf]
      %v523 = vld [vmem:[%s165 + $0x14] sm:$0xf]
      %v524 = vld [vmem:[%s165 + $0x18] sm:$0xf]
      %v525 = vld [vmem:[%s165 + $0x1c] sm:$0xf]
      %v526 = vld [vmem:[%s165 + $0x20] sm:$0xf]
      %v527 = vld [vmem:[%s165 + $0x24] sm:$0xf]
      %v528 = vld [vmem:[%s165 + $0x28] sm:$0xf]
      %v529 = vld [vmem:[%s165 + $0x2c] sm:$0xf]
      %v538 = vunpack.c.l.b16 %v522
      %v539 = vunpack.c.l.b16 %v523
      %v540 = vunpack.c.l.b16 %v524
      %v541 = vunpack.c.l.b16 %v525
      %v542 = vunpack.c.l.b16 %v526
      %v543 = vunpack.c.l.b16 %v527
      %v544 = vunpack.c.l.b16 %v528
      %v545 = vunpack.c.l.b16 %v529
      %v546 = vpack.c.b16 %v539, %v538
      %v547 = vpack.c.b16 %v541, %v540
      %v548 = vpack.c.b16 %v543, %v542
      %v549 = vpack.c.b16 %v545, %v544
      %554 = vst.msk [vmem:[#allocation2 + $0x18] sm:$0xff] %vm204, %v546
      %555 = vst.msk [vmem:[#allocation2 + $0x40] sm:$0xff] %vm204, %v547
      %556 = vst.msk [vmem:[#allocation2 + $0x68] sm:$0xff] %vm204, %v548
      %557 = vst.msk [vmem:[#allocation2 + $0x90] sm:$0xff] %vm204, %v549
      %v558 = vld [vmem:[%s165 + $0x10] sm:$0xf]
      %v559 = vld [vmem:[%s165 + $0x14] sm:$0xf]
      %v560 = vld [vmem:[%s165 + $0x18] sm:$0xf]
      %v561 = vld [vmem:[%s165 + $0x1c] sm:$0xf]
      %v562 = vld [vmem:[%s165 + $0x20] sm:$0xf]
      %v563 = vld [vmem:[%s165 + $0x24] sm:$0xf]
      %v564 = vld [vmem:[%s165 + $0x28] sm:$0xf]
      %v565 = vld [vmem:[%s165 + $0x2c] sm:$0xf]
      %v566 = vld [vmem:[%s165 + $0x30] sm:$0x1]
      %v576 = vunpack.c.l.b16 %v558
      %v577 = vunpack.c.l.b16 %v559
      %v578 = vunpack.c.l.b16 %v560
      %v579 = vunpack.c.l.b16 %v561
      %v580 = vunpack.c.l.b16 %v562
      %v581 = vunpack.c.l.b16 %v563
      %v582 = vunpack.c.l.b16 %v564
      %v583 = vunpack.c.l.b16 %v565
      %v584 = vunpack.c.l.b16 %v566
      %v585 = vpack.c.b16 %v577, %v576
      %v586 = vpack.c.b16 %v579, %v578
      %v587 = vpack.c.b16 %v581, %v580
      %v588 = vpack.c.b16 %v583, %v582
      %v589 = vpack.c.b16 %v584, %v584
      %v591 = vshrl.u32 %v585, 16
      %v593 = vshll.u32 %v585, 16
      %v595 = vrot.slane %v593, 1
      %v596 = vor.u32 %v591, %v595
      %v598 = vshll.u32 %v586, 16
      %v600 = vrot.slane %v598, 1
      %v601 = vsel %vm241, %v596, %v600
      %v602 = vshrl.u32 %v586, 16
      %v604 = vor.u32 %v602, %v600
      %v606 = vshll.u32 %v587, 16
      %v608 = vrot.slane %v606, 1
      %v609 = vsel %vm241, %v604, %v608
      %v610 = vshrl.u32 %v587, 16
      %v612 = vor.u32 %v610, %v608
      %v614 = vshll.u32 %v588, 16
      %v616 = vrot.slane %v614, 1
      %v617 = vsel %vm241, %v612, %v616
      %v618 = vshrl.u32 %v588, 16
      %v620 = vor.u32 %v618, %v616
      %v622 = vshll.u32 %v589, 16
      %v624 = vrot.slane %v622, 1
      %v625 = vsel %vm241, %v620, %v624
      %626 = vrot.lane.b32.xlu0 %v601, 64
      %v627 = vpop.permute.xlu0 %626
      %628 = vrot.lane.b32.xlu0 %v609, 64
      %v629 = vpop.permute.xlu0 %628
      %630 = vrot.lane.b32.xlu0 %v617, 64
      %v631 = vpop.permute.xlu0 %630
      %632 = vrot.lane.b32.xlu0 %v625, 64
      %v633 = vpop.permute.xlu0 %632
      %638 = vst.msk [vmem:[#allocation2 + $0x18] sm:$0xff] %vm290, %v627
      %639 = vst.msk [vmem:[#allocation2 + $0x40] sm:$0xff] %vm290, %v629
      %640 = vst.msk [vmem:[#allocation2 + $0x68] sm:$0xff] %vm290, %v631
      %641 = vst.msk [vmem:[#allocation2 + $0x90] sm:$0xff] %vm290, %v633
      %v642 = vld [vmem:[%s165 + $0x10] sm:$0xe]
      %v643 = vld [vmem:[%s165 + $0x14] sm:$0xf]
      %v644 = vld [vmem:[%s165 + $0x18] sm:$0xf]
      %v645 = vld [vmem:[%s165 + $0x1c] sm:$0xf]
      %v646 = vld [vmem:[%s165 + $0x20] sm:$0xf]
      %v647 = vld [vmem:[%s165 + $0x24] sm:$0xf]
      %v648 = vld [vmem:[%s165 + $0x28] sm:$0xf]
      %v649 = vld [vmem:[%s165 + $0x2c] sm:$0xf]
      %v650 = vld [vmem:[%s165 + $0x30] sm:$0x1]
      %v660 = vunpack.c.l.b16 %v642
      %v661 = vunpack.c.l.b16 %v643
      %v662 = vunpack.c.l.b16 %v644
      %v663 = vunpack.c.l.b16 %v645
      %v664 = vunpack.c.l.b16 %v646
      %v665 = vunpack.c.l.b16 %v647
      %v666 = vunpack.c.l.b16 %v648
      %v667 = vunpack.c.l.b16 %v649
      %v668 = vunpack.c.l.b16 %v650
      %v669 = vpack.c.b16 %v661, %v660
      %v670 = vpack.c.b16 %v663, %v662
      %v671 = vpack.c.b16 %v665, %v664
      %v672 = vpack.c.b16 %v667, %v666
      %v673 = vpack.c.b16 %v668, %v668
      %v674 = vrot.slane %v669, 1
      %v675 = vrot.slane %v670, 1
      %v676 = vsel %vm327, %v674, %v675
      %v677 = vrot.slane %v671, 1
      %v678 = vsel %vm327, %v675, %v677
      %v679 = vrot.slane %v672, 1
      %v680 = vsel %vm327, %v677, %v679
      %v681 = vrot.slane %v673, 1
      %v682 = vsel %vm327, %v679, %v681
      %687 = vst.msk [vmem:[#allocation2 + $0x20] sm:$0xff] %vm204, %v676
      %688 = vst.msk [vmem:[#allocation2 + $0x48] sm:$0xff] %vm204, %v678
      %689 = vst.msk [vmem:[#allocation2 + $0x70] sm:$0xff] %vm204, %v680
      %690 = vst.msk [vmem:[#allocation2 + $0x98] sm:$0xff] %vm204, %v682
      %v691 = vld [vmem:[#allocation2] sm:$0xff]
      %v692 = vld [vmem:[#allocation2 + $0x8] sm:$0xff]
      %v693 = vld [vmem:[#allocation2 + $0x10] sm:$0xff]
      %v694 = vld [vmem:[#allocation2 + $0x18] sm:$0xff]
      %v695 = vld [vmem:[#allocation2 + $0x20] sm:$0xff]
      %v696 = vld [vmem:[#allocation2 + $0x28] sm:$0xff]
      %v697 = vld [vmem:[#allocation2 + $0x30] sm:$0xff]
      %v698 = vld [vmem:[#allocation2 + $0x38] sm:$0xff]
      %v699 = vld [vmem:[#allocation2 + $0x40] sm:$0xff]
      %v700 = vld [vmem:[#allocation2 + $0x48] sm:$0xff]
      %v701 = vld [vmem:[#allocation2 + $0x50] sm:$0xff]
      %v702 = vld [vmem:[#allocation2 + $0x58] sm:$0xff]
      %v703 = vld [vmem:[#allocation2 + $0x60] sm:$0xff]
      %v704 = vld [vmem:[#allocation2 + $0x68] sm:$0xff]
      %v705 = vld [vmem:[#allocation2 + $0x70] sm:$0xff]
      %v706 = vld [vmem:[#allocation2 + $0x78] sm:$0xff]
      %v707 = vld [vmem:[#allocation2 + $0x80] sm:$0xff]
      %v708 = vld [vmem:[#allocation2 + $0x88] sm:$0xff]
      %v709 = vld [vmem:[#allocation2 + $0x90] sm:$0xff]
      %v710 = vld [vmem:[#allocation2 + $0x98] sm:$0xff]
      %v711 = vld [vmem:[%s1] sm:$0xf]
      %v712 = vld [vmem:[%s1 + $0x4] sm:$0xf]
      %v713 = vld [vmem:[%s1 + $0x8] sm:$0xf]
      %v714 = vld [vmem:[%s1 + $0xc] sm:$0xf]
      %v715 = vld [vmem:[%s1 + $0x10] sm:$0xf]
      %v716 = vld [vmem:[%s1 + $0x14] sm:$0xf]
      %v717 = vld [vmem:[%s1 + $0x18] sm:$0xf]
      %v718 = vld [vmem:[%s1 + $0x1c] sm:$0xf]
      %v719 = vld [vmem:[%s1 + $0x20] sm:$0xf]
      %v720 = vld [vmem:[%s1 + $0x24] sm:$0xf]
      %v721 = vld [vmem:[%s1 + $0x28] sm:$0xf]
      %v722 = vld [vmem:[%s1 + $0x2c] sm:$0xf]
      %v723 = vld [vmem:[%s1 + $0x30] sm:$0xf]
      %v724 = vld [vmem:[%s1 + $0x34] sm:$0xf]
      %v725 = vld [vmem:[%s1 + $0x38] sm:$0xf]
      %v726 = vld [vmem:[%s1 + $0x3c] sm:$0xf]
      %v727 = vld [vmem:[%s1 + $0x40] sm:$0xf]
      %v728 = vld [vmem:[%s1 + $0x44] sm:$0xf]
      %v729 = vld [vmem:[%s1 + $0x48] sm:$0xf]
      %v730 = vld [vmem:[%s1 + $0x4c] sm:$0xf]
      %v731 = vld [vmem:[%s1 + $0x50] sm:$0xf]
      %v732 = vld [vmem:[%s1 + $0x54] sm:$0xf]
      %v733 = vld [vmem:[%s1 + $0x58] sm:$0xf]
      %v734 = vld [vmem:[%s1 + $0x5c] sm:$0xf]
      %v735 = vld [vmem:[%s1 + $0x60] sm:$0xf]
      %v736 = vld [vmem:[%s1 + $0x64] sm:$0xf]
      %v737 = vld [vmem:[%s1 + $0x68] sm:$0xf]
      %v738 = vld [vmem:[%s1 + $0x6c] sm:$0xf]
      %v739 = vld [vmem:[%s1 + $0x70] sm:$0xf]
      %v740 = vld [vmem:[%s1 + $0x74] sm:$0xf]
      %v741 = vld [vmem:[%s1 + $0x78] sm:$0xf]
      %v742 = vld [vmem:[%s1 + $0x7c] sm:$0xf]
      %v743 = vld [vmem:[%s1 + $0x80] sm:$0xf]
      %v744 = vld [vmem:[%s1 + $0x84] sm:$0xf]
      %v745 = vld [vmem:[%s1 + $0x88] sm:$0xf]
      %v746 = vld [vmem:[%s1 + $0x8c] sm:$0xf]
      %v747 = vld [vmem:[%s1 + $0x90] sm:$0xf]
      %v748 = vld [vmem:[%s1 + $0x94] sm:$0xf]
      %v749 = vld [vmem:[%s1 + $0x98] sm:$0xf]
      %v750 = vld [vmem:[%s1 + $0x9c] sm:$0xf]
      %v751 = vld [vmem:[%s1 + $0xa0] sm:$0xf]
      %v752 = vld [vmem:[%s1 + $0xa4] sm:$0xf]
      %v753 = vld [vmem:[%s1 + $0xa8] sm:$0xf]
      %v754 = vld [vmem:[%s1 + $0xac] sm:$0xf]
      %v755 = vld [vmem:[%s1 + $0xb0] sm:$0xf]
      %v756 = vld [vmem:[%s1 + $0xb4] sm:$0xf]
      %v757 = vld [vmem:[%s1 + $0xb8] sm:$0xf]
      %v758 = vld [vmem:[%s1 + $0xbc] sm:$0xf]
      %v759 = vld [vmem:[%s1 + $0xc0] sm:$0xf]
      %v760 = vld [vmem:[%s1 + $0xc4] sm:$0xf]
      %v761 = vld [vmem:[%s1 + $0xc8] sm:$0xf]
      %v762 = vld [vmem:[%s1 + $0xcc] sm:$0xf]
      %v763 = vld [vmem:[%s1 + $0xd0] sm:$0xf]
      %v764 = vld [vmem:[%s1 + $0xd4] sm:$0xf]
      %v765 = vld [vmem:[%s1 + $0xd8] sm:$0xf]
      %v766 = vld [vmem:[%s1 + $0xdc] sm:$0xf]
      %v767 = vld [vmem:[%s1 + $0xe0] sm:$0xf]
      %v768 = vld [vmem:[%s1 + $0xe4] sm:$0xf]
      %v769 = vld [vmem:[%s1 + $0xe8] sm:$0xf]
      %v770 = vld [vmem:[%s1 + $0xec] sm:$0xf]
      %v771 = vld [vmem:[%s1 + $0xf0] sm:$0xf]
      %v772 = vld [vmem:[%s1 + $0xf4] sm:$0xf]
      %v773 = vld [vmem:[%s1 + $0xf8] sm:$0xf]
      %v774 = vld [vmem:[%s1 + $0xfc] sm:$0xf]
      %v775 = vld [vmem:[%s1 + $0x100] sm:$0xf]
      %v776 = vld [vmem:[%s1 + $0x104] sm:$0xf]
      %v777 = vld [vmem:[%s1 + $0x108] sm:$0xf]
      %v778 = vld [vmem:[%s1 + $0x10c] sm:$0xf]
      %v779 = vld [vmem:[%s1 + $0x110] sm:$0xf]
      %v780 = vld [vmem:[%s1 + $0x114] sm:$0xf]
      %v781 = vld [vmem:[%s1 + $0x118] sm:$0xf]
      %v782 = vld [vmem:[%s1 + $0x11c] sm:$0xf]
      %v783 = vld [vmem:[%s2] sm:$0x1]
      %v785 = vlaneseq
      %v786 = vshrl.u32 %v785, 7
      %v787 = vsub.s32 0, %v786
      %v788 = vrot.slane %v783, %v787
      %v862 = vunpack.c.l.b16 %v711
      %v863 = vunpack.c.l.b16 %v712
      %v864 = vunpack.c.l.b16 %v713
      %v865 = vunpack.c.l.b16 %v714
      %v866 = vunpack.c.l.b16 %v715
      %v867 = vunpack.c.l.b16 %v716
      %v868 = vunpack.c.l.b16 %v717
      %v869 = vunpack.c.l.b16 %v718
      %v870 = vunpack.c.l.b16 %v719
      %v871 = vunpack.c.l.b16 %v720
      %v872 = vunpack.c.l.b16 %v721
      %v873 = vunpack.c.l.b16 %v722
      %v874 = vunpack.c.l.b16 %v723
      %v875 = vunpack.c.l.b16 %v724
      %v876 = vunpack.c.l.b16 %v725
      %v877 = vunpack.c.l.b16 %v726
      %v878 = vunpack.c.l.b16 %v727
      %v879 = vunpack.c.l.b16 %v728
      %v880 = vunpack.c.l.b16 %v729
      %v881 = vunpack.c.l.b16 %v730
      %v882 = vunpack.c.l.b16 %v731
      %v883 = vunpack.c.l.b16 %v732
      %v884 = vunpack.c.l.b16 %v733
      %v885 = vunpack.c.l.b16 %v734
      %v886 = vunpack.c.l.b16 %v735
      %v887 = vunpack.c.l.b16 %v736
      %v888 = vunpack.c.l.b16 %v737
      %v889 = vunpack.c.l.b16 %v738
      %v890 = vunpack.c.l.b16 %v739
      %v891 = vunpack.c.l.b16 %v740
      %v892 = vunpack.c.l.b16 %v741
      %v893 = vunpack.c.l.b16 %v742
      %v894 = vunpack.c.l.b16 %v743
      %v895 = vunpack.c.l.b16 %v744
      %v896 = vunpack.c.l.b16 %v745
      %v897 = vunpack.c.l.b16 %v746
      %v898 = vunpack.c.l.b16 %v747
      %v899 = vunpack.c.l.b16 %v748
      %v900 = vunpack.c.l.b16 %v749
      %v901 = vunpack.c.l.b16 %v750
      %v902 = vunpack.c.l.b16 %v751
      %v903 = vunpack.c.l.b16 %v752
      %v904 = vunpack.c.l.b16 %v753
      %v905 = vunpack.c.l.b16 %v754
      %v906 = vunpack.c.l.b16 %v755
      %v907 = vunpack.c.l.b16 %v756
      %v908 = vunpack.c.l.b16 %v757
      %v909 = vunpack.c.l.b16 %v758
      %v910 = vunpack.c.l.b16 %v759
      %v911 = vunpack.c.l.b16 %v760
      %v912 = vunpack.c.l.b16 %v761
      %v913 = vunpack.c.l.b16 %v762
      %v914 = vunpack.c.l.b16 %v763
      %v915 = vunpack.c.l.b16 %v764
      %v916 = vunpack.c.l.b16 %v765
      %v917 = vunpack.c.l.b16 %v766
      %v918 = vunpack.c.l.b16 %v767
      %v919 = vunpack.c.l.b16 %v768
      %v920 = vunpack.c.l.b16 %v769
      %v921 = vunpack.c.l.b16 %v770
      %v922 = vunpack.c.l.b16 %v771
      %v923 = vunpack.c.l.b16 %v772
      %v924 = vunpack.c.l.b16 %v773
      %v925 = vunpack.c.l.b16 %v774
      %v926 = vunpack.c.l.b16 %v775
      %v927 = vunpack.c.l.b16 %v776
      %v928 = vunpack.c.l.b16 %v777
      %v929 = vunpack.c.l.b16 %v778
      %v930 = vunpack.c.l.b16 %v779
      %v931 = vunpack.c.l.b16 %v780
      %v932 = vunpack.c.l.b16 %v781
      %v933 = vunpack.c.l.b16 %v782
      %v934 = vpack.c.b16 %v863, %v862
      %v935 = vpack.c.b16 %v865, %v864
      %v936 = vpack.c.b16 %v867, %v866
      %v937 = vpack.c.b16 %v869, %v868
      %v938 = vpack.c.b16 %v871, %v870
      %v939 = vpack.c.b16 %v873, %v872
      %v940 = vpack.c.b16 %v875, %v874
      %v941 = vpack.c.b16 %v877, %v876
      %v942 = vpack.c.b16 %v879, %v878
      %v943 = vpack.c.b16 %v881, %v880
      %v944 = vpack.c.b16 %v883, %v882
      %v945 = vpack.c.b16 %v885, %v884
      %v946 = vpack.c.b16 %v887, %v886
      %v947 = vpack.c.b16 %v889, %v888
      %v948 = vpack.c.b16 %v891, %v890
      %v949 = vpack.c.b16 %v893, %v892
      %v950 = vpack.c.b16 %v895, %v894
      %v951 = vpack.c.b16 %v897, %v896
      %v952 = vpack.c.b16 %v899, %v898
      %v953 = vpack.c.b16 %v901, %v900
      %v954 = vpack.c.b16 %v903, %v902
      %v955 = vpack.c.b16 %v905, %v904
      %v956 = vpack.c.b16 %v907, %v906
      %v957 = vpack.c.b16 %v909, %v908
      %v958 = vpack.c.b16 %v911, %v910
      %v959 = vpack.c.b16 %v913, %v912
      %v960 = vpack.c.b16 %v915, %v914
      %v961 = vpack.c.b16 %v917, %v916
      %v962 = vpack.c.b16 %v919, %v918
      %v963 = vpack.c.b16 %v921, %v920
      %v964 = vpack.c.b16 %v923, %v922
      %v965 = vpack.c.b16 %v925, %v924
      %v966 = vpack.c.b16 %v927, %v926
      %v967 = vpack.c.b16 %v929, %v928
      %v968 = vpack.c.b16 %v931, %v930
      %v969 = vpack.c.b16 %v933, %v932
      %v1007 = vsel %vm204, %v695, 0
      %v1010 = vsel %vm204, %v700, 0
      %v1013 = vsel %vm204, %v705, 0
      %v1016 = vsel %vm204, %v710, 0
      %1018 = vmatprep.subr.bf16.mxu0 0
      %1019 = vmatpush1.bf16.msra.mxu0 %v934
      %1020 = vmatprep.subr.bf16.mxu0 0
      %1021 = vmatpush1.bf16.msra.mxu0 %v935
      %1022 = vmatprep.subr.bf16.mxu0 0
      %1023 = vmatpush1.bf16.msra.mxu0 %v936
      %1024 = vmatprep.subr.bf16.mxu0 0
      %1025 = vmatpush1.bf16.msra.mxu0 %v937
      %1026 = vmatprep.subr.bf16.mxu0 0
      %1027 = vmatpush1.bf16.msra.mxu0 %v938
      %1028 = vmatprep.subr.bf16.mxu0 0
      %1029 = vmatpush1.bf16.msra.mxu0 %v939
      %1030 = vmatprep.subr.bf16.mxu0 0
      %1031 = vmatpush1.bf16.msra.mxu0 %v940
      %1032 = vmatprep.subr.bf16.mxu0 0
      %1033 = vmatpush1.bf16.msra.mxu0 %v941
      %1034 = vmatprep.subr.bf16.mxu0 0
      %1035 = vmatpush1.bf16.msra.mxu0 %v942
      %1036 = vmatprep.subr.bf16.mxu0 0
      %1037 = vmatpush1.bf16.msra.mxu0 %v943
      %1038 = vmatprep.subr.bf16.mxu0 0
      %1039 = vmatpush1.bf16.msra.mxu0 %v944
      %1040 = vmatprep.subr.bf16.mxu0 0
      %1041 = vmatpush1.bf16.msra.mxu0 %v945
      %1042 = vmatprep.subr.bf16.mxu0 0
      %1043 = vmatpush1.bf16.msra.mxu0 %v946
      %1044 = vmatprep.subr.bf16.mxu0 0
      %1045 = vmatpush1.bf16.msra.mxu0 %v947
      %1046 = vmatprep.subr.bf16.mxu0 0
      %1047 = vmatpush1.bf16.msra.mxu0 %v948
      %1048 = vmatprep.subr.bf16.mxu0 0
      %1049 = vmatpush1.bf16.msra.mxu0 %v949
      %1050 = vmatprep.mubr.bf16.mxu0 %v692
      %1051 = vmatmul.mubr.bf16.gmra.mrb[0].mxu0 %v691
      %v1052 = vpop.f32.mrb[0].mxu0
      %v1053 = vadd.f32 %v788, %v1052
      %v1054 = vpop.f32.mrb[0].mxu0
      %v1055 = vpop.f32.mrb[0].mxu0
      %v1056 = vadd.f32 %v788, %v1055
      %v1057 = vpop.f32.mrb[0].mxu0
      %1058 = vmatprep.mubr.bf16.mxu0 %v697
      %1059 = vmatmul.mubr.bf16.gmra.mrb[0].mxu0 %v696
      %v1060 = vpop.f32.mrb[0].mxu0
      %v1061 = vadd.f32 %v788, %v1060
      %v1062 = vpop.f32.mrb[0].mxu0
      %v1063 = vpop.f32.mrb[0].mxu0
      %v1064 = vadd.f32 %v788, %v1063
      %v1065 = vpop.f32.mrb[0].mxu0
      %1066 = vmatprep.mubr.bf16.mxu0 %v702
      %1067 = vmatmul.mubr.bf16.gmra.mrb[0].mxu0 %v701
      %v1068 = vpop.f32.mrb[0].mxu0
      %v1069 = vadd.f32 %v788, %v1068
      %v1070 = vpop.f32.mrb[0].mxu0
      %v1071 = vpop.f32.mrb[0].mxu0
      %v1072 = vadd.f32 %v788, %v1071
      %v1073 = vpop.f32.mrb[0].mxu0
      %1074 = vmatprep.mubr.bf16.mxu0 %v707
      %1075 = vmatmul.mubr.bf16.gmra.mrb[0].mxu0 %v706
      %v1076 = vpop.f32.mrb[0].mxu0
      %v1077 = vadd.f32 %v788, %v1076
      %v1078 = vpop.f32.mrb[0].mxu0
      %v1079 = vpop.f32.mrb[0].mxu0
      %v1080 = vadd.f32 %v788, %v1079
      %v1081 = vpop.f32.mrb[0].mxu0
      %1082 = vdwg.mxu0
      %1083 = vmatprep.subr.bf16.mxu0 0
      %1084 = vmatpush1.bf16.msra.mxu0 %v950
      %1085 = vmatprep.subr.bf16.mxu0 0
      %1086 = vmatpush1.bf16.msra.mxu0 %v951
      %1087 = vmatprep.subr.bf16.mxu0 0
      %1088 = vmatpush1.bf16.msra.mxu0 %v952
      %1089 = vmatprep.subr.bf16.mxu0 0
      %1090 = vmatpush1.bf16.msra.mxu0 %v953
      %1091 = vmatprep.subr.bf16.mxu0 0
      %1092 = vmatpush1.bf16.msra.mxu0 %v954
      %1093 = vmatprep.subr.bf16.mxu0 0
      %1094 = vmatpush1.bf16.msra.mxu0 %v955
      %1095 = vmatprep.subr.bf16.mxu0 0
      %1096 = vmatpush1.bf16.msra.mxu0 %v956
      %1097 = vmatprep.subr.bf16.mxu0 0
      %1098 = vmatpush1.bf16.msra.mxu0 %v957
      %1099 = vmatprep.subr.bf16.mxu0 0
      %1100 = vmatpush1.bf16.msra.mxu0 %v958
      %1101 = vmatprep.subr.bf16.mxu0 0
      %1102 = vmatpush1.bf16.msra.mxu0 %v959
      %1103 = vmatprep.subr.bf16.mxu0 0
      %1104 = vmatpush1.bf16.msra.mxu0 %v960
      %1105 = vmatprep.subr.bf16.mxu0 0
      %1106 = vmatpush1.bf16.msra.mxu0 %v961
      %1107 = vmatprep.subr.bf16.mxu0 0
      %1108 = vmatpush1.bf16.msra.mxu0 %v962
      %1109 = vmatprep.subr.bf16.mxu0 0
      %1110 = vmatpush1.bf16.msra.mxu0 %v963
      %1111 = vmatprep.subr.bf16.mxu0 0
      %1112 = vmatpush1.bf16.msra.mxu0 %v964
      %1113 = vmatprep.subr.bf16.mxu0 0
      %1114 = vmatpush1.bf16.msra.mxu0 %v965
      %1115 = vmatprep.mubr.bf16.mxu0 %v694
      %1116 = vmatmul.mubr.bf16.gmra.mrb[0].mxu0 %v693
      %v1117 = vpop.f32.mrb[0].mxu0
      %v1118 = vadd.f32 %v1053, %v1117
      %v1119 = vpop.f32.mrb[0].mxu0
      %v1120 = vpop.f32.mrb[0].mxu0
      %v1121 = vadd.f32 %v1056, %v1120
      %v1122 = vpop.f32.mrb[0].mxu0
      %1123 = vmatprep.mubr.bf16.mxu0 %v699
      %1124 = vmatmul.mubr.bf16.gmra.mrb[0].mxu0 %v698
      %v1125 = vpop.f32.mrb[0].mxu0
      %v1126 = vadd.f32 %v1061, %v1125
      %v1127 = vpop.f32.mrb[0].mxu0
      %v1128 = vpop.f32.mrb[0].mxu0
      %v1129 = vadd.f32 %v1064, %v1128
      %v1130 = vpop.f32.mrb[0].mxu0
      %1131 = vmatprep.mubr.bf16.mxu0 %v704
      %1132 = vmatmul.mubr.bf16.gmra.mrb[0].mxu0 %v703
      %v1133 = vpop.f32.mrb[0].mxu0
      %v1134 = vadd.f32 %v1069, %v1133
      %v1135 = vpop.f32.mrb[0].mxu0
      %v1136 = vpop.f32.mrb[0].mxu0
      %v1137 = vadd.f32 %v1072, %v1136
      %v1138 = vpop.f32.mrb[0].mxu0
      %1139 = vmatprep.mubr.bf16.mxu0 %v709
      %1140 = vmatmul.mubr.bf16.gmra.mrb[0].mxu0 %v708
      %v1141 = vpop.f32.mrb[0].mxu0
      %v1142 = vadd.f32 %v1077, %v1141
      %v1143 = vpop.f32.mrb[0].mxu0
      %v1144 = vpop.f32.mrb[0].mxu0
      %v1145 = vadd.f32 %v1080, %v1144
      %v1146 = vpop.f32.mrb[0].mxu0
      %1147 = vdwg.mxu0
      %1148 = vmatprep.subr.bf16.mxu0 0
      %1149 = vmatpush1.bf16.msra.mxu0 %v966
      %1150 = vmatprep.subr.bf16.mxu0 0
      %1151 = vmatpush1.bf16.msra.mxu0 %v967
      %1152 = vmatprep.subr.bf16.mxu0 0
      %1153 = vmatpush1.bf16.msra.mxu0 %v968
      %1154 = vmatprep.subr.bf16.mxu0 0
      %1155 = vmatpush1.bf16.msra.mxu0 %v969
      %1156 = vmatprep.subr.bf16.mxu0 0
      %1157 = vmatpush1.bf16.msra.mxu0 0
      %1158 = vmatprep.subr.bf16.mxu0 0
      %1159 = vmatpush1.bf16.msra.mxu0 0
      %1160 = vmatprep.subr.bf16.mxu0 0
      %1161 = vmatpush1.bf16.msra.mxu0 0
      %1162 = vmatprep.subr.bf16.mxu0 0
      %1163 = vmatpush1.bf16.msra.mxu0 0
      %1164 = vmatprep.subr.bf16.mxu0 0
      %1165 = vmatpush1.bf16.msra.mxu0 0
      %1166 = vmatprep.subr.bf16.mxu0 0
      %1167 = vmatpush1.bf16.msra.mxu0 0
      %1168 = vmatprep.subr.bf16.mxu0 0
      %1169 = vmatpush1.bf16.msra.mxu0 0
      %1170 = vmatprep.subr.bf16.mxu0 0
      %1171 = vmatpush1.bf16.msra.mxu0 0
      %1172 = vmatprep.subr.bf16.mxu0 0
      %1173 = vmatpush1.bf16.msra.mxu0 0
      %1174 = vmatprep.subr.bf16.mxu0 0
      %1175 = vmatpush1.bf16.msra.mxu0 0
      %1176 = vmatprep.subr.bf16.mxu0 0
      %1177 = vmatpush1.bf16.msra.mxu0 0
      %1178 = vmatprep.subr.bf16.mxu0 0
      %1179 = vmatpush1.bf16.msra.mxu0 0
      %1180 = vmatprep.mubr.bf16.mxu0 0
      %1181 = vmatmul.mubr.bf16.gmra.mrb[0].mxu0 %v1007
      %v1182 = vpop.f32.mrb[0].mxu0
      %v1183 = vadd.f32 %v1118, %v1182
      %v1184 = vpop.f32.mrb[0].mxu0
      %v1185 = vpop.f32.mrb[0].mxu0
      %v1186 = vadd.f32 %v1121, %v1185
      %v1187 = vpop.f32.mrb[0].mxu0
      %1188 = vmatprep.mubr.bf16.mxu0 0
      %1189 = vmatmul.mubr.bf16.gmra.mrb[0].mxu0 %v1010
      %v1190 = vpop.f32.mrb[0].mxu0
      %v1191 = vadd.f32 %v1126, %v1190
      %v1192 = vpop.f32.mrb[0].mxu0
      %v1193 = vpop.f32.mrb[0].mxu0
      %v1194 = vadd.f32 %v1129, %v1193
      %v1195 = vpop.f32.mrb[0].mxu0
      %1196 = vmatprep.mubr.bf16.mxu0 0
      %1197 = vmatmul.mubr.bf16.gmra.mrb[0].mxu0 %v1013
      %v1198 = vpop.f32.mrb[0].mxu0
      %v1199 = vadd.f32 %v1134, %v1198
      %v1200 = vpop.f32.mrb[0].mxu0
      %v1201 = vpop.f32.mrb[0].mxu0
      %v1202 = vadd.f32 %v1137, %v1201
      %v1203 = vpop.f32.mrb[0].mxu0
      %1204 = vmatprep.mubr.bf16.mxu0 0
      %1205 = vmatmul.mubr.bf16.gmra.mrb[0].mxu0 %v1016
      %v1206 = vpop.f32.mrb[0].mxu0
      %v1207 = vadd.f32 %v1142, %v1206
      %v1208 = vpop.f32.mrb[0].mxu0
      %v1209 = vpop.f32.mrb[0].mxu0
      %v1210 = vadd.f32 %v1145, %v1209
      %v1211 = vpop.f32.mrb[0].mxu0
      %1212 = vdwg.mxu0
      %v1213 = vmax.f32 %v1183, 0.0
      %v1214 = vmax.f32 %v1186, 0.0
      %v1215 = vmax.f32 %v1191, 0.0
      %v1216 = vmax.f32 %v1194, 0.0
      %v1217 = vmax.f32 %v1199, 0.0
      %v1218 = vmax.f32 %v1202, 0.0
      %v1219 = vmax.f32 %v1207, 0.0
      %v1220 = vmax.f32 %v1210, 0.0
      %v1221 = vpack.c.bf16 %v1214, %v1213
      %v1222 = vpack.c.bf16 %v1216, %v1215
      %v1223 = vpack.c.bf16 %v1218, %v1217
      %v1224 = vpack.c.bf16 %v1220, %v1219
      %v1229 = vunpack.c.l.b16 %v1221
      %v1230 = vunpack.c.h.b16 %v1221
      %v1231 = vunpack.c.l.b16 %v1222
      %v1232 = vunpack.c.h.b16 %v1222
      %v1233 = vunpack.c.l.b16 %v1223
      %v1234 = vunpack.c.h.b16 %v1223
      %v1235 = vunpack.c.l.b16 %v1224
      %v1236 = vunpack.c.h.b16 %v1224
      %v1237 = vpack.c.b16 %v1229, %v1229
      %v1238 = vpack.c.b16 %v1230, %v1230
      %v1239 = vpack.c.b16 %v1231, %v1231
      %v1240 = vpack.c.b16 %v1232, %v1232
      %v1241 = vpack.c.b16 %v1233, %v1233
      %v1242 = vpack.c.b16 %v1234, %v1234
      %v1243 = vpack.c.b16 %v1235, %v1235
      %v1244 = vpack.c.b16 %v1236, %v1236
      %1253 = vst [vmem:[%s170] sm:$0xf] %v1237
      %1254 = vst [vmem:[%s170 + $0x4] sm:$0xf] %v1238
      %1255 = vst [vmem:[%s170 + $0x8] sm:$0xf] %v1239
      %1256 = vst [vmem:[%s170 + $0xc] sm:$0xf] %v1240
      %1257 = vst [vmem:[%s170 + $0x10] sm:$0xf] %v1241
      %1258 = vst [vmem:[%s170 + $0x14] sm:$0xf] %v1242
      %1259 = vst [vmem:[%s170 + $0x18] sm:$0xf] %v1243
      %1260 = vst [vmem:[%s170 + $0x1c] sm:$0xf] %v1244
      %p1261 = scmp.lt.s32.totalorder %s14, 1
      %s1262 = scalar_select %p1261, %s14, 1
      %s1263 = smul.addr %s1262, 8
      %s1264 = smul.addr %s1263, 4
      %s1265 = scalar_lea.vmem %s3, %s1264
      // Predicated region
      $region33: #{_ts_forward.5} parent=31 // pred_check
        %p1266 = pneg %p100
      $region34: #{_ts_forward.5} parent=31 // pred_check_branch
        %1268 = sbr.rel (%p1266) target = $region36
      $region35: #{_ts_forward.5} parent=31 // pred_region
        _
      $region36: #{_ts_forward.5} parent=31 // pred_fallthru
        _
    $region32: #{_ts_forward.5} parent=5 // pred_fallthru
      _
    %p1269 = scmp.le.s32.totalorder 2, %s9
    // Predicated region
    $region37: #{_ts_forward.5} parent=5 // pred_check
      %p1270 = pneg %p1269
    $region38: #{_ts_forward.5} parent=5 // pred_check_branch
      %1272 = sbr.rel (%p1270) target = $region40
    $region39: #{_ts_forward.5} parent=5 // pred_region
      %s1273 = ssub.s32 %s9, 2
      // Predicated region
      $region41: #{_ts_forward.5} parent=39 // pred_check
        %p1274 = pneg %p106
      $region42: #{_ts_forward.5} parent=39 // pred_check_branch
        %1276 = sbr.rel (%p1274) target = $region44
      $region43: #{_ts_forward.5} parent=39 // pred_region
        %p1277 = scmp.lt.s32.totalorder %s15, 1
        %s1278 = scalar_select %p1277, %s15, 1
        %s1279 = smul.addr %s1278, 8
        %s1280 = smul.addr %s1279, 4
        %s1281 = scalar_lea.vmem %s3, %s1280
      $region44: #{_ts_forward.5} parent=39 // pred_fallthru
        _
    $region40: #{_ts_forward.5} parent=5 // pred_fallthru
      _
  $region6: #{_ts_forward.5} parent=0 // loop_footer
    %s13 = sadd.s32 1, %s9
  $region7: #{_ts_forward.5} parent=0 // loop_footer_branch
    %8 = sbr.rel target = $region3
  $region8: #{_ts_forward.5} parent=0 // loop_exit
    _

// kernel: _ts_forward.3
$region0: #{_ts_forward.3}
  #allocation0 [shape = 'u32[]', space=smem, size = 0x4, offset = 0x4, fixed_abs, tag = 'smem constant byte address 0x4 - core index']
  #allocation1 [shape = 'u32[144,128]{1,0:T(1,128)}', space=vmem, size = 0x12000, scoped, tag = 'internal scratch']
  #allocation2 [shape = 'bf16[512,144]{1,0:T(16,128)(2,1)}', space=vmem, size = 0x40000, scoped, tag = 'scratch operand']
  %s0 = inlined_call_operand.vmem [shape: bf16[2,592,16], index: 0, kind: input, shape index: {}]
  %s1 = inlined_call_operand.vmem [shape: bf16[144,128], index: 1, kind: input, shape index: {}]
  %s2 = inlined_call_operand.vmem [shape: f32[1,128], index: 2, kind: input, shape index: {}]
  %s3 = inlined_call_operand.vmem [shape: bf16[2,512,128], index: 3, kind: output, shape index: {}]
  %s4 = sld [smem:[#allocation0]]
  $region45: #{_ts_forward.3} parent=0
    _
  %s6 = ssub.s32 1, %s4
  %s7 = scalar_select 0, %s6, %s4
  loop: start=0, step=1, limit=4
  $region2: #{_ts_forward.3} parent=0 // loop_pre_header
    _
  $region3: #{_ts_forward.3} parent=0 // loop_header
    %s9 = sphi 0, %s13
    %p10 = scmp.ge.s32.totalorder %s9, 4
    %s19 = sphi 0, %s21
    %s22 = sphi 0, %s19
    %s23 = sphi 0, %s22
    %s39 = sphi 0, %s23
    %s43 = sphi 0, %s43
    %s45 = sphi 0, %s43
    %s46 = sphi 0, %s45
    %s60 = sphi 0, %s46
    %s64 = sphi 0, %s64
    %s66 = sphi 0, %s64
    %s67 = sphi 0, %s66
    %s81 = sphi 0, %s67
    %s87 = sphi 0, %s89
    %s90 = sphi 0, %s87
    %s91 = sphi 0, %s90
    %s107 = sphi 0, %s91
  $region4: #{_ts_forward.3} parent=0 // loop_header_branch
    %12 = sbr.rel (%p10) target = $region8
  $region5: #{_ts_forward.3} parent=0 // loop_body
    %s14 = ssub.s32 %s9, 1
    %s15 = ssub.s32 %s9, 2
    %s16 = sadd.s32 %s9, 1
    %s17 = ssub.s32 %s9, %s16
    %p18 = scmp.eq.s32.totalorder %s17, 0
    %s20 = sadd.s32 %s19, 1
    %s21 = scalar_select %p18, %s19, %s20
    %p24 = pneg %p18
    %p25 = scmp.eq.s32.totalorder %s9, 1
    %p26 = por %p24, %p25
    %p27 = scmp.ne.s32.totalorder %s19, %s22
    %p28 = scmp.eq.s32.totalorder %s9, 0
    %p29 = por %p27, %p28
    %p30 = scmp.ne.s32.totalorder %s19, %s22
    %p31 = scmp.eq.s32.totalorder %s14, 1
    %p32 = por %p30, %p31
    %p33 = scmp.ne.s32.totalorder %s22, %s23
    %p34 = scmp.eq.s32.totalorder %s14, 0
    %p35 = por %p33, %p34
    %p36 = scmp.ne.s32.totalorder %s22, %s23
    %p37 = scmp.eq.s32.totalorder %s15, 1
    %p38 = por %p36, %p37
    %p40 = scmp.ne.s32.totalorder %s23, %s39
    %p41 = scmp.eq.s32.totalorder %s15, 0
    %p42 = por %p40, %p41
    %s44 = sadd.s32 %s43, 1
    %p47 = scmp.eq.s32.totalorder %s9, 1
    %p48 = scmp.ne.s32.totalorder %s43, %s45
    %p49 = scmp.eq.s32.totalorder %s9, 0
    %p50 = por %p48, %p49
    %p51 = scmp.ne.s32.totalorder %s43, %s45
    %p52 = scmp.eq.s32.totalorder %s14, 1
    %p53 = por %p51, %p52
    %p54 = scmp.ne.s32.totalorder %s45, %s46
    %p55 = scmp.eq.s32.totalorder %s14, 0
    %p56 = por %p54, %p55
    %p57 = scmp.ne.s32.totalorder %s45, %s46
    %p58 = scmp.eq.s32.totalorder %s15, 1
    %p59 = por %p57, %p58
    %p61 = scmp.ne.s32.totalorder %s46, %s60
    %p62 = scmp.eq.s32.totalorder %s15, 0
    %p63 = por %p61, %p62
    %s65 = sadd.s32 %s64, 1
    %p68 = scmp.eq.s32.totalorder %s9, 1
    %p69 = scmp.ne.s32.totalorder %s64, %s66
    %p70 = scmp.eq.s32.totalorder %s9, 0
    %p71 = por %p69, %p70
    %p72 = scmp.ne.s32.totalorder %s64, %s66
    %p73 = scmp.eq.s32.totalorder %s14, 1
    %p74 = por %p72, %p73
    %p75 = scmp.ne.s32.totalorder %s66, %s67
    %p76 = scmp.eq.s32.totalorder %s14, 0
    %p77 = por %p75, %p76
    %p78 = scmp.ne.s32.totalorder %s66, %s67
    %p79 = scmp.eq.s32.totalorder %s15, 1
    %p80 = por %p78, %p79
    %p82 = scmp.ne.s32.totalorder %s67, %s81
    %p83 = scmp.eq.s32.totalorder %s15, 0
    %p84 = por %p82, %p83
    %s85 = ssub.s32 %s9, %s16
    %p86 = scmp.eq.s32.totalorder %s85, 0
    %s88 = sadd.s32 %s87, 1
    %s89 = scalar_select %p86, %s87, %s88
    %p92 = pneg %p86
    %p93 = scmp.eq.s32.totalorder %s9, 1
    %p94 = por %p92, %p93
    %p95 = scmp.ne.s32.totalorder %s87, %s90
    %p96 = scmp.eq.s32.totalorder %s9, 0
    %p97 = por %p95, %p96
    %p98 = scmp.ne.s32.totalorder %s87, %s90
    %p99 = scmp.eq.s32.totalorder %s14, 1
    %p100 = por %p98, %p99
    %p101 = scmp.ne.s32.totalorder %s90, %s91
    %p102 = scmp.eq.s32.totalorder %s14, 0
    %p103 = por %p101, %p102
    %p104 = scmp.ne.s32.totalorder %s90, %s91
    %p105 = scmp.eq.s32.totalorder %s15, 1
    %p106 = por %p104, %p105
    %p108 = scmp.ne.s32.totalorder %s91, %s107
    %p109 = scmp.eq.s32.totalorder %s15, 0
    %p110 = por %p108, %p109
    %p111 = scmp.le.s32.totalorder 1, %s9
    %p112 = scmp.lt.s32.totalorder %s9, 3
    %p113 = pnand %p111, %p112
    %p114 = pneg %p113
    // Predicated region
    $region9: #{_ts_forward.3} parent=5 // pred_check
      _
    $region10: #{_ts_forward.3} parent=5 // pred_check_branch
      %116 = sbr.rel (%p113) target = $region12
    $region11: #{_ts_forward.3} parent=5 // pred_region
      %s117 = ssub.s32 %s9, 1
      // Predicated region
      $region13: #{_ts_forward.3} parent=11 // pred_check
        %p118 = pneg %p56
      $region14: #{_ts_forward.3} parent=11 // pred_check_branch
        %120 = sbr.rel (%p118) target = $region16
      $region15: #{_ts_forward.3} parent=11 // pred_region
        _
      $region16: #{_ts_forward.3} parent=11 // pred_fallthru
        _
      // Predicated region
      $region17: #{_ts_forward.3} parent=11 // pred_check
        %p121 = pneg %p77
      $region18: #{_ts_forward.3} parent=11 // pred_check_branch
        %123 = sbr.rel (%p121) target = $region20
      $region19: #{_ts_forward.3} parent=11 // pred_region
        _
      $region20: #{_ts_forward.3} parent=11 // pred_fallthru
        _
    $region12: #{_ts_forward.3} parent=5 // pred_fallthru
      _
    %p124 = scmp.lt.s32.totalorder %s9, 2
    // Predicated region
    $region21: #{_ts_forward.3} parent=5 // pred_check
      %p125 = pneg %p124
    $region22: #{_ts_forward.3} parent=5 // pred_check_branch
      %127 = sbr.rel (%p125) target = $region24
    $region23: #{_ts_forward.3} parent=5 // pred_region
      // Predicated region
      $region25: #{_ts_forward.3} parent=23 // pred_check
        %p128 = pneg %p29
      $region26: #{_ts_forward.3} parent=23 // pred_check_branch
        %130 = sbr.rel (%p128) target = $region28
      $region27: #{_ts_forward.3} parent=23 // pred_region
        %p131 = scmp.lt.s32.totalorder %s9, 1
        %s132 = scalar_select %p131, %s9, 1
        %s133 = smul.addr %s132, 74
        %s134 = smul.addr %s133, 4
        %s135 = scalar_lea.vmem %s0, %s134
      $region28: #{_ts_forward.3} parent=23 // pred_fallthru
        _
    $region24: #{_ts_forward.3} parent=5 // pred_fallthru
      _
    %p136 = scmp.le.s32.totalorder 1, %s9
    %p137 = scmp.lt.s32.totalorder %s9, 3
    %p138 = pnand %p136, %p137
    %p139 = pneg %p138
    // Predicated region
    $region29: #{_ts_forward.3} parent=5 // pred_check
      _
    $region30: #{_ts_forward.3} parent=5 // pred_check_branch
      %141 = sbr.rel (%p138) target = $region32
    $region31: #{_ts_forward.3} parent=5 // pred_region
      %s142 = ssub.s32 %s9, 1
      %p143 = scmp.lt.s32.totalorder %s14, 1
      %s144 = scalar_select %p143, %s14, 1
      %s145 = smul.addr %s144, 74
      %s146 = smul.addr %s145, 4
      %s147 = scalar_lea.vmem %s0, %s146
      %p148 = pneg %p35
      %p149 = pneg %p32
      %p150 = pneg %p56
      %p151 = pneg %p53
      %p152 = pneg %p77
      %p153 = pneg %p74
      %p154 = pneg %p103
      %p155 = pneg %p100
      %p156 = scmp.lt.s32.totalorder %s14, 1
      %s157 = scalar_select %p156, %s14, 1
      %s158 = smul.addr %s157, 64
      %s159 = smul.addr %s158, 4
      %s160 = scalar_lea.vmem %s3, %s159
      %p161 = scmp.lt.s32.totalorder %s14, 1
      %s162 = scalar_select %p161, %s14, 1
      %s163 = smul.addr %s162, 74
      %s164 = smul.addr %s163, 4
      %s165 = scalar_lea.vmem %s0, %s164
      %p166 = scmp.lt.s32.totalorder %s14, 1
      %s167 = scalar_select %p166, %s14, 1
      %s168 = smul.addr %s167, 64
      %s169 = smul.addr %s168, 4
      %s170 = scalar_lea.vmem %s3, %s169
      %v172 = vld [vmem:[%s165] sm:$0xf]
      %v173 = vld [vmem:[%s165 + $0x4] sm:$0xf]
      %v174 = vld [vmem:[%s165 + $0x8] sm:$0xf]
      %v175 = vld [vmem:[%s165 + $0xc] sm:$0xf]
      %v176 = vld [vmem:[%s165 + $0x10] sm:$0xf]
      %v177 = vld [vmem:[%s165 + $0x14] sm:$0xf]
      %v178 = vld [vmem:[%s165 + $0x18] sm:$0xf]
      %v179 = vld [vmem:[%s165 + $0x1c] sm:$0xf]
      %v180 = vld [vmem:[%s165 + $0x20] sm:$0xf]
      %v181 = vld [vmem:[%s165 + $0x24] sm:$0xf]
      %v182 = vld [vmem:[%s165 + $0x28] sm:$0xf]
      %v183 = vld [vmem:[%s165 + $0x2c] sm:$0xf]
      %v184 = vld [vmem:[%s165 + $0x30] sm:$0xf]
      %v185 = vld [vmem:[%s165 + $0x34] sm:$0xf]
      %v186 = vld [vmem:[%s165 + $0x38] sm:$0xf]
      %v187 = vld [vmem:[%s165 + $0x3c] sm:$0xf]
      %v188 = vld [vmem:[%s165 + $0x40] sm:$0xf]
      %v189 = vld [vmem:[%s165 + $0x44] sm:$0xf]
      %v190 = vld [vmem:[%s165 + $0x48] sm:$0xf]
      %v191 = vld [vmem:[%s165 + $0x4c] sm:$0xf]
      %v192 = vld [vmem:[%s165 + $0x50] sm:$0xf]
      %v193 = vld [vmem:[%s165 + $0x54] sm:$0xf]
      %v194 = vld [vmem:[%s165 + $0x58] sm:$0xf]
      %v195 = vld [vmem:[%s165 + $0x5c] sm:$0xf]
      %v196 = vld [vmem:[%s165 + $0x60] sm:$0xf]
      %v197 = vld [vmem:[%s165 + $0x64] sm:$0xf]
      %v198 = vld [vmem:[%s165 + $0x68] sm:$0xf]
      %v199 = vld [vmem:[%s165 + $0x6c] sm:$0xf]
      %v200 = vld [vmem:[%s165 + $0x70] sm:$0xf]
      %v201 = vld [vmem:[%s165 + $0x74] sm:$0xf]
      %v202 = vld [vmem:[%s165 + $0x78] sm:$0xf]
      %v203 = vld [vmem:[%s165 + $0x7c] sm:$0xf]
      %v204 = vld [vmem:[%s165 + $0x80] sm:$0xf]
      %v205 = vld [vmem:[%s165 + $0x84] sm:$0xf]
      %v206 = vld [vmem:[%s165 + $0x88] sm:$0xf]
      %v207 = vld [vmem:[%s165 + $0x8c] sm:$0xf]
      %v208 = vld [vmem:[%s165 + $0x90] sm:$0xf]
      %v209 = vld [vmem:[%s165 + $0x94] sm:$0xf]
      %v210 = vld [vmem:[%s165 + $0x98] sm:$0xf]
      %v211 = vld [vmem:[%s165 + $0x9c] sm:$0xf]
      %v212 = vld [vmem:[%s165 + $0xa0] sm:$0xf]
      %v213 = vld [vmem:[%s165 + $0xa4] sm:$0xf]
      %v214 = vld [vmem:[%s165 + $0xa8] sm:$0xf]
      %v215 = vld [vmem:[%s165 + $0xac] sm:$0xf]
      %v216 = vld [vmem:[%s165 + $0xb0] sm:$0xf]
      %v217 = vld [vmem:[%s165 + $0xb4] sm:$0xf]
      %v218 = vld [vmem:[%s165 + $0xb8] sm:$0xf]
      %v219 = vld [vmem:[%s165 + $0xbc] sm:$0xf]
      %v220 = vld [vmem:[%s165 + $0xc0] sm:$0xf]
      %v221 = vld [vmem:[%s165 + $0xc4] sm:$0xf]
      %v222 = vld [vmem:[%s165 + $0xc8] sm:$0xf]
      %v223 = vld [vmem:[%s165 + $0xcc] sm:$0xf]
      %v224 = vld [vmem:[%s165 + $0xd0] sm:$0xf]
      %v225 = vld [vmem:[%s165 + $0xd4] sm:$0xf]
      %v226 = vld [vmem:[%s165 + $0xd8] sm:$0xf]
      %v227 = vld [vmem:[%s165 + $0xdc] sm:$0xf]
      %v228 = vld [vmem:[%s165 + $0xe0] sm:$0xf]
      %v229 = vld [vmem:[%s165 + $0xe4] sm:$0xf]
      %v230 = vld [vmem:[%s165 + $0xe8] sm:$0xf]
      %v231 = vld [vmem:[%s165 + $0xec] sm:$0xf]
      %v232 = vld [vmem:[%s165 + $0xf0] sm:$0xf]
      %v233 = vld [vmem:[%s165 + $0xf4] sm:$0xf]
      %v234 = vld [vmem:[%s165 + $0xf8] sm:$0xf]
      %v235 = vld [vmem:[%s165 + $0xfc] sm:$0xf]
      %v300 = vunpack.c.l.b16 %v172
      %v301 = vunpack.c.l.b16 %v173
      %v302 = vunpack.c.l.b16 %v174
      %v303 = vunpack.c.l.b16 %v175
      %v304 = vunpack.c.l.b16 %v176
      %v305 = vunpack.c.l.b16 %v177
      %v306 = vunpack.c.l.b16 %v178
      %v307 = vunpack.c.l.b16 %v179
      %v308 = vunpack.c.l.b16 %v180
      %v309 = vunpack.c.l.b16 %v181
      %v310 = vunpack.c.l.b16 %v182
      %v311 = vunpack.c.l.b16 %v183
      %v312 = vunpack.c.l.b16 %v184
      %v313 = vunpack.c.l.b16 %v185
      %v314 = vunpack.c.l.b16 %v186
      %v315 = vunpack.c.l.b16 %v187
      %v316 = vunpack.c.l.b16 %v188
      %v317 = vunpack.c.l.b16 %v189
      %v318 = vunpack.c.l.b16 %v190
      %v319 = vunpack.c.l.b16 %v191
      %v320 = vunpack.c.l.b16 %v192
      %v321 = vunpack.c.l.b16 %v193
      %v322 = vunpack.c.l.b16 %v194
      %v323 = vunpack.c.l.b16 %v195
      %v324 = vunpack.c.l.b16 %v196
      %v325 = vunpack.c.l.b16 %v197
      %v326 = vunpack.c.l.b16 %v198
      %v327 = vunpack.c.l.b16 %v199
      %v328 = vunpack.c.l.b16 %v200
      %v329 = vunpack.c.l.b16 %v201
      %v330 = vunpack.c.l.b16 %v202
      %v331 = vunpack.c.l.b16 %v203
      %v332 = vunpack.c.l.b16 %v204
      %v333 = vunpack.c.l.b16 %v205
      %v334 = vunpack.c.l.b16 %v206
      %v335 = vunpack.c.l.b16 %v207
      %v336 = vunpack.c.l.b16 %v208
      %v337 = vunpack.c.l.b16 %v209
      %v338 = vunpack.c.l.b16 %v210
      %v339 = vunpack.c.l.b16 %v211
      %v340 = vunpack.c.l.b16 %v212
      %v341 = vunpack.c.l.b16 %v213
      %v342 = vunpack.c.l.b16 %v214
      %v343 = vunpack.c.l.b16 %v215
      %v344 = vunpack.c.l.b16 %v216
      %v345 = vunpack.c.l.b16 %v217
      %v346 = vunpack.c.l.b16 %v218
      %v347 = vunpack.c.l.b16 %v219
      %v348 = vunpack.c.l.b16 %v220
      %v349 = vunpack.c.l.b16 %v221
      %v350 = vunpack.c.l.b16 %v222
      %v351 = vunpack.c.l.b16 %v223
      %v352 = vunpack.c.l.b16 %v224
      %v353 = vunpack.c.l.b16 %v225
      %v354 = vunpack.c.l.b16 %v226
      %v355 = vunpack.c.l.b16 %v227
      %v356 = vunpack.c.l.b16 %v228
      %v357 = vunpack.c.l.b16 %v229
      %v358 = vunpack.c.l.b16 %v230
      %v359 = vunpack.c.l.b16 %v231
      %v360 = vunpack.c.l.b16 %v232
      %v361 = vunpack.c.l.b16 %v233
      %v362 = vunpack.c.l.b16 %v234
      %v363 = vunpack.c.l.b16 %v235
      %v364 = vpack.c.b16 %v301, %v300
      %v365 = vpack.c.b16 %v303, %v302
      %v366 = vpack.c.b16 %v305, %v304
      %v367 = vpack.c.b16 %v307, %v306
      %v368 = vpack.c.b16 %v309, %v308
      %v369 = vpack.c.b16 %v311, %v310
      %v370 = vpack.c.b16 %v313, %v312
      %v371 = vpack.c.b16 %v315, %v314
      %v372 = vpack.c.b16 %v317, %v316
      %v373 = vpack.c.b16 %v319, %v318
      %v374 = vpack.c.b16 %v321, %v320
      %v375 = vpack.c.b16 %v323, %v322
      %v376 = vpack.c.b16 %v325, %v324
      %v377 = vpack.c.b16 %v327, %v326
      %v378 = vpack.c.b16 %v329, %v328
      %v379 = vpack.c.b16 %v331, %v330
      %v380 = vpack.c.b16 %v333, %v332
      %v381 = vpack.c.b16 %v335, %v334
      %v382 = vpack.c.b16 %v337, %v336
      %v383 = vpack.c.b16 %v339, %v338
      %v384 = vpack.c.b16 %v341, %v340
      %v385 = vpack.c.b16 %v343, %v342
      %v386 = vpack.c.b16 %v345, %v344
      %v387 = vpack.c.b16 %v347, %v346
      %v388 = vpack.c.b16 %v349, %v348
      %v389 = vpack.c.b16 %v351, %v350
      %v390 = vpack.c.b16 %v353, %v352
      %v391 = vpack.c.b16 %v355, %v354
      %v392 = vpack.c.b16 %v357, %v356
      %v393 = vpack.c.b16 %v359, %v358
      %v394 = vpack.c.b16 %v361, %v360
      %v395 = vpack.c.b16 %v363, %v362
      %vm428 = vcmask 130048
      %429 = vst.msk [vmem:[#allocation2] sm:$0xff] %vm428, %v364
      %430 = vst.msk [vmem:[#allocation2 + $0x10] sm:$0xff] %vm428, %v365
      %431 = vst.msk [vmem:[#allocation2 + $0x20] sm:$0xff] %vm428, %v366
      %432 = vst.msk [vmem:[#allocation2 + $0x30] sm:$0xff] %vm428, %v367
      %433 = vst.msk [vmem:[#allocation2 + $0x40] sm:$0xff] %vm428, %v368
      %434 = vst.msk [vmem:[#allocation2 + $0x50] sm:$0xff] %vm428, %v369
      %435 = vst.msk [vmem:[#allocation2 + $0x60] sm:$0xff] %vm428, %v370
      %436 = vst.msk [vmem:[#allocation2 + $0x70] sm:$0xff] %vm428, %v371
      %437 = vst.msk [vmem:[#allocation2 + $0x80] sm:$0xff] %vm428, %v372
      %438 = vst.msk [vmem:[#allocation2 + $0x90] sm:$0xff] %vm428, %v373
      %439 = vst.msk [vmem:[#allocation2 + $0xa0] sm:$0xff] %vm428, %v374
      %440 = vst.msk [vmem:[#allocation2 + $0xb0] sm:$0xff] %vm428, %v375
      %441 = vst.msk [vmem:[#allocation2 + $0xc0] sm:$0xff] %vm428, %v376
      %442 = vst.msk [vmem:[#allocation2 + $0xd0] sm:$0xff] %vm428, %v377
      %443 = vst.msk [vmem:[#allocation2 + $0xe0] sm:$0xff] %vm428, %v378
      %444 = vst.msk [vmem:[#allocation2 + $0xf0] sm:$0xff] %vm428, %v379
      %445 = vst.msk [vmem:[#allocation2 + $0x100] sm:$0xff] %vm428, %v380
      %446 = vst.msk [vmem:[#allocation2 + $0x110] sm:$0xff] %vm428, %v381
      %447 = vst.msk [vmem:[#allocation2 + $0x120] sm:$0xff] %vm428, %v382
      %448 = vst.msk [vmem:[#allocation2 + $0x130] sm:$0xff] %vm428, %v383
      %449 = vst.msk [vmem:[#allocation2 + $0x140] sm:$0xff] %vm428, %v384
      %450 = vst.msk [vmem:[#allocation2 + $0x150] sm:$0xff] %vm428, %v385
      %451 = vst.msk [vmem:[#allocation2 + $0x160] sm:$0xff] %vm428, %v386
      %452 = vst.msk [vmem:[#allocation2 + $0x170] sm:$0xff] %vm428, %v387
      %453 = vst.msk [vmem:[#allocation2 + $0x180] sm:$0xff] %vm428, %v388
      %454 = vst.msk [vmem:[#allocation2 + $0x190] sm:$0xff] %vm428, %v389
      %455 = vst.msk [vmem:[#allocation2 + $0x1a0] sm:$0xff] %vm428, %v390
      %456 = vst.msk [vmem:[#allocation2 + $0x1b0] sm:$0xff] %vm428, %v391
      %457 = vst.msk [vmem:[#allocation2 + $0x1c0] sm:$0xff] %vm428, %v392
      %458 = vst.msk [vmem:[#allocation2 + $0x1d0] sm:$0xff] %vm428, %v393
      %459 = vst.msk [vmem:[#allocation2 + $0x1e0] sm:$0xff] %vm428, %v394
      %460 = vst.msk [vmem:[#allocation2 + $0x1f0] sm:$0xff] %vm428, %v395
      %v461 = vld [vmem:[%s165] sm:$0xf]
      %v462 = vld [vmem:[%s165 + $0x4] sm:$0xf]
      %v463 = vld [vmem:[%s165 + $0x8] sm:$0xf]
      %v464 = vld [vmem:[%s165 + $0xc] sm:$0xf]
      %v465 = vld [vmem:[%s165 + $0x10] sm:$0xf]
      %v466 = vld [vmem:[%s165 + $0x14] sm:$0xf]
      %v467 = vld [vmem:[%s165 + $0x18] sm:$0xf]
      %v468 = vld [vmem:[%s165 + $0x1c] sm:$0xf]
      %v469 = vld [vmem:[%s165 + $0x20] sm:$0xf]
      %v470 = vld [vmem:[%s165 + $0x24] sm:$0xf]
      %v471 = vld [vmem:[%s165 + $0x28] sm:$0xf]
      %v472 = vld [vmem:[%s165 + $0x2c] sm:$0xf]
      %v473 = vld [vmem:[%s165 + $0x30] sm:$0xf]
      %v474 = vld [vmem:[%s165 + $0x34] sm:$0xf]
      %v475 = vld [vmem:[%s165 + $0x38] sm:$0xf]
      %v476 = vld [vmem:[%s165 + $0x3c] sm:$0xf]
      %v477 = vld [vmem:[%s165 + $0x40] sm:$0xf]
      %v478 = vld [vmem:[%s165 + $0x44] sm:$0xf]
      %v479 = vld [vmem:[%s165 + $0x48] sm:$0xf]
      %v480 = vld [vmem:[%s165 + $0x4c] sm:$0xf]
      %v481 = vld [vmem:[%s165 + $0x50] sm:$0xf]
      %v482 = vld [vmem:[%s165 + $0x54] sm:$0xf]
      %v483 = vld [vmem:[%s165 + $0x58] sm:$0xf]
      %v484 = vld [vmem:[%s165 + $0x5c] sm:$0xf]
      %v485 = vld [vmem:[%s165 + $0x60] sm:$0xf]
      %v486 = vld [vmem:[%s165 + $0x64] sm:$0xf]
      %v487 = vld [vmem:[%s165 + $0x68] sm:$0xf]
      %v488 = vld [vmem:[%s165 + $0x6c] sm:$0xf]
      %v489 = vld [vmem:[%s165 + $0x70] sm:$0xf]
      %v490 = vld [vmem:[%s165 + $0x74] sm:$0xf]
      %v491 = vld [vmem:[%s165 + $0x78] sm:$0xf]
      %v492 = vld [vmem:[%s165 + $0x7c] sm:$0xf]
      %v493 = vld [vmem:[%s165 + $0x80] sm:$0xf]
      %v494 = vld [vmem:[%s165 + $0x84] sm:$0xf]
      %v495 = vld [vmem:[%s165 + $0x88] sm:$0xf]
      %v496 = vld [vmem:[%s165 + $0x8c] sm:$0xf]
      %v497 = vld [vmem:[%s165 + $0x90] sm:$0xf]
      %v498 = vld [vmem:[%s165 + $0x94] sm:$0xf]
      %v499 = vld [vmem:[%s165 + $0x98] sm:$0xf]
      %v500 = vld [vmem:[%s165 + $0x9c] sm:$0xf]
      %v501 = vld [vmem:[%s165 + $0xa0] sm:$0xf]
      %v502 = vld [vmem:[%s165 + $0xa4] sm:$0xf]
      %v503 = vld [vmem:[%s165 + $0xa8] sm:$0xf]
      %v504 = vld [vmem:[%s165 + $0xac] sm:$0xf]
      %v505 = vld [vmem:[%s165 + $0xb0] sm:$0xf]
      %v506 = vld [vmem:[%s165 + $0xb4] sm:$0xf]
      %v507 = vld [vmem:[%s165 + $0xb8] sm:$0xf]
      %v508 = vld [vmem:[%s165 + $0xbc] sm:$0xf]
      %v509 = vld [vmem:[%s165 + $0xc0] sm:$0xf]
      %v510 = vld [vmem:[%s165 + $0xc4] sm:$0xf]
      %v511 = vld [vmem:[%s165 + $0xc8] sm:$0xf]
      %v512 = vld [vmem:[%s165 + $0xcc] sm:$0xf]
      %v513 = vld [vmem:[%s165 + $0xd0] sm:$0xf]
      %v514 = vld [vmem:[%s165 + $0xd4] sm:$0xf]
      %v515 = vld [vmem:[%s165 + $0xd8] sm:$0xf]
      %v516 = vld [vmem:[%s165 + $0xdc] sm:$0xf]
      %v517 = vld [vmem:[%s165 + $0xe0] sm:$0xf]
      %v518 = vld [vmem:[%s165 + $0xe4] sm:$0xf]
      %v519 = vld [vmem:[%s165 + $0xe8] sm:$0xf]
      %v520 = vld [vmem:[%s165 + $0xec] sm:$0xf]
      %v521 = vld [vmem:[%s165 + $0xf0] sm:$0xf]
      %v522 = vld [vmem:[%s165 + $0xf4] sm:$0xf]
      %v523 = vld [vmem:[%s165 + $0xf8] sm:$0xf]
      %v524 = vld [vmem:[%s165 + $0xfc] sm:$0xf]
      %v525 = vld [vmem:[%s165 + $0x100] sm:$0x1]
      %v591 = vunpack.c.l.b16 %v461
      %v592 = vunpack.c.l.b16 %v462
      %v593 = vunpack.c.l.b16 %v463
      %v594 = vunpack.c.l.b16 %v464
      %v595 = vunpack.c.l.b16 %v465
      %v596 = vunpack.c.l.b16 %v466
      %v597 = vunpack.c.l.b16 %v467
      %v598 = vunpack.c.l.b16 %v468
      %v599 = vunpack.c.l.b16 %v469
      %v600 = vunpack.c.l.b16 %v470
      %v601 = vunpack.c.l.b16 %v471
      %v602 = vunpack.c.l.b16 %v472
      %v603 = vunpack.c.l.b16 %v473
      %v604 = vunpack.c.l.b16 %v474
      %v605 = vunpack.c.l.b16 %v475
      %v606 = vunpack.c.l.b16 %v476
      %v607 = vunpack.c.l.b16 %v477
      %v608 = vunpack.c.l.b16 %v478
      %v609 = vunpack.c.l.b16 %v479
      %v610 = vunpack.c.l.b16 %v480
      %v611 = vunpack.c.l.b16 %v481
      %v612 = vunpack.c.l.b16 %v482
      %v613 = vunpack.c.l.b16 %v483
      %v614 = vunpack.c.l.b16 %v484
      %v615 = vunpack.c.l.b16 %v485
      %v616 = vunpack.c.l.b16 %v486
      %v617 = vunpack.c.l.b16 %v487
      %v618 = vunpack.c.l.b16 %v488
      %v619 = vunpack.c.l.b16 %v489
      %v620 = vunpack.c.l.b16 %v490
      %v621 = vunpack.c.l.b16 %v491
      %v622 = vunpack.c.l.b16 %v492
      %v623 = vunpack.c.l.b16 %v493
      %v624 = vunpack.c.l.b16 %v494
      %v625 = vunpack.c.l.b16 %v495
      %v626 = vunpack.c.l.b16 %v496
      %v627 = vunpack.c.l.b16 %v497
      %v628 = vunpack.c.l.b16 %v498
      %v629 = vunpack.c.l.b16 %v499
      %v630 = vunpack.c.l.b16 %v500
      %v631 = vunpack.c.l.b16 %v501
      %v632 = vunpack.c.l.b16 %v502
      %v633 = vunpack.c.l.b16 %v503
      %v634 = vunpack.c.l.b16 %v504
      %v635 = vunpack.c.l.b16 %v505
      %v636 = vunpack.c.l.b16 %v506
      %v637 = vunpack.c.l.b16 %v507
      %v638 = vunpack.c.l.b16 %v508
      %v639 = vunpack.c.l.b16 %v509
      %v640 = vunpack.c.l.b16 %v510
      %v641 = vunpack.c.l.b16 %v511
      %v642 = vunpack.c.l.b16 %v512
      %v643 = vunpack.c.l.b16 %v513
      %v644 = vunpack.c.l.b16 %v514
      %v645 = vunpack.c.l.b16 %v515
      %v646 = vunpack.c.l.b16 %v516
      %v647 = vunpack.c.l.b16 %v517
      %v648 = vunpack.c.l.b16 %v518
      %v649 = vunpack.c.l.b16 %v519
      %v650 = vunpack.c.l.b16 %v520
      %v651 = vunpack.c.l.b16 %v521
      %v652 = vunpack.c.l.b16 %v522
      %v653 = vunpack.c.l.b16 %v523
      %v654 = vunpack.c.l.b16 %v524
      %v655 = vunpack.c.l.b16 %v525
      %v656 = vpack.c.b16 %v592, %v591
      %v657 = vpack.c.b16 %v594, %v593
      %v658 = vpack.c.b16 %v596, %v595
      %v659 = vpack.c.b16 %v598, %v597
      %v660 = vpack.c.b16 %v600, %v599
      %v661 = vpack.c.b16 %v602, %v601
      %v662 = vpack.c.b16 %v604, %v603
      %v663 = vpack.c.b16 %v606, %v605
      %v664 = vpack.c.b16 %v608, %v607
      %v665 = vpack.c.b16 %v610, %v609
      %v666 = vpack.c.b16 %v612, %v611
      %v667 = vpack.c.b16 %v614, %v613
      %v668 = vpack.c.b16 %v616, %v615
      %v669 = vpack.c.b16 %v618, %v617
      %v670 = vpack.c.b16 %v620, %v619
      %v671 = vpack.c.b16 %v622, %v621
      %v672 = vpack.c.b16 %v624, %v623
      %v673 = vpack.c.b16 %v626, %v625
      %v674 = vpack.c.b16 %v628, %v627
      %v675 = vpack.c.b16 %v630, %v629
      %v676 = vpack.c.b16 %v632, %v631
      %v677 = vpack.c.b16 %v634, %v633
      %v678 = vpack.c.b16 %v636, %v635
      %v679 = vpack.c.b16 %v638, %v637
      %v680 = vpack.c.b16 %v640, %v639
      %v681 = vpack.c.b16 %v642, %v641
      %v682 = vpack.c.b16 %v644, %v643
      %v683 = vpack.c.b16 %v646, %v645
      %v684 = vpack.c.b16 %v648, %v647
      %v685 = vpack.c.b16 %v650, %v649
      %v686 = vpack.c.b16 %v652, %v651
      %v687 = vpack.c.b16 %v654, %v653
      %v688 = vpack.c.b16 %v655, %v655
      %vm689 = vsmask.f32 7424
      %v691 = vshrl.u32 %v656, 16
      %v693 = vshll.u32 %v656, 16
      %v695 = vrot.slane %v693, 1
      %v696 = vor.u32 %v691, %v695
      %v698 = vshll.u32 %v657, 16
      %v700 = vrot.slane %v698, 1
      %v701 = vsel %vm689, %v696, %v700
      %v702 = vshrl.u32 %v657, 16
      %v704 = vor.u32 %v702, %v700
      %v706 = vshll.u32 %v658, 16
      %v708 = vrot.slane %v706, 1
      %v709 = vsel %vm689, %v704, %v708
      %v710 = vshrl.u32 %v658, 16
      %v712 = vor.u32 %v710, %v708
      %v714 = vshll.u32 %v659, 16
      %v716 = vrot.slane %v714, 1
      %v717 = vsel %vm689, %v712, %v716
      %v718 = vshrl.u32 %v659, 16
      %v720 = vor.u32 %v718, %v716
      %v722 = vshll.u32 %v660, 16
      %v724 = vrot.slane %v722, 1
      %v725 = vsel %vm689, %v720, %v724
      %v726 = vshrl.u32 %v660, 16
      %v728 = vor.u32 %v726, %v724
      %v730 = vshll.u32 %v661, 16
      %v732 = vrot.slane %v730, 1
      %v733 = vsel %vm689, %v728, %v732
      %v734 = vshrl.u32 %v661, 16
      %v736 = vor.u32 %v734, %v732
      %v738 = vshll.u32 %v662, 16
      %v740 = vrot.slane %v738, 1
      %v741 = vsel %vm689, %v736, %v740
      %v742 = vshrl.u32 %v662, 16
      %v744 = vor.u32 %v742, %v740
      %v746 = vshll.u32 %v663, 16
      %v748 = vrot.slane %v746, 1
      %v749 = vsel %vm689, %v744, %v748
      %v750 = vshrl.u32 %v663, 16
      %v752 = vor.u32 %v750, %v748
      %v754 = vshll.u32 %v664, 16
      %v756 = vrot.slane %v754, 1
      %v757 = vsel %vm689, %v752, %v756
      %v758 = vshrl.u32 %v664, 16
      %v760 = vor.u32 %v758, %v756
      %v762 = vshll.u32 %v665, 16
      %v764 = vrot.slane %v762, 1
      %v765 = vsel %vm689, %v760, %v764
      %v766 = vshrl.u32 %v665, 16
      %v768 = vor.u32 %v766, %v764
      %v770 = vshll.u32 %v666, 16
      %v772 = vrot.slane %v770, 1
      %v773 = vsel %vm689, %v768, %v772
      %v774 = vshrl.u32 %v666, 16
      %v776 = vor.u32 %v774, %v772
      %v778 = vshll.u32 %v667, 16
      %v780 = vrot.slane %v778, 1
      %v781 = vsel %vm689, %v776, %v780
      %v782 = vshrl.u32 %v667, 16
      %v784 = vor.u32 %v782, %v780
      %v786 = vshll.u32 %v668, 16
      %v788 = vrot.slane %v786, 1
      %v789 = vsel %vm689, %v784, %v788
      %v790 = vshrl.u32 %v668, 16
      %v792 = vor.u32 %v790, %v788
      %v794 = vshll.u32 %v669, 16
      %v796 = vrot.slane %v794, 1
      %v797 = vsel %vm689, %v792, %v796
      %v798 = vshrl.u32 %v669, 16
      %v800 = vor.u32 %v798, %v796
      %v802 = vshll.u32 %v670, 16
      %v804 = vrot.slane %v802, 1
      %v805 = vsel %vm689, %v800, %v804
      %v806 = vshrl.u32 %v670, 16
      %v808 = vor.u32 %v806, %v804
      %v810 = vshll.u32 %v671, 16
      %v812 = vrot.slane %v810, 1
      %v813 = vsel %vm689, %v808, %v812
      %v814 = vshrl.u32 %v671, 16
      %v816 = vor.u32 %v814, %v812
      %v818 = vshll.u32 %v672, 16
      %v820 = vrot.slane %v818, 1
      %v821 = vsel %vm689, %v816, %v820
      %v822 = vshrl.u32 %v672, 16
      %v824 = vor.u32 %v822, %v820
      %v826 = vshll.u32 %v673, 16
      %v828 = vrot.slane %v826, 1
      %v829 = vsel %vm689, %v824, %v828
      %v830 = vshrl.u32 %v673, 16
      %v832 = vor.u32 %v830, %v828
      %v834 = vshll.u32 %v674, 16
      %v836 = vrot.slane %v834, 1
      %v837 = vsel %vm689, %v832, %v836
      %v838 = vshrl.u32 %v674, 16
      %v840 = vor.u32 %v838, %v836
      %v842 = vshll.u32 %v675, 16
      %v844 = vrot.slane %v842, 1
      %v845 = vsel %vm689, %v840, %v844
      %v846 = vshrl.u32 %v675, 16
      %v848 = vor.u32 %v846, %v844
      %v850 = vshll.u32 %v676, 16
      %v852 = vrot.slane %v850, 1
      %v853 = vsel %vm689, %v848, %v852
      %v854 = vshrl.u32 %v676, 16
      %v856 = vor.u32 %v854, %v852
      %v858 = vshll.u32 %v677, 16
      %v860 = vrot.slane %v858, 1
      %v861 = vsel %vm689, %v856, %v860
      %v862 = vshrl.u32 %v677, 16
      %v864 = vor.u32 %v862, %v860
      %v866 = vshll.u32 %v678, 16
      %v868 = vrot.slane %v866, 1
      %v869 = vsel %vm689, %v864, %v868
      %v870 = vshrl.u32 %v678, 16
      %v872 = vor.u32 %v870, %v868
      %v874 = vshll.u32 %v679, 16
      %v876 = vrot.slane %v874, 1
      %v877 = vsel %vm689, %v872, %v876
      %v878 = vshrl.u32 %v679, 16
      %v880 = vor.u32 %v878, %v876
      %v882 = vshll.u32 %v680, 16
      %v884 = vrot.slane %v882, 1
      %v885 = vsel %vm689, %v880, %v884
      %v886 = vshrl.u32 %v680, 16
      %v888 = vor.u32 %v886, %v884
      %v890 = vshll.u32 %v681, 16
      %v892 = vrot.slane %v890, 1
      %v893 = vsel %vm689, %v888, %v892
      %v894 = vshrl.u32 %v681, 16
      %v896 = vor.u32 %v894, %v892
      %v898 = vshll.u32 %v682, 16
      %v900 = vrot.slane %v898, 1
      %v901 = vsel %vm689, %v896, %v900
      %v902 = vshrl.u32 %v682, 16
      %v904 = vor.u32 %v902, %v900
      %v906 = vshll.u32 %v683, 16
      %v908 = vrot.slane %v906, 1
      %v909 = vsel %vm689, %v904, %v908
      %v910 = vshrl.u32 %v683, 16
      %v912 = vor.u32 %v910, %v908
      %v914 = vshll.u32 %v684, 16
      %v916 = vrot.slane %v914, 1
      %v917 = vsel %vm689, %v912, %v916
      %v918 = vshrl.u32 %v684, 16
      %v920 = vor.u32 %v918, %v916
      %v922 = vshll.u32 %v685, 16
      %v924 = vrot.slane %v922, 1
      %v925 = vsel %vm689, %v920, %v924
      %v926 = vshrl.u32 %v685, 16
      %v928 = vor.u32 %v926, %v924
      %v930 = vshll.u32 %v686, 16
      %v932 = vrot.slane %v930, 1
      %v933 = vsel %vm689, %v928, %v932
      %v934 = vshrl.u32 %v686, 16
      %v936 = vor.u32 %v934, %v932
      %v938 = vshll.u32 %v687, 16
      %v940 = vrot.slane %v938, 1
      %v941 = vsel %vm689, %v936, %v940
      %v942 = vshrl.u32 %v687, 16
      %v944 = vor.u32 %v942, %v940
      %v946 = vshll.u32 %v688, 16
      %v948 = vrot.slane %v946, 1
      %v949 = vsel %vm689, %v944, %v948
      %950 = vrot.lane.b32.xlu0 %v701, 16
      %v951 = vpop.permute.xlu0 %950
      %952 = vrot.lane.b32.xlu0 %v709, 16
      %v953 = vpop.permute.xlu0 %952
      %954 = vrot.lane.b32.xlu0 %v717, 16
      %v955 = vpop.permute.xlu0 %954
      %956 = vrot.lane.b32.xlu0 %v725, 16
      %v957 = vpop.permute.xlu0 %956
      %958 = vrot.lane.b32.xlu0 %v733, 16
      %v959 = vpop.permute.xlu0 %958
      %960 = vrot.lane.b32.xlu0 %v741, 16
      %v961 = vpop.permute.xlu0 %960
      %962 = vrot.lane.b32.xlu0 %v749, 16
      %v963 = vpop.permute.xlu0 %962
      %964 = vrot.lane.b32.xlu0 %v757, 16
      %v965 = vpop.permute.xlu0 %964
      %966 = vrot.lane.b32.xlu0 %v765, 16
      %v967 = vpop.permute.xlu0 %966
      %968 = vrot.lane.b32.xlu0 %v773, 16
      %v969 = vpop.permute.xlu0 %968
      %970 = vrot.lane.b32.xlu0 %v781, 16
      %v971 = vpop.permute.xlu0 %970
      %972 = vrot.lane.b32.xlu0 %v789, 16
      %v973 = vpop.permute.xlu0 %972
      %974 = vrot.lane.b32.xlu0 %v797, 16
      %v975 = vpop.permute.xlu0 %974
      %976 = vrot.lane.b32.xlu0 %v805, 16
      %v977 = vpop.permute.xlu0 %976
      %978 = vrot.lane.b32.xlu0 %v813, 16
      %v979 = vpop.permute.xlu0 %978
      %980 = vrot.lane.b32.xlu0 %v821, 16
      %v981 = vpop.permute.xlu0 %980
      %982 = vrot.lane.b32.xlu0 %v829, 16
      %v983 = vpop.permute.xlu0 %982
      %984 = vrot.lane.b32.xlu0 %v837, 16
      %v985 = vpop.permute.xlu0 %984
      %986 = vrot.lane.b32.xlu0 %v845, 16
      %v987 = vpop.permute.xlu0 %986
      %988 = vrot.lane.b32.xlu0 %v853, 16
      %v989 = vpop.permute.xlu0 %988
      %990 = vrot.lane.b32.xlu0 %v861, 16
      %v991 = vpop.permute.xlu0 %990
      %992 = vrot.lane.b32.xlu0 %v869, 16
      %v993 = vpop.permute.xlu0 %992
      %994 = vrot.lane.b32.xlu0 %v877, 16
      %v995 = vpop.permute.xlu0 %994
      %996 = vrot.lane.b32.xlu0 %v885, 16
      %v997 = vpop.permute.xlu0 %996
      %998 = vrot.lane.b32.xlu0 %v893, 16
      %v999 = vpop.permute.xlu0 %998
      %1000 = vrot.lane.b32.xlu0 %v901, 16
      %v1001 = vpop.permute.xlu0 %1000
      %1002 = vrot.lane.b32.xlu0 %v909, 16
      %v1003 = vpop.permute.xlu0 %1002
      %1004 = vrot.lane.b32.xlu0 %v917, 16
      %v1005 = vpop.permute.xlu0 %1004
      %1006 = vrot.lane.b32.xlu0 %v925, 16
      %v1007 = vpop.permute.xlu0 %1006
      %1008 = vrot.lane.b32.xlu0 %v933, 16
      %v1009 = vpop.permute.xlu0 %1008
      %1010 = vrot.lane.b32.xlu0 %v941, 16
      %v1011 = vpop.permute.xlu0 %1010
      %1012 = vrot.lane.b32.xlu0 %v949, 16
      %v1013 = vpop.permute.xlu0 %1012
      %vm1046 = vcmask 261248
      %1047 = vst.msk [vmem:[#allocation2] sm:$0xff] %vm1046, %v951
      %1048 = vst.msk [vmem:[#allocation2 + $0x10] sm:$0xff] %vm1046, %v953
      %1049 = vst.msk [vmem:[#allocation2 + $0x20] sm:$0xff] %vm1046, %v955
      %1050 = vst.msk [vmem:[#allocation2 + $0x30] sm:$0xff] %vm1046, %v957
      %1051 = vst.msk [vmem:[#allocation2 + $0x40] sm:$0xff] %vm1046, %v959
      %1052 = vst.msk [vmem:[#allocation2 + $0x50] sm:$0xff] %vm1046, %v961
      %1053 = vst.msk [vmem:[#allocation2 + $0x60] sm:$0xff] %vm1046, %v963
      %1054 = vst.msk [vmem:[#allocation2 + $0x70] sm:$0xff] %vm1046, %v965
      %1055 = vst.msk [vmem:[#allocation2 + $0x80] sm:$0xff] %vm1046, %v967
      %1056 = vst.msk [vmem:[#allocation2 + $0x90] sm:$0xff] %vm1046, %v969
      %1057 = vst.msk [vmem:[#allocation2 + $0xa0] sm:$0xff] %vm1046, %v971
      %1058 = vst.msk [vmem:[#allocation2 + $0xb0] sm:$0xff] %vm1046, %v973
      %1059 = vst.msk [vmem:[#allocation2 + $0xc0] sm:$0xff] %vm1046, %v975
      %1060 = vst.msk [vmem:[#allocation2 + $0xd0] sm:$0xff] %vm1046, %v977
      %1061 = vst.msk [vmem:[#allocation2 + $0xe0] sm:$0xff] %vm1046, %v979
      %1062 = vst.msk [vmem:[#allocation2 + $0xf0] sm:$0xff] %vm1046, %v981
      %1063 = vst.msk [vmem:[#allocation2 + $0x100] sm:$0xff] %vm1046, %v983
      %1064 = vst.msk [vmem:[#allocation2 + $0x110] sm:$0xff] %vm1046, %v985
      %1065 = vst.msk [vmem:[#allocation2 + $0x120] sm:$0xff] %vm1046, %v987
      %1066 = vst.msk [vmem:[#allocation2 + $0x130] sm:$0xff] %vm1046, %v989
      %1067 = vst.msk [vmem:[#allocation2 + $0x140] sm:$0xff] %vm1046, %v991
      %1068 = vst.msk [vmem:[#allocation2 + $0x150] sm:$0xff] %vm1046, %v993
      %1069 = vst.msk [vmem:[#allocation2 + $0x160] sm:$0xff] %vm1046, %v995
      %1070 = vst.msk [vmem:[#allocation2 + $0x170] sm:$0xff] %vm1046, %v997
      %1071 = vst.msk [vmem:[#allocation2 + $0x180] sm:$0xff] %vm1046, %v999
      %1072 = vst.msk [vmem:[#allocation2 + $0x190] sm:$0xff] %vm1046, %v1001
      %1073 = vst.msk [vmem:[#allocation2 + $0x1a0] sm:$0xff] %vm1046, %v1003
      %1074 = vst.msk [vmem:[#allocation2 + $0x1b0] sm:$0xff] %vm1046, %v1005
      %1075 = vst.msk [vmem:[#allocation2 + $0x1c0] sm:$0xff] %vm1046, %v1007
      %1076 = vst.msk [vmem:[#allocation2 + $0x1d0] sm:$0xff] %vm1046, %v1009
      %1077 = vst.msk [vmem:[#allocation2 + $0x1e0] sm:$0xff] %vm1046, %v1011
      %1078 = vst.msk [vmem:[#allocation2 + $0x1f0] sm:$0xff] %vm1046, %v1013
      %v1079 = vld [vmem:[%s165] sm:$0xe]
      %v1080 = vld [vmem:[%s165 + $0x4] sm:$0xf]
      %v1081 = vld [vmem:[%s165 + $0x8] sm:$0xf]
      %v1082 = vld [vmem:[%s165 + $0xc] sm:$0xf]
      %v1083 = vld [vmem:[%s165 + $0x10] sm:$0xf]
      %v1084 = vld [vmem:[%s165 + $0x14] sm:$0xf]
      %v1085 = vld [vmem:[%s165 + $0x18] sm:$0xf]
      %v1086 = vld [vmem:[%s165 + $0x1c] sm:$0xf]
      %v1087 = vld [vmem:[%s165 + $0x20] sm:$0xf]
      %v1088 = vld [vmem:[%s165 + $0x24] sm:$0xf]
      %v1089 = vld [vmem:[%s165 + $0x28] sm:$0xf]
      %v1090 = vld [vmem:[%s165 + $0x2c] sm:$0xf]
      %v1091 = vld [vmem:[%s165 + $0x30] sm:$0xf]
      %v1092 = vld [vmem:[%s165 + $0x34] sm:$0xf]
      %v1093 = vld [vmem:[%s165 + $0x38] sm:$0xf]
      %v1094 = vld [vmem:[%s165 + $0x3c] sm:$0xf]
      %v1095 = vld [vmem:[%s165 + $0x40] sm:$0xf]
      %v1096 = vld [vmem:[%s165 + $0x44] sm:$0xf]
      %v1097 = vld [vmem:[%s165 + $0x48] sm:$0xf]
      %v1098 = vld [vmem:[%s165 + $0x4c] sm:$0xf]
      %v1099 = vld [vmem:[%s165 + $0x50] sm:$0xf]
      %v1100 = vld [vmem:[%s165 + $0x54] sm:$0xf]
      %v1101 = vld [vmem:[%s165 + $0x58] sm:$0xf]
      %v1102 = vld [vmem:[%s165 + $0x5c] sm:$0xf]
      %v1103 = vld [vmem:[%s165 + $0x60] sm:$0xf]
      %v1104 = vld [vmem:[%s165 + $0x64] sm:$0xf]
      %v1105 = vld [vmem:[%s165 + $0x68] sm:$0xf]
      %v1106 = vld [vmem:[%s165 + $0x6c] sm:$0xf]
      %v1107 = vld [vmem:[%s165 + $0x70] sm:$0xf]
      %v1108 = vld [vmem:[%s165 + $0x74] sm:$0xf]
      %v1109 = vld [vmem:[%s165 + $0x78] sm:$0xf]
      %v1110 = vld [vmem:[%s165 + $0x7c] sm:$0xf]
      %v1111 = vld [vmem:[%s165 + $0x80] sm:$0xf]
      %v1112 = vld [vmem:[%s165 + $0x84] sm:$0xf]
      %v1113 = vld [vmem:[%s165 + $0x88] sm:$0xf]
      %v1114 = vld [vmem:[%s165 + $0x8c] sm:$0xf]
      %v1115 = vld [vmem:[%s165 + $0x90] sm:$0xf]
      %v1116 = vld [vmem:[%s165 + $0x94] sm:$0xf]
      %v1117 = vld [vmem:[%s165 + $0x98] sm:$0xf]
      %v1118 = vld [vmem:[%s165 + $0x9c] sm:$0xf]
      %v1119 = vld [vmem:[%s165 + $0xa0] sm:$0xf]
      %v1120 = vld [vmem:[%s165 + $0xa4] sm:$0xf]
      %v1121 = vld [vmem:[%s165 + $0xa8] sm:$0xf]
      %v1122 = vld [vmem:[%s165 + $0xac] sm:$0xf]
      %v1123 = vld [vmem:[%s165 + $0xb0] sm:$0xf]
      %v1124 = vld [vmem:[%s165 + $0xb4] sm:$0xf]
      %v1125 = vld [vmem:[%s165 + $0xb8] sm:$0xf]
      %v1126 = vld [vmem:[%s165 + $0xbc] sm:$0xf]
      %v1127 = vld [vmem:[%s165 + $0xc0] sm:$0xf]
      %v1128 = vld [vmem:[%s165 + $0xc4] sm:$0xf]
      %v1129 = vld [vmem:[%s165 + $0xc8] sm:$0xf]
      %v1130 = vld [vmem:[%s165 + $0xcc] sm:$0xf]
      %v1131 = vld [vmem:[%s165 + $0xd0] sm:$0xf]
      %v1132 = vld [vmem:[%s165 + $0xd4] sm:$0xf]
      %v1133 = vld [vmem:[%s165 + $0xd8] sm:$0xf]
      %v1134 = vld [vmem:[%s165 + $0xdc] sm:$0xf]
      %v1135 = vld [vmem:[%s165 + $0xe0] sm:$0xf]
      %v1136 = vld [vmem:[%s165 + $0xe4] sm:$0xf]
      %v1137 = vld [vmem:[%s165 + $0xe8] sm:$0xf]
      %v1138 = vld [vmem:[%s165 + $0xec] sm:$0xf]
      %v1139 = vld [vmem:[%s165 + $0xf0] sm:$0xf]
      %v1140 = vld [vmem:[%s165 + $0xf4] sm:$0xf]
      %v1141 = vld [vmem:[%s165 + $0xf8] sm:$0xf]
      %v1142 = vld [vmem:[%s165 + $0xfc] sm:$0xf]
      %v1143 = vld [vmem:[%s165 + $0x100] sm:$0x1]
      %v1209 = vunpack.c.l.b16 %v1079
      %v1210 = vunpack.c.l.b16 %v1080
      %v1211 = vunpack.c.l.b16 %v1081
      %v1212 = vunpack.c.l.b16 %v1082
      %v1213 = vunpack.c.l.b16 %v1083
      %v1214 = vunpack.c.l.b16 %v1084
      %v1215 = vunpack.c.l.b16 %v1085
      %v1216 = vunpack.c.l.b16 %v1086
      %v1217 = vunpack.c.l.b16 %v1087
      %v1218 = vunpack.c.l.b16 %v1088
      %v1219 = vunpack.c.l.b16 %v1089
      %v1220 = vunpack.c.l.b16 %v1090
      %v1221 = vunpack.c.l.b16 %v1091
      %v1222 = vunpack.c.l.b16 %v1092
      %v1223 = vunpack.c.l.b16 %v1093
      %v1224 = vunpack.c.l.b16 %v1094
      %v1225 = vunpack.c.l.b16 %v1095
      %v1226 = vunpack.c.l.b16 %v1096
      %v1227 = vunpack.c.l.b16 %v1097
      %v1228 = vunpack.c.l.b16 %v1098
      %v1229 = vunpack.c.l.b16 %v1099
      %v1230 = vunpack.c.l.b16 %v1100
      %v1231 = vunpack.c.l.b16 %v1101
      %v1232 = vunpack.c.l.b16 %v1102
      %v1233 = vunpack.c.l.b16 %v1103
      %v1234 = vunpack.c.l.b16 %v1104
      %v1235 = vunpack.c.l.b16 %v1105
      %v1236 = vunpack.c.l.b16 %v1106
      %v1237 = vunpack.c.l.b16 %v1107
      %v1238 = vunpack.c.l.b16 %v1108
      %v1239 = vunpack.c.l.b16 %v1109
      %v1240 = vunpack.c.l.b16 %v1110
      %v1241 = vunpack.c.l.b16 %v1111
      %v1242 = vunpack.c.l.b16 %v1112
      %v1243 = vunpack.c.l.b16 %v1113
      %v1244 = vunpack.c.l.b16 %v1114
      %v1245 = vunpack.c.l.b16 %v1115
      %v1246 = vunpack.c.l.b16 %v1116
      %v1247 = vunpack.c.l.b16 %v1117
      %v1248 = vunpack.c.l.b16 %v1118
      %v1249 = vunpack.c.l.b16 %v1119
      %v1250 = vunpack.c.l.b16 %v1120
      %v1251 = vunpack.c.l.b16 %v1121
      %v1252 = vunpack.c.l.b16 %v1122
      %v1253 = vunpack.c.l.b16 %v1123
      %v1254 = vunpack.c.l.b16 %v1124
      %v1255 = vunpack.c.l.b16 %v1125
      %v1256 = vunpack.c.l.b16 %v1126
      %v1257 = vunpack.c.l.b16 %v1127
      %v1258 = vunpack.c.l.b16 %v1128
      %v1259 = vunpack.c.l.b16 %v1129
      %v1260 = vunpack.c.l.b16 %v1130
      %v1261 = vunpack.c.l.b16 %v1131
      %v1262 = vunpack.c.l.b16 %v1132
      %v1263 = vunpack.c.l.b16 %v1133
      %v1264 = vunpack.c.l.b16 %v1134
      %v1265 = vunpack.c.l.b16 %v1135
      %v1266 = vunpack.c.l.b16 %v1136
      %v1267 = vunpack.c.l.b16 %v1137
      %v1268 = vunpack.c.l.b16 %v1138
      %v1269 = vunpack.c.l.b16 %v1139
      %v1270 = vunpack.c.l.b16 %v1140
      %v1271 = vunpack.c.l.b16 %v1141
      %v1272 = vunpack.c.l.b16 %v1142
      %v1273 = vunpack.c.l.b16 %v1143
      %v1274 = vpack.c.b16 %v1210, %v1209
      %v1275 = vpack.c.b16 %v1212, %v1211
      %v1276 = vpack.c.b16 %v1214, %v1213
      %v1277 = vpack.c.b16 %v1216, %v1215
      %v1278 = vpack.c.b16 %v1218, %v1217
      %v1279 = vpack.c.b16 %v1220, %v1219
      %v1280 = vpack.c.b16 %v1222, %v1221
      %v1281 = vpack.c.b16 %v1224, %v1223
      %v1282 = vpack.c.b16 %v1226, %v1225
      %v1283 = vpack.c.b16 %v1228, %v1227
      %v1284 = vpack.c.b16 %v1230, %v1229
      %v1285 = vpack.c.b16 %v1232, %v1231
      %v1286 = vpack.c.b16 %v1234, %v1233
      %v1287 = vpack.c.b16 %v1236, %v1235
      %v1288 = vpack.c.b16 %v1238, %v1237
      %v1289 = vpack.c.b16 %v1240, %v1239
      %v1290 = vpack.c.b16 %v1242, %v1241
      %v1291 = vpack.c.b16 %v1244, %v1243
      %v1292 = vpack.c.b16 %v1246, %v1245
      %v1293 = vpack.c.b16 %v1248, %v1247
      %v1294 = vpack.c.b16 %v1250, %v1249
      %v1295 = vpack.c.b16 %v1252, %v1251
      %v1296 = vpack.c.b16 %v1254, %v1253
      %v1297 = vpack.c.b16 %v1256, %v1255
      %v1298 = vpack.c.b16 %v1258, %v1257
      %v1299 = vpack.c.b16 %v1260, %v1259
      %v1300 = vpack.c.b16 %v1262, %v1261
      %v1301 = vpack.c.b16 %v1264, %v1263
      %v1302 = vpack.c.b16 %v1266, %v1265
      %v1303 = vpack.c.b16 %v1268, %v1267
      %v1304 = vpack.c.b16 %v1270, %v1269
      %v1305 = vpack.c.b16 %v1272, %v1271
      %v1306 = vpack.c.b16 %v1273, %v1273
      %vm1307 = vcmask 1046528
      %v1308 = vrot.slane %v1274, 1
      %v1309 = vrot.slane %v1275, 1
      %v1310 = vsel %vm1307, %v1308, %v1309
      %v1311 = vrot.slane %v1276, 1
      %v1312 = vsel %vm1307, %v1309, %v1311
      %v1313 = vrot.slane %v1277, 1
      %v1314 = vsel %vm1307, %v1311, %v1313
      %v1315 = vrot.slane %v1278, 1
      %v1316 = vsel %vm1307, %v1313, %v1315
      %v1317 = vrot.slane %v1279, 1
      %v1318 = vsel %vm1307, %v1315, %v1317
      %v1319 = vrot.slane %v1280, 1
      %v1320 = vsel %vm1307, %v1317, %v1319
      %v1321 = vrot.slane %v1281, 1
      %v1322 = vsel %vm1307, %v1319, %v1321
      %v1323 = vrot.slane %v1282, 1
      %v1324 = vsel %vm1307, %v1321, %v1323
      %v1325 = vrot.slane %v1283, 1
      %v1326 = vsel %vm1307, %v1323, %v1325
      %v1327 = vrot.slane %v1284, 1
      %v1328 = vsel %vm1307, %v1325, %v1327
      %v1329 = vrot.slane %v1285, 1
      %v1330 = vsel %vm1307, %v1327, %v1329
      %v1331 = vrot.slane %v1286, 1
      %v1332 = vsel %vm1307, %v1329, %v1331
      %v1333 = vrot.slane %v1287, 1
      %v1334 = vsel %vm1307, %v1331, %v1333
      %v1335 = vrot.slane %v1288, 1
      %v1336 = vsel %vm1307, %v1333, %v1335
      %v1337 = vrot.slane %v1289, 1
      %v1338 = vsel %vm1307, %v1335, %v1337
      %v1339 = vrot.slane %v1290, 1
      %v1340 = vsel %vm1307, %v1337, %v1339
      %v1341 = vrot.slane %v1291, 1
      %v1342 = vsel %vm1307, %v1339, %v1341
      %v1343 = vrot.slane %v1292, 1
      %v1344 = vsel %vm1307, %v1341, %v1343
      %v1345 = vrot.slane %v1293, 1
      %v1346 = vsel %vm1307, %v1343, %v1345
      %v1347 = vrot.slane %v1294, 1
      %v1348 = vsel %vm1307, %v1345, %v1347
      %v1349 = vrot.slane %v1295, 1
      %v1350 = vsel %vm1307, %v1347, %v1349
      %v1351 = vrot.slane %v1296, 1
      %v1352 = vsel %vm1307, %v1349, %v1351
      %v1353 = vrot.slane %v1297, 1
      %v1354 = vsel %vm1307, %v1351, %v1353
      %v1355 = vrot.slane %v1298, 1
      %v1356 = vsel %vm1307, %v1353, %v1355
      %v1357 = vrot.slane %v1299, 1
      %v1358 = vsel %vm1307, %v1355, %v1357
      %v1359 = vrot.slane %v1300, 1
      %v1360 = vsel %vm1307, %v1357, %v1359
      %v1361 = vrot.slane %v1301, 1
      %v1362 = vsel %vm1307, %v1359, %v1361
      %v1363 = vrot.slane %v1302, 1
      %v1364 = vsel %vm1307, %v1361, %v1363
      %v1365 = vrot.slane %v1303, 1
      %v1366 = vsel %vm1307, %v1363, %v1365
      %v1367 = vrot.slane %v1304, 1
      %v1368 = vsel %vm1307, %v1365, %v1367
      %v1369 = vrot.slane %v1305, 1
      %v1370 = vsel %vm1307, %v1367, %v1369
      %v1371 = vrot.slane %v1306, 1
      %v1372 = vsel %vm1307, %v1369, %v1371
      %1373 = vrot.lane.b32.xlu0 %v1310, 32
      %v1374 = vpop.permute.xlu0 %1373
      %1375 = vrot.lane.b32.xlu0 %v1312, 32
      %v1376 = vpop.permute.xlu0 %1375
      %1377 = vrot.lane.b32.xlu0 %v1314, 32
      %v1378 = vpop.permute.xlu0 %1377
      %1379 = vrot.lane.b32.xlu0 %v1316, 32
      %v1380 = vpop.permute.xlu0 %1379
      %1381 = vrot.lane.b32.xlu0 %v1318, 32
      %v1382 = vpop.permute.xlu0 %1381
      %1383 = vrot.lane.b32.xlu0 %v1320, 32
      %v1384 = vpop.permute.xlu0 %1383
      %1385 = vrot.lane.b32.xlu0 %v1322, 32
      %v1386 = vpop.permute.xlu0 %1385
      %1387 = vrot.lane.b32.xlu0 %v1324, 32
      %v1388 = vpop.permute.xlu0 %1387
      %1389 = vrot.lane.b32.xlu0 %v1326, 32
      %v1390 = vpop.permute.xlu0 %1389
      %1391 = vrot.lane.b32.xlu0 %v1328, 32
      %v1392 = vpop.permute.xlu0 %1391
      %1393 = vrot.lane.b32.xlu0 %v1330, 32
      %v1394 = vpop.permute.xlu0 %1393
      %1395 = vrot.lane.b32.xlu0 %v1332, 32
      %v1396 = vpop.permute.xlu0 %1395
      %1397 = vrot.lane.b32.xlu0 %v1334, 32
      %v1398 = vpop.permute.xlu0 %1397
      %1399 = vrot.lane.b32.xlu0 %v1336, 32
      %v1400 = vpop.permute.xlu0 %1399
      %1401 = vrot.lane.b32.xlu0 %v1338, 32
      %v1402 = vpop.permute.xlu0 %1401
      %1403 = vrot.lane.b32.xlu0 %v1340, 32
      %v1404 = vpop.permute.xlu0 %1403
      %1405 = vrot.lane.b32.xlu0 %v1342, 32
      %v1406 = vpop.permute.xlu0 %1405
      %1407 = vrot.lane.b32.xlu0 %v1344, 32
      %v1408 = vpop.permute.xlu0 %1407
      %1409 = vrot.lane.b32.xlu0 %v1346, 32
      %v1410 = vpop.permute.xlu0 %1409
      %1411 = vrot.lane.b32.xlu0 %v1348, 32
      %v1412 = vpop.permute.xlu0 %1411
      %1413 = vrot.lane.b32.xlu0 %v1350, 32
      %v1414 = vpop.permute.xlu0 %1413
      %1415 = vrot.lane.b32.xlu0 %v1352, 32
      %v1416 = vpop.permute.xlu0 %1415
      %1417 = vrot.lane.b32.xlu0 %v1354, 32
      %v1418 = vpop.permute.xlu0 %1417
      %1419 = vrot.lane.b32.xlu0 %v1356, 32
      %v1420 = vpop.permute.xlu0 %1419
      %1421 = vrot.lane.b32.xlu0 %v1358, 32
      %v1422 = vpop.permute.xlu0 %1421
      %1423 = vrot.lane.b32.xlu0 %v1360, 32
      %v1424 = vpop.permute.xlu0 %1423
      %1425 = vrot.lane.b32.xlu0 %v1362, 32
      %v1426 = vpop.permute.xlu0 %1425
      %1427 = vrot.lane.b32.xlu0 %v1364, 32
      %v1428 = vpop.permute.xlu0 %1427
      %1429 = vrot.lane.b32.xlu0 %v1366, 32
      %v1430 = vpop.permute.xlu0 %1429
      %1431 = vrot.lane.b32.xlu0 %v1368, 32
      %v1432 = vpop.permute.xlu0 %1431
      %1433 = vrot.lane.b32.xlu0 %v1370, 32
      %v1434 = vpop.permute.xlu0 %1433
      %1435 = vrot.lane.b32.xlu0 %v1372, 32
      %v1436 = vpop.permute.xlu0 %1435
      %vm1469 = vcmask 392448
      %1470 = vst.msk [vmem:[#allocation2] sm:$0xff] %vm1469, %v1374
      %1471 = vst.msk [vmem:[#allocation2 + $0x10] sm:$0xff] %vm1469, %v1376
      %1472 = vst.msk [vmem:[#allocation2 + $0x20] sm:$0xff] %vm1469, %v1378
      %1473 = vst.msk [vmem:[#allocation2 + $0x30] sm:$0xff] %vm1469, %v1380
      %1474 = vst.msk [vmem:[#allocation2 + $0x40] sm:$0xff] %vm1469, %v1382
      %1475 = vst.msk [vmem:[#allocation2 + $0x50] sm:$0xff] %vm1469, %v1384
      %1476 = vst.msk [vmem:[#allocation2 + $0x60] sm:$0xff] %vm1469, %v1386
      %1477 = vst.msk [vmem:[#allocation2 + $0x70] sm:$0xff] %vm1469, %v1388
      %1478 = vst.msk [vmem:[#allocation2 + $0x80] sm:$0xff] %vm1469, %v1390
      %1479 = vst.msk [vmem:[#allocation2 + $0x90] sm:$0xff] %vm1469, %v1392
      %1480 = vst.msk [vmem:[#allocation2 + $0xa0] sm:$0xff] %vm1469, %v1394
      %1481 = vst.msk [vmem:[#allocation2 + $0xb0] sm:$0xff] %vm1469, %v1396
      %1482 = vst.msk [vmem:[#allocation2 + $0xc0] sm:$0xff] %vm1469, %v1398
      %1483 = vst.msk [vmem:[#allocation2 + $0xd0] sm:$0xff] %vm1469, %v1400
      %1484 = vst.msk [vmem:[#allocation2 + $0xe0] sm:$0xff] %vm1469, %v1402
      %1485 = vst.msk [vmem:[#allocation2 + $0xf0] sm:$0xff] %vm1469, %v1404
      %1486 = vst.msk [vmem:[#allocation2 + $0x100] sm:$0xff] %vm1469, %v1406
      %1487 = vst.msk [vmem:[#allocation2 + $0x110] sm:$0xff] %vm1469, %v1408
      %1488 = vst.msk [vmem:[#allocation2 + $0x120] sm:$0xff] %vm1469, %v1410
      %1489 = vst.msk [vmem:[#allocation2 + $0x130] sm:$0xff] %vm1469, %v1412
      %1490 = vst.msk [vmem:[#allocation2 + $0x140] sm:$0xff] %vm1469, %v1414
      %1491 = vst.msk [vmem:[#allocation2 + $0x150] sm:$0xff] %vm1469, %v1416
      %1492 = vst.msk [vmem:[#allocation2 + $0x160] sm:$0xff] %vm1469, %v1418
      %1493 = vst.msk [vmem:[#allocation2 + $0x170] sm:$0xff] %vm1469, %v1420
      %1494 = vst.msk [vmem:[#allocation2 + $0x180] sm:$0xff] %vm1469, %v1422
      %1495 = vst.msk [vmem:[#allocation2 + $0x190] sm:$0xff] %vm1469, %v1424
      %1496 = vst.msk [vmem:[#allocation2 + $0x1a0] sm:$0xff] %vm1469, %v1426
      %1497 = vst.msk [vmem:[#allocation2 + $0x1b0] sm:$0xff] %vm1469, %v1428
      %1498 = vst.msk [vmem:[#allocation2 + $0x1c0] sm:$0xff] %vm1469, %v1430
      %1499 = vst.msk [vmem:[#allocation2 + $0x1d0] sm:$0xff] %vm1469, %v1432
      %1500 = vst.msk [vmem:[#allocation2 + $0x1e0] sm:$0xff] %vm1469, %v1434
      %1501 = vst.msk [vmem:[#allocation2 + $0x1f0] sm:$0xff] %vm1469, %v1436
      %v1502 = vld [vmem:[%s165 + $0x10] sm:$0xf]
      %v1503 = vld [vmem:[%s165 + $0x14] sm:$0xf]
      %v1504 = vld [vmem:[%s165 + $0x18] sm:$0xf]
      %v1505 = vld [vmem:[%s165 + $0x1c] sm:$0xf]
      %v1506 = vld [vmem:[%s165 + $0x20] sm:$0xf]
      %v1507 = vld [vmem:[%s165 + $0x24] sm:$0xf]
      %v1508 = vld [vmem:[%s165 + $0x28] sm:$0xf]
      %v1509 = vld [vmem:[%s165 + $0x2c] sm:$0xf]
      %v1510 = vld [vmem:[%s165 + $0x30] sm:$0xf]
      %v1511 = vld [vmem:[%s165 + $0x34] sm:$0xf]
      %v1512 = vld [vmem:[%s165 + $0x38] sm:$0xf]
      %v1513 = vld [vmem:[%s165 + $0x3c] sm:$0xf]
      %v1514 = vld [vmem:[%s165 + $0x40] sm:$0xf]
      %v1515 = vld [vmem:[%s165 + $0x44] sm:$0xf]
      %v1516 = vld [vmem:[%s165 + $0x48] sm:$0xf]
      %v1517 = vld [vmem:[%s165 + $0x4c] sm:$0xf]
      %v1518 = vld [vmem:[%s165 + $0x50] sm:$0xf]
      %v1519 = vld [vmem:[%s165 + $0x54] sm:$0xf]
      %v1520 = vld [vmem:[%s165 + $0x58] sm:$0xf]
      %v1521 = vld [vmem:[%s165 + $0x5c] sm:$0xf]
      %v1522 = vld [vmem:[%s165 + $0x60] sm:$0xf]
      %v1523 = vld [vmem:[%s165 + $0x64] sm:$0xf]
      %v1524 = vld [vmem:[%s165 + $0x68] sm:$0xf]
      %v1525 = vld [vmem:[%s165 + $0x6c] sm:$0xf]
      %v1526 = vld [vmem:[%s165 + $0x70] sm:$0xf]
      %v1527 = vld [vmem:[%s165 + $0x74] sm:$0xf]
      %v1528 = vld [vmem:[%s165 + $0x78] sm:$0xf]
      %v1529 = vld [vmem:[%s165 + $0x7c] sm:$0xf]
      %v1530 = vld [vmem:[%s165 + $0x80] sm:$0xf]
      %v1531 = vld [vmem:[%s165 + $0x84] sm:$0xf]
      %v1532 = vld [vmem:[%s165 + $0x88] sm:$0xf]
      %v1533 = vld [vmem:[%s165 + $0x8c] sm:$0xf]
      %v1534 = vld [vmem:[%s165 + $0x90] sm:$0xf]
      %v1535 = vld [vmem:[%s165 + $0x94] sm:$0xf]
      %v1536 = vld [vmem:[%s165 + $0x98] sm:$0xf]
      %v1537 = vld [vmem:[%s165 + $0x9c] sm:$0xf]
      %v1538 = vld [vmem:[%s165 + $0xa0] sm:$0xf]
      %v1539 = vld [vmem:[%s165 + $0xa4] sm:$0xf]
      %v1540 = vld [vmem:[%s165 + $0xa8] sm:$0xf]
      %v1541 = vld [vmem:[%s165 + $0xac] sm:$0xf]
      %v1542 = vld [vmem:[%s165 + $0xb0] sm:$0xf]
      %v1543 = vld [vmem:[%s165 + $0xb4] sm:$0xf]
      %v1544 = vld [vmem:[%s165 + $0xb8] sm:$0xf]
      %v1545 = vld [vmem:[%s165 + $0xbc] sm:$0xf]
      %v1546 = vld [vmem:[%s165 + $0xc0] sm:$0xf]
      %v1547 = vld [vmem:[%s165 + $0xc4] sm:$0xf]
      %v1548 = vld [vmem:[%s165 + $0xc8] sm:$0xf]
      %v1549 = vld [vmem:[%s165 + $0xcc] sm:$0xf]
      %v1550 = vld [vmem:[%s165 + $0xd0] sm:$0xf]
      %v1551 = vld [vmem:[%s165 + $0xd4] sm:$0xf]
      %v1552 = vld [vmem:[%s165 + $0xd8] sm:$0xf]
      %v1553 = vld [vmem:[%s165 + $0xdc] sm:$0xf]
      %v1554 = vld [vmem:[%s165 + $0xe0] sm:$0xf]
      %v1555 = vld [vmem:[%s165 + $0xe4] sm:$0xf]
      %v1556 = vld [vmem:[%s165 + $0xe8] sm:$0xf]
      %v1557 = vld [vmem:[%s165 + $0xec] sm:$0xf]
      %v1558 = vld [vmem:[%s165 + $0xf0] sm:$0xf]
      %v1559 = vld [vmem:[%s165 + $0xf4] sm:$0xf]
      %v1560 = vld [vmem:[%s165 + $0xf8] sm:$0xf]
      %v1561 = vld [vmem:[%s165 + $0xfc] sm:$0xf]
      %v1562 = vld [vmem:[%s165 + $0x100] sm:$0xf]
      %v1563 = vld [vmem:[%s165 + $0x104] sm:$0xf]
      %v1564 = vld [vmem:[%s165 + $0x108] sm:$0xf]
      %v1565 = vld [vmem:[%s165 + $0x10c] sm:$0xf]
      %v1630 = vunpack.c.l.b16 %v1502
      %v1631 = vunpack.c.l.b16 %v1503
      %v1632 = vunpack.c.l.b16 %v1504
      %v1633 = vunpack.c.l.b16 %v1505
      %v1634 = vunpack.c.l.b16 %v1506
      %v1635 = vunpack.c.l.b16 %v1507
      %v1636 = vunpack.c.l.b16 %v1508
      %v1637 = vunpack.c.l.b16 %v1509
      %v1638 = vunpack.c.l.b16 %v1510
      %v1639 = vunpack.c.l.b16 %v1511
      %v1640 = vunpack.c.l.b16 %v1512
      %v1641 = vunpack.c.l.b16 %v1513
      %v1642 = vunpack.c.l.b16 %v1514
      %v1643 = vunpack.c.l.b16 %v1515
      %v1644 = vunpack.c.l.b16 %v1516
      %v1645 = vunpack.c.l.b16 %v1517
      %v1646 = vunpack.c.l.b16 %v1518
      %v1647 = vunpack.c.l.b16 %v1519
      %v1648 = vunpack.c.l.b16 %v1520
      %v1649 = vunpack.c.l.b16 %v1521
      %v1650 = vunpack.c.l.b16 %v1522
      %v1651 = vunpack.c.l.b16 %v1523
      %v1652 = vunpack.c.l.b16 %v1524
      %v1653 = vunpack.c.l.b16 %v1525
      %v1654 = vunpack.c.l.b16 %v1526
      %v1655 = vunpack.c.l.b16 %v1527
      %v1656 = vunpack.c.l.b16 %v1528
      %v1657 = vunpack.c.l.b16 %v1529
      %v1658 = vunpack.c.l.b16 %v1530
      %v1659 = vunpack.c.l.b16 %v1531
      %v1660 = vunpack.c.l.b16 %v1532
      %v1661 = vunpack.c.l.b16 %v1533
      %v1662 = vunpack.c.l.b16 %v1534
      %v1663 = vunpack.c.l.b16 %v1535
      %v1664 = vunpack.c.l.b16 %v1536
      %v1665 = vunpack.c.l.b16 %v1537
      %v1666 = vunpack.c.l.b16 %v1538
      %v1667 = vunpack.c.l.b16 %v1539
      %v1668 = vunpack.c.l.b16 %v1540
      %v1669 = vunpack.c.l.b16 %v1541
      %v1670 = vunpack.c.l.b16 %v1542
      %v1671 = vunpack.c.l.b16 %v1543
      %v1672 = vunpack.c.l.b16 %v1544
      %v1673 = vunpack.c.l.b16 %v1545
      %v1674 = vunpack.c.l.b16 %v1546
      %v1675 = vunpack.c.l.b16 %v1547
      %v1676 = vunpack.c.l.b16 %v1548
      %v1677 = vunpack.c.l.b16 %v1549
      %v1678 = vunpack.c.l.b16 %v1550
      %v1679 = vunpack.c.l.b16 %v1551
      %v1680 = vunpack.c.l.b16 %v1552
      %v1681 = vunpack.c.l.b16 %v1553
      %v1682 = vunpack.c.l.b16 %v1554
      %v1683 = vunpack.c.l.b16 %v1555
      %v1684 = vunpack.c.l.b16 %v1556
      %v1685 = vunpack.c.l.b16 %v1557
      %v1686 = vunpack.c.l.b16 %v1558
      %v1687 = vunpack.c.l.b16 %v1559
      %v1688 = vunpack.c.l.b16 %v1560
      %v1689 = vunpack.c.l.b16 %v1561
      %v1690 = vunpack.c.l.b16 %v1562
      %v1691 = vunpack.c.l.b16 %v1563
      %v1692 = vunpack.c.l.b16 %v1564
      %v1693 = vunpack.c.l.b16 %v1565
      %v1694 = vpack.c.b16 %v1631, %v1630
      %v1695 = vpack.c.b16 %v1633, %v1632
      %v1696 = vpack.c.b16 %v1635, %v1634
      %v1697 = vpack.c.b16 %v1637, %v1636
      %v1698 = vpack.c.b16 %v1639, %v1638
      %v1699 = vpack.c.b16 %v1641, %v1640
      %v1700 = vpack.c.b16 %v1643, %v1642
      %v1701 = vpack.c.b16 %v1645, %v1644
      %v1702 = vpack.c.b16 %v1647, %v1646
      %v1703 = vpack.c.b16 %v1649, %v1648
      %v1704 = vpack.c.b16 %v1651, %v1650
      %v1705 = vpack.c.b16 %v1653, %v1652
      %v1706 = vpack.c.b16 %v1655, %v1654
      %v1707 = vpack.c.b16 %v1657, %v1656
      %v1708 = vpack.c.b16 %v1659, %v1658
      %v1709 = vpack.c.b16 %v1661, %v1660
      %v1710 = vpack.c.b16 %v1663, %v1662
      %v1711 = vpack.c.b16 %v1665, %v1664
      %v1712 = vpack.c.b16 %v1667, %v1666
      %v1713 = vpack.c.b16 %v1669, %v1668
      %v1714 = vpack.c.b16 %v1671, %v1670
      %v1715 = vpack.c.b16 %v1673, %v1672
      %v1716 = vpack.c.b16 %v1675, %v1674
      %v1717 = vpack.c.b16 %v1677, %v1676
      %v1718 = vpack.c.b16 %v1679, %v1678
      %v1719 = vpack.c.b16 %v1681, %v1680
      %v1720 = vpack.c.b16 %v1683, %v1682
      %v1721 = vpack.c.b16 %v1685, %v1684
      %v1722 = vpack.c.b16 %v1687, %v1686
      %v1723 = vpack.c.b16 %v1689, %v1688
      %v1724 = vpack.c.b16 %v1691, %v1690
      %v1725 = vpack.c.b16 %v1693, %v1692
      %1726 = vrot.lane.b32.xlu0 %v1694, 48
      %v1727 = vpop.permute.xlu0 %1726
      %1728 = vrot.lane.b32.xlu0 %v1695, 48
      %v1729 = vpop.permute.xlu0 %1728
      %1730 = vrot.lane.b32.xlu0 %v1696, 48
      %v1731 = vpop.permute.xlu0 %1730
      %1732 = vrot.lane.b32.xlu0 %v1697, 48
      %v1733 = vpop.permute.xlu0 %1732
      %1734 = vrot.lane.b32.xlu0 %v1698, 48
      %v1735 = vpop.permute.xlu0 %1734
      %1736 = vrot.lane.b32.xlu0 %v1699, 48
      %v1737 = vpop.permute.xlu0 %1736
      %1738 = vrot.lane.b32.xlu0 %v1700, 48
      %v1739 = vpop.permute.xlu0 %1738
      %1740 = vrot.lane.b32.xlu0 %v1701, 48
      %v1741 = vpop.permute.xlu0 %1740
      %1742 = vrot.lane.b32.xlu0 %v1702, 48
      %v1743 = vpop.permute.xlu0 %1742
      %1744 = vrot.lane.b32.xlu0 %v1703, 48
      %v1745 = vpop.permute.xlu0 %1744
      %1746 = vrot.lane.b32.xlu0 %v1704, 48
      %v1747 = vpop.permute.xlu0 %1746
      %1748 = vrot.lane.b32.xlu0 %v1705, 48
      %v1749 = vpop.permute.xlu0 %1748
      %1750 = vrot.lane.b32.xlu0 %v1706, 48
      %v1751 = vpop.permute.xlu0 %1750
      %1752 = vrot.lane.b32.xlu0 %v1707, 48
      %v1753 = vpop.permute.xlu0 %1752
      %1754 = vrot.lane.b32.xlu0 %v1708, 48
      %v1755 = vpop.permute.xlu0 %1754
      %1756 = vrot.lane.b32.xlu0 %v1709, 48
      %v1757 = vpop.permute.xlu0 %1756
      %1758 = vrot.lane.b32.xlu0 %v1710, 48
      %v1759 = vpop.permute.xlu0 %1758
      %1760 = vrot.lane.b32.xlu0 %v1711, 48
      %v1761 = vpop.permute.xlu0 %1760
      %1762 = vrot.lane.b32.xlu0 %v1712, 48
      %v1763 = vpop.permute.xlu0 %1762
      %1764 = vrot.lane.b32.xlu0 %v1713, 48
      %v1765 = vpop.permute.xlu0 %1764
      %1766 = vrot.lane.b32.xlu0 %v1714, 48
      %v1767 = vpop.permute.xlu0 %1766
      %1768 = vrot.lane.b32.xlu0 %v1715, 48
      %v1769 = vpop.permute.xlu0 %1768
      %1770 = vrot.lane.b32.xlu0 %v1716, 48
      %v1771 = vpop.permute.xlu0 %1770
      %1772 = vrot.lane.b32.xlu0 %v1717, 48
      %v1773 = vpop.permute.xlu0 %1772
      %1774 = vrot.lane.b32.xlu0 %v1718, 48
      %v1775 = vpop.permute.xlu0 %1774
      %1776 = vrot.lane.b32.xlu0 %v1719, 48
      %v1777 = vpop.permute.xlu0 %1776
      %1778 = vrot.lane.b32.xlu0 %v1720, 48
      %v1779 = vpop.permute.xlu0 %1778
      %1780 = vrot.lane.b32.xlu0 %v1721, 48
      %v1781 = vpop.permute.xlu0 %1780
      %1782 = vrot.lane.b32.xlu0 %v1722, 48
      %v1783 = vpop.permute.xlu0 %1782
      %1784 = vrot.lane.b32.xlu0 %v1723, 48
      %v1785 = vpop.permute.xlu0 %1784
      %1786 = vrot.lane.b32.xlu0 %v1724, 48
      %v1787 = vpop.permute.xlu0 %1786
      %1788 = vrot.lane.b32.xlu0 %v1725, 48
      %v1789 = vpop.permute.xlu0 %1788
      %vm1822 = vcmask 523648
      %1823 = vst.msk [vmem:[#allocation2] sm:$0xff] %vm1822, %v1727
      %1824 = vst.msk [vmem:[#allocation2 + $0x10] sm:$0xff] %vm1822, %v1729
      %1825 = vst.msk [vmem:[#allocation2 + $0x20] sm:$0xff] %vm1822, %v1731
      %1826 = vst.msk [vmem:[#allocation2 + $0x30] sm:$0xff] %vm1822, %v1733
      %1827 = vst.msk [vmem:[#allocation2 + $0x40] sm:$0xff] %vm1822, %v1735
      %1828 = vst.msk [vmem:[#allocation2 + $0x50] sm:$0xff] %vm1822, %v1737
      %1829 = vst.msk [vmem:[#allocation2 + $0x60] sm:$0xff] %vm1822, %v1739
      %1830 = vst.msk [vmem:[#allocation2 + $0x70] sm:$0xff] %vm1822, %v1741
      %1831 = vst.msk [vmem:[#allocation2 + $0x80] sm:$0xff] %vm1822, %v1743
      %1832 = vst.msk [vmem:[#allocation2 + $0x90] sm:$0xff] %vm1822, %v1745
      %1833 = vst.msk [vmem:[#allocation2 + $0xa0] sm:$0xff] %vm1822, %v1747
      %1834 = vst.msk [vmem:[#allocation2 + $0xb0] sm:$0xff] %vm1822, %v1749
      %1835 = vst.msk [vmem:[#allocation2 + $0xc0] sm:$0xff] %vm1822, %v1751
      %1836 = vst.msk [vmem:[#allocation2 + $0xd0] sm:$0xff] %vm1822, %v1753
      %1837 = vst.msk [vmem:[#allocation2 + $0xe0] sm:$0xff] %vm1822, %v1755
      %1838 = vst.msk [vmem:[#allocation2 + $0xf0] sm:$0xff] %vm1822, %v1757
      %1839 = vst.msk [vmem:[#allocation2 + $0x100] sm:$0xff] %vm1822, %v1759
      %1840 = vst.msk [vmem:[#allocation2 + $0x110] sm:$0xff] %vm1822, %v1761
      %1841 = vst.msk [vmem:[#allocation2 + $0x120] sm:$0xff] %vm1822, %v1763
      %1842 = vst.msk [vmem:[#allocation2 + $0x130] sm:$0xff] %vm1822, %v1765
      %1843 = vst.msk [vmem:[#allocation2 + $0x140] sm:$0xff] %vm1822, %v1767
      %1844 = vst.msk [vmem:[#allocation2 + $0x150] sm:$0xff] %vm1822, %v1769
      %1845 = vst.msk [vmem:[#allocation2 + $0x160] sm:$0xff] %vm1822, %v1771
      %1846 = vst.msk [vmem:[#allocation2 + $0x170] sm:$0xff] %vm1822, %v1773
      %1847 = vst.msk [vmem:[#allocation2 + $0x180] sm:$0xff] %vm1822, %v1775
      %1848 = vst.msk [vmem:[#allocation2 + $0x190] sm:$0xff] %vm1822, %v1777
      %1849 = vst.msk [vmem:[#allocation2 + $0x1a0] sm:$0xff] %vm1822, %v1779
      %1850 = vst.msk [vmem:[#allocation2 + $0x1b0] sm:$0xff] %vm1822, %v1781
      %1851 = vst.msk [vmem:[#allocation2 + $0x1c0] sm:$0xff] %vm1822, %v1783
      %1852 = vst.msk [vmem:[#allocation2 + $0x1d0] sm:$0xff] %vm1822, %v1785
      %1853 = vst.msk [vmem:[#allocation2 + $0x1e0] sm:$0xff] %vm1822, %v1787
      %1854 = vst.msk [vmem:[#allocation2 + $0x1f0] sm:$0xff] %vm1822, %v1789
      %v1855 = vld [vmem:[%s165 + $0x10] sm:$0xf]
      %v1856 = vld [vmem:[%s165 + $0x14] sm:$0xf]
      %v1857 = vld [vmem:[%s165 + $0x18] sm:$0xf]
      %v1858 = vld [vmem:[%s165 + $0x1c] sm:$0xf]
      %v1859 = vld [vmem:[%s165 + $0x20] sm:$0xf]
      %v1860 = vld [vmem:[%s165 + $0x24] sm:$0xf]
      %v1861 = vld [vmem:[%s165 + $0x28] sm:$0xf]
      %v1862 = vld [vmem:[%s165 + $0x2c] sm:$0xf]
      %v1863 = vld [vmem:[%s165 + $0x30] sm:$0xf]
      %v1864 = vld [vmem:[%s165 + $0x34] sm:$0xf]
      %v1865 = vld [vmem:[%s165 + $0x38] sm:$0xf]
      %v1866 = vld [vmem:[%s165 + $0x3c] sm:$0xf]
      %v1867 = vld [vmem:[%s165 + $0x40] sm:$0xf]
      %v1868 = vld [vmem:[%s165 + $0x44] sm:$0xf]
      %v1869 = vld [vmem:[%s165 + $0x48] sm:$0xf]
      %v1870 = vld [vmem:[%s165 + $0x4c] sm:$0xf]
      %v1871 = vld [vmem:[%s165 + $0x50] sm:$0xf]
      %v1872 = vld [vmem:[%s165 + $0x54] sm:$0xf]
      %v1873 = vld [vmem:[%s165 + $0x58] sm:$0xf]
      %v1874 = vld [vmem:[%s165 + $0x5c] sm:$0xf]
      %v1875 = vld [vmem:[%s165 + $0x60] sm:$0xf]
      %v1876 = vld [vmem:[%s165 + $0x64] sm:$0xf]
      %v1877 = vld [vmem:[%s165 + $0x68] sm:$0xf]
      %v1878 = vld [vmem:[%s165 + $0x6c] sm:$0xf]
      %v1879 = vld [vmem:[%s165 + $0x70] sm:$0xf]
      %v1880 = vld [vmem:[%s165 + $0x74] sm:$0xf]
      %v1881 = vld [vmem:[%s165 + $0x78] sm:$0xf]
      %v1882 = vld [vmem:[%s165 + $0x7c] sm:$0xf]
      %v1883 = vld [vmem:[%s165 + $0x80] sm:$0xf]
      %v1884 = vld [vmem:[%s165 + $0x84] sm:$0xf]
      %v1885 = vld [vmem:[%s165 + $0x88] sm:$0xf]
      %v1886 = vld [vmem:[%s165 + $0x8c] sm:$0xf]
      %v1887 = vld [vmem:[%s165 + $0x90] sm:$0xf]
      %v1888 = vld [vmem:[%s165 + $0x94] sm:$0xf]
      %v1889 = vld [vmem:[%s165 + $0x98] sm:$0xf]
      %v1890 = vld [vmem:[%s165 + $0x9c] sm:$0xf]
      %v1891 = vld [vmem:[%s165 + $0xa0] sm:$0xf]
      %v1892 = vld [vmem:[%s165 + $0xa4] sm:$0xf]
      %v1893 = vld [vmem:[%s165 + $0xa8] sm:$0xf]
      %v1894 = vld [vmem:[%s165 + $0xac] sm:$0xf]
      %v1895 = vld [vmem:[%s165 + $0xb0] sm:$0xf]
      %v1896 = vld [vmem:[%s165 + $0xb4] sm:$0xf]
      %v1897 = vld [vmem:[%s165 + $0xb8] sm:$0xf]
      %v1898 = vld [vmem:[%s165 + $0xbc] sm:$0xf]
      %v1899 = vld [vmem:[%s165 + $0xc0] sm:$0xf]
      %v1900 = vld [vmem:[%s165 + $0xc4] sm:$0xf]
      %v1901 = vld [vmem:[%s165 + $0xc8] sm:$0xf]
      %v1902 = vld [vmem:[%s165 + $0xcc] sm:$0xf]
      %v1903 = vld [vmem:[%s165 + $0xd0] sm:$0xf]
      %v1904 = vld [vmem:[%s165 + $0xd4] sm:$0xf]
      %v1905 = vld [vmem:[%s165 + $0xd8] sm:$0xf]
      %v1906 = vld [vmem:[%s165 + $0xdc] sm:$0xf]
      %v1907 = vld [vmem:[%s165 + $0xe0] sm:$0xf]
      %v1908 = vld [vmem:[%s165 + $0xe4] sm:$0xf]
      %v1909 = vld [vmem:[%s165 + $0xe8] sm:$0xf]
      %v1910 = vld [vmem:[%s165 + $0xec] sm:$0xf]
      %v1911 = vld [vmem:[%s165 + $0xf0] sm:$0xf]
      %v1912 = vld [vmem:[%s165 + $0xf4] sm:$0xf]
      %v1913 = vld [vmem:[%s165 + $0xf8] sm:$0xf]
      %v1914 = vld [vmem:[%s165 + $0xfc] sm:$0xf]
      %v1915 = vld [vmem:[%s165 + $0x100] sm:$0xf]
      %v1916 = vld [vmem:[%s165 + $0x104] sm:$0xf]
      %v1917 = vld [vmem:[%s165 + $0x108] sm:$0xf]
      %v1918 = vld [vmem:[%s165 + $0x10c] sm:$0xf]
      %v1919 = vld [vmem:[%s165 + $0x110] sm:$0x1]
      %v1985 = vunpack.c.l.b16 %v1855
      %v1986 = vunpack.c.l.b16 %v1856
      %v1987 = vunpack.c.l.b16 %v1857
      %v1988 = vunpack.c.l.b16 %v1858
      %v1989 = vunpack.c.l.b16 %v1859
      %v1990 = vunpack.c.l.b16 %v1860
      %v1991 = vunpack.c.l.b16 %v1861
      %v1992 = vunpack.c.l.b16 %v1862
      %v1993 = vunpack.c.l.b16 %v1863
      %v1994 = vunpack.c.l.b16 %v1864
      %v1995 = vunpack.c.l.b16 %v1865
      %v1996 = vunpack.c.l.b16 %v1866
      %v1997 = vunpack.c.l.b16 %v1867
      %v1998 = vunpack.c.l.b16 %v1868
      %v1999 = vunpack.c.l.b16 %v1869
      %v2000 = vunpack.c.l.b16 %v1870
      %v2001 = vunpack.c.l.b16 %v1871
      %v2002 = vunpack.c.l.b16 %v1872
      %v2003 = vunpack.c.l.b16 %v1873
      %v2004 = vunpack.c.l.b16 %v1874
      %v2005 = vunpack.c.l.b16 %v1875
      %v2006 = vunpack.c.l.b16 %v1876
      %v2007 = vunpack.c.l.b16 %v1877
      %v2008 = vunpack.c.l.b16 %v1878
      %v2009 = vunpack.c.l.b16 %v1879
      %v2010 = vunpack.c.l.b16 %v1880
      %v2011 = vunpack.c.l.b16 %v1881
      %v2012 = vunpack.c.l.b16 %v1882
      %v2013 = vunpack.c.l.b16 %v1883
      %v2014 = vunpack.c.l.b16 %v1884
      %v2015 = vunpack.c.l.b16 %v1885
      %v2016 = vunpack.c.l.b16 %v1886
      %v2017 = vunpack.c.l.b16 %v1887
      %v2018 = vunpack.c.l.b16 %v1888
      %v2019 = vunpack.c.l.b16 %v1889
      %v2020 = vunpack.c.l.b16 %v1890
      %v2021 = vunpack.c.l.b16 %v1891
      %v2022 = vunpack.c.l.b16 %v1892
      %v2023 = vunpack.c.l.b16 %v1893
      %v2024 = vunpack.c.l.b16 %v1894
      %v2025 = vunpack.c.l.b16 %v1895
      %v2026 = vunpack.c.l.b16 %v1896
      %v2027 = vunpack.c.l.b16 %v1897
      %v2028 = vunpack.c.l.b16 %v1898
      %v2029 = vunpack.c.l.b16 %v1899
      %v2030 = vunpack.c.l.b16 %v1900
      %v2031 = vunpack.c.l.b16 %v1901
      %v2032 = vunpack.c.l.b16 %v1902
      %v2033 = vunpack.c.l.b16 %v1903
      %v2034 = vunpack.c.l.b16 %v1904
      %v2035 = vunpack.c.l.b16 %v1905
      %v2036 = vunpack.c.l.b16 %v1906
      %v2037 = vunpack.c.l.b16 %v1907
      %v2038 = vunpack.c.l.b16 %v1908
      %v2039 = vunpack.c.l.b16 %v1909
      %v2040 = vunpack.c.l.b16 %v1910
      %v2041 = vunpack.c.l.b16 %v1911
      %v2042 = vunpack.c.l.b16 %v1912
      %v2043 = vunpack.c.l.b16 %v1913
      %v2044 = vunpack.c.l.b16 %v1914
      %v2045 = vunpack.c.l.b16 %v1915
      %v2046 = vunpack.c.l.b16 %v1916
      %v2047 = vunpack.c.l.b16 %v1917
      %v2048 = vunpack.c.l.b16 %v1918
      %v2049 = vunpack.c.l.b16 %v1919
      %v2050 = vpack.c.b16 %v1986, %v1985
      %v2051 = vpack.c.b16 %v1988, %v1987
      %v2052 = vpack.c.b16 %v1990, %v1989
      %v2053 = vpack.c.b16 %v1992, %v1991
      %v2054 = vpack.c.b16 %v1994, %v1993
      %v2055 = vpack.c.b16 %v1996, %v1995
      %v2056 = vpack.c.b16 %v1998, %v1997
      %v2057 = vpack.c.b16 %v2000, %v1999
      %v2058 = vpack.c.b16 %v2002, %v2001
      %v2059 = vpack.c.b16 %v2004, %v2003
      %v2060 = vpack.c.b16 %v2006, %v2005
      %v2061 = vpack.c.b16 %v2008, %v2007
      %v2062 = vpack.c.b16 %v2010, %v2009
      %v2063 = vpack.c.b16 %v2012, %v2011
      %v2064 = vpack.c.b16 %v2014, %v2013
      %v2065 = vpack.c.b16 %v2016, %v2015
      %v2066 = vpack.c.b16 %v2018, %v2017
      %v2067 = vpack.c.b16 %v2020, %v2019
      %v2068 = vpack.c.b16 %v2022, %v2021
      %v2069 = vpack.c.b16 %v2024, %v2023
      %v2070 = vpack.c.b16 %v2026, %v2025
      %v2071 = vpack.c.b16 %v2028, %v2027
      %v2072 = vpack.c.b16 %v2030, %v2029
      %v2073 = vpack.c.b16 %v2032, %v2031
      %v2074 = vpack.c.b16 %v2034, %v2033
      %v2075 = vpack.c.b16 %v2036, %v2035
      %v2076 = vpack.c.b16 %v2038, %v2037
      %v2077 = vpack.c.b16 %v2040, %v2039
      %v2078 = vpack.c.b16 %v2042, %v2041
      %v2079 = vpack.c.b16 %v2044, %v2043
      %v2080 = vpack.c.b16 %v2046, %v2045
      %v2081 = vpack.c.b16 %v2048, %v2047
      %v2082 = vpack.c.b16 %v2049, %v2049
      %v2084 = vshrl.u32 %v2050, 16
      %v2086 = vshll.u32 %v2050, 16
      %v2088 = vrot.slane %v2086, 1
      %v2089 = vor.u32 %v2084, %v2088
      %v2091 = vshll.u32 %v2051, 16
      %v2093 = vrot.slane %v2091, 1
      %v2094 = vsel %vm689, %v2089, %v2093
      %v2095 = vshrl.u32 %v2051, 16
      %v2097 = vor.u32 %v2095, %v2093
      %v2099 = vshll.u32 %v2052, 16
      %v2101 = vrot.slane %v2099, 1
      %v2102 = vsel %vm689, %v2097, %v2101
      %v2103 = vshrl.u32 %v2052, 16
      %v2105 = vor.u32 %v2103, %v2101
      %v2107 = vshll.u32 %v2053, 16
      %v2109 = vrot.slane %v2107, 1
      %v2110 = vsel %vm689, %v2105, %v2109
      %v2111 = vshrl.u32 %v2053, 16
      %v2113 = vor.u32 %v2111, %v2109
      %v2115 = vshll.u32 %v2054, 16
      %v2117 = vrot.slane %v2115, 1
      %v2118 = vsel %vm689, %v2113, %v2117
      %v2119 = vshrl.u32 %v2054, 16
      %v2121 = vor.u32 %v2119, %v2117
      %v2123 = vshll.u32 %v2055, 16
      %v2125 = vrot.slane %v2123, 1
      %v2126 = vsel %vm689, %v2121, %v2125
      %v2127 = vshrl.u32 %v2055, 16
      %v2129 = vor.u32 %v2127, %v2125
      %v2131 = vshll.u32 %v2056, 16
      %v2133 = vrot.slane %v2131, 1
      %v2134 = vsel %vm689, %v2129, %v2133
      %v2135 = vshrl.u32 %v2056, 16
      %v2137 = vor.u32 %v2135, %v2133
      %v2139 = vshll.u32 %v2057, 16
      %v2141 = vrot.slane %v2139, 1
      %v2142 = vsel %vm689, %v2137, %v2141
      %v2143 = vshrl.u32 %v2057, 16
      %v2145 = vor.u32 %v2143, %v2141
      %v2147 = vshll.u32 %v2058, 16
      %v2149 = vrot.slane %v2147, 1
      %v2150 = vsel %vm689, %v2145, %v2149
      %v2151 = vshrl.u32 %v2058, 16
      %v2153 = vor.u32 %v2151, %v2149
      %v2155 = vshll.u32 %v2059, 16
      %v2157 = vrot.slane %v2155, 1
      %v2158 = vsel %vm689, %v2153, %v2157
      %v2159 = vshrl.u32 %v2059, 16
      %v2161 = vor.u32 %v2159, %v2157
      %v2163 = vshll.u32 %v2060, 16
      %v2165 = vrot.slane %v2163, 1
      %v2166 = vsel %vm689, %v2161, %v2165
      %v2167 = vshrl.u32 %v2060, 16
      %v2169 = vor.u32 %v2167, %v2165
      %v2171 = vshll.u32 %v2061, 16
      %v2173 = vrot.slane %v2171, 1
      %v2174 = vsel %vm689, %v2169, %v2173
      %v2175 = vshrl.u32 %v2061, 16
      %v2177 = vor.u32 %v2175, %v2173
      %v2179 = vshll.u32 %v2062, 16
      %v2181 = vrot.slane %v2179, 1
      %v2182 = vsel %vm689, %v2177, %v2181
      %v2183 = vshrl.u32 %v2062, 16
      %v2185 = vor.u32 %v2183, %v2181
      %v2187 = vshll.u32 %v2063, 16
      %v2189 = vrot.slane %v2187, 1
      %v2190 = vsel %vm689, %v2185, %v2189
      %v2191 = vshrl.u32 %v2063, 16
      %v2193 = vor.u32 %v2191, %v2189
      %v2195 = vshll.u32 %v2064, 16
      %v2197 = vrot.slane %v2195, 1
      %v2198 = vsel %vm689, %v2193, %v2197
      %v2199 = vshrl.u32 %v2064, 16
      %v2201 = vor.u32 %v2199, %v2197
      %v2203 = vshll.u32 %v2065, 16
      %v2205 = vrot.slane %v2203, 1
      %v2206 = vsel %vm689, %v2201, %v2205
      %v2207 = vshrl.u32 %v2065, 16
      %v2209 = vor.u32 %v2207, %v2205
      %v2211 = vshll.u32 %v2066, 16
      %v2213 = vrot.slane %v2211, 1
      %v2214 = vsel %vm689, %v2209, %v2213
      %v2215 = vshrl.u32 %v2066, 16
      %v2217 = vor.u32 %v2215, %v2213
      %v2219 = vshll.u32 %v2067, 16
      %v2221 = vrot.slane %v2219, 1
      %v2222 = vsel %vm689, %v2217, %v2221
      %v2223 = vshrl.u32 %v2067, 16
      %v2225 = vor.u32 %v2223, %v2221
      %v2227 = vshll.u32 %v2068, 16
      %v2229 = vrot.slane %v2227, 1
      %v2230 = vsel %vm689, %v2225, %v2229
      %v2231 = vshrl.u32 %v2068, 16
      %v2233 = vor.u32 %v2231, %v2229
      %v2235 = vshll.u32 %v2069, 16
      %v2237 = vrot.slane %v2235, 1
      %v2238 = vsel %vm689, %v2233, %v2237
      %v2239 = vshrl.u32 %v2069, 16
      %v2241 = vor.u32 %v2239, %v2237
      %v2243 = vshll.u32 %v2070, 16
      %v2245 = vrot.slane %v2243, 1
      %v2246 = vsel %vm689, %v2241, %v2245
      %v2247 = vshrl.u32 %v2070, 16
      %v2249 = vor.u32 %v2247, %v2245
      %v2251 = vshll.u32 %v2071, 16
      %v2253 = vrot.slane %v2251, 1
      %v2254 = vsel %vm689, %v2249, %v2253
      %v2255 = vshrl.u32 %v2071, 16
      %v2257 = vor.u32 %v2255, %v2253
      %v2259 = vshll.u32 %v2072, 16
      %v2261 = vrot.slane %v2259, 1
      %v2262 = vsel %vm689, %v2257, %v2261
      %v2263 = vshrl.u32 %v2072, 16
      %v2265 = vor.u32 %v2263, %v2261
      %v2267 = vshll.u32 %v2073, 16
      %v2269 = vrot.slane %v2267, 1
      %v2270 = vsel %vm689, %v2265, %v2269
      %v2271 = vshrl.u32 %v2073, 16
      %v2273 = vor.u32 %v2271, %v2269
      %v2275 = vshll.u32 %v2074, 16
      %v2277 = vrot.slane %v2275, 1
      %v2278 = vsel %vm689, %v2273, %v2277
      %v2279 = vshrl.u32 %v2074, 16
      %v2281 = vor.u32 %v2279, %v2277
      %v2283 = vshll.u32 %v2075, 16
      %v2285 = vrot.slane %v2283, 1
      %v2286 = vsel %vm689, %v2281, %v2285
      %v2287 = vshrl.u32 %v2075, 16
      %v2289 = vor.u32 %v2287, %v2285
      %v2291 = vshll.u32 %v2076, 16
      %v2293 = vrot.slane %v2291, 1
      %v2294 = vsel %vm689, %v2289, %v2293
      %v2295 = vshrl.u32 %v2076, 16
      %v2297 = vor.u32 %v2295, %v2293
      %v2299 = vshll.u32 %v2077, 16
      %v2301 = vrot.slane %v2299, 1
      %v2302 = vsel %vm689, %v2297, %v2301
      %v2303 = vshrl.u32 %v2077, 16
      %v2305 = vor.u32 %v2303, %v2301
      %v2307 = vshll.u32 %v2078, 16
      %v2309 = vrot.slane %v2307, 1
      %v2310 = vsel %vm689, %v2305, %v2309
      %v2311 = vshrl.u32 %v2078, 16
      %v2313 = vor.u32 %v2311, %v2309
      %v2315 = vshll.u32 %v2079, 16
      %v2317 = vrot.slane %v2315, 1
      %v2318 = vsel %vm689, %v2313, %v2317
      %v2319 = vshrl.u32 %v2079, 16
      %v2321 = vor.u32 %v2319, %v2317
      %v2323 = vshll.u32 %v2080, 16
      %v2325 = vrot.slane %v2323, 1
      %v2326 = vsel %vm689, %v2321, %v2325
      %v2327 = vshrl.u32 %v2080, 16
      %v2329 = vor.u32 %v2327, %v2325
      %v2331 = vshll.u32 %v2081, 16
      %v2333 = vrot.slane %v2331, 1
      %v2334 = vsel %vm689, %v2329, %v2333
      %v2335 = vshrl.u32 %v2081, 16
      %v2337 = vor.u32 %v2335, %v2333
      %v2339 = vshll.u32 %v2082, 16
      %v2341 = vrot.slane %v2339, 1
      %v2342 = vsel %vm689, %v2337, %v2341
      %2343 = vrot.lane.b32.xlu0 %v2094, 64
      %v2344 = vpop.permute.xlu0 %2343
      %2345 = vrot.lane.b32.xlu0 %v2102, 64
      %v2346 = vpop.permute.xlu0 %2345
      %2347 = vrot.lane.b32.xlu0 %v2110, 64
      %v2348 = vpop.permute.xlu0 %2347
      %2349 = vrot.lane.b32.xlu0 %v2118, 64
      %v2350 = vpop.permute.xlu0 %2349
      %2351 = vrot.lane.b32.xlu0 %v2126, 64
      %v2352 = vpop.permute.xlu0 %2351
      %2353 = vrot.lane.b32.xlu0 %v2134, 64
      %v2354 = vpop.permute.xlu0 %2353
      %2355 = vrot.lane.b32.xlu0 %v2142, 64
      %v2356 = vpop.permute.xlu0 %2355
      %2357 = vrot.lane.b32.xlu0 %v2150, 64
      %v2358 = vpop.permute.xlu0 %2357
      %2359 = vrot.lane.b32.xlu0 %v2158, 64
      %v2360 = vpop.permute.xlu0 %2359
      %2361 = vrot.lane.b32.xlu0 %v2166, 64
      %v2362 = vpop.permute.xlu0 %2361
      %2363 = vrot.lane.b32.xlu0 %v2174, 64
      %v2364 = vpop.permute.xlu0 %2363
      %2365 = vrot.lane.b32.xlu0 %v2182, 64
      %v2366 = vpop.permute.xlu0 %2365
      %2367 = vrot.lane.b32.xlu0 %v2190, 64
      %v2368 = vpop.permute.xlu0 %2367
      %2369 = vrot.lane.b32.xlu0 %v2198, 64
      %v2370 = vpop.permute.xlu0 %2369
      %2371 = vrot.lane.b32.xlu0 %v2206, 64
      %v2372 = vpop.permute.xlu0 %2371
      %2373 = vrot.lane.b32.xlu0 %v2214, 64
      %v2374 = vpop.permute.xlu0 %2373
      %2375 = vrot.lane.b32.xlu0 %v2222, 64
      %v2376 = vpop.permute.xlu0 %2375
      %2377 = vrot.lane.b32.xlu0 %v2230, 64
      %v2378 = vpop.permute.xlu0 %2377
      %2379 = vrot.lane.b32.xlu0 %v2238, 64
      %v2380 = vpop.permute.xlu0 %2379
      %2381 = vrot.lane.b32.xlu0 %v2246, 64
      %v2382 = vpop.permute.xlu0 %2381
      %2383 = vrot.lane.b32.xlu0 %v2254, 64
      %v2384 = vpop.permute.xlu0 %2383
      %2385 = vrot.lane.b32.xlu0 %v2262, 64
      %v2386 = vpop.permute.xlu0 %2385
      %2387 = vrot.lane.b32.xlu0 %v2270, 64
      %v2388 = vpop.permute.xlu0 %2387
      %2389 = vrot.lane.b32.xlu0 %v2278, 64
      %v2390 = vpop.permute.xlu0 %2389
      %2391 = vrot.lane.b32.xlu0 %v2286, 64
      %v2392 = vpop.permute.xlu0 %2391
      %2393 = vrot.lane.b32.xlu0 %v2294, 64
      %v2394 = vpop.permute.xlu0 %2393
      %2395 = vrot.lane.b32.xlu0 %v2302, 64
      %v2396 = vpop.permute.xlu0 %2395
      %2397 = vrot.lane.b32.xlu0 %v2310, 64
      %v2398 = vpop.permute.xlu0 %2397
      %2399 = vrot.lane.b32.xlu0 %v2318, 64
      %v2400 = vpop.permute.xlu0 %2399
      %2401 = vrot.lane.b32.xlu0 %v2326, 64
      %v2402 = vpop.permute.xlu0 %2401
      %2403 = vrot.lane.b32.xlu0 %v2334, 64
      %v2404 = vpop.permute.xlu0 %2403
      %2405 = vrot.lane.b32.xlu0 %v2342, 64
      %v2406 = vpop.permute.xlu0 %2405
      %vm2439 = vcmask 654848
      %2440 = vst.msk [vmem:[#allocation2] sm:$0xff] %vm2439, %v2344
      %2441 = vst.msk [vmem:[#allocation2 + $0x10] sm:$0xff] %vm2439, %v2346
      %2442 = vst.msk [vmem:[#allocation2 + $0x20] sm:$0xff] %vm2439, %v2348
      %2443 = vst.msk [vmem:[#allocation2 + $0x30] sm:$0xff] %vm2439, %v2350
      %2444 = vst.msk [vmem:[#allocation2 + $0x40] sm:$0xff] %vm2439, %v2352
      %2445 = vst.msk [vmem:[#allocation2 + $0x50] sm:$0xff] %vm2439, %v2354
      %2446 = vst.msk [vmem:[#allocation2 + $0x60] sm:$0xff] %vm2439, %v2356
      %2447 = vst.msk [vmem:[#allocation2 + $0x70] sm:$0xff] %vm2439, %v2358
      %2448 = vst.msk [vmem:[#allocation2 + $0x80] sm:$0xff] %vm2439, %v2360
      %2449 = vst.msk [vmem:[#allocation2 + $0x90] sm:$0xff] %vm2439, %v2362
      %2450 = vst.msk [vmem:[#allocation2 + $0xa0] sm:$0xff] %vm2439, %v2364
      %2451 = vst.msk [vmem:[#allocation2 + $0xb0] sm:$0xff] %vm2439, %v2366
      %2452 = vst.msk [vmem:[#allocation2 + $0xc0] sm:$0xff] %vm2439, %v2368
      %2453 = vst.msk [vmem:[#allocation2 + $0xd0] sm:$0xff] %vm2439, %v2370
      %2454 = vst.msk [vmem:[#allocation2 + $0xe0] sm:$0xff] %vm2439, %v2372
      %2455 = vst.msk [vmem:[#allocation2 + $0xf0] sm:$0xff] %vm2439, %v2374
      %2456 = vst.msk [vmem:[#allocation2 + $0x100] sm:$0xff] %vm2439, %v2376
      %2457 = vst.msk [vmem:[#allocation2 + $0x110] sm:$0xff] %vm2439, %v2378
      %2458 = vst.msk [vmem:[#allocation2 + $0x120] sm:$0xff] %vm2439, %v2380
      %2459 = vst.msk [vmem:[#allocation2 + $0x130] sm:$0xff] %vm2439, %v2382
      %2460 = vst.msk [vmem:[#allocation2 + $0x140] sm:$0xff] %vm2439, %v2384
      %2461 = vst.msk [vmem:[#allocation2 + $0x150] sm:$0xff] %vm2439, %v2386
      %2462 = vst.msk [vmem:[#allocation2 + $0x160] sm:$0xff] %vm2439, %v2388
      %2463 = vst.msk [vmem:[#allocation2 + $0x170] sm:$0xff] %vm2439, %v2390
      %2464 = vst.msk [vmem:[#allocation2 + $0x180] sm:$0xff] %vm2439, %v2392
      %2465 = vst.msk [vmem:[#allocation2 + $0x190] sm:$0xff] %vm2439, %v2394
      %2466 = vst.msk [vmem:[#allocation2 + $0x1a0] sm:$0xff] %vm2439, %v2396
      %2467 = vst.msk [vmem:[#allocation2 + $0x1b0] sm:$0xff] %vm2439, %v2398
      %2468 = vst.msk [vmem:[#allocation2 + $0x1c0] sm:$0xff] %vm2439, %v2400
      %2469 = vst.msk [vmem:[#allocation2 + $0x1d0] sm:$0xff] %vm2439, %v2402
      %2470 = vst.msk [vmem:[#allocation2 + $0x1e0] sm:$0xff] %vm2439, %v2404
      %2471 = vst.msk [vmem:[#allocation2 + $0x1f0] sm:$0xff] %vm2439, %v2406
      %v2472 = vld [vmem:[%s165 + $0x10] sm:$0xe]
      %v2473 = vld [vmem:[%s165 + $0x14] sm:$0xf]
      %v2474 = vld [vmem:[%s165 + $0x18] sm:$0xf]
      %v2475 = vld [vmem:[%s165 + $0x1c] sm:$0xf]
      %v2476 = vld [vmem:[%s165 + $0x20] sm:$0xf]
      %v2477 = vld [vmem:[%s165 + $0x24] sm:$0xf]
      %v2478 = vld [vmem:[%s165 + $0x28] sm:$0xf]
      %v2479 = vld [vmem:[%s165 + $0x2c] sm:$0xf]
      %v2480 = vld [vmem:[%s165 + $0x30] sm:$0xf]
      %v2481 = vld [vmem:[%s165 + $0x34] sm:$0xf]
      %v2482 = vld [vmem:[%s165 + $0x38] sm:$0xf]
      %v2483 = vld [vmem:[%s165 + $0x3c] sm:$0xf]
      %v2484 = vld [vmem:[%s165 + $0x40] sm:$0xf]
      %v2485 = vld [vmem:[%s165 + $0x44] sm:$0xf]
      %v2486 = vld [vmem:[%s165 + $0x48] sm:$0xf]
      %v2487 = vld [vmem:[%s165 + $0x4c] sm:$0xf]
      %v2488 = vld [vmem:[%s165 + $0x50] sm:$0xf]
      %v2489 = vld [vmem:[%s165 + $0x54] sm:$0xf]
      %v2490 = vld [vmem:[%s165 + $0x58] sm:$0xf]
      %v2491 = vld [vmem:[%s165 + $0x5c] sm:$0xf]
      %v2492 = vld [vmem:[%s165 + $0x60] sm:$0xf]
      %v2493 = vld [vmem:[%s165 + $0x64] sm:$0xf]
      %v2494 = vld [vmem:[%s165 + $0x68] sm:$0xf]
      %v2495 = vld [vmem:[%s165 + $0x6c] sm:$0xf]
      %v2496 = vld [vmem:[%s165 + $0x70] sm:$0xf]
      %v2497 = vld [vmem:[%s165 + $0x74] sm:$0xf]
      %v2498 = vld [vmem:[%s165 + $0x78] sm:$0xf]
      %v2499 = vld [vmem:[%s165 + $0x7c] sm:$0xf]
      %v2500 = vld [vmem:[%s165 + $0x80] sm:$0xf]
      %v2501 = vld [vmem:[%s165 + $0x84] sm:$0xf]
      %v2502 = vld [vmem:[%s165 + $0x88] sm:$0xf]
      %v2503 = vld [vmem:[%s165 + $0x8c] sm:$0xf]
      %v2504 = vld [vmem:[%s165 + $0x90] sm:$0xf]
      %v2505 = vld [vmem:[%s165 + $0x94] sm:$0xf]
      %v2506 = vld [vmem:[%s165 + $0x98] sm:$0xf]
      %v2507 = vld [vmem:[%s165 + $0x9c] sm:$0xf]
      %v2508 = vld [vmem:[%s165 + $0xa0] sm:$0xf]
      %v2509 = vld [vmem:[%s165 + $0xa4] sm:$0xf]
      %v2510 = vld [vmem:[%s165 + $0xa8] sm:$0xf]
      %v2511 = vld [vmem:[%s165 + $0xac] sm:$0xf]
      %v2512 = vld [vmem:[%s165 + $0xb0] sm:$0xf]
      %v2513 = vld [vmem:[%s165 + $0xb4] sm:$0xf]
      %v2514 = vld [vmem:[%s165 + $0xb8] sm:$0xf]
      %v2515 = vld [vmem:[%s165 + $0xbc] sm:$0xf]
      %v2516 = vld [vmem:[%s165 + $0xc0] sm:$0xf]
      %v2517 = vld [vmem:[%s165 + $0xc4] sm:$0xf]
      %v2518 = vld [vmem:[%s165 + $0xc8] sm:$0xf]
      %v2519 = vld [vmem:[%s165 + $0xcc] sm:$0xf]
      %v2520 = vld [vmem:[%s165 + $0xd0] sm:$0xf]
      %v2521 = vld [vmem:[%s165 + $0xd4] sm:$0xf]
      %v2522 = vld [vmem:[%s165 + $0xd8] sm:$0xf]
      %v2523 = vld [vmem:[%s165 + $0xdc] sm:$0xf]
      %v2524 = vld [vmem:[%s165 + $0xe0] sm:$0xf]
      %v2525 = vld [vmem:[%s165 + $0xe4] sm:$0xf]
      %v2526 = vld [vmem:[%s165 + $0xe8] sm:$0xf]
      %v2527 = vld [vmem:[%s165 + $0xec] sm:$0xf]
      %v2528 = vld [vmem:[%s165 + $0xf0] sm:$0xf]
      %v2529 = vld [vmem:[%s165 + $0xf4] sm:$0xf]
      %v2530 = vld [vmem:[%s165 + $0xf8] sm:$0xf]
      %v2531 = vld [vmem:[%s165 + $0xfc] sm:$0xf]
      %v2532 = vld [vmem:[%s165 + $0x100] sm:$0xf]
      %v2533 = vld [vmem:[%s165 + $0x104] sm:$0xf]
      %v2534 = vld [vmem:[%s165 + $0x108] sm:$0xf]
      %v2535 = vld [vmem:[%s165 + $0x10c] sm:$0xf]
      %v2536 = vld [vmem:[%s165 + $0x110] sm:$0x1]
      %v2602 = vunpack.c.l.b16 %v2472
      %v2603 = vunpack.c.l.b16 %v2473
      %v2604 = vunpack.c.l.b16 %v2474
      %v2605 = vunpack.c.l.b16 %v2475
      %v2606 = vunpack.c.l.b16 %v2476
      %v2607 = vunpack.c.l.b16 %v2477
      %v2608 = vunpack.c.l.b16 %v2478
      %v2609 = vunpack.c.l.b16 %v2479
      %v2610 = vunpack.c.l.b16 %v2480
      %v2611 = vunpack.c.l.b16 %v2481
      %v2612 = vunpack.c.l.b16 %v2482
      %v2613 = vunpack.c.l.b16 %v2483
      %v2614 = vunpack.c.l.b16 %v2484
      %v2615 = vunpack.c.l.b16 %v2485
      %v2616 = vunpack.c.l.b16 %v2486
      %v2617 = vunpack.c.l.b16 %v2487
      %v2618 = vunpack.c.l.b16 %v2488
      %v2619 = vunpack.c.l.b16 %v2489
      %v2620 = vunpack.c.l.b16 %v2490
      %v2621 = vunpack.c.l.b16 %v2491
      %v2622 = vunpack.c.l.b16 %v2492
      %v2623 = vunpack.c.l.b16 %v2493
      %v2624 = vunpack.c.l.b16 %v2494
      %v2625 = vunpack.c.l.b16 %v2495
      %v2626 = vunpack.c.l.b16 %v2496
      %v2627 = vunpack.c.l.b16 %v2497
      %v2628 = vunpack.c.l.b16 %v2498
      %v2629 = vunpack.c.l.b16 %v2499
      %v2630 = vunpack.c.l.b16 %v2500
      %v2631 = vunpack.c.l.b16 %v2501
      %v2632 = vunpack.c.l.b16 %v2502
      %v2633 = vunpack.c.l.b16 %v2503
      %v2634 = vunpack.c.l.b16 %v2504
      %v2635 = vunpack.c.l.b16 %v2505
      %v2636 = vunpack.c.l.b16 %v2506
      %v2637 = vunpack.c.l.b16 %v2507
      %v2638 = vunpack.c.l.b16 %v2508
      %v2639 = vunpack.c.l.b16 %v2509
      %v2640 = vunpack.c.l.b16 %v2510
      %v2641 = vunpack.c.l.b16 %v2511
      %v2642 = vunpack.c.l.b16 %v2512
      %v2643 = vunpack.c.l.b16 %v2513
      %v2644 = vunpack.c.l.b16 %v2514
      %v2645 = vunpack.c.l.b16 %v2515
      %v2646 = vunpack.c.l.b16 %v2516
      %v2647 = vunpack.c.l.b16 %v2517
      %v2648 = vunpack.c.l.b16 %v2518
      %v2649 = vunpack.c.l.b16 %v2519
      %v2650 = vunpack.c.l.b16 %v2520
      %v2651 = vunpack.c.l.b16 %v2521
      %v2652 = vunpack.c.l.b16 %v2522
      %v2653 = vunpack.c.l.b16 %v2523
      %v2654 = vunpack.c.l.b16 %v2524
      %v2655 = vunpack.c.l.b16 %v2525
      %v2656 = vunpack.c.l.b16 %v2526
      %v2657 = vunpack.c.l.b16 %v2527
      %v2658 = vunpack.c.l.b16 %v2528
      %v2659 = vunpack.c.l.b16 %v2529
      %v2660 = vunpack.c.l.b16 %v2530
      %v2661 = vunpack.c.l.b16 %v2531
      %v2662 = vunpack.c.l.b16 %v2532
      %v2663 = vunpack.c.l.b16 %v2533
      %v2664 = vunpack.c.l.b16 %v2534
      %v2665 = vunpack.c.l.b16 %v2535
      %v2666 = vunpack.c.l.b16 %v2536
      %v2667 = vpack.c.b16 %v2603, %v2602
      %v2668 = vpack.c.b16 %v2605, %v2604
      %v2669 = vpack.c.b16 %v2607, %v2606
      %v2670 = vpack.c.b16 %v2609, %v2608
      %v2671 = vpack.c.b16 %v2611, %v2610
      %v2672 = vpack.c.b16 %v2613, %v2612
      %v2673 = vpack.c.b16 %v2615, %v2614
      %v2674 = vpack.c.b16 %v2617, %v2616
      %v2675 = vpack.c.b16 %v2619, %v2618
      %v2676 = vpack.c.b16 %v2621, %v2620
      %v2677 = vpack.c.b16 %v2623, %v2622
      %v2678 = vpack.c.b16 %v2625, %v2624
      %v2679 = vpack.c.b16 %v2627, %v2626
      %v2680 = vpack.c.b16 %v2629, %v2628
      %v2681 = vpack.c.b16 %v2631, %v2630
      %v2682 = vpack.c.b16 %v2633, %v2632
      %v2683 = vpack.c.b16 %v2635, %v2634
      %v2684 = vpack.c.b16 %v2637, %v2636
      %v2685 = vpack.c.b16 %v2639, %v2638
      %v2686 = vpack.c.b16 %v2641, %v2640
      %v2687 = vpack.c.b16 %v2643, %v2642
      %v2688 = vpack.c.b16 %v2645, %v2644
      %v2689 = vpack.c.b16 %v2647, %v2646
      %v2690 = vpack.c.b16 %v2649, %v2648
      %v2691 = vpack.c.b16 %v2651, %v2650
      %v2692 = vpack.c.b16 %v2653, %v2652
      %v2693 = vpack.c.b16 %v2655, %v2654
      %v2694 = vpack.c.b16 %v2657, %v2656
      %v2695 = vpack.c.b16 %v2659, %v2658
      %v2696 = vpack.c.b16 %v2661, %v2660
      %v2697 = vpack.c.b16 %v2663, %v2662
      %v2698 = vpack.c.b16 %v2665, %v2664
      %v2699 = vpack.c.b16 %v2666, %v2666
      %v2700 = vrot.slane %v2667, 1
      %v2701 = vrot.slane %v2668, 1
      %v2702 = vsel %vm1307, %v2700, %v2701
      %v2703 = vrot.slane %v2669, 1
      %v2704 = vsel %vm1307, %v2701, %v2703
      %v2705 = vrot.slane %v2670, 1
      %v2706 = vsel %vm1307, %v2703, %v2705
      %v2707 = vrot.slane %v2671, 1
      %v2708 = vsel %vm1307, %v2705, %v2707
      %v2709 = vrot.slane %v2672, 1
      %v2710 = vsel %vm1307, %v2707, %v2709
      %v2711 = vrot.slane %v2673, 1
      %v2712 = vsel %vm1307, %v2709, %v2711
      %v2713 = vrot.slane %v2674, 1
      %v2714 = vsel %vm1307, %v2711, %v2713
      %v2715 = vrot.slane %v2675, 1
      %v2716 = vsel %vm1307, %v2713, %v2715
      %v2717 = vrot.slane %v2676, 1
      %v2718 = vsel %vm1307, %v2715, %v2717
      %v2719 = vrot.slane %v2677, 1
      %v2720 = vsel %vm1307, %v2717, %v2719
      %v2721 = vrot.slane %v2678, 1
      %v2722 = vsel %vm1307, %v2719, %v2721
      %v2723 = vrot.slane %v2679, 1
      %v2724 = vsel %vm1307, %v2721, %v2723
      %v2725 = vrot.slane %v2680, 1
      %v2726 = vsel %vm1307, %v2723, %v2725
      %v2727 = vrot.slane %v2681, 1
      %v2728 = vsel %vm1307, %v2725, %v2727
      %v2729 = vrot.slane %v2682, 1
      %v2730 = vsel %vm1307, %v2727, %v2729
      %v2731 = vrot.slane %v2683, 1
      %v2732 = vsel %vm1307, %v2729, %v2731
      %v2733 = vrot.slane %v2684, 1
      %v2734 = vsel %vm1307, %v2731, %v2733
      %v2735 = vrot.slane %v2685, 1
      %v2736 = vsel %vm1307, %v2733, %v2735
      %v2737 = vrot.slane %v2686, 1
      %v2738 = vsel %vm1307, %v2735, %v2737
      %v2739 = vrot.slane %v2687, 1
      %v2740 = vsel %vm1307, %v2737, %v2739
      %v2741 = vrot.slane %v2688, 1
      %v2742 = vsel %vm1307, %v2739, %v2741
      %v2743 = vrot.slane %v2689, 1
      %v2744 = vsel %vm1307, %v2741, %v2743
      %v2745 = vrot.slane %v2690, 1
      %v2746 = vsel %vm1307, %v2743, %v2745
      %v2747 = vrot.slane %v2691, 1
      %v2748 = vsel %vm1307, %v2745, %v2747
      %v2749 = vrot.slane %v2692, 1
      %v2750 = vsel %vm1307, %v2747, %v2749
      %v2751 = vrot.slane %v2693, 1
      %v2752 = vsel %vm1307, %v2749, %v2751
      %v2753 = vrot.slane %v2694, 1
      %v2754 = vsel %vm1307, %v2751, %v2753
      %v2755 = vrot.slane %v2695, 1
      %v2756 = vsel %vm1307, %v2753, %v2755
      %v2757 = vrot.slane %v2696, 1
      %v2758 = vsel %vm1307, %v2755, %v2757
      %v2759 = vrot.slane %v2697, 1
      %v2760 = vsel %vm1307, %v2757, %v2759
      %v2761 = vrot.slane %v2698, 1
      %v2762 = vsel %vm1307, %v2759, %v2761
      %v2763 = vrot.slane %v2699, 1
      %v2764 = vsel %vm1307, %v2761, %v2763
      %2765 = vrot.lane.b32.xlu0 %v2702, 80
      %v2766 = vpop.permute.xlu0 %2765
      %2767 = vrot.lane.b32.xlu0 %v2704, 80
      %v2768 = vpop.permute.xlu0 %2767
      %2769 = vrot.lane.b32.xlu0 %v2706, 80
      %v2770 = vpop.permute.xlu0 %2769
      %2771 = vrot.lane.b32.xlu0 %v2708, 80
      %v2772 = vpop.permute.xlu0 %2771
      %2773 = vrot.lane.b32.xlu0 %v2710, 80
      %v2774 = vpop.permute.xlu0 %2773
      %2775 = vrot.lane.b32.xlu0 %v2712, 80
      %v2776 = vpop.permute.xlu0 %2775
      %2777 = vrot.lane.b32.xlu0 %v2714, 80
      %v2778 = vpop.permute.xlu0 %2777
      %2779 = vrot.lane.b32.xlu0 %v2716, 80
      %v2780 = vpop.permute.xlu0 %2779
      %2781 = vrot.lane.b32.xlu0 %v2718, 80
      %v2782 = vpop.permute.xlu0 %2781
      %2783 = vrot.lane.b32.xlu0 %v2720, 80
      %v2784 = vpop.permute.xlu0 %2783
      %2785 = vrot.lane.b32.xlu0 %v2722, 80
      %v2786 = vpop.permute.xlu0 %2785
      %2787 = vrot.lane.b32.xlu0 %v2724, 80
      %v2788 = vpop.permute.xlu0 %2787
      %2789 = vrot.lane.b32.xlu0 %v2726, 80
      %v2790 = vpop.permute.xlu0 %2789
      %2791 = vrot.lane.b32.xlu0 %v2728, 80
      %v2792 = vpop.permute.xlu0 %2791
      %2793 = vrot.lane.b32.xlu0 %v2730, 80
      %v2794 = vpop.permute.xlu0 %2793
      %2795 = vrot.lane.b32.xlu0 %v2732, 80
      %v2796 = vpop.permute.xlu0 %2795
      %2797 = vrot.lane.b32.xlu0 %v2734, 80
      %v2798 = vpop.permute.xlu0 %2797
      %2799 = vrot.lane.b32.xlu0 %v2736, 80
      %v2800 = vpop.permute.xlu0 %2799
      %2801 = vrot.lane.b32.xlu0 %v2738, 80
      %v2802 = vpop.permute.xlu0 %2801
      %2803 = vrot.lane.b32.xlu0 %v2740, 80
      %v2804 = vpop.permute.xlu0 %2803
      %2805 = vrot.lane.b32.xlu0 %v2742, 80
      %v2806 = vpop.permute.xlu0 %2805
      %2807 = vrot.lane.b32.xlu0 %v2744, 80
      %v2808 = vpop.permute.xlu0 %2807
      %2809 = vrot.lane.b32.xlu0 %v2746, 80
      %v2810 = vpop.permute.xlu0 %2809
      %2811 = vrot.lane.b32.xlu0 %v2748, 80
      %v2812 = vpop.permute.xlu0 %2811
      %2813 = vrot.lane.b32.xlu0 %v2750, 80
      %v2814 = vpop.permute.xlu0 %2813
      %2815 = vrot.lane.b32.xlu0 %v2752, 80
      %v2816 = vpop.permute.xlu0 %2815
      %2817 = vrot.lane.b32.xlu0 %v2754, 80
      %v2818 = vpop.permute.xlu0 %2817
      %2819 = vrot.lane.b32.xlu0 %v2756, 80
      %v2820 = vpop.permute.xlu0 %2819
      %2821 = vrot.lane.b32.xlu0 %v2758, 80
      %v2822 = vpop.permute.xlu0 %2821
      %2823 = vrot.lane.b32.xlu0 %v2760, 80
      %v2824 = vpop.permute.xlu0 %2823
      %2825 = vrot.lane.b32.xlu0 %v2762, 80
      %v2826 = vpop.permute.xlu0 %2825
      %2827 = vrot.lane.b32.xlu0 %v2764, 80
      %v2828 = vpop.permute.xlu0 %2827
      %vm2861 = vcmask 786048
      %2862 = vst.msk [vmem:[#allocation2] sm:$0xff] %vm2861, %v2766
      %2863 = vst.msk [vmem:[#allocation2 + $0x10] sm:$0xff] %vm2861, %v2768
      %2864 = vst.msk [vmem:[#allocation2 + $0x20] sm:$0xff] %vm2861, %v2770
      %2865 = vst.msk [vmem:[#allocation2 + $0x30] sm:$0xff] %vm2861, %v2772
      %2866 = vst.msk [vmem:[#allocation2 + $0x40] sm:$0xff] %vm2861, %v2774
      %2867 = vst.msk [vmem:[#allocation2 + $0x50] sm:$0xff] %vm2861, %v2776
      %2868 = vst.msk [vmem:[#allocation2 + $0x60] sm:$0xff] %vm2861, %v2778
      %2869 = vst.msk [vmem:[#allocation2 + $0x70] sm:$0xff] %vm2861, %v2780
      %2870 = vst.msk [vmem:[#allocation2 + $0x80] sm:$0xff] %vm2861, %v2782
      %2871 = vst.msk [vmem:[#allocation2 + $0x90] sm:$0xff] %vm2861, %v2784
      %2872 = vst.msk [vmem:[#allocation2 + $0xa0] sm:$0xff] %vm2861, %v2786
      %2873 = vst.msk [vmem:[#allocation2 + $0xb0] sm:$0xff] %vm2861, %v2788
      %2874 = vst.msk [vmem:[#allocation2 + $0xc0] sm:$0xff] %vm2861, %v2790
      %2875 = vst.msk [vmem:[#allocation2 + $0xd0] sm:$0xff] %vm2861, %v2792
      %2876 = vst.msk [vmem:[#allocation2 + $0xe0] sm:$0xff] %vm2861, %v2794
      %2877 = vst.msk [vmem:[#allocation2 + $0xf0] sm:$0xff] %vm2861, %v2796
      %2878 = vst.msk [vmem:[#allocation2 + $0x100] sm:$0xff] %vm2861, %v2798
      %2879 = vst.msk [vmem:[#allocation2 + $0x110] sm:$0xff] %vm2861, %v2800
      %2880 = vst.msk [vmem:[#allocation2 + $0x120] sm:$0xff] %vm2861, %v2802
      %2881 = vst.msk [vmem:[#allocation2 + $0x130] sm:$0xff] %vm2861, %v2804
      %2882 = vst.msk [vmem:[#allocation2 + $0x140] sm:$0xff] %vm2861, %v2806
      %2883 = vst.msk [vmem:[#allocation2 + $0x150] sm:$0xff] %vm2861, %v2808
      %2884 = vst.msk [vmem:[#allocation2 + $0x160] sm:$0xff] %vm2861, %v2810
      %2885 = vst.msk [vmem:[#allocation2 + $0x170] sm:$0xff] %vm2861, %v2812
      %2886 = vst.msk [vmem:[#allocation2 + $0x180] sm:$0xff] %vm2861, %v2814
      %2887 = vst.msk [vmem:[#allocation2 + $0x190] sm:$0xff] %vm2861, %v2816
      %2888 = vst.msk [vmem:[#allocation2 + $0x1a0] sm:$0xff] %vm2861, %v2818
      %2889 = vst.msk [vmem:[#allocation2 + $0x1b0] sm:$0xff] %vm2861, %v2820
      %2890 = vst.msk [vmem:[#allocation2 + $0x1c0] sm:$0xff] %vm2861, %v2822
      %2891 = vst.msk [vmem:[#allocation2 + $0x1d0] sm:$0xff] %vm2861, %v2824
      %2892 = vst.msk [vmem:[#allocation2 + $0x1e0] sm:$0xff] %vm2861, %v2826
      %2893 = vst.msk [vmem:[#allocation2 + $0x1f0] sm:$0xff] %vm2861, %v2828
      %v2894 = vld [vmem:[%s165 + $0x20] sm:$0xf]
      %v2895 = vld [vmem:[%s165 + $0x24] sm:$0xf]
      %v2896 = vld [vmem:[%s165 + $0x28] sm:$0xf]
      %v2897 = vld [vmem:[%s165 + $0x2c] sm:$0xf]
      %v2898 = vld [vmem:[%s165 + $0x30] sm:$0xf]
      %v2899 = vld [vmem:[%s165 + $0x34] sm:$0xf]
      %v2900 = vld [vmem:[%s165 + $0x38] sm:$0xf]
      %v2901 = vld [vmem:[%s165 + $0x3c] sm:$0xf]
      %v2902 = vld [vmem:[%s165 + $0x40] sm:$0xf]
      %v2903 = vld [vmem:[%s165 + $0x44] sm:$0xf]
      %v2904 = vld [vmem:[%s165 + $0x48] sm:$0xf]
      %v2905 = vld [vmem:[%s165 + $0x4c] sm:$0xf]
      %v2906 = vld [vmem:[%s165 + $0x50] sm:$0xf]
      %v2907 = vld [vmem:[%s165 + $0x54] sm:$0xf]
      %v2908 = vld [vmem:[%s165 + $0x58] sm:$0xf]
      %v2909 = vld [vmem:[%s165 + $0x5c] sm:$0xf]
      %v2910 = vld [vmem:[%s165 + $0x60] sm:$0xf]
      %v2911 = vld [vmem:[%s165 + $0x64] sm:$0xf]
      %v2912 = vld [vmem:[%s165 + $0x68] sm:$0xf]
      %v2913 = vld [vmem:[%s165 + $0x6c] sm:$0xf]
      %v2914 = vld [vmem:[%s165 + $0x70] sm:$0xf]
      %v2915 = vld [vmem:[%s165 + $0x74] sm:$0xf]
      %v2916 = vld [vmem:[%s165 + $0x78] sm:$0xf]
      %v2917 = vld [vmem:[%s165 + $0x7c] sm:$0xf]
      %v2918 = vld [vmem:[%s165 + $0x80] sm:$0xf]
      %v2919 = vld [vmem:[%s165 + $0x84] sm:$0xf]
      %v2920 = vld [vmem:[%s165 + $0x88] sm:$0xf]
      %v2921 = vld [vmem:[%s165 + $0x8c] sm:$0xf]
      %v2922 = vld [vmem:[%s165 + $0x90] sm:$0xf]
      %v2923 = vld [vmem:[%s165 + $0x94] sm:$0xf]
      %v2924 = vld [vmem:[%s165 + $0x98] sm:$0xf]
      %v2925 = vld [vmem:[%s165 + $0x9c] sm:$0xf]
      %v2926 = vld [vmem:[%s165 + $0xa0] sm:$0xf]
      %v2927 = vld [vmem:[%s165 + $0xa4] sm:$0xf]
      %v2928 = vld [vmem:[%s165 + $0xa8] sm:$0xf]
      %v2929 = vld [vmem:[%s165 + $0xac] sm:$0xf]
      %v2930 = vld [vmem:[%s165 + $0xb0] sm:$0xf]
      %v2931 = vld [vmem:[%s165 + $0xb4] sm:$0xf]
      %v2932 = vld [vmem:[%s165 + $0xb8] sm:$0xf]
      %v2933 = vld [vmem:[%s165 + $0xbc] sm:$0xf]
      %v2934 = vld [vmem:[%s165 + $0xc0] sm:$0xf]
      %v2935 = vld [vmem:[%s165 + $0xc4] sm:$0xf]
      %v2936 = vld [vmem:[%s165 + $0xc8] sm:$0xf]
      %v2937 = vld [vmem:[%s165 + $0xcc] sm:$0xf]
      %v2938 = vld [vmem:[%s165 + $0xd0] sm:$0xf]
      %v2939 = vld [vmem:[%s165 + $0xd4] sm:$0xf]
      %v2940 = vld [vmem:[%s165 + $0xd8] sm:$0xf]
      %v2941 = vld [vmem:[%s165 + $0xdc] sm:$0xf]
      %v2942 = vld [vmem:[%s165 + $0xe0] sm:$0xf]
      %v2943 = vld [vmem:[%s165 + $0xe4] sm:$0xf]
      %v2944 = vld [vmem:[%s165 + $0xe8] sm:$0xf]
      %v2945 = vld [vmem:[%s165 + $0xec] sm:$0xf]
      %v2946 = vld [vmem:[%s165 + $0xf0] sm:$0xf]
      %v2947 = vld [vmem:[%s165 + $0xf4] sm:$0xf]
      %v2948 = vld [vmem:[%s165 + $0xf8] sm:$0xf]
      %v2949 = vld [vmem:[%s165 + $0xfc] sm:$0xf]
      %v2950 = vld [vmem:[%s165 + $0x100] sm:$0xf]
      %v2951 = vld [vmem:[%s165 + $0x104] sm:$0xf]
      %v2952 = vld [vmem:[%s165 + $0x108] sm:$0xf]
      %v2953 = vld [vmem:[%s165 + $0x10c] sm:$0xf]
      %v2954 = vld [vmem:[%s165 + $0x110] sm:$0xf]
      %v2955 = vld [vmem:[%s165 + $0x114] sm:$0xf]
      %v2956 = vld [vmem:[%s165 + $0x118] sm:$0xf]
      %v2957 = vld [vmem:[%s165 + $0x11c] sm:$0xf]
      %v3022 = vunpack.c.l.b16 %v2894
      %v3023 = vunpack.c.l.b16 %v2895
      %v3024 = vunpack.c.l.b16 %v2896
      %v3025 = vunpack.c.l.b16 %v2897
      %v3026 = vunpack.c.l.b16 %v2898
      %v3027 = vunpack.c.l.b16 %v2899
      %v3028 = vunpack.c.l.b16 %v2900
      %v3029 = vunpack.c.l.b16 %v2901
      %v3030 = vunpack.c.l.b16 %v2902
      %v3031 = vunpack.c.l.b16 %v2903
      %v3032 = vunpack.c.l.b16 %v2904
      %v3033 = vunpack.c.l.b16 %v2905
      %v3034 = vunpack.c.l.b16 %v2906
      %v3035 = vunpack.c.l.b16 %v2907
      %v3036 = vunpack.c.l.b16 %v2908
      %v3037 = vunpack.c.l.b16 %v2909
      %v3038 = vunpack.c.l.b16 %v2910
      %v3039 = vunpack.c.l.b16 %v2911
      %v3040 = vunpack.c.l.b16 %v2912
      %v3041 = vunpack.c.l.b16 %v2913
      %v3042 = vunpack.c.l.b16 %v2914
      %v3043 = vunpack.c.l.b16 %v2915
      %v3044 = vunpack.c.l.b16 %v2916
      %v3045 = vunpack.c.l.b16 %v2917
      %v3046 = vunpack.c.l.b16 %v2918
      %v3047 = vunpack.c.l.b16 %v2919
      %v3048 = vunpack.c.l.b16 %v2920
      %v3049 = vunpack.c.l.b16 %v2921
      %v3050 = vunpack.c.l.b16 %v2922
      %v3051 = vunpack.c.l.b16 %v2923
      %v3052 = vunpack.c.l.b16 %v2924
      %v3053 = vunpack.c.l.b16 %v2925
      %v3054 = vunpack.c.l.b16 %v2926
      %v3055 = vunpack.c.l.b16 %v2927
      %v3056 = vunpack.c.l.b16 %v2928
      %v3057 = vunpack.c.l.b16 %v2929
      %v3058 = vunpack.c.l.b16 %v2930
      %v3059 = vunpack.c.l.b16 %v2931
      %v3060 = vunpack.c.l.b16 %v2932
      %v3061 = vunpack.c.l.b16 %v2933
      %v3062 = vunpack.c.l.b16 %v2934
      %v3063 = vunpack.c.l.b16 %v2935
      %v3064 = vunpack.c.l.b16 %v2936
      %v3065 = vunpack.c.l.b16 %v2937
      %v3066 = vunpack.c.l.b16 %v2938
      %v3067 = vunpack.c.l.b16 %v2939
      %v3068 = vunpack.c.l.b16 %v2940
      %v3069 = vunpack.c.l.b16 %v2941
      %v3070 = vunpack.c.l.b16 %v2942
      %v3071 = vunpack.c.l.b16 %v2943
      %v3072 = vunpack.c.l.b16 %v2944
      %v3073 = vunpack.c.l.b16 %v2945
      %v3074 = vunpack.c.l.b16 %v2946
      %v3075 = vunpack.c.l.b16 %v2947
      %v3076 = vunpack.c.l.b16 %v2948
      %v3077 = vunpack.c.l.b16 %v2949
      %v3078 = vunpack.c.l.b16 %v2950
      %v3079 = vunpack.c.l.b16 %v2951
      %v3080 = vunpack.c.l.b16 %v2952
      %v3081 = vunpack.c.l.b16 %v2953
      %v3082 = vunpack.c.l.b16 %v2954
      %v3083 = vunpack.c.l.b16 %v2955
      %v3084 = vunpack.c.l.b16 %v2956
      %v3085 = vunpack.c.l.b16 %v2957
      %v3086 = vpack.c.b16 %v3023, %v3022
      %v3087 = vpack.c.b16 %v3025, %v3024
      %v3088 = vpack.c.b16 %v3027, %v3026
      %v3089 = vpack.c.b16 %v3029, %v3028
      %v3090 = vpack.c.b16 %v3031, %v3030
      %v3091 = vpack.c.b16 %v3033, %v3032
      %v3092 = vpack.c.b16 %v3035, %v3034
      %v3093 = vpack.c.b16 %v3037, %v3036
      %v3094 = vpack.c.b16 %v3039, %v3038
      %v3095 = vpack.c.b16 %v3041, %v3040
      %v3096 = vpack.c.b16 %v3043, %v3042
      %v3097 = vpack.c.b16 %v3045, %v3044
      %v3098 = vpack.c.b16 %v3047, %v3046
      %v3099 = vpack.c.b16 %v3049, %v3048
      %v3100 = vpack.c.b16 %v3051, %v3050
      %v3101 = vpack.c.b16 %v3053, %v3052
      %v3102 = vpack.c.b16 %v3055, %v3054
      %v3103 = vpack.c.b16 %v3057, %v3056
      %v3104 = vpack.c.b16 %v3059, %v3058
      %v3105 = vpack.c.b16 %v3061, %v3060
      %v3106 = vpack.c.b16 %v3063, %v3062
      %v3107 = vpack.c.b16 %v3065, %v3064
      %v3108 = vpack.c.b16 %v3067, %v3066
      %v3109 = vpack.c.b16 %v3069, %v3068
      %v3110 = vpack.c.b16 %v3071, %v3070
      %v3111 = vpack.c.b16 %v3073, %v3072
      %v3112 = vpack.c.b16 %v3075, %v3074
      %v3113 = vpack.c.b16 %v3077, %v3076
      %v3114 = vpack.c.b16 %v3079, %v3078
      %v3115 = vpack.c.b16 %v3081, %v3080
      %v3116 = vpack.c.b16 %v3083, %v3082
      %v3117 = vpack.c.b16 %v3085, %v3084
      %3118 = vrot.lane.b32.xlu0 %v3086, 96
      %v3119 = vpop.permute.xlu0 %3118
      %3120 = vrot.lane.b32.xlu0 %v3087, 96
      %v3121 = vpop.permute.xlu0 %3120
      %3122 = vrot.lane.b32.xlu0 %v3088, 96
      %v3123 = vpop.permute.xlu0 %3122
      %3124 = vrot.lane.b32.xlu0 %v3089, 96
      %v3125 = vpop.permute.xlu0 %3124
      %3126 = vrot.lane.b32.xlu0 %v3090, 96
      %v3127 = vpop.permute.xlu0 %3126
      %3128 = vrot.lane.b32.xlu0 %v3091, 96
      %v3129 = vpop.permute.xlu0 %3128
      %3130 = vrot.lane.b32.xlu0 %v3092, 96
      %v3131 = vpop.permute.xlu0 %3130
      %3132 = vrot.lane.b32.xlu0 %v3093, 96
      %v3133 = vpop.permute.xlu0 %3132
      %3134 = vrot.lane.b32.xlu0 %v3094, 96
      %v3135 = vpop.permute.xlu0 %3134
      %3136 = vrot.lane.b32.xlu0 %v3095, 96
      %v3137 = vpop.permute.xlu0 %3136
      %3138 = vrot.lane.b32.xlu0 %v3096, 96
      %v3139 = vpop.permute.xlu0 %3138
      %3140 = vrot.lane.b32.xlu0 %v3097, 96
      %v3141 = vpop.permute.xlu0 %3140
      %3142 = vrot.lane.b32.xlu0 %v3098, 96
      %v3143 = vpop.permute.xlu0 %3142
      %3144 = vrot.lane.b32.xlu0 %v3099, 96
      %v3145 = vpop.permute.xlu0 %3144
      %3146 = vrot.lane.b32.xlu0 %v3100, 96
      %v3147 = vpop.permute.xlu0 %3146
      %3148 = vrot.lane.b32.xlu0 %v3101, 96
      %v3149 = vpop.permute.xlu0 %3148
      %3150 = vrot.lane.b32.xlu0 %v3102, 96
      %v3151 = vpop.permute.xlu0 %3150
      %3152 = vrot.lane.b32.xlu0 %v3103, 96
      %v3153 = vpop.permute.xlu0 %3152
      %3154 = vrot.lane.b32.xlu0 %v3104, 96
      %v3155 = vpop.permute.xlu0 %3154
      %3156 = vrot.lane.b32.xlu0 %v3105, 96
      %v3157 = vpop.permute.xlu0 %3156
      %3158 = vrot.lane.b32.xlu0 %v3106, 96
      %v3159 = vpop.permute.xlu0 %3158
      %3160 = vrot.lane.b32.xlu0 %v3107, 96
      %v3161 = vpop.permute.xlu0 %3160
      %3162 = vrot.lane.b32.xlu0 %v3108, 96
      %v3163 = vpop.permute.xlu0 %3162
      %3164 = vrot.lane.b32.xlu0 %v3109, 96
      %v3165 = vpop.permute.xlu0 %3164
      %3166 = vrot.lane.b32.xlu0 %v3110, 96
      %v3167 = vpop.permute.xlu0 %3166
      %3168 = vrot.lane.b32.xlu0 %v3111, 96
      %v3169 = vpop.permute.xlu0 %3168
      %3170 = vrot.lane.b32.xlu0 %v3112, 96
      %v3171 = vpop.permute.xlu0 %3170
      %3172 = vrot.lane.b32.xlu0 %v3113, 96
      %v3173 = vpop.permute.xlu0 %3172
      %3174 = vrot.lane.b32.xlu0 %v3114, 96
      %v3175 = vpop.permute.xlu0 %3174
      %3176 = vrot.lane.b32.xlu0 %v3115, 96
      %v3177 = vpop.permute.xlu0 %3176
      %3178 = vrot.lane.b32.xlu0 %v3116, 96
      %v3179 = vpop.permute.xlu0 %3178
      %3180 = vrot.lane.b32.xlu0 %v3117, 96
      %v3181 = vpop.permute.xlu0 %3180
      %vm3214 = vcmask 917248
      %3215 = vst.msk [vmem:[#allocation2] sm:$0xff] %vm3214, %v3119
      %3216 = vst.msk [vmem:[#allocation2 + $0x10] sm:$0xff] %vm3214, %v3121
      %3217 = vst.msk [vmem:[#allocation2 + $0x20] sm:$0xff] %vm3214, %v3123
      %3218 = vst.msk [vmem:[#allocation2 + $0x30] sm:$0xff] %vm3214, %v3125
      %3219 = vst.msk [vmem:[#allocation2 + $0x40] sm:$0xff] %vm3214, %v3127
      %3220 = vst.msk [vmem:[#allocation2 + $0x50] sm:$0xff] %vm3214, %v3129
      %3221 = vst.msk [vmem:[#allocation2 + $0x60] sm:$0xff] %vm3214, %v3131
      %3222 = vst.msk [vmem:[#allocation2 + $0x70] sm:$0xff] %vm3214, %v3133
      %3223 = vst.msk [vmem:[#allocation2 + $0x80] sm:$0xff] %vm3214, %v3135
      %3224 = vst.msk [vmem:[#allocation2 + $0x90] sm:$0xff] %vm3214, %v3137
      %3225 = vst.msk [vmem:[#allocation2 + $0xa0] sm:$0xff] %vm3214, %v3139
      %3226 = vst.msk [vmem:[#allocation2 + $0xb0] sm:$0xff] %vm3214, %v3141
      %3227 = vst.msk [vmem:[#allocation2 + $0xc0] sm:$0xff] %vm3214, %v3143
      %3228 = vst.msk [vmem:[#allocation2 + $0xd0] sm:$0xff] %vm3214, %v3145
      %3229 = vst.msk [vmem:[#allocation2 + $0xe0] sm:$0xff] %vm3214, %v3147
      %3230 = vst.msk [vmem:[#allocation2 + $0xf0] sm:$0xff] %vm3214, %v3149
      %3231 = vst.msk [vmem:[#allocation2 + $0x100] sm:$0xff] %vm3214, %v3151
      %3232 = vst.msk [vmem:[#allocation2 + $0x110] sm:$0xff] %vm3214, %v3153
      %3233 = vst.msk [vmem:[#allocation2 + $0x120] sm:$0xff] %vm3214, %v3155
      %3234 = vst.msk [vmem:[#allocation2 + $0x130] sm:$0xff] %vm3214, %v3157
      %3235 = vst.msk [vmem:[#allocation2 + $0x140] sm:$0xff] %vm3214, %v3159
      %3236 = vst.msk [vmem:[#allocation2 + $0x150] sm:$0xff] %vm3214, %v3161
      %3237 = vst.msk [vmem:[#allocation2 + $0x160] sm:$0xff] %vm3214, %v3163
      %3238 = vst.msk [vmem:[#allocation2 + $0x170] sm:$0xff] %vm3214, %v3165
      %3239 = vst.msk [vmem:[#allocation2 + $0x180] sm:$0xff] %vm3214, %v3167
      %3240 = vst.msk [vmem:[#allocation2 + $0x190] sm:$0xff] %vm3214, %v3169
      %3241 = vst.msk [vmem:[#allocation2 + $0x1a0] sm:$0xff] %vm3214, %v3171
      %3242 = vst.msk [vmem:[#allocation2 + $0x1b0] sm:$0xff] %vm3214, %v3173
      %3243 = vst.msk [vmem:[#allocation2 + $0x1c0] sm:$0xff] %vm3214, %v3175
      %3244 = vst.msk [vmem:[#allocation2 + $0x1d0] sm:$0xff] %vm3214, %v3177
      %3245 = vst.msk [vmem:[#allocation2 + $0x1e0] sm:$0xff] %vm3214, %v3179
      %3246 = vst.msk [vmem:[#allocation2 + $0x1f0] sm:$0xff] %vm3214, %v3181
      %v3247 = vld [vmem:[%s165 + $0x20] sm:$0xf]
      %v3248 = vld [vmem:[%s165 + $0x24] sm:$0xf]
      %v3249 = vld [vmem:[%s165 + $0x28] sm:$0xf]
      %v3250 = vld [vmem:[%s165 + $0x2c] sm:$0xf]
      %v3251 = vld [vmem:[%s165 + $0x30] sm:$0xf]
      %v3252 = vld [vmem:[%s165 + $0x34] sm:$0xf]
      %v3253 = vld [vmem:[%s165 + $0x38] sm:$0xf]
      %v3254 = vld [vmem:[%s165 + $0x3c] sm:$0xf]
      %v3255 = vld [vmem:[%s165 + $0x40] sm:$0xf]
      %v3256 = vld [vmem:[%s165 + $0x44] sm:$0xf]
      %v3257 = vld [vmem:[%s165 + $0x48] sm:$0xf]
      %v3258 = vld [vmem:[%s165 + $0x4c] sm:$0xf]
      %v3259 = vld [vmem:[%s165 + $0x50] sm:$0xf]
      %v3260 = vld [vmem:[%s165 + $0x54] sm:$0xf]
      %v3261 = vld [vmem:[%s165 + $0x58] sm:$0xf]
      %v3262 = vld [vmem:[%s165 + $0x5c] sm:$0xf]
      %v3263 = vld [vmem:[%s165 + $0x60] sm:$0xf]
      %v3264 = vld [vmem:[%s165 + $0x64] sm:$0xf]
      %v3265 = vld [vmem:[%s165 + $0x68] sm:$0xf]
      %v3266 = vld [vmem:[%s165 + $0x6c] sm:$0xf]
      %v3267 = vld [vmem:[%s165 + $0x70] sm:$0xf]
      %v3268 = vld [vmem:[%s165 + $0x74] sm:$0xf]
      %v3269 = vld [vmem:[%s165 + $0x78] sm:$0xf]
      %v3270 = vld [vmem:[%s165 + $0x7c] sm:$0xf]
      %v3271 = vld [vmem:[%s165 + $0x80] sm:$0xf]
      %v3272 = vld [vmem:[%s165 + $0x84] sm:$0xf]
      %v3273 = vld [vmem:[%s165 + $0x88] sm:$0xf]
      %v3274 = vld [vmem:[%s165 + $0x8c] sm:$0xf]
      %v3275 = vld [vmem:[%s165 + $0x90] sm:$0xf]
      %v3276 = vld [vmem:[%s165 + $0x94] sm:$0xf]
      %v3277 = vld [vmem:[%s165 + $0x98] sm:$0xf]
      %v3278 = vld [vmem:[%s165 + $0x9c] sm:$0xf]
      %v3279 = vld [vmem:[%s165 + $0xa0] sm:$0xf]
      %v3280 = vld [vmem:[%s165 + $0xa4] sm:$0xf]
      %v3281 = vld [vmem:[%s165 + $0xa8] sm:$0xf]
      %v3282 = vld [vmem:[%s165 + $0xac] sm:$0xf]
      %v3283 = vld [vmem:[%s165 + $0xb0] sm:$0xf]
      %v3284 = vld [vmem:[%s165 + $0xb4] sm:$0xf]
      %v3285 = vld [vmem:[%s165 + $0xb8] sm:$0xf]
      %v3286 = vld [vmem:[%s165 + $0xbc] sm:$0xf]
      %v3287 = vld [vmem:[%s165 + $0xc0] sm:$0xf]
      %v3288 = vld [vmem:[%s165 + $0xc4] sm:$0xf]
      %v3289 = vld [vmem:[%s165 + $0xc8] sm:$0xf]
      %v3290 = vld [vmem:[%s165 + $0xcc] sm:$0xf]
      %v3291 = vld [vmem:[%s165 + $0xd0] sm:$0xf]
      %v3292 = vld [vmem:[%s165 + $0xd4] sm:$0xf]
      %v3293 = vld [vmem:[%s165 + $0xd8] sm:$0xf]
      %v3294 = vld [vmem:[%s165 + $0xdc] sm:$0xf]
      %v3295 = vld [vmem:[%s165 + $0xe0] sm:$0xf]
      %v3296 = vld [vmem:[%s165 + $0xe4] sm:$0xf]
      %v3297 = vld [vmem:[%s165 + $0xe8] sm:$0xf]
      %v3298 = vld [vmem:[%s165 + $0xec] sm:$0xf]
      %v3299 = vld [vmem:[%s165 + $0xf0] sm:$0xf]
      %v3300 = vld [vmem:[%s165 + $0xf4] sm:$0xf]
      %v3301 = vld [vmem:[%s165 + $0xf8] sm:$0xf]
      %v3302 = vld [vmem:[%s165 + $0xfc] sm:$0xf]
      %v3303 = vld [vmem:[%s165 + $0x100] sm:$0xf]
      %v3304 = vld [vmem:[%s165 + $0x104] sm:$0xf]
      %v3305 = vld [vmem:[%s165 + $0x108] sm:$0xf]
      %v3306 = vld [vmem:[%s165 + $0x10c] sm:$0xf]
      %v3307 = vld [vmem:[%s165 + $0x110] sm:$0xf]
      %v3308 = vld [vmem:[%s165 + $0x114] sm:$0xf]
      %v3309 = vld [vmem:[%s165 + $0x118] sm:$0xf]
      %v3310 = vld [vmem:[%s165 + $0x11c] sm:$0xf]
      %v3311 = vld [vmem:[%s165 + $0x120] sm:$0x1]
      %v3377 = vunpack.c.l.b16 %v3247
      %v3378 = vunpack.c.l.b16 %v3248
      %v3379 = vunpack.c.l.b16 %v3249
      %v3380 = vunpack.c.l.b16 %v3250
      %v3381 = vunpack.c.l.b16 %v3251
      %v3382 = vunpack.c.l.b16 %v3252
      %v3383 = vunpack.c.l.b16 %v3253
      %v3384 = vunpack.c.l.b16 %v3254
      %v3385 = vunpack.c.l.b16 %v3255
      %v3386 = vunpack.c.l.b16 %v3256
      %v3387 = vunpack.c.l.b16 %v3257
      %v3388 = vunpack.c.l.b16 %v3258
      %v3389 = vunpack.c.l.b16 %v3259
      %v3390 = vunpack.c.l.b16 %v3260
      %v3391 = vunpack.c.l.b16 %v3261
      %v3392 = vunpack.c.l.b16 %v3262
      %v3393 = vunpack.c.l.b16 %v3263
      %v3394 = vunpack.c.l.b16 %v3264
      %v3395 = vunpack.c.l.b16 %v3265
      %v3396 = vunpack.c.l.b16 %v3266
      %v3397 = vunpack.c.l.b16 %v3267
      %v3398 = vunpack.c.l.b16 %v3268
      %v3399 = vunpack.c.l.b16 %v3269
      %v3400 = vunpack.c.l.b16 %v3270
      %v3401 = vunpack.c.l.b16 %v3271
      %v3402 = vunpack.c.l.b16 %v3272
      %v3403 = vunpack.c.l.b16 %v3273
      %v3404 = vunpack.c.l.b16 %v3274
      %v3405 = vunpack.c.l.b16 %v3275
      %v3406 = vunpack.c.l.b16 %v3276
      %v3407 = vunpack.c.l.b16 %v3277
      %v3408 = vunpack.c.l.b16 %v3278
      %v3409 = vunpack.c.l.b16 %v3279
      %v3410 = vunpack.c.l.b16 %v3280
      %v3411 = vunpack.c.l.b16 %v3281
      %v3412 = vunpack.c.l.b16 %v3282
      %v3413 = vunpack.c.l.b16 %v3283
      %v3414 = vunpack.c.l.b16 %v3284
      %v3415 = vunpack.c.l.b16 %v3285
      %v3416 = vunpack.c.l.b16 %v3286
      %v3417 = vunpack.c.l.b16 %v3287
      %v3418 = vunpack.c.l.b16 %v3288
      %v3419 = vunpack.c.l.b16 %v3289
      %v3420 = vunpack.c.l.b16 %v3290
      %v3421 = vunpack.c.l.b16 %v3291
      %v3422 = vunpack.c.l.b16 %v3292
      %v3423 = vunpack.c.l.b16 %v3293
      %v3424 = vunpack.c.l.b16 %v3294
      %v3425 = vunpack.c.l.b16 %v3295
      %v3426 = vunpack.c.l.b16 %v3296
      %v3427 = vunpack.c.l.b16 %v3297
      %v3428 = vunpack.c.l.b16 %v3298
      %v3429 = vunpack.c.l.b16 %v3299
      %v3430 = vunpack.c.l.b16 %v3300
      %v3431 = vunpack.c.l.b16 %v3301
      %v3432 = vunpack.c.l.b16 %v3302
      %v3433 = vunpack.c.l.b16 %v3303
      %v3434 = vunpack.c.l.b16 %v3304
      %v3435 = vunpack.c.l.b16 %v3305
      %v3436 = vunpack.c.l.b16 %v3306
      %v3437 = vunpack.c.l.b16 %v3307
      %v3438 = vunpack.c.l.b16 %v3308
      %v3439 = vunpack.c.l.b16 %v3309
      %v3440 = vunpack.c.l.b16 %v3310
      %v3441 = vunpack.c.l.b16 %v3311
      %v3442 = vpack.c.b16 %v3378, %v3377
      %v3443 = vpack.c.b16 %v3380, %v3379
      %v3444 = vpack.c.b16 %v3382, %v3381
      %v3445 = vpack.c.b16 %v3384, %v3383
      %v3446 = vpack.c.b16 %v3386, %v3385
      %v3447 = vpack.c.b16 %v3388, %v3387
      %v3448 = vpack.c.b16 %v3390, %v3389
      %v3449 = vpack.c.b16 %v3392, %v3391
      %v3450 = vpack.c.b16 %v3394, %v3393
      %v3451 = vpack.c.b16 %v3396, %v3395
      %v3452 = vpack.c.b16 %v3398, %v3397
      %v3453 = vpack.c.b16 %v3400, %v3399
      %v3454 = vpack.c.b16 %v3402, %v3401
      %v3455 = vpack.c.b16 %v3404, %v3403
      %v3456 = vpack.c.b16 %v3406, %v3405
      %v3457 = vpack.c.b16 %v3408, %v3407
      %v3458 = vpack.c.b16 %v3410, %v3409
      %v3459 = vpack.c.b16 %v3412, %v3411
      %v3460 = vpack.c.b16 %v3414, %v3413
      %v3461 = vpack.c.b16 %v3416, %v3415
      %v3462 = vpack.c.b16 %v3418, %v3417
      %v3463 = vpack.c.b16 %v3420, %v3419
      %v3464 = vpack.c.b16 %v3422, %v3421
      %v3465 = vpack.c.b16 %v3424, %v3423
      %v3466 = vpack.c.b16 %v3426, %v3425
      %v3467 = vpack.c.b16 %v3428, %v3427
      %v3468 = vpack.c.b16 %v3430, %v3429
      %v3469 = vpack.c.b16 %v3432, %v3431
      %v3470 = vpack.c.b16 %v3434, %v3433
      %v3471 = vpack.c.b16 %v3436, %v3435
      %v3472 = vpack.c.b16 %v3438, %v3437
      %v3473 = vpack.c.b16 %v3440, %v3439
      %v3474 = vpack.c.b16 %v3441, %v3441
      %v3476 = vshrl.u32 %v3442, 16
      %v3478 = vshll.u32 %v3442, 16
      %v3480 = vrot.slane %v3478, 1
      %v3481 = vor.u32 %v3476, %v3480
      %v3483 = vshll.u32 %v3443, 16
      %v3485 = vrot.slane %v3483, 1
      %v3486 = vsel %vm689, %v3481, %v3485
      %v3487 = vshrl.u32 %v3443, 16
      %v3489 = vor.u32 %v3487, %v3485
      %v3491 = vshll.u32 %v3444, 16
      %v3493 = vrot.slane %v3491, 1
      %v3494 = vsel %vm689, %v3489, %v3493
      %v3495 = vshrl.u32 %v3444, 16
      %v3497 = vor.u32 %v3495, %v3493
      %v3499 = vshll.u32 %v3445, 16
      %v3501 = vrot.slane %v3499, 1
      %v3502 = vsel %vm689, %v3497, %v3501
      %v3503 = vshrl.u32 %v3445, 16
      %v3505 = vor.u32 %v3503, %v3501
      %v3507 = vshll.u32 %v3446, 16
      %v3509 = vrot.slane %v3507, 1
      %v3510 = vsel %vm689, %v3505, %v3509
      %v3511 = vshrl.u32 %v3446, 16
      %v3513 = vor.u32 %v3511, %v3509
      %v3515 = vshll.u32 %v3447, 16
      %v3517 = vrot.slane %v3515, 1
      %v3518 = vsel %vm689, %v3513, %v3517
      %v3519 = vshrl.u32 %v3447, 16
      %v3521 = vor.u32 %v3519, %v3517
      %v3523 = vshll.u32 %v3448, 16
      %v3525 = vrot.slane %v3523, 1
      %v3526 = vsel %vm689, %v3521, %v3525
      %v3527 = vshrl.u32 %v3448, 16
      %v3529 = vor.u32 %v3527, %v3525
      %v3531 = vshll.u32 %v3449, 16
      %v3533 = vrot.slane %v3531, 1
      %v3534 = vsel %vm689, %v3529, %v3533
      %v3535 = vshrl.u32 %v3449, 16
      %v3537 = vor.u32 %v3535, %v3533
      %v3539 = vshll.u32 %v3450, 16
      %v3541 = vrot.slane %v3539, 1
      %v3542 = vsel %vm689, %v3537, %v3541
      %v3543 = vshrl.u32 %v3450, 16
      %v3545 = vor.u32 %v3543, %v3541
      %v3547 = vshll.u32 %v3451, 16
      %v3549 = vrot.slane %v3547, 1
      %v3550 = vsel %vm689, %v3545, %v3549
      %v3551 = vshrl.u32 %v3451, 16
      %v3553 = vor.u32 %v3551, %v3549
      %v3555 = vshll.u32 %v3452, 16
      %v3557 = vrot.slane %v3555, 1
      %v3558 = vsel %vm689, %v3553, %v3557
      %v3559 = vshrl.u32 %v3452, 16
      %v3561 = vor.u32 %v3559, %v3557
      %v3563 = vshll.u32 %v3453, 16
      %v3565 = vrot.slane %v3563, 1
      %v3566 = vsel %vm689, %v3561, %v3565
      %v3567 = vshrl.u32 %v3453, 16
      %v3569 = vor.u32 %v3567, %v3565
      %v3571 = vshll.u32 %v3454, 16
      %v3573 = vrot.slane %v3571, 1
      %v3574 = vsel %vm689, %v3569, %v3573
      %v3575 = vshrl.u32 %v3454, 16
      %v3577 = vor.u32 %v3575, %v3573
      %v3579 = vshll.u32 %v3455, 16
      %v3581 = vrot.slane %v3579, 1
      %v3582 = vsel %vm689, %v3577, %v3581
      %v3583 = vshrl.u32 %v3455, 16
      %v3585 = vor.u32 %v3583, %v3581
      %v3587 = vshll.u32 %v3456, 16
      %v3589 = vrot.slane %v3587, 1
      %v3590 = vsel %vm689, %v3585, %v3589
      %v3591 = vshrl.u32 %v3456, 16
      %v3593 = vor.u32 %v3591, %v3589
      %v3595 = vshll.u32 %v3457, 16
      %v3597 = vrot.slane %v3595, 1
      %v3598 = vsel %vm689, %v3593, %v3597
      %v3599 = vshrl.u32 %v3457, 16
      %v3601 = vor.u32 %v3599, %v3597
      %v3603 = vshll.u32 %v3458, 16
      %v3605 = vrot.slane %v3603, 1
      %v3606 = vsel %vm689, %v3601, %v3605
      %v3607 = vshrl.u32 %v3458, 16
      %v3609 = vor.u32 %v3607, %v3605
      %v3611 = vshll.u32 %v3459, 16
      %v3613 = vrot.slane %v3611, 1
      %v3614 = vsel %vm689, %v3609, %v3613
      %v3615 = vshrl.u32 %v3459, 16
      %v3617 = vor.u32 %v3615, %v3613
      %v3619 = vshll.u32 %v3460, 16
      %v3621 = vrot.slane %v3619, 1
      %v3622 = vsel %vm689, %v3617, %v3621
      %v3623 = vshrl.u32 %v3460, 16
      %v3625 = vor.u32 %v3623, %v3621
      %v3627 = vshll.u32 %v3461, 16
      %v3629 = vrot.slane %v3627, 1
      %v3630 = vsel %vm689, %v3625, %v3629
      %v3631 = vshrl.u32 %v3461, 16
      %v3633 = vor.u32 %v3631, %v3629
      %v3635 = vshll.u32 %v3462, 16
      %v3637 = vrot.slane %v3635, 1
      %v3638 = vsel %vm689, %v3633, %v3637
      %v3639 = vshrl.u32 %v3462, 16
      %v3641 = vor.u32 %v3639, %v3637
      %v3643 = vshll.u32 %v3463, 16
      %v3645 = vrot.slane %v3643, 1
      %v3646 = vsel %vm689, %v3641, %v3645
      %v3647 = vshrl.u32 %v3463, 16
      %v3649 = vor.u32 %v3647, %v3645
      %v3651 = vshll.u32 %v3464, 16
      %v3653 = vrot.slane %v3651, 1
      %v3654 = vsel %vm689, %v3649, %v3653
      %v3655 = vshrl.u32 %v3464, 16
      %v3657 = vor.u32 %v3655, %v3653
      %v3659 = vshll.u32 %v3465, 16
      %v3661 = vrot.slane %v3659, 1
      %v3662 = vsel %vm689, %v3657, %v3661
      %v3663 = vshrl.u32 %v3465, 16
      %v3665 = vor.u32 %v3663, %v3661
      %v3667 = vshll.u32 %v3466, 16
      %v3669 = vrot.slane %v3667, 1
      %v3670 = vsel %vm689, %v3665, %v3669
      %v3671 = vshrl.u32 %v3466, 16
      %v3673 = vor.u32 %v3671, %v3669
      %v3675 = vshll.u32 %v3467, 16
      %v3677 = vrot.slane %v3675, 1
      %v3678 = vsel %vm689, %v3673, %v3677
      %v3679 = vshrl.u32 %v3467, 16
      %v3681 = vor.u32 %v3679, %v3677
      %v3683 = vshll.u32 %v3468, 16
      %v3685 = vrot.slane %v3683, 1
      %v3686 = vsel %vm689, %v3681, %v3685
      %v3687 = vshrl.u32 %v3468, 16
      %v3689 = vor.u32 %v3687, %v3685
      %v3691 = vshll.u32 %v3469, 16
      %v3693 = vrot.slane %v3691, 1
      %v3694 = vsel %vm689, %v3689, %v3693
      %v3695 = vshrl.u32 %v3469, 16
      %v3697 = vor.u32 %v3695, %v3693
      %v3699 = vshll.u32 %v3470, 16
      %v3701 = vrot.slane %v3699, 1
      %v3702 = vsel %vm689, %v3697, %v3701
      %v3703 = vshrl.u32 %v3470, 16
      %v3705 = vor.u32 %v3703, %v3701
      %v3707 = vshll.u32 %v3471, 16
      %v3709 = vrot.slane %v3707, 1
      %v3710 = vsel %vm689, %v3705, %v3709
      %v3711 = vshrl.u32 %v3471, 16
      %v3713 = vor.u32 %v3711, %v3709
      %v3715 = vshll.u32 %v3472, 16
      %v3717 = vrot.slane %v3715, 1
      %v3718 = vsel %vm689, %v3713, %v3717
      %v3719 = vshrl.u32 %v3472, 16
      %v3721 = vor.u32 %v3719, %v3717
      %v3723 = vshll.u32 %v3473, 16
      %v3725 = vrot.slane %v3723, 1
      %v3726 = vsel %vm689, %v3721, %v3725
      %v3727 = vshrl.u32 %v3473, 16
      %v3729 = vor.u32 %v3727, %v3725
      %v3731 = vshll.u32 %v3474, 16
      %v3733 = vrot.slane %v3731, 1
      %v3734 = vsel %vm689, %v3729, %v3733
      %3735 = vrot.lane.b32.xlu0 %v3486, 112
      %v3736 = vpop.permute.xlu0 %3735
      %3737 = vrot.lane.b32.xlu0 %v3494, 112
      %v3738 = vpop.permute.xlu0 %3737
      %3739 = vrot.lane.b32.xlu0 %v3502, 112
      %v3740 = vpop.permute.xlu0 %3739
      %3741 = vrot.lane.b32.xlu0 %v3510, 112
      %v3742 = vpop.permute.xlu0 %3741
      %3743 = vrot.lane.b32.xlu0 %v3518, 112
      %v3744 = vpop.permute.xlu0 %3743
      %3745 = vrot.lane.b32.xlu0 %v3526, 112
      %v3746 = vpop.permute.xlu0 %3745
      %3747 = vrot.lane.b32.xlu0 %v3534, 112
      %v3748 = vpop.permute.xlu0 %3747
      %3749 = vrot.lane.b32.xlu0 %v3542, 112
      %v3750 = vpop.permute.xlu0 %3749
      %3751 = vrot.lane.b32.xlu0 %v3550, 112
      %v3752 = vpop.permute.xlu0 %3751
      %3753 = vrot.lane.b32.xlu0 %v3558, 112
      %v3754 = vpop.permute.xlu0 %3753
      %3755 = vrot.lane.b32.xlu0 %v3566, 112
      %v3756 = vpop.permute.xlu0 %3755
      %3757 = vrot.lane.b32.xlu0 %v3574, 112
      %v3758 = vpop.permute.xlu0 %3757
      %3759 = vrot.lane.b32.xlu0 %v3582, 112
      %v3760 = vpop.permute.xlu0 %3759
      %3761 = vrot.lane.b32.xlu0 %v3590, 112
      %v3762 = vpop.permute.xlu0 %3761
      %3763 = vrot.lane.b32.xlu0 %v3598, 112
      %v3764 = vpop.permute.xlu0 %3763
      %3765 = vrot.lane.b32.xlu0 %v3606, 112
      %v3766 = vpop.permute.xlu0 %3765
      %3767 = vrot.lane.b32.xlu0 %v3614, 112
      %v3768 = vpop.permute.xlu0 %3767
      %3769 = vrot.lane.b32.xlu0 %v3622, 112
      %v3770 = vpop.permute.xlu0 %3769
      %3771 = vrot.lane.b32.xlu0 %v3630, 112
      %v3772 = vpop.permute.xlu0 %3771
      %3773 = vrot.lane.b32.xlu0 %v3638, 112
      %v3774 = vpop.permute.xlu0 %3773
      %3775 = vrot.lane.b32.xlu0 %v3646, 112
      %v3776 = vpop.permute.xlu0 %3775
      %3777 = vrot.lane.b32.xlu0 %v3654, 112
      %v3778 = vpop.permute.xlu0 %3777
      %3779 = vrot.lane.b32.xlu0 %v3662, 112
      %v3780 = vpop.permute.xlu0 %3779
      %3781 = vrot.lane.b32.xlu0 %v3670, 112
      %v3782 = vpop.permute.xlu0 %3781
      %3783 = vrot.lane.b32.xlu0 %v3678, 112
      %v3784 = vpop.permute.xlu0 %3783
      %3785 = vrot.lane.b32.xlu0 %v3686, 112
      %v3786 = vpop.permute.xlu0 %3785
      %3787 = vrot.lane.b32.xlu0 %v3694, 112
      %v3788 = vpop.permute.xlu0 %3787
      %3789 = vrot.lane.b32.xlu0 %v3702, 112
      %v3790 = vpop.permute.xlu0 %3789
      %3791 = vrot.lane.b32.xlu0 %v3710, 112
      %v3792 = vpop.permute.xlu0 %3791
      %3793 = vrot.lane.b32.xlu0 %v3718, 112
      %v3794 = vpop.permute.xlu0 %3793
      %3795 = vrot.lane.b32.xlu0 %v3726, 112
      %v3796 = vpop.permute.xlu0 %3795
      %3797 = vrot.lane.b32.xlu0 %v3734, 112
      %v3798 = vpop.permute.xlu0 %3797
      %vm3831 = vcmask 1048448
      %3832 = vst.msk [vmem:[#allocation2] sm:$0xff] %vm3831, %v3736
      %3833 = vst.msk [vmem:[#allocation2 + $0x10] sm:$0xff] %vm3831, %v3738
      %3834 = vst.msk [vmem:[#allocation2 + $0x20] sm:$0xff] %vm3831, %v3740
      %3835 = vst.msk [vmem:[#allocation2 + $0x30] sm:$0xff] %vm3831, %v3742
      %3836 = vst.msk [vmem:[#allocation2 + $0x40] sm:$0xff] %vm3831, %v3744
      %3837 = vst.msk [vmem:[#allocation2 + $0x50] sm:$0xff] %vm3831, %v3746
      %3838 = vst.msk [vmem:[#allocation2 + $0x60] sm:$0xff] %vm3831, %v3748
      %3839 = vst.msk [vmem:[#allocation2 + $0x70] sm:$0xff] %vm3831, %v3750
      %3840 = vst.msk [vmem:[#allocation2 + $0x80] sm:$0xff] %vm3831, %v3752
      %3841 = vst.msk [vmem:[#allocation2 + $0x90] sm:$0xff] %vm3831, %v3754
      %3842 = vst.msk [vmem:[#allocation2 + $0xa0] sm:$0xff] %vm3831, %v3756
      %3843 = vst.msk [vmem:[#allocation2 + $0xb0] sm:$0xff] %vm3831, %v3758
      %3844 = vst.msk [vmem:[#allocation2 + $0xc0] sm:$0xff] %vm3831, %v3760
      %3845 = vst.msk [vmem:[#allocation2 + $0xd0] sm:$0xff] %vm3831, %v3762
      %3846 = vst.msk [vmem:[#allocation2 + $0xe0] sm:$0xff] %vm3831, %v3764
      %3847 = vst.msk [vmem:[#allocation2 + $0xf0] sm:$0xff] %vm3831, %v3766
      %3848 = vst.msk [vmem:[#allocation2 + $0x100] sm:$0xff] %vm3831, %v3768
      %3849 = vst.msk [vmem:[#allocation2 + $0x110] sm:$0xff] %vm3831, %v3770
      %3850 = vst.msk [vmem:[#allocation2 + $0x120] sm:$0xff] %vm3831, %v3772
      %3851 = vst.msk [vmem:[#allocation2 + $0x130] sm:$0xff] %vm3831, %v3774
      %3852 = vst.msk [vmem:[#allocation2 + $0x140] sm:$0xff] %vm3831, %v3776
      %3853 = vst.msk [vmem:[#allocation2 + $0x150] sm:$0xff] %vm3831, %v3778
      %3854 = vst.msk [vmem:[#allocation2 + $0x160] sm:$0xff] %vm3831, %v3780
      %3855 = vst.msk [vmem:[#allocation2 + $0x170] sm:$0xff] %vm3831, %v3782
      %3856 = vst.msk [vmem:[#allocation2 + $0x180] sm:$0xff] %vm3831, %v3784
      %3857 = vst.msk [vmem:[#allocation2 + $0x190] sm:$0xff] %vm3831, %v3786
      %3858 = vst.msk [vmem:[#allocation2 + $0x1a0] sm:$0xff] %vm3831, %v3788
      %3859 = vst.msk [vmem:[#allocation2 + $0x1b0] sm:$0xff] %vm3831, %v3790
      %3860 = vst.msk [vmem:[#allocation2 + $0x1c0] sm:$0xff] %vm3831, %v3792
      %3861 = vst.msk [vmem:[#allocation2 + $0x1d0] sm:$0xff] %vm3831, %v3794
      %3862 = vst.msk [vmem:[#allocation2 + $0x1e0] sm:$0xff] %vm3831, %v3796
      %3863 = vst.msk [vmem:[#allocation2 + $0x1f0] sm:$0xff] %vm3831, %v3798
      %v3864 = vld [vmem:[%s165 + $0x20] sm:$0xe]
      %v3865 = vld [vmem:[%s165 + $0x24] sm:$0xf]
      %v3866 = vld [vmem:[%s165 + $0x28] sm:$0xf]
      %v3867 = vld [vmem:[%s165 + $0x2c] sm:$0xf]
      %v3868 = vld [vmem:[%s165 + $0x30] sm:$0xf]
      %v3869 = vld [vmem:[%s165 + $0x34] sm:$0xf]
      %v3870 = vld [vmem:[%s165 + $0x38] sm:$0xf]
      %v3871 = vld [vmem:[%s165 + $0x3c] sm:$0xf]
      %v3872 = vld [vmem:[%s165 + $0x40] sm:$0xf]
      %v3873 = vld [vmem:[%s165 + $0x44] sm:$0xf]
      %v3874 = vld [vmem:[%s165 + $0x48] sm:$0xf]
      %v3875 = vld [vmem:[%s165 + $0x4c] sm:$0xf]
      %v3876 = vld [vmem:[%s165 + $0x50] sm:$0xf]
      %v3877 = vld [vmem:[%s165 + $0x54] sm:$0xf]
      %v3878 = vld [vmem:[%s165 + $0x58] sm:$0xf]
      %v3879 = vld [vmem:[%s165 + $0x5c] sm:$0xf]
      %v3880 = vld [vmem:[%s165 + $0x60] sm:$0xf]
      %v3881 = vld [vmem:[%s165 + $0x64] sm:$0xf]
      %v3882 = vld [vmem:[%s165 + $0x68] sm:$0xf]
      %v3883 = vld [vmem:[%s165 + $0x6c] sm:$0xf]
      %v3884 = vld [vmem:[%s165 + $0x70] sm:$0xf]
      %v3885 = vld [vmem:[%s165 + $0x74] sm:$0xf]
      %v3886 = vld [vmem:[%s165 + $0x78] sm:$0xf]
      %v3887 = vld [vmem:[%s165 + $0x7c] sm:$0xf]
      %v3888 = vld [vmem:[%s165 + $0x80] sm:$0xf]
      %v3889 = vld [vmem:[%s165 + $0x84] sm:$0xf]
      %v3890 = vld [vmem:[%s165 + $0x88] sm:$0xf]
      %v3891 = vld [vmem:[%s165 + $0x8c] sm:$0xf]
      %v3892 = vld [vmem:[%s165 + $0x90] sm:$0xf]
      %v3893 = vld [vmem:[%s165 + $0x94] sm:$0xf]
      %v3894 = vld [vmem:[%s165 + $0x98] sm:$0xf]
      %v3895 = vld [vmem:[%s165 + $0x9c] sm:$0xf]
      %v3896 = vld [vmem:[%s165 + $0xa0] sm:$0xf]
      %v3897 = vld [vmem:[%s165 + $0xa4] sm:$0xf]
      %v3898 = vld [vmem:[%s165 + $0xa8] sm:$0xf]
      %v3899 = vld [vmem:[%s165 + $0xac] sm:$0xf]
      %v3900 = vld [vmem:[%s165 + $0xb0] sm:$0xf]
      %v3901 = vld [vmem:[%s165 + $0xb4] sm:$0xf]
      %v3902 = vld [vmem:[%s165 + $0xb8] sm:$0xf]
      %v3903 = vld [vmem:[%s165 + $0xbc] sm:$0xf]
      %v3904 = vld [vmem:[%s165 + $0xc0] sm:$0xf]
      %v3905 = vld [vmem:[%s165 + $0xc4] sm:$0xf]
      %v3906 = vld [vmem:[%s165 + $0xc8] sm:$0xf]
      %v3907 = vld [vmem:[%s165 + $0xcc] sm:$0xf]
      %v3908 = vld [vmem:[%s165 + $0xd0] sm:$0xf]
      %v3909 = vld [vmem:[%s165 + $0xd4] sm:$0xf]
      %v3910 = vld [vmem:[%s165 + $0xd8] sm:$0xf]
      %v3911 = vld [vmem:[%s165 + $0xdc] sm:$0xf]
      %v3912 = vld [vmem:[%s165 + $0xe0] sm:$0xf]
      %v3913 = vld [vmem:[%s165 + $0xe4] sm:$0xf]
      %v3914 = vld [vmem:[%s165 + $0xe8] sm:$0xf]
      %v3915 = vld [vmem:[%s165 + $0xec] sm:$0xf]
      %v3916 = vld [vmem:[%s165 + $0xf0] sm:$0xf]
      %v3917 = vld [vmem:[%s165 + $0xf4] sm:$0xf]
      %v3918 = vld [vmem:[%s165 + $0xf8] sm:$0xf]
      %v3919 = vld [vmem:[%s165 + $0xfc] sm:$0xf]
      %v3920 = vld [vmem:[%s165 + $0x100] sm:$0xf]
      %v3921 = vld [vmem:[%s165 + $0x104] sm:$0xf]
      %v3922 = vld [vmem:[%s165 + $0x108] sm:$0xf]
      %v3923 = vld [vmem:[%s165 + $0x10c] sm:$0xf]
      %v3924 = vld [vmem:[%s165 + $0x110] sm:$0xf]
      %v3925 = vld [vmem:[%s165 + $0x114] sm:$0xf]
      %v3926 = vld [vmem:[%s165 + $0x118] sm:$0xf]
      %v3927 = vld [vmem:[%s165 + $0x11c] sm:$0xf]
      %v3928 = vld [vmem:[%s165 + $0x120] sm:$0x1]
      %v3994 = vunpack.c.l.b16 %v3864
      %v3995 = vunpack.c.l.b16 %v3865
      %v3996 = vunpack.c.l.b16 %v3866
      %v3997 = vunpack.c.l.b16 %v3867
      %v3998 = vunpack.c.l.b16 %v3868
      %v3999 = vunpack.c.l.b16 %v3869
      %v4000 = vunpack.c.l.b16 %v3870
      %v4001 = vunpack.c.l.b16 %v3871
      %v4002 = vunpack.c.l.b16 %v3872
      %v4003 = vunpack.c.l.b16 %v3873
      %v4004 = vunpack.c.l.b16 %v3874
      %v4005 = vunpack.c.l.b16 %v3875
      %v4006 = vunpack.c.l.b16 %v3876
      %v4007 = vunpack.c.l.b16 %v3877
      %v4008 = vunpack.c.l.b16 %v3878
      %v4009 = vunpack.c.l.b16 %v3879
      %v4010 = vunpack.c.l.b16 %v3880
      %v4011 = vunpack.c.l.b16 %v3881
      %v4012 = vunpack.c.l.b16 %v3882
      %v4013 = vunpack.c.l.b16 %v3883
      %v4014 = vunpack.c.l.b16 %v3884
      %v4015 = vunpack.c.l.b16 %v3885
      %v4016 = vunpack.c.l.b16 %v3886
      %v4017 = vunpack.c.l.b16 %v3887
      %v4018 = vunpack.c.l.b16 %v3888
      %v4019 = vunpack.c.l.b16 %v3889
      %v4020 = vunpack.c.l.b16 %v3890
      %v4021 = vunpack.c.l.b16 %v3891
      %v4022 = vunpack.c.l.b16 %v3892
      %v4023 = vunpack.c.l.b16 %v3893
      %v4024 = vunpack.c.l.b16 %v3894
      %v4025 = vunpack.c.l.b16 %v3895
      %v4026 = vunpack.c.l.b16 %v3896
      %v4027 = vunpack.c.l.b16 %v3897
      %v4028 = vunpack.c.l.b16 %v3898
      %v4029 = vunpack.c.l.b16 %v3899
      %v4030 = vunpack.c.l.b16 %v3900
      %v4031 = vunpack.c.l.b16 %v3901
      %v4032 = vunpack.c.l.b16 %v3902
      %v4033 = vunpack.c.l.b16 %v3903
      %v4034 = vunpack.c.l.b16 %v3904
      %v4035 = vunpack.c.l.b16 %v3905
      %v4036 = vunpack.c.l.b16 %v3906
      %v4037 = vunpack.c.l.b16 %v3907
      %v4038 = vunpack.c.l.b16 %v3908
      %v4039 = vunpack.c.l.b16 %v3909
      %v4040 = vunpack.c.l.b16 %v3910
      %v4041 = vunpack.c.l.b16 %v3911
      %v4042 = vunpack.c.l.b16 %v3912
      %v4043 = vunpack.c.l.b16 %v3913
      %v4044 = vunpack.c.l.b16 %v3914
      %v4045 = vunpack.c.l.b16 %v3915
      %v4046 = vunpack.c.l.b16 %v3916
      %v4047 = vunpack.c.l.b16 %v3917
      %v4048 = vunpack.c.l.b16 %v3918
      %v4049 = vunpack.c.l.b16 %v3919
      %v4050 = vunpack.c.l.b16 %v3920
      %v4051 = vunpack.c.l.b16 %v3921
      %v4052 = vunpack.c.l.b16 %v3922
      %v4053 = vunpack.c.l.b16 %v3923
      %v4054 = vunpack.c.l.b16 %v3924
      %v4055 = vunpack.c.l.b16 %v3925
      %v4056 = vunpack.c.l.b16 %v3926
      %v4057 = vunpack.c.l.b16 %v3927
      %v4058 = vunpack.c.l.b16 %v3928
      %v4059 = vpack.c.b16 %v3995, %v3994
      %v4060 = vpack.c.b16 %v3997, %v3996
      %v4061 = vpack.c.b16 %v3999, %v3998
      %v4062 = vpack.c.b16 %v4001, %v4000
      %v4063 = vpack.c.b16 %v4003, %v4002
      %v4064 = vpack.c.b16 %v4005, %v4004
      %v4065 = vpack.c.b16 %v4007, %v4006
      %v4066 = vpack.c.b16 %v4009, %v4008
      %v4067 = vpack.c.b16 %v4011, %v4010
      %v4068 = vpack.c.b16 %v4013, %v4012
      %v4069 = vpack.c.b16 %v4015, %v4014
      %v4070 = vpack.c.b16 %v4017, %v4016
      %v4071 = vpack.c.b16 %v4019, %v4018
      %v4072 = vpack.c.b16 %v4021, %v4020
      %v4073 = vpack.c.b16 %v4023, %v4022
      %v4074 = vpack.c.b16 %v4025, %v4024
      %v4075 = vpack.c.b16 %v4027, %v4026
      %v4076 = vpack.c.b16 %v4029, %v4028
      %v4077 = vpack.c.b16 %v4031, %v4030
      %v4078 = vpack.c.b16 %v4033, %v4032
      %v4079 = vpack.c.b16 %v4035, %v4034
      %v4080 = vpack.c.b16 %v4037, %v4036
      %v4081 = vpack.c.b16 %v4039, %v4038
      %v4082 = vpack.c.b16 %v4041, %v4040
      %v4083 = vpack.c.b16 %v4043, %v4042
      %v4084 = vpack.c.b16 %v4045, %v4044
      %v4085 = vpack.c.b16 %v4047, %v4046
      %v4086 = vpack.c.b16 %v4049, %v4048
      %v4087 = vpack.c.b16 %v4051, %v4050
      %v4088 = vpack.c.b16 %v4053, %v4052
      %v4089 = vpack.c.b16 %v4055, %v4054
      %v4090 = vpack.c.b16 %v4057, %v4056
      %v4091 = vpack.c.b16 %v4058, %v4058
      %v4092 = vrot.slane %v4059, 1
      %v4093 = vrot.slane %v4060, 1
      %v4094 = vsel %vm1307, %v4092, %v4093
      %v4095 = vrot.slane %v4061, 1
      %v4096 = vsel %vm1307, %v4093, %v4095
      %v4097 = vrot.slane %v4062, 1
      %v4098 = vsel %vm1307, %v4095, %v4097
      %v4099 = vrot.slane %v4063, 1
      %v4100 = vsel %vm1307, %v4097, %v4099
      %v4101 = vrot.slane %v4064, 1
      %v4102 = vsel %vm1307, %v4099, %v4101
      %v4103 = vrot.slane %v4065, 1
      %v4104 = vsel %vm1307, %v4101, %v4103
      %v4105 = vrot.slane %v4066, 1
      %v4106 = vsel %vm1307, %v4103, %v4105
      %v4107 = vrot.slane %v4067, 1
      %v4108 = vsel %vm1307, %v4105, %v4107
      %v4109 = vrot.slane %v4068, 1
      %v4110 = vsel %vm1307, %v4107, %v4109
      %v4111 = vrot.slane %v4069, 1
      %v4112 = vsel %vm1307, %v4109, %v4111
      %v4113 = vrot.slane %v4070, 1
      %v4114 = vsel %vm1307, %v4111, %v4113
      %v4115 = vrot.slane %v4071, 1
      %v4116 = vsel %vm1307, %v4113, %v4115
      %v4117 = vrot.slane %v4072, 1
      %v4118 = vsel %vm1307, %v4115, %v4117
      %v4119 = vrot.slane %v4073, 1
      %v4120 = vsel %vm1307, %v4117, %v4119
      %v4121 = vrot.slane %v4074, 1
      %v4122 = vsel %vm1307, %v4119, %v4121
      %v4123 = vrot.slane %v4075, 1
      %v4124 = vsel %vm1307, %v4121, %v4123
      %v4125 = vrot.slane %v4076, 1
      %v4126 = vsel %vm1307, %v4123, %v4125
      %v4127 = vrot.slane %v4077, 1
      %v4128 = vsel %vm1307, %v4125, %v4127
      %v4129 = vrot.slane %v4078, 1
      %v4130 = vsel %vm1307, %v4127, %v4129
      %v4131 = vrot.slane %v4079, 1
      %v4132 = vsel %vm1307, %v4129, %v4131
      %v4133 = vrot.slane %v4080, 1
      %v4134 = vsel %vm1307, %v4131, %v4133
      %v4135 = vrot.slane %v4081, 1
      %v4136 = vsel %vm1307, %v4133, %v4135
      %v4137 = vrot.slane %v4082, 1
      %v4138 = vsel %vm1307, %v4135, %v4137
      %v4139 = vrot.slane %v4083, 1
      %v4140 = vsel %vm1307, %v4137, %v4139
      %v4141 = vrot.slane %v4084, 1
      %v4142 = vsel %vm1307, %v4139, %v4141
      %v4143 = vrot.slane %v4085, 1
      %v4144 = vsel %vm1307, %v4141, %v4143
      %v4145 = vrot.slane %v4086, 1
      %v4146 = vsel %vm1307, %v4143, %v4145
      %v4147 = vrot.slane %v4087, 1
      %v4148 = vsel %vm1307, %v4145, %v4147
      %v4149 = vrot.slane %v4088, 1
      %v4150 = vsel %vm1307, %v4147, %v4149
      %v4151 = vrot.slane %v4089, 1
      %v4152 = vsel %vm1307, %v4149, %v4151
      %v4153 = vrot.slane %v4090, 1
      %v4154 = vsel %vm1307, %v4151, %v4153
      %v4155 = vrot.slane %v4091, 1
      %v4156 = vsel %vm1307, %v4153, %v4155
      %4189 = vst.msk [vmem:[#allocation2 + $0x8] sm:$0xff] %vm428, %v4094
      %4190 = vst.msk [vmem:[#allocation2 + $0x18] sm:$0xff] %vm428, %v4096
      %4191 = vst.msk [vmem:[#allocation2 + $0x28] sm:$0xff] %vm428, %v4098
      %4192 = vst.msk [vmem:[#allocation2 + $0x38] sm:$0xff] %vm428, %v4100
      %4193 = vst.msk [vmem:[#allocation2 + $0x48] sm:$0xff] %vm428, %v4102
      %4194 = vst.msk [vmem:[#allocation2 + $0x58] sm:$0xff] %vm428, %v4104
      %4195 = vst.msk [vmem:[#allocation2 + $0x68] sm:$0xff] %vm428, %v4106
      %4196 = vst.msk [vmem:[#allocation2 + $0x78] sm:$0xff] %vm428, %v4108
      %4197 = vst.msk [vmem:[#allocation2 + $0x88] sm:$0xff] %vm428, %v4110
      %4198 = vst.msk [vmem:[#allocation2 + $0x98] sm:$0xff] %vm428, %v4112
      %4199 = vst.msk [vmem:[#allocation2 + $0xa8] sm:$0xff] %vm428, %v4114
      %4200 = vst.msk [vmem:[#allocation2 + $0xb8] sm:$0xff] %vm428, %v4116
      %4201 = vst.msk [vmem:[#allocation2 + $0xc8] sm:$0xff] %vm428, %v4118
      %4202 = vst.msk [vmem:[#allocation2 + $0xd8] sm:$0xff] %vm428, %v4120
      %4203 = vst.msk [vmem:[#allocation2 + $0xe8] sm:$0xff] %vm428, %v4122
      %4204 = vst.msk [vmem:[#allocation2 + $0xf8] sm:$0xff] %vm428, %v4124
      %4205 = vst.msk [vmem:[#allocation2 + $0x108] sm:$0xff] %vm428, %v4126
      %4206 = vst.msk [vmem:[#allocation2 + $0x118] sm:$0xff] %vm428, %v4128
      %4207 = vst.msk [vmem:[#allocation2 + $0x128] sm:$0xff] %vm428, %v4130
      %4208 = vst.msk [vmem:[#allocation2 + $0x138] sm:$0xff] %vm428, %v4132
      %4209 = vst.msk [vmem:[#allocation2 + $0x148] sm:$0xff] %vm428, %v4134
      %4210 = vst.msk [vmem:[#allocation2 + $0x158] sm:$0xff] %vm428, %v4136
      %4211 = vst.msk [vmem:[#allocation2 + $0x168] sm:$0xff] %vm428, %v4138
      %4212 = vst.msk [vmem:[#allocation2 + $0x178] sm:$0xff] %vm428, %v4140
      %4213 = vst.msk [vmem:[#allocation2 + $0x188] sm:$0xff] %vm428, %v4142
      %4214 = vst.msk [vmem:[#allocation2 + $0x198] sm:$0xff] %vm428, %v4144
      %4215 = vst.msk [vmem:[#allocation2 + $0x1a8] sm:$0xff] %vm428, %v4146
      %4216 = vst.msk [vmem:[#allocation2 + $0x1b8] sm:$0xff] %vm428, %v4148
      %4217 = vst.msk [vmem:[#allocation2 + $0x1c8] sm:$0xff] %vm428, %v4150
      %4218 = vst.msk [vmem:[#allocation2 + $0x1d8] sm:$0xff] %vm428, %v4152
      %4219 = vst.msk [vmem:[#allocation2 + $0x1e8] sm:$0xff] %vm428, %v4154
      %4220 = vst.msk [vmem:[#allocation2 + $0x1f8] sm:$0xff] %vm428, %v4156
      %v4221 = vld [vmem:[#allocation2] sm:$0xff]
      %v4222 = vld [vmem:[#allocation2 + $0x8] sm:$0xff]
      %v4223 = vld [vmem:[#allocation2 + $0x10] sm:$0xff]
      %v4224 = vld [vmem:[#allocation2 + $0x18] sm:$0xff]
      %v4225 = vld [vmem:[#allocation2 + $0x20] sm:$0xff]
      %v4226 = vld [vmem:[#allocation2 + $0x28] sm:$0xff]
      %v4227 = vld [vmem:[#allocation2 + $0x30] sm:$0xff]
      %v4228 = vld [vmem:[#allocation2 + $0x38] sm:$0xff]
      %v4229 = vld [vmem:[#allocation2 + $0x40] sm:$0xff]
      %v4230 = vld [vmem:[#allocation2 + $0x48] sm:$0xff]
      %v4231 = vld [vmem:[#allocation2 + $0x50] sm:$0xff]
      %v4232 = vld [vmem:[#allocation2 + $0x58] sm:$0xff]
      %v4233 = vld [vmem:[#allocation2 + $0x60] sm:$0xff]
      %v4234 = vld [vmem:[#allocation2 + $0x68] sm:$0xff]
      %v4235 = vld [vmem:[#allocation2 + $0x70] sm:$0xff]
      %v4236 = vld [vmem:[#allocation2 + $0x78] sm:$0xff]
      %v4237 = vld [vmem:[#allocation2 + $0x80] sm:$0xff]
      %v4238 = vld [vmem:[#allocation2 + $0x88] sm:$0xff]
      %v4239 = vld [vmem:[#allocation2 + $0x90] sm:$0xff]
      %v4240 = vld [vmem:[#allocation2 + $0x98] sm:$0xff]
      %v4241 = vld [vmem:[#allocation2 + $0xa0] sm:$0xff]
      %v4242 = vld [vmem:[#allocation2 + $0xa8] sm:$0xff]
      %v4243 = vld [vmem:[#allocation2 + $0xb0] sm:$0xff]
      %v4244 = vld [vmem:[#allocation2 + $0xb8] sm:$0xff]
      %v4245 = vld [vmem:[#allocation2 + $0xc0] sm:$0xff]
      %v4246 = vld [vmem:[#allocation2 + $0xc8] sm:$0xff]
      %v4247 = vld [vmem:[#allocation2 + $0xd0] sm:$0xff]
      %v4248 = vld [vmem:[#allocation2 + $0xd8] sm:$0xff]
      %v4249 = vld [vmem:[#allocation2 + $0xe0] sm:$0xff]
      %v4250 = vld [vmem:[#allocation2 + $0xe8] sm:$0xff]
      %v4251 = vld [vmem:[#allocation2 + $0xf0] sm:$0xff]
      %v4252 = vld [vmem:[#allocation2 + $0xf8] sm:$0xff]
      %v4253 = vld [vmem:[#allocation2 + $0x100] sm:$0xff]
      %v4254 = vld [vmem:[#allocation2 + $0x108] sm:$0xff]
      %v4255 = vld [vmem:[#allocation2 + $0x110] sm:$0xff]
      %v4256 = vld [vmem:[#allocation2 + $0x118] sm:$0xff]
      %v4257 = vld [vmem:[#allocation2 + $0x120] sm:$0xff]
      %v4258 = vld [vmem:[#allocation2 + $0x128] sm:$0xff]
      %v4259 = vld [vmem:[#allocation2 + $0x130] sm:$0xff]
      %v4260 = vld [vmem:[#allocation2 + $0x138] sm:$0xff]
      %v4261 = vld [vmem:[#allocation2 + $0x140] sm:$0xff]
      %v4262 = vld [vmem:[#allocation2 + $0x148] sm:$0xff]
      %v4263 = vld [vmem:[#allocation2 + $0x150] sm:$0xff]
      %v4264 = vld [vmem:[#allocation2 + $0x158] sm:$0xff]
      %v4265 = vld [vmem:[#allocation2 + $0x160] sm:$0xff]
      %v4266 = vld [vmem:[#allocation2 + $0x168] sm:$0xff]
      %v4267 = vld [vmem:[#allocation2 + $0x170] sm:$0xff]
      %v4268 = vld [vmem:[#allocation2 + $0x178] sm:$0xff]
      %v4269 = vld [vmem:[#allocation2 + $0x180] sm:$0xff]
      %v4270 = vld [vmem:[#allocation2 + $0x188] sm:$0xff]
      %v4271 = vld [vmem:[#allocation2 + $0x190] sm:$0xff]
      %v4272 = vld [vmem:[#allocation2 + $0x198] sm:$0xff]
      %v4273 = vld [vmem:[#allocation2 + $0x1a0] sm:$0xff]
      %v4274 = vld [vmem:[#allocation2 + $0x1a8] sm:$0xff]
      %v4275 = vld [vmem:[#allocation2 + $0x1b0] sm:$0xff]
      %v4276 = vld [vmem:[#allocation2 + $0x1b8] sm:$0xff]
      %v4277 = vld [vmem:[#allocation2 + $0x1c0] sm:$0xff]
      %v4278 = vld [vmem:[#allocation2 + $0x1c8] sm:$0xff]
      %v4279 = vld [vmem:[#allocation2 + $0x1d0] sm:$0xff]
      %v4280 = vld [vmem:[#allocation2 + $0x1d8] sm:$0xff]
      %v4281 = vld [vmem:[#allocation2 + $0x1e0] sm:$0xff]
      %v4282 = vld [vmem:[#allocation2 + $0x1e8] sm:$0xff]
      %v4283 = vld [vmem:[#allocation2 + $0x1f0] sm:$0xff]
      %v4284 = vld [vmem:[#allocation2 + $0x1f8] sm:$0xff]
      %v4285 = vld [vmem:[%s1] sm:$0xf]
      %v4286 = vld [vmem:[%s1 + $0x4] sm:$0xf]
      %v4287 = vld [vmem:[%s1 + $0x8] sm:$0xf]
      %v4288 = vld [vmem:[%s1 + $0xc] sm:$0xf]
      %v4289 = vld [vmem:[%s1 + $0x10] sm:$0xf]
      %v4290 = vld [vmem:[%s1 + $0x14] sm:$0xf]
      %v4291 = vld [vmem:[%s1 + $0x18] sm:$0xf]
      %v4292 = vld [vmem:[%s1 + $0x1c] sm:$0xf]
      %v4293 = vld [vmem:[%s1 + $0x20] sm:$0xf]
      %v4294 = vld [vmem:[%s1 + $0x24] sm:$0xf]
      %v4295 = vld [vmem:[%s1 + $0x28] sm:$0xf]
      %v4296 = vld [vmem:[%s1 + $0x2c] sm:$0xf]
      %v4297 = vld [vmem:[%s1 + $0x30] sm:$0xf]
      %v4298 = vld [vmem:[%s1 + $0x34] sm:$0xf]
      %v4299 = vld [vmem:[%s1 + $0x38] sm:$0xf]
      %v4300 = vld [vmem:[%s1 + $0x3c] sm:$0xf]
      %v4301 = vld [vmem:[%s1 + $0x40] sm:$0xf]
      %v4302 = vld [vmem:[%s1 + $0x44] sm:$0xf]
      %v4303 = vld [vmem:[%s2] sm:$0x1]
      %v4305 = vlaneseq
      %v4306 = vshrl.u32 %v4305, 7
      %v4307 = vsub.s32 0, %v4306
      %v4308 = vrot.slane %v4303, %v4307
      %v4328 = vunpack.c.l.b16 %v4285
      %v4329 = vunpack.c.l.b16 %v4286
      %v4330 = vunpack.c.l.b16 %v4287
      %v4331 = vunpack.c.l.b16 %v4288
      %v4332 = vunpack.c.l.b16 %v4289
      %v4333 = vunpack.c.l.b16 %v4290
      %v4334 = vunpack.c.l.b16 %v4291
      %v4335 = vunpack.c.l.b16 %v4292
      %v4336 = vunpack.c.l.b16 %v4293
      %v4337 = vunpack.c.l.b16 %v4294
      %v4338 = vunpack.c.l.b16 %v4295
      %v4339 = vunpack.c.l.b16 %v4296
      %v4340 = vunpack.c.l.b16 %v4297
      %v4341 = vunpack.c.l.b16 %v4298
      %v4342 = vunpack.c.l.b16 %v4299
      %v4343 = vunpack.c.l.b16 %v4300
      %v4344 = vunpack.c.l.b16 %v4301
      %v4345 = vunpack.c.l.b16 %v4302
      %v4346 = vpack.c.b16 %v4329, %v4328
      %v4347 = vpack.c.b16 %v4331, %v4330
      %v4348 = vpack.c.b16 %v4333, %v4332
      %v4349 = vpack.c.b16 %v4335, %v4334
      %v4350 = vpack.c.b16 %v4337, %v4336
      %v4351 = vpack.c.b16 %v4339, %v4338
      %v4352 = vpack.c.b16 %v4341, %v4340
      %v4353 = vpack.c.b16 %v4343, %v4342
      %v4354 = vpack.c.b16 %v4345, %v4344
      %v4365 = vsel %vm428, %v4222, 0
      %v4368 = vsel %vm428, %v4224, 0
      %v4371 = vsel %vm428, %v4226, 0
      %v4374 = vsel %vm428, %v4228, 0
      %v4377 = vsel %vm428, %v4230, 0
      %v4380 = vsel %vm428, %v4232, 0
      %v4383 = vsel %vm428, %v4234, 0
      %v4386 = vsel %vm428, %v4236, 0
      %v4389 = vsel %vm428, %v4238, 0
      %v4392 = vsel %vm428, %v4240, 0
      %v4395 = vsel %vm428, %v4242, 0
      %v4398 = vsel %vm428, %v4244, 0
      %v4401 = vsel %vm428, %v4246, 0
      %v4404 = vsel %vm428, %v4248, 0
      %v4407 = vsel %vm428, %v4250, 0
      %v4410 = vsel %vm428, %v4252, 0
      %v4413 = vsel %vm428, %v4254, 0
      %v4416 = vsel %vm428, %v4256, 0
      %v4419 = vsel %vm428, %v4258, 0
      %v4422 = vsel %vm428, %v4260, 0
      %v4425 = vsel %vm428, %v4262, 0
      %v4428 = vsel %vm428, %v4264, 0
      %v4431 = vsel %vm428, %v4266, 0
      %v4434 = vsel %vm428, %v4268, 0
      %v4437 = vsel %vm428, %v4270, 0
      %v4440 = vsel %vm428, %v4272, 0
      %v4443 = vsel %vm428, %v4274, 0
      %v4446 = vsel %vm428, %v4276, 0
      %v4449 = vsel %vm428, %v4278, 0
      %v4452 = vsel %vm428, %v4280, 0
      %v4455 = vsel %vm428, %v4282, 0
      %v4458 = vsel %vm428, %v4284, 0
      %4460 = vmatprep.subr.bf16.mxu0 0
      %4461 = vmatpush1.bf16.msra.mxu0 %v4346
      %4462 = vmatprep.subr.bf16.mxu0 0
      %4463 = vmatpush1.bf16.msra.mxu0 %v4347
      %4464 = vmatprep.subr.bf16.mxu0 0
      %4465 = vmatpush1.bf16.msra.mxu0 %v4348
      %4466 = vmatprep.subr.bf16.mxu0 0
      %4467 = vmatpush1.bf16.msra.mxu0 %v4349
      %4468 = vmatprep.subr.bf16.mxu0 0
      %4469 = vmatpush1.bf16.msra.mxu0 %v4350
      %4470 = vmatprep.subr.bf16.mxu0 0
      %4471 = vmatpush1.bf16.msra.mxu0 %v4351
      %4472 = vmatprep.subr.bf16.mxu0 0
      %4473 = vmatpush1.bf16.msra.mxu0 %v4352
      %4474 = vmatprep.subr.bf16.mxu0 0
      %4475 = vmatpush1.bf16.msra.mxu0 %v4353
      %4476 = vmatprep.subr.bf16.mxu0 0
      %4477 = vmatpush1.bf16.msra.mxu0 %v4354
      %4478 = vmatprep.subr.bf16.mxu0 0
      %4479 = vmatpush1.bf16.msra.mxu0 0
      %4480 = vmatprep.subr.bf16.mxu0 0
      %4481 = vmatpush1.bf16.msra.mxu0 0
      %4482 = vmatprep.subr.bf16.mxu0 0
      %4483 = vmatpush1.bf16.msra.mxu0 0
      %4484 = vmatprep.subr.bf16.mxu0 0
      %4485 = vmatpush1.bf16.msra.mxu0 0
      %4486 = vmatprep.subr.bf16.mxu0 0
      %4487 = vmatpush1.bf16.msra.mxu0 0
      %4488 = vmatprep.subr.bf16.mxu0 0
      %4489 = vmatpush1.bf16.msra.mxu0 0
      %4490 = vmatprep.subr.bf16.mxu0 0
      %4491 = vmatpush1.bf16.msra.mxu0 0
      %4492 = vmatprep.mubr.bf16.mxu0 %v4365
      %4493 = vmatmul.mubr.bf16.gmra.mrb[0].mxu0 %v4221
      %v4494 = vpop.f32.mrb[0].mxu0
      %v4495 = vadd.f32 %v4308, %v4494
      %v4496 = vpop.f32.mrb[0].mxu0
      %v4497 = vpop.f32.mrb[0].mxu0
      %v4498 = vadd.f32 %v4308, %v4497
      %v4499 = vpop.f32.mrb[0].mxu0
      %4500 = vmatprep.mubr.bf16.mxu0 %v4368
      %4501 = vmatmul.mubr.bf16.gmra.mrb[0].mxu0 %v4223
      %v4502 = vpop.f32.mrb[0].mxu0
      %v4503 = vadd.f32 %v4308, %v4502
      %v4504 = vpop.f32.mrb[0].mxu0
      %v4505 = vpop.f32.mrb[0].mxu0
      %v4506 = vadd.f32 %v4308, %v4505
      %v4507 = vpop.f32.mrb[0].mxu0
      %4508 = vmatprep.mubr.bf16.mxu0 %v4371
      %4509 = vmatmul.mubr.bf16.gmra.mrb[0].mxu0 %v4225
      %v4510 = vpop.f32.mrb[0].mxu0
      %v4511 = vadd.f32 %v4308, %v4510
      %v4512 = vpop.f32.mrb[0].mxu0
      %v4513 = vpop.f32.mrb[0].mxu0
      %v4514 = vadd.f32 %v4308, %v4513
      %v4515 = vpop.f32.mrb[0].mxu0
      %4516 = vmatprep.mubr.bf16.mxu0 %v4374
      %4517 = vmatmul.mubr.bf16.gmra.mrb[0].mxu0 %v4227
      %v4518 = vpop.f32.mrb[0].mxu0
      %v4519 = vadd.f32 %v4308, %v4518
      %v4520 = vpop.f32.mrb[0].mxu0
      %v4521 = vpop.f32.mrb[0].mxu0
      %v4522 = vadd.f32 %v4308, %v4521
      %v4523 = vpop.f32.mrb[0].mxu0
      %4524 = vmatprep.mubr.bf16.mxu0 %v4377
      %4525 = vmatmul.mubr.bf16.gmra.mrb[0].mxu0 %v4229
      %v4526 = vpop.f32.mrb[0].mxu0
      %v4527 = vadd.f32 %v4308, %v4526
      %v4528 = vpop.f32.mrb[0].mxu0
      %v4529 = vpop.f32.mrb[0].mxu0
      %v4530 = vadd.f32 %v4308, %v4529
      %v4531 = vpop.f32.mrb[0].mxu0
      %4532 = vmatprep.mubr.bf16.mxu0 %v4380
      %4533 = vmatmul.mubr.bf16.gmra.mrb[0].mxu0 %v4231
      %v4534 = vpop.f32.mrb[0].mxu0
      %v4535 = vadd.f32 %v4308, %v4534
      %v4536 = vpop.f32.mrb[0].mxu0
      %v4537 = vpop.f32.mrb[0].mxu0
      %v4538 = vadd.f32 %v4308, %v4537
      %v4539 = vpop.f32.mrb[0].mxu0
      %4540 = vmatprep.mubr.bf16.mxu0 %v4383
      %4541 = vmatmul.mubr.bf16.gmra.mrb[0].mxu0 %v4233
      %v4542 = vpop.f32.mrb[0].mxu0
      %v4543 = vadd.f32 %v4308, %v4542
      %v4544 = vpop.f32.mrb[0].mxu0
      %v4545 = vpop.f32.mrb[0].mxu0
      %v4546 = vadd.f32 %v4308, %v4545
      %v4547 = vpop.f32.mrb[0].mxu0
      %4548 = vmatprep.mubr.bf16.mxu0 %v4386
      %4549 = vmatmul.mubr.bf16.gmra.mrb[0].mxu0 %v4235
      %v4550 = vpop.f32.mrb[0].mxu0
      %v4551 = vadd.f32 %v4308, %v4550
      %v4552 = vpop.f32.mrb[0].mxu0
      %v4553 = vpop.f32.mrb[0].mxu0
      %v4554 = vadd.f32 %v4308, %v4553
      %v4555 = vpop.f32.mrb[0].mxu0
      %4556 = vmatprep.mubr.bf16.mxu0 %v4389
      %4557 = vmatmul.mubr.bf16.gmra.mrb[0].mxu0 %v4237
      %v4558 = vpop.f32.mrb[0].mxu0
      %v4559 = vadd.f32 %v4308, %v4558
      %v4560 = vpop.f32.mrb[0].mxu0
      %v4561 = vpop.f32.mrb[0].mxu0
      %v4562 = vadd.f32 %v4308, %v4561
      %v4563 = vpop.f32.mrb[0].mxu0
      %4564 = vmatprep.mubr.bf16.mxu0 %v4392
      %4565 = vmatmul.mubr.bf16.gmra.mrb[0].mxu0 %v4239
      %v4566 = vpop.f32.mrb[0].mxu0
      %v4567 = vadd.f32 %v4308, %v4566
      %v4568 = vpop.f32.mrb[0].mxu0
      %v4569 = vpop.f32.mrb[0].mxu0
      %v4570 = vadd.f32 %v4308, %v4569
      %v4571 = vpop.f32.mrb[0].mxu0
      %4572 = vmatprep.mubr.bf16.mxu0 %v4395
      %4573 = vmatmul.mubr.bf16.gmra.mrb[0].mxu0 %v4241
      %v4574 = vpop.f32.mrb[0].mxu0
      %v4575 = vadd.f32 %v4308, %v4574
      %v4576 = vpop.f32.mrb[0].mxu0
      %v4577 = vpop.f32.mrb[0].mxu0
      %v4578 = vadd.f32 %v4308, %v4577
      %v4579 = vpop.f32.mrb[0].mxu0
      %4580 = vmatprep.mubr.bf16.mxu0 %v4398
      %4581 = vmatmul.mubr.bf16.gmra.mrb[0].mxu0 %v4243
      %v4582 = vpop.f32.mrb[0].mxu0
      %v4583 = vadd.f32 %v4308, %v4582
      %v4584 = vpop.f32.mrb[0].mxu0
      %v4585 = vpop.f32.mrb[0].mxu0
      %v4586 = vadd.f32 %v4308, %v4585
      %v4587 = vpop.f32.mrb[0].mxu0
      %4588 = vmatprep.mubr.bf16.mxu0 %v4401
      %4589 = vmatmul.mubr.bf16.gmra.mrb[0].mxu0 %v4245
      %v4590 = vpop.f32.mrb[0].mxu0
      %v4591 = vadd.f32 %v4308, %v4590
      %v4592 = vpop.f32.mrb[0].mxu0
      %v4593 = vpop.f32.mrb[0].mxu0
      %v4594 = vadd.f32 %v4308, %v4593
      %v4595 = vpop.f32.mrb[0].mxu0
      %4596 = vmatprep.mubr.bf16.mxu0 %v4404
      %4597 = vmatmul.mubr.bf16.gmra.mrb[0].mxu0 %v4247
      %v4598 = vpop.f32.mrb[0].mxu0
      %v4599 = vadd.f32 %v4308, %v4598
      %v4600 = vpop.f32.mrb[0].mxu0
      %v4601 = vpop.f32.mrb[0].mxu0
      %v4602 = vadd.f32 %v4308, %v4601
      %v4603 = vpop.f32.mrb[0].mxu0
      %4604 = vmatprep.mubr.bf16.mxu0 %v4407
      %4605 = vmatmul.mubr.bf16.gmra.mrb[0].mxu0 %v4249
      %v4606 = vpop.f32.mrb[0].mxu0
      %v4607 = vadd.f32 %v4308, %v4606
      %v4608 = vpop.f32.mrb[0].mxu0
      %v4609 = vpop.f32.mrb[0].mxu0
      %v4610 = vadd.f32 %v4308, %v4609
      %v4611 = vpop.f32.mrb[0].mxu0
      %4612 = vmatprep.mubr.bf16.mxu0 %v4410
      %4613 = vmatmul.mubr.bf16.gmra.mrb[0].mxu0 %v4251
      %v4614 = vpop.f32.mrb[0].mxu0
      %v4615 = vadd.f32 %v4308, %v4614
      %v4616 = vpop.f32.mrb[0].mxu0
      %v4617 = vpop.f32.mrb[0].mxu0
      %v4618 = vadd.f32 %v4308, %v4617
      %v4619 = vpop.f32.mrb[0].mxu0
      %4620 = vmatprep.mubr.bf16.mxu0 %v4413
      %4621 = vmatmul.mubr.bf16.gmra.mrb[0].mxu0 %v4253
      %v4622 = vpop.f32.mrb[0].mxu0
      %v4623 = vadd.f32 %v4308, %v4622
      %v4624 = vpop.f32.mrb[0].mxu0
      %v4625 = vpop.f32.mrb[0].mxu0
      %v4626 = vadd.f32 %v4308, %v4625
      %v4627 = vpop.f32.mrb[0].mxu0
      %4628 = vmatprep.mubr.bf16.mxu0 %v4416
      %4629 = vmatmul.mubr.bf16.gmra.mrb[0].mxu0 %v4255
      %v4630 = vpop.f32.mrb[0].mxu0
      %v4631 = vadd.f32 %v4308, %v4630
      %v4632 = vpop.f32.mrb[0].mxu0
      %v4633 = vpop.f32.mrb[0].mxu0
      %v4634 = vadd.f32 %v4308, %v4633
      %v4635 = vpop.f32.mrb[0].mxu0
      %4636 = vmatprep.mubr.bf16.mxu0 %v4419
      %4637 = vmatmul.mubr.bf16.gmra.mrb[0].mxu0 %v4257
      %v4638 = vpop.f32.mrb[0].mxu0
      %v4639 = vadd.f32 %v4308, %v4638
      %v4640 = vpop.f32.mrb[0].mxu0
      %v4641 = vpop.f32.mrb[0].mxu0
      %v4642 = vadd.f32 %v4308, %v4641
      %v4643 = vpop.f32.mrb[0].mxu0
      %4644 = vmatprep.mubr.bf16.mxu0 %v4422
      %4645 = vmatmul.mubr.bf16.gmra.mrb[0].mxu0 %v4259
      %v4646 = vpop.f32.mrb[0].mxu0
      %v4647 = vadd.f32 %v4308, %v4646
      %v4648 = vpop.f32.mrb[0].mxu0
      %v4649 = vpop.f32.mrb[0].mxu0
      %v4650 = vadd.f32 %v4308, %v4649
      %v4651 = vpop.f32.mrb[0].mxu0
      %4652 = vmatprep.mubr.bf16.mxu0 %v4425
      %4653 = vmatmul.mubr.bf16.gmra.mrb[0].mxu0 %v4261
      %v4654 = vpop.f32.mrb[0].mxu0
      %v4655 = vadd.f32 %v4308, %v4654
      %v4656 = vpop.f32.mrb[0].mxu0
      %v4657 = vpop.f32.mrb[0].mxu0
      %v4658 = vadd.f32 %v4308, %v4657
      %v4659 = vpop.f32.mrb[0].mxu0
      %4660 = vmatprep.mubr.bf16.mxu0 %v4428
      %4661 = vmatmul.mubr.bf16.gmra.mrb[0].mxu0 %v4263
      %v4662 = vpop.f32.mrb[0].mxu0
      %v4663 = vadd.f32 %v4308, %v4662
      %v4664 = vpop.f32.mrb[0].mxu0
      %v4665 = vpop.f32.mrb[0].mxu0
      %v4666 = vadd.f32 %v4308, %v4665
      %v4667 = vpop.f32.mrb[0].mxu0
      %4668 = vmatprep.mubr.bf16.mxu0 %v4431
      %4669 = vmatmul.mubr.bf16.gmra.mrb[0].mxu0 %v4265
      %v4670 = vpop.f32.mrb[0].mxu0
      %v4671 = vadd.f32 %v4308, %v4670
      %v4672 = vpop.f32.mrb[0].mxu0
      %v4673 = vpop.f32.mrb[0].mxu0
      %v4674 = vadd.f32 %v4308, %v4673
      %v4675 = vpop.f32.mrb[0].mxu0
      %4676 = vmatprep.mubr.bf16.mxu0 %v4434
      %4677 = vmatmul.mubr.bf16.gmra.mrb[0].mxu0 %v4267
      %v4678 = vpop.f32.mrb[0].mxu0
      %v4679 = vadd.f32 %v4308, %v4678
      %v4680 = vpop.f32.mrb[0].mxu0
      %v4681 = vpop.f32.mrb[0].mxu0
      %v4682 = vadd.f32 %v4308, %v4681
      %v4683 = vpop.f32.mrb[0].mxu0
      %4684 = vmatprep.mubr.bf16.mxu0 %v4437
      %4685 = vmatmul.mubr.bf16.gmra.mrb[0].mxu0 %v4269
      %v4686 = vpop.f32.mrb[0].mxu0
      %v4687 = vadd.f32 %v4308, %v4686
      %v4688 = vpop.f32.mrb[0].mxu0
      %v4689 = vpop.f32.mrb[0].mxu0
      %v4690 = vadd.f32 %v4308, %v4689
      %v4691 = vpop.f32.mrb[0].mxu0
      %4692 = vmatprep.mubr.bf16.mxu0 %v4440
      %4693 = vmatmul.mubr.bf16.gmra.mrb[0].mxu0 %v4271
      %v4694 = vpop.f32.mrb[0].mxu0
      %v4695 = vadd.f32 %v4308, %v4694
      %v4696 = vpop.f32.mrb[0].mxu0
      %v4697 = vpop.f32.mrb[0].mxu0
      %v4698 = vadd.f32 %v4308, %v4697
      %v4699 = vpop.f32.mrb[0].mxu0
      %4700 = vmatprep.mubr.bf16.mxu0 %v4443
      %4701 = vmatmul.mubr.bf16.gmra.mrb[0].mxu0 %v4273
      %v4702 = vpop.f32.mrb[0].mxu0
      %v4703 = vadd.f32 %v4308, %v4702
      %v4704 = vpop.f32.mrb[0].mxu0
      %v4705 = vpop.f32.mrb[0].mxu0
      %v4706 = vadd.f32 %v4308, %v4705
      %v4707 = vpop.f32.mrb[0].mxu0
      %4708 = vmatprep.mubr.bf16.mxu0 %v4446
      %4709 = vmatmul.mubr.bf16.gmra.mrb[0].mxu0 %v4275
      %v4710 = vpop.f32.mrb[0].mxu0
      %v4711 = vadd.f32 %v4308, %v4710
      %v4712 = vpop.f32.mrb[0].mxu0
      %v4713 = vpop.f32.mrb[0].mxu0
      %v4714 = vadd.f32 %v4308, %v4713
      %v4715 = vpop.f32.mrb[0].mxu0
      %4716 = vmatprep.mubr.bf16.mxu0 %v4449
      %4717 = vmatmul.mubr.bf16.gmra.mrb[0].mxu0 %v4277
      %v4718 = vpop.f32.mrb[0].mxu0
      %v4719 = vadd.f32 %v4308, %v4718
      %v4720 = vpop.f32.mrb[0].mxu0
      %v4721 = vpop.f32.mrb[0].mxu0
      %v4722 = vadd.f32 %v4308, %v4721
      %v4723 = vpop.f32.mrb[0].mxu0
      %4724 = vmatprep.mubr.bf16.mxu0 %v4452
      %4725 = vmatmul.mubr.bf16.gmra.mrb[0].mxu0 %v4279
      %v4726 = vpop.f32.mrb[0].mxu0
      %v4727 = vadd.f32 %v4308, %v4726
      %v4728 = vpop.f32.mrb[0].mxu0
      %v4729 = vpop.f32.mrb[0].mxu0
      %v4730 = vadd.f32 %v4308, %v4729
      %v4731 = vpop.f32.mrb[0].mxu0
      %4732 = vmatprep.mubr.bf16.mxu0 %v4455
      %4733 = vmatmul.mubr.bf16.gmra.mrb[0].mxu0 %v4281
      %v4734 = vpop.f32.mrb[0].mxu0
      %v4735 = vadd.f32 %v4308, %v4734
      %v4736 = vpop.f32.mrb[0].mxu0
      %v4737 = vpop.f32.mrb[0].mxu0
      %v4738 = vadd.f32 %v4308, %v4737
      %v4739 = vpop.f32.mrb[0].mxu0
      %4740 = vmatprep.mubr.bf16.mxu0 %v4458
      %4741 = vmatmul.mubr.bf16.gmra.mrb[0].mxu0 %v4283
      %v4742 = vpop.f32.mrb[0].mxu0
      %v4743 = vadd.f32 %v4308, %v4742
      %v4744 = vpop.f32.mrb[0].mxu0
      %v4745 = vpop.f32.mrb[0].mxu0
      %v4746 = vadd.f32 %v4308, %v4745
      %v4747 = vpop.f32.mrb[0].mxu0
      %4748 = vdwg.mxu0
      %v4749 = vmax.f32 %v4495, 0.0
      %v4750 = vmax.f32 %v4498, 0.0
      %v4751 = vmax.f32 %v4503, 0.0
      %v4752 = vmax.f32 %v4506, 0.0
      %v4753 = vmax.f32 %v4511, 0.0
      %v4754 = vmax.f32 %v4514, 0.0
      %v4755 = vmax.f32 %v4519, 0.0
      %v4756 = vmax.f32 %v4522, 0.0
      %v4757 = vmax.f32 %v4527, 0.0
      %v4758 = vmax.f32 %v4530, 0.0
      %v4759 = vmax.f32 %v4535, 0.0
      %v4760 = vmax.f32 %v4538, 0.0
      %v4761 = vmax.f32 %v4543, 0.0
      %v4762 = vmax.f32 %v4546, 0.0
      %v4763 = vmax.f32 %v4551, 0.0
      %v4764 = vmax.f32 %v4554, 0.0
      %v4765 = vmax.f32 %v4559, 0.0
      %v4766 = vmax.f32 %v4562, 0.0
      %v4767 = vmax.f32 %v4567, 0.0
      %v4768 = vmax.f32 %v4570, 0.0
      %v4769 = vmax.f32 %v4575, 0.0
      %v4770 = vmax.f32 %v4578, 0.0
      %v4771 = vmax.f32 %v4583, 0.0
      %v4772 = vmax.f32 %v4586, 0.0
      %v4773 = vmax.f32 %v4591, 0.0
      %v4774 = vmax.f32 %v4594, 0.0
      %v4775 = vmax.f32 %v4599, 0.0
      %v4776 = vmax.f32 %v4602, 0.0
      %v4777 = vmax.f32 %v4607, 0.0
      %v4778 = vmax.f32 %v4610, 0.0
      %v4779 = vmax.f32 %v4615, 0.0
      %v4780 = vmax.f32 %v4618, 0.0
      %v4781 = vmax.f32 %v4623, 0.0
      %v4782 = vmax.f32 %v4626, 0.0
      %v4783 = vmax.f32 %v4631, 0.0
      %v4784 = vmax.f32 %v4634, 0.0
      %v4785 = vmax.f32 %v4639, 0.0
      %v4786 = vmax.f32 %v4642, 0.0
      %v4787 = vmax.f32 %v4647, 0.0
      %v4788 = vmax.f32 %v4650, 0.0
      %v4789 = vmax.f32 %v4655, 0.0
      %v4790 = vmax.f32 %v4658, 0.0
      %v4791 = vmax.f32 %v4663, 0.0
      %v4792 = vmax.f32 %v4666, 0.0
      %v4793 = vmax.f32 %v4671, 0.0
      %v4794 = vmax.f32 %v4674, 0.0
      %v4795 = vmax.f32 %v4679, 0.0
      %v4796 = vmax.f32 %v4682, 0.0
      %v4797 = vmax.f32 %v4687, 0.0
      %v4798 = vmax.f32 %v4690, 0.0
      %v4799 = vmax.f32 %v4695, 0.0
      %v4800 = vmax.f32 %v4698, 0.0
      %v4801 = vmax.f32 %v4703, 0.0
      %v4802 = vmax.f32 %v4706, 0.0
      %v4803 = vmax.f32 %v4711, 0.0
      %v4804 = vmax.f32 %v4714, 0.0
      %v4805 = vmax.f32 %v4719, 0.0
      %v4806 = vmax.f32 %v4722, 0.0
      %v4807 = vmax.f32 %v4727, 0.0
      %v4808 = vmax.f32 %v4730, 0.0
      %v4809 = vmax.f32 %v4735, 0.0
      %v4810 = vmax.f32 %v4738, 0.0
      %v4811 = vmax.f32 %v4743, 0.0
      %v4812 = vmax.f32 %v4746, 0.0
      %v4813 = vpack.c.bf16 %v4750, %v4749
      %v4814 = vpack.c.bf16 %v4752, %v4751
      %v4815 = vpack.c.bf16 %v4754, %v4753
      %v4816 = vpack.c.bf16 %v4756, %v4755
      %v4817 = vpack.c.bf16 %v4758, %v4757
      %v4818 = vpack.c.bf16 %v4760, %v4759
      %v4819 = vpack.c.bf16 %v4762, %v4761
      %v4820 = vpack.c.bf16 %v4764, %v4763
      %v4821 = vpack.c.bf16 %v4766, %v4765
      %v4822 = vpack.c.bf16 %v4768, %v4767
      %v4823 = vpack.c.bf16 %v4770, %v4769
      %v4824 = vpack.c.bf16 %v4772, %v4771
      %v4825 = vpack.c.bf16 %v4774, %v4773
      %v4826 = vpack.c.bf16 %v4776, %v4775
      %v4827 = vpack.c.bf16 %v4778, %v4777
      %v4828 = vpack.c.bf16 %v4780, %v4779
      %v4829 = vpack.c.bf16 %v4782, %v4781
      %v4830 = vpack.c.bf16 %v4784, %v4783
      %v4831 = vpack.c.bf16 %v4786, %v4785
      %v4832 = vpack.c.bf16 %v4788, %v4787
      %v4833 = vpack.c.bf16 %v4790, %v4789
      %v4834 = vpack.c.bf16 %v4792, %v4791
      %v4835 = vpack.c.bf16 %v4794, %v4793
      %v4836 = vpack.c.bf16 %v4796, %v4795
      %v4837 = vpack.c.bf16 %v4798, %v4797
      %v4838 = vpack.c.bf16 %v4800, %v4799
      %v4839 = vpack.c.bf16 %v4802, %v4801
      %v4840 = vpack.c.bf16 %v4804, %v4803
      %v4841 = vpack.c.bf16 %v4806, %v4805
      %v4842 = vpack.c.bf16 %v4808, %v4807
      %v4843 = vpack.c.bf16 %v4810, %v4809
      %v4844 = vpack.c.bf16 %v4812, %v4811
      %v4877 = vunpack.c.l.b16 %v4813
      %v4878 = vunpack.c.h.b16 %v4813
      %v4879 = vunpack.c.l.b16 %v4814
      %v4880 = vunpack.c.h.b16 %v4814
      %v4881 = vunpack.c.l.b16 %v4815
      %v4882 = vunpack.c.h.b16 %v4815
      %v4883 = vunpack.c.l.b16 %v4816
      %v4884 = vunpack.c.h.b16 %v4816
      %v4885 = vunpack.c.l.b16 %v4817
      %v4886 = vunpack.c.h.b16 %v4817
      %v4887 = vunpack.c.l.b16 %v4818
      %v4888 = vunpack.c.h.b16 %v4818
      %v4889 = vunpack.c.l.b16 %v4819
      %v4890 = vunpack.c.h.b16 %v4819
      %v4891 = vunpack.c.l.b16 %v4820
      %v4892 = vunpack.c.h.b16 %v4820
      %v4893 = vunpack.c.l.b16 %v4821
      %v4894 = vunpack.c.h.b16 %v4821
      %v4895 = vunpack.c.l.b16 %v4822
      %v4896 = vunpack.c.h.b16 %v4822
      %v4897 = vunpack.c.l.b16 %v4823
      %v4898 = vunpack.c.h.b16 %v4823
      %v4899 = vunpack.c.l.b16 %v4824
      %v4900 = vunpack.c.h.b16 %v4824
      %v4901 = vunpack.c.l.b16 %v4825
      %v4902 = vunpack.c.h.b16 %v4825
      %v4903 = vunpack.c.l.b16 %v4826
      %v4904 = vunpack.c.h.b16 %v4826
      %v4905 = vunpack.c.l.b16 %v4827
      %v4906 = vunpack.c.h.b16 %v4827
      %v4907 = vunpack.c.l.b16 %v4828
      %v4908 = vunpack.c.h.b16 %v4828
      %v4909 = vunpack.c.l.b16 %v4829
      %v4910 = vunpack.c.h.b16 %v4829
      %v4911 = vunpack.c.l.b16 %v4830
      %v4912 = vunpack.c.h.b16 %v4830
      %v4913 = vunpack.c.l.b16 %v4831
      %v4914 = vunpack.c.h.b16 %v4831
      %v4915 = vunpack.c.l.b16 %v4832
      %v4916 = vunpack.c.h.b16 %v4832
      %v4917 = vunpack.c.l.b16 %v4833
      %v4918 = vunpack.c.h.b16 %v4833
      %v4919 = vunpack.c.l.b16 %v4834
      %v4920 = vunpack.c.h.b16 %v4834
      %v4921 = vunpack.c.l.b16 %v4835
      %v4922 = vunpack.c.h.b16 %v4835
      %v4923 = vunpack.c.l.b16 %v4836
      %v4924 = vunpack.c.h.b16 %v4836
      %v4925 = vunpack.c.l.b16 %v4837
      %v4926 = vunpack.c.h.b16 %v4837
      %v4927 = vunpack.c.l.b16 %v4838
      %v4928 = vunpack.c.h.b16 %v4838
      %v4929 = vunpack.c.l.b16 %v4839
      %v4930 = vunpack.c.h.b16 %v4839
      %v4931 = vunpack.c.l.b16 %v4840
      %v4932 = vunpack.c.h.b16 %v4840
      %v4933 = vunpack.c.l.b16 %v4841
      %v4934 = vunpack.c.h.b16 %v4841
      %v4935 = vunpack.c.l.b16 %v4842
      %v4936 = vunpack.c.h.b16 %v4842
      %v4937 = vunpack.c.l.b16 %v4843
      %v4938 = vunpack.c.h.b16 %v4843
      %v4939 = vunpack.c.l.b16 %v4844
      %v4940 = vunpack.c.h.b16 %v4844
      %v4941 = vpack.c.b16 %v4877, %v4877
      %v4942 = vpack.c.b16 %v4878, %v4878
      %v4943 = vpack.c.b16 %v4879, %v4879
      %v4944 = vpack.c.b16 %v4880, %v4880
      %v4945 = vpack.c.b16 %v4881, %v4881
      %v4946 = vpack.c.b16 %v4882, %v4882
      %v4947 = vpack.c.b16 %v4883, %v4883
      %v4948 = vpack.c.b16 %v4884, %v4884
      %v4949 = vpack.c.b16 %v4885, %v4885
      %v4950 = vpack.c.b16 %v4886, %v4886
      %v4951 = vpack.c.b16 %v4887, %v4887
      %v4952 = vpack.c.b16 %v4888, %v4888
      %v4953 = vpack.c.b16 %v4889, %v4889
      %v4954 = vpack.c.b16 %v4890, %v4890
      %v4955 = vpack.c.b16 %v4891, %v4891
      %v4956 = vpack.c.b16 %v4892, %v4892
      %v4957 = vpack.c.b16 %v4893, %v4893
      %v4958 = vpack.c.b16 %v4894, %v4894
      %v4959 = vpack.c.b16 %v4895, %v4895
      %v4960 = vpack.c.b16 %v4896, %v4896
      %v4961 = vpack.c.b16 %v4897, %v4897
      %v4962 = vpack.c.b16 %v4898, %v4898
      %v4963 = vpack.c.b16 %v4899, %v4899
      %v4964 = vpack.c.b16 %v4900, %v4900
      %v4965 = vpack.c.b16 %v4901, %v4901
      %v4966 = vpack.c.b16 %v4902, %v4902
      %v4967 = vpack.c.b16 %v4903, %v4903
      %v4968 = vpack.c.b16 %v4904, %v4904
      %v4969 = vpack.c.b16 %v4905, %v4905
      %v4970 = vpack.c.b16 %v4906, %v4906
      %v4971 = vpack.c.b16 %v4907, %v4907
      %v4972 = vpack.c.b16 %v4908, %v4908
      %v4973 = vpack.c.b16 %v4909, %v4909
      %v4974 = vpack.c.b16 %v4910, %v4910
      %v4975 = vpack.c.b16 %v4911, %v4911
      %v4976 = vpack.c.b16 %v4912, %v4912
      %v4977 = vpack.c.b16 %v4913, %v4913
      %v4978 = vpack.c.b16 %v4914, %v4914
      %v4979 = vpack.c.b16 %v4915, %v4915
      %v4980 = vpack.c.b16 %v4916, %v4916
      %v4981 = vpack.c.b16 %v4917, %v4917
      %v4982 = vpack.c.b16 %v4918, %v4918
      %v4983 = vpack.c.b16 %v4919, %v4919
      %v4984 = vpack.c.b16 %v4920, %v4920
      %v4985 = vpack.c.b16 %v4921, %v4921
      %v4986 = vpack.c.b16 %v4922, %v4922
      %v4987 = vpack.c.b16 %v4923, %v4923
      %v4988 = vpack.c.b16 %v4924, %v4924
      %v4989 = vpack.c.b16 %v4925, %v4925
      %v4990 = vpack.c.b16 %v4926, %v4926
      %v4991 = vpack.c.b16 %v4927, %v4927
      %v4992 = vpack.c.b16 %v4928, %v4928
      %v4993 = vpack.c.b16 %v4929, %v4929
      %v4994 = vpack.c.b16 %v4930, %v4930
      %v4995 = vpack.c.b16 %v4931, %v4931
      %v4996 = vpack.c.b16 %v4932, %v4932
      %v4997 = vpack.c.b16 %v4933, %v4933
      %v4998 = vpack.c.b16 %v4934, %v4934
      %v4999 = vpack.c.b16 %v4935, %v4935
      %v5000 = vpack.c.b16 %v4936, %v4936
      %v5001 = vpack.c.b16 %v4937, %v4937
      %v5002 = vpack.c.b16 %v4938, %v4938
      %v5003 = vpack.c.b16 %v4939, %v4939
      %v5004 = vpack.c.b16 %v4940, %v4940
      %5069 = vst [vmem:[%s170] sm:$0xf] %v4941
      %5070 = vst [vmem:[%s170 + $0x4] sm:$0xf] %v4942
      %5071 = vst [vmem:[%s170 + $0x8] sm:$0xf] %v4943
      %5072 = vst [vmem:[%s170 + $0xc] sm:$0xf] %v4944
      %5073 = vst [vmem:[%s170 + $0x10] sm:$0xf] %v4945
      %5074 = vst [vmem:[%s170 + $0x14] sm:$0xf] %v4946
      %5075 = vst [vmem:[%s170 + $0x18] sm:$0xf] %v4947
      %5076 = vst [vmem:[%s170 + $0x1c] sm:$0xf] %v4948
      %5077 = vst [vmem:[%s170 + $0x20] sm:$0xf] %v4949
      %5078 = vst [vmem:[%s170 + $0x24] sm:$0xf] %v4950
      %5079 = vst [vmem:[%s170 + $0x28] sm:$0xf] %v4951
      %5080 = vst [vmem:[%s170 + $0x2c] sm:$0xf] %v4952
      %5081 = vst [vmem:[%s170 + $0x30] sm:$0xf] %v4953
      %5082 = vst [vmem:[%s170 + $0x34] sm:$0xf] %v4954
      %5083 = vst [vmem:[%s170 + $0x38] sm:$0xf] %v4955
      %5084 = vst [vmem:[%s170 + $0x3c] sm:$0xf] %v4956
      %5085 = vst [vmem:[%s170 + $0x40] sm:$0xf] %v4957
      %5086 = vst [vmem:[%s170 + $0x44] sm:$0xf] %v4958
      %5087 = vst [vmem:[%s170 + $0x48] sm:$0xf] %v4959
      %5088 = vst [vmem:[%s170 + $0x4c] sm:$0xf] %v4960
      %5089 = vst [vmem:[%s170 + $0x50] sm:$0xf] %v4961
      %5090 = vst [vmem:[%s170 + $0x54] sm:$0xf] %v4962
      %5091 = vst [vmem:[%s170 + $0x58] sm:$0xf] %v4963
      %5092 = vst [vmem:[%s170 + $0x5c] sm:$0xf] %v4964
      %5093 = vst [vmem:[%s170 + $0x60] sm:$0xf] %v4965
      %5094 = vst [vmem:[%s170 + $0x64] sm:$0xf] %v4966
      %5095 = vst [vmem:[%s170 + $0x68] sm:$0xf] %v4967
      %5096 = vst [vmem:[%s170 + $0x6c] sm:$0xf] %v4968
      %5097 = vst [vmem:[%s170 + $0x70] sm:$0xf] %v4969
      %5098 = vst [vmem:[%s170 + $0x74] sm:$0xf] %v4970
      %5099 = vst [vmem:[%s170 + $0x78] sm:$0xf] %v4971
      %5100 = vst [vmem:[%s170 + $0x7c] sm:$0xf] %v4972
      %5101 = vst [vmem:[%s170 + $0x80] sm:$0xf] %v4973
      %5102 = vst [vmem:[%s170 + $0x84] sm:$0xf] %v4974
      %5103 = vst [vmem:[%s170 + $0x88] sm:$0xf] %v4975
      %5104 = vst [vmem:[%s170 + $0x8c] sm:$0xf] %v4976
      %5105 = vst [vmem:[%s170 + $0x90] sm:$0xf] %v4977
      %5106 = vst [vmem:[%s170 + $0x94] sm:$0xf] %v4978
      %5107 = vst [vmem:[%s170 + $0x98] sm:$0xf] %v4979
      %5108 = vst [vmem:[%s170 + $0x9c] sm:$0xf] %v4980
      %5109 = vst [vmem:[%s170 + $0xa0] sm:$0xf] %v4981
      %5110 = vst [vmem:[%s170 + $0xa4] sm:$0xf] %v4982
      %5111 = vst [vmem:[%s170 + $0xa8] sm:$0xf] %v4983
      %5112 = vst [vmem:[%s170 + $0xac] sm:$0xf] %v4984
      %5113 = vst [vmem:[%s170 + $0xb0] sm:$0xf] %v4985
      %5114 = vst [vmem:[%s170 + $0xb4] sm:$0xf] %v4986
      %5115 = vst [vmem:[%s170 + $0xb8] sm:$0xf] %v4987
      %5116 = vst [vmem:[%s170 + $0xbc] sm:$0xf] %v4988
      %5117 = vst [vmem:[%s170 + $0xc0] sm:$0xf] %v4989
      %5118 = vst [vmem:[%s170 + $0xc4] sm:$0xf] %v4990
      %5119 = vst [vmem:[%s170 + $0xc8] sm:$0xf] %v4991
      %5120 = vst [vmem:[%s170 + $0xcc] sm:$0xf] %v4992
      %5121 = vst [vmem:[%s170 + $0xd0] sm:$0xf] %v4993
      %5122 = vst [vmem:[%s170 + $0xd4] sm:$0xf] %v4994
      %5123 = vst [vmem:[%s170 + $0xd8] sm:$0xf] %v4995
      %5124 = vst [vmem:[%s170 + $0xdc] sm:$0xf] %v4996
      %5125 = vst [vmem:[%s170 + $0xe0] sm:$0xf] %v4997
      %5126 = vst [vmem:[%s170 + $0xe4] sm:$0xf] %v4998
      %5127 = vst [vmem:[%s170 + $0xe8] sm:$0xf] %v4999
      %5128 = vst [vmem:[%s170 + $0xec] sm:$0xf] %v5000
      %5129 = vst [vmem:[%s170 + $0xf0] sm:$0xf] %v5001
      %5130 = vst [vmem:[%s170 + $0xf4] sm:$0xf] %v5002
      %5131 = vst [vmem:[%s170 + $0xf8] sm:$0xf] %v5003
      %5132 = vst [vmem:[%s170 + $0xfc] sm:$0xf] %v5004
      %p5133 = scmp.lt.s32.totalorder %s14, 1
      %s5134 = scalar_select %p5133, %s14, 1
      %s5135 = smul.addr %s5134, 64
      %s5136 = smul.addr %s5135, 4
      %s5137 = scalar_lea.vmem %s3, %s5136
      // Predicated region
      $region33: #{_ts_forward.3} parent=31 // pred_check
        %p5138 = pneg %p100
      $region34: #{_ts_forward.3} parent=31 // pred_check_branch
        %5140 = sbr.rel (%p5138) target = $region36
      $region35: #{_ts_forward.3} parent=31 // pred_region
        _
      $region36: #{_ts_forward.3} parent=31 // pred_fallthru
        _
    $region32: #{_ts_forward.3} parent=5 // pred_fallthru
      _
    %p5141 = scmp.le.s32.totalorder 2, %s9
    // Predicated region
    $region37: #{_ts_forward.3} parent=5 // pred_check
      %p5142 = pneg %p5141
    $region38: #{_ts_forward.3} parent=5 // pred_check_branch
      %5144 = sbr.rel (%p5142) target = $region40
    $region39: #{_ts_forward.3} parent=5 // pred_region
      %s5145 = ssub.s32 %s9, 2
      // Predicated region
      $region41: #{_ts_forward.3} parent=39 // pred_check
        %p5146 = pneg %p106
      $region42: #{_ts_forward.3} parent=39 // pred_check_branch
        %5148 = sbr.rel (%p5146) target = $region44
      $region43: #{_ts_forward.3} parent=39 // pred_region
        %p5149 = scmp.lt.s32.totalorder %s15, 1
        %s5150 = scalar_select %p5149, %s15, 1
        %s5151 = smul.addr %s5150, 64
        %s5152 = smul.addr %s5151, 4
        %s5153 = scalar_lea.vmem %s3, %s5152
      $region44: #{_ts_forward.3} parent=39 // pred_fallthru
        _
    $region40: #{_ts_forward.3} parent=5 // pred_fallthru
      _
  $region6: #{_ts_forward.3} parent=0 // loop_footer
    %s13 = sadd.s32 1, %s9
  $region7: #{_ts_forward.3} parent=0 // loop_footer_branch
    %8 = sbr.rel target = $region3
  $region8: #{_ts_forward.3} parent=0 // loop_exit
    _

</llo_original>
